<compile_context>
chip_gen: v7x
topology: tpu7x:2x2x1
jax: 0.10.0
libtpu: 0.0.40
codegen_flags: <defaults>
</compile_context>

<pallas_src>
import numpy as np

import jax
import jax.numpy as jnp
from jax.experimental import pallas as pl
from jax.experimental.pallas import tpu as pltpu

NEG_SLOPE = 0.01  # PyTorch nn.LeakyReLU default negative_slope


# --------------------------------------------------------------------------
# Host-side (one-time) weight preprocessing: express convs on the packed row
# layout (H, W*C) as  out_rows = taps(H rows) @ block-Toeplitz matrices.
# --------------------------------------------------------------------------

def _conv3x3_rowmats_np(w_hwio, W, stride):
    """(3,3,Cin,Cout) -> stacked (3*W*Cin, (W//stride)*Cout) block-Toeplitz."""
    w = np.asarray(w_hwio, np.float32)
    KH, KW, Cin, Cout = w.shape
    Wo = W // stride
    mats = []
    for ky in range(KH):
        m = np.zeros((W + 2, Cin, Wo, Cout), np.float32)   # padded-W coords
        for kx in range(KW):
            for wo in range(Wo):
                m[stride * wo + kx, :, wo, :] = w[ky, kx]
        mats.append(m[1:1 + W].reshape(W * Cin, Wo * Cout))  # drop W-pad cols
    return np.concatenate(mats, axis=0)                      # (3*W*Cin, Wo*Cout)


def _conv1x1_rowmat_np(w_io, W, stride):
    """(Cin, Cout) -> (W*Cin, (W//stride)*Cout) for a (strided) 1x1 conv."""
    w = np.asarray(w_io, np.float32)
    Cin, Cout = w.shape
    Wo = W // stride
    m = np.zeros((W, Cin, Wo, Cout), np.float32)
    for wo in range(Wo):
        m[stride * wo, :, wo, :] = w
    return m.reshape(W * Cin, Wo * Cout)


def _block_entry(p, Hin, Win, stride, with_gdn, af_p):
    """Static config + preprocessed weights for one residual block."""
    Cin, Cout = p["w1"].shape[2], p["w1"].shape[3]
    S = stride
    Ho, Wo = Hin // S, Win // S
    Kout = Wo * Cout
    has_skip = "ws" in p
    if not has_skip:
        assert Cin == Cout and S == 1, \
            "identity skip requires Cin == Cout and stride == 1"

    weights = [
        _conv3x3_rowmats_np(p["w1"], Win, S),                       # t1
        np.tile(np.asarray(p["b1"], np.float32), Wo).reshape(1, Kout),
        _conv3x3_rowmats_np(p["w2"], Wo, 1),                        # t2
        np.tile(np.asarray(p["b2"], np.float32), Wo).reshape(1, Kout),
    ]
    if has_skip:
        weights += [
            _conv1x1_rowmat_np(p["ws"], Win, S),
            np.tile(np.asarray(p["bs"], np.float32), Wo).reshape(1, Kout),
        ]
    if with_gdn:
        weights += [
            np.kron(np.eye(Wo, dtype=np.float32),
                    np.asarray(p["gamma_t"], np.float32)),          # (Kout,Kout)
            np.tile(np.asarray(p["beta"], np.float32), Wo).reshape(1, Kout),
        ]
    has_af = af_p is not None
    if has_af:
        eye = np.eye(Cout, dtype=np.float32)
        w1 = np.asarray(af_p["w1"], np.float32)
        weights += [
            np.tile(eye, (Wo, 1)) / float(Ho * Wo),                 # mean-pool mat
            w1[:Cout],                                              # ctx rows
            w1[Cout:Cout + 1],                                      # snr row
            np.asarray(af_p["b1"], np.float32).reshape(1, Cout),
            np.asarray(af_p["w2"], np.float32),
            np.asarray(af_p["b2"], np.float32).reshape(1, Cout),
            np.tile(eye, (1, Wo)),                                  # gate broadcast
        ]
    cfg = dict(stride=S, Hin=Hin, Ho=Ho, Wo=Wo, Cout=Cout, Kout=Kout,
               has_skip=has_skip, has_gdn=with_gdn, has_af=has_af,
               n_refs=len(weights))
    return cfg, weights


# --------------------------------------------------------------------------
# Fully fused kernel: all 6 blocks per grid step (one batch image per step).
# --------------------------------------------------------------------------

def _make_fused_kernel(plan, attn):
    def leaky(v):
        return jnp.where(v > 0, v, NEG_SLOPE * v)

    def kernel(*refs):
        it = iter(refs)
        snr_ref = next(it) if attn else None
        x_ref = next(it)
        block_refs = [[next(it) for _ in range(cfg["n_refs"])] for cfg in plan]
        o_ref = next(it)

        f32 = jnp.float32
        snr = snr_ref[pl.program_id(0), 0] if attn else None   # SMEM scalar read

        a = x_ref[0]                                           # (H, W*Cin)

        for cfg, wr in zip(plan, block_refs):
            wi = iter(wr)
            t1 = next(wi)[...]; b1 = next(wi)[...]
            t2 = next(wi)[...]; b2 = next(wi)[...]
            if cfg["has_skip"]:
                ws = next(wi)[...]; bs = next(wi)[...]
            if cfg["has_gdn"]:
                g = next(wi)[...]; gb = next(wi)[...]
            if cfg["has_af"]:
                pmean = next(wi)[...]; aw1c = next(wi)[...]; aw1s = next(wi)[...]
                ab1 = next(wi)[...]; aw2 = next(wi)[...]; ab2 = next(wi)[...]
                abc = next(wi)[...]

            S, Hin, Ho, Kout = cfg["stride"], cfg["Hin"], cfg["Ho"], cfg["Kout"]
            Kin = a.shape[1]

            # H zero-padding (pad=1) as two extra rows of the in-register value.
            zin = jnp.zeros((1, Kin), f32)
            apad = jnp.concatenate([zin, a, zin], axis=0)      # (Hin+2, Kin)

            if S == 1:
                # three row-shifted taps, lane-concatenated -> ONE matmul
                taps1 = jnp.concatenate(
                    [apad[0:Ho], apad[1:1 + Ho], apad[2:2 + Ho]], axis=1)
                srow = a                                       # identity rows
            else:
                # stride-2: per-tap row selection via tiny 0/1 matmuls (robust,
                # avoids strided sublane slices); padded row = S*h + ky.
                Hp = Hin + 2
                r = jax.lax.broadcasted_iota(jnp.int32, (Ho, Hp), 0)
                c = jax.lax.broadcasted_iota(jnp.int32, (Ho, Hp), 1)
                tap_list = [
                    jnp.dot((c == S * r + ky).astype(f32), apad,
                            preferred_element_type=f32)
                    for ky in range(3)]
                taps1 = jnp.concatenate(tap_list, axis=1)
                srow = tap_list[1]                             # unpadded rows 0,S,2S,...

            # ---- conv1 (3x3, stride=S) + LeakyReLU ----------------------------
            h1 = leaky(jnp.dot(taps1, t1, preferred_element_type=f32) + b1)

            # ---- conv2 (3x3, stride=1) + (LeakyReLU | GDN) --------------------
            zo = jnp.zeros((1, Kout), f32)
            hpad = jnp.concatenate([zo, h1, zo], axis=0)       # (Ho+2, Kout)
            taps2 = jnp.concatenate(
                [hpad[0:Ho], hpad[1:1 + Ho], hpad[2:2 + Ho]], axis=1)
            out = jnp.dot(taps2, t2, preferred_element_type=f32) + b2

            if cfg["has_gdn"]:
                norm = gb + jnp.dot(out * out, g, preferred_element_type=f32)
                out = out * jax.lax.rsqrt(norm)
            else:
                out = leaky(out)

            # ---- skip connection + residual add --------------------------------
            if cfg["has_skip"]:
                identity = jnp.dot(srow, ws, preferred_element_type=f32) + bs
            else:
                identity = srow                                # Kin == Kout, S == 1
            out = out + identity

            # ---- fused AFModule epilogue ----------------------------------------
            if cfg["has_af"]:
                ctx = jnp.dot(jnp.sum(out, axis=0, keepdims=True), pmean,
                              preferred_element_type=f32)      # (1, Cout) mean
                hh = leaky(jnp.dot(ctx, aw1c, preferred_element_type=f32)
                           + snr * aw1s + ab1)
                gate_c = jax.nn.sigmoid(
                    jnp.dot(hh, aw2, preferred_element_type=f32) + ab2)
                gate = jnp.dot(gate_c, abc, preferred_element_type=f32)  # (1,Kout)
                out = out * gate

            a = out                                            # (Ho, Kout)

        # single store of the final activation (packed rows)
        o_ref[...] = a.reshape(1, a.shape[0], a.shape[1])

    return kernel


# --------------------------------------------------------------------------
# Builder: preprocess weights ONCE, return a jitted forward closure.
# --------------------------------------------------------------------------

def make_encoder_fn(params, *, B, H, W, c_in, attn):
    assert H % 2 == 0 and W % 2 == 0

    if attn:
        order = [("rb1", 1, False, params["af1"]),
                 ("rb2", 1, False, None), ("rb3", 1, False, None),
                 ("rb4", 1, False, None), ("rb5", 1, False, None),
                 ("rbws1", 2, True, params["af2"])]
    else:
        order = [("rbws1", 2, True, None),
                 ("rb1", 1, False, None), ("rb2", 1, False, None),
                 ("rb3", 1, False, None), ("rb4", 1, False, None),
                 ("rb5", 1, False, None)]

    plan, weights = [], []
    h, w = H, W
    for name, stride, gdn, afp in order:
        cfg, wts = _block_entry(params[name], h, w, stride, gdn, afp)
        plan.append(cfg)
        weights.extend(wts)
        h //= stride
        w //= stride
    Hf, Wf = h, w
    c_out = plan[-1]["Cout"]
    Kf = Wf * c_out

    weights_dev = [jnp.asarray(wt) for wt in weights]          # prepared once

    in_specs = []
    if attn:
        # snr rides the scalar path: whole (B,1) array in SMEM.
        in_specs.append(pl.BlockSpec(memory_space=pltpu.MemorySpace.SMEM))
    in_specs.append(pl.BlockSpec((1, H, W * c_in), lambda b: (b, 0, 0)))
    for wt in weights_dev:
        # constant index_map -> weights stay VMEM-resident across grid steps
        in_specs.append(pl.BlockSpec(wt.shape, lambda b: (0, 0)))
    out_spec = pl.BlockSpec((1, Hf, Kf), lambda b: (b, 0, 0))

    call = pl.pallas_call(
        _make_fused_kernel(plan, attn),
        out_shape=jax.ShapeDtypeStruct((B, Hf, Kf), jnp.float32),
        grid=(B,),
        in_specs=in_specs,
        out_specs=out_spec,
        compiler_params=pltpu.CompilerParams(
            dimension_semantics=("parallel",)),                # v7x: 2 TCs
    )

    def fwd(x_nchw, snr):
        assert x_nchw.shape[0] == B
        x = jnp.transpose(x_nchw, (0, 2, 3, 1)).astype(jnp.float32)  # NCHW->NHWC
        xp = x.reshape(B, H, W * c_in)                               # packed rows
        args = []
        if attn:
            assert B % snr.shape[0] == 0, "batch must be a multiple of snr batch"
            snr_b = jnp.repeat(snr.astype(jnp.float32), B // snr.shape[0], axis=0)
            args.append(snr_b)
        args.append(xp)
        args.extend(weights_dev)
        out = call(*args)                                            # (B, Hf, Wf*C)
        out = out.reshape(B, Hf, Wf, c_out)
        return jnp.transpose(out, (0, 3, 1, 2))                      # NHWC -> NCHW

    return jax.jit(fwd)


# --------------------------------------------------------------------------
# Pure-JAX reference (lax.conv based; independent of the packed-layout math)
# --------------------------------------------------------------------------

_HI = jax.lax.Precision.HIGHEST


def _leaky(x):
    return jnp.where(x > 0, x, NEG_SLOPE * x)


def _conv_ref(x, w_hwio, b, stride):
    pad = (1, 1) if w_hwio.shape[0] == 3 else (0, 0)
    y = jax.lax.conv_general_dilated(
        x, w_hwio, window_strides=(stride, stride), padding=(pad, pad),
        dimension_numbers=("NHWC", "HWIO", "NHWC"), precision=_HI)
    return y + b


def _rb_ref(x, p):
    h = _leaky(_conv_ref(x, p["w1"], p["b1"], 1))
    h = _leaky(_conv_ref(h, p["w2"], p["b2"], 1))
    identity = _conv_ref(x, p["ws"][None, None], p["bs"], 1) if "ws" in p else x
    return h + identity


def _rbws_ref(x, p):
    h = _leaky(_conv_ref(x, p["w1"], p["b1"], 2))
    h = _conv_ref(h, p["w2"], p["b2"], 1)
    norm = jnp.dot(h * h, p["gamma_t"], precision=_HI) + p["beta"]
    h = h * jax.lax.rsqrt(norm)
    identity = _conv_ref(x, p["ws"][None, None], p["bs"], 2)
    return h + identity


def _af_ref(x, snr_b, p):
    ctx = jnp.mean(x, axis=(1, 2))
    ci = jnp.concatenate([ctx, snr_b], axis=1)
    h = _leaky(jnp.dot(ci, p["w1"], precision=_HI) + p["b1"])
    m = jax.nn.sigmoid(jnp.dot(h, p["w2"], precision=_HI) + p["b2"])
    return x * m[:, None, None, :]


def encoder_ref(x_nchw, snr, params, attn):
    x = jnp.transpose(x_nchw, (0, 2, 3, 1)).astype(jnp.float32)
    B = x.shape[0]
    snr_b = jnp.repeat(snr.astype(jnp.float32), B // snr.shape[0], axis=0)
    if attn:
        x = _af_ref(_rb_ref(x, params["rb1"]), snr_b, params["af1"])
        for k in ("rb2", "rb3", "rb4", "rb5"):
            x = _rb_ref(x, params[k])
        x = _af_ref(_rbws_ref(x, params["rbws1"]), snr_b, params["af2"])
    else:
        x = _rbws_ref(x, params["rbws1"])
        for k in ("rb1", "rb2", "rb3", "rb4", "rb5"):
            x = _rb_ref(x, params[k])
    return jnp.transpose(x, (0, 3, 1, 2))


# --------------------------------------------------------------------------
# Parameters
# --------------------------------------------------------------------------

def init_params(key, c_in, c_feat, c_out, attn=True):
    keys = iter(jax.random.split(key, 64))

    def conv3(cin, cout):
        return (0.1 * jax.random.normal(next(keys), (3, 3, cin, cout), jnp.float32),
                0.01 * jax.random.normal(next(keys), (cout,), jnp.float32))

    def lin(cin, cout):
        return (0.1 * jax.random.normal(next(keys), (cin, cout), jnp.float32),
                0.01 * jax.random.normal(next(keys), (cout,), jnp.float32))

    def rb(cin, cout):
        p = {}
        p["w1"], p["b1"] = conv3(cin, cout)
        p["w2"], p["b2"] = conv3(cout, cout)
        if cin != cout:
            p["ws"], p["bs"] = lin(cin, cout)
        return p

    def rbws(cin, cout):
        p = {}
        p["w1"], p["b1"] = conv3(cin, cout)
        p["w2"], p["b2"] = conv3(cout, cout)
        p["ws"], p["bs"] = lin(cin, cout)                 # 1x1 stride-2 skip
        p["gamma_t"] = 0.1 * jnp.eye(cout, dtype=jnp.float32)
        p["beta"] = jnp.ones((cout,), jnp.float32)
        return p

    def af(c):
        p = {}
        p["w1"], p["b1"] = lin(c + 1, c)
        p["w2"], p["b2"] = lin(c, c)
        return p

    if attn:
        return {"rb1": rb(c_in, c_feat), "af1": af(c_feat),
                "rb2": rb(c_feat, c_feat), "rb3": rb(c_feat, c_feat),
                "rb4": rb(c_feat, c_feat), "rb5": rb(c_feat, c_feat),
                "rbws1": rbws(c_feat, c_out), "af2": af(c_out)}
    return {"rbws1": rbws(c_in, c_feat),
            "rb1": rb(c_feat, c_feat), "rb2": rb(c_feat, c_feat),
            "rb3": rb(c_feat, c_feat), "rb4": rb(c_feat, c_feat),
            "rb5": rb(c_feat, c_out)}


# --------------------------------------------------------------------------
# main
# --------------------------------------------------------------------------

if __name__ == "__main__":
    key = jax.random.PRNGKey(0)
    kx, kp1, kp2 = jax.random.split(key, 3)

    B, C_IN, H, W = 2, 4, 16, 16
    C_FEAT, C_OUT = 8, 8

    x = jax.random.normal(kx, (B, C_IN, H, W), jnp.float32)
    snr = jnp.full((1, 1), 5.0, jnp.float32)   # PyTorch: snr tensor of shape (1,1)

    # attn=True architecture (uses the provided AFModule)
    params_a = init_params(kp1, C_IN, C_FEAT, C_OUT, attn=True)
    fwd_a = make_encoder_fn(params_a, B=B, H=H, W=W, c_in=C_IN, attn=True)
    out_a = jax.block_until_ready(fwd_a(x, snr))
    ref_a = encoder_ref(x, snr, params_a, attn=True)
    np.testing.assert_allclose(np.asarray(out_a), np.asarray(ref_a),
                               rtol=1e-3, atol=1e-3)
    assert out_a.shape == (B, C_OUT, H // 2, W // 2)

    # attn=False (regular) architecture
    params_r = init_params(kp2, C_IN, C_FEAT, C_OUT, attn=False)
    fwd_r = make_encoder_fn(params_r, B=B, H=H, W=W, c_in=C_IN, attn=False)
    out_r = jax.block_until_ready(fwd_r(x, snr))
    ref_r = encoder_ref(x, snr, params_r, attn=False)
    np.testing.assert_allclose(np.asarray(out_r), np.asarray(ref_r),
                               rtol=1e-3, atol=1e-3)
    assert out_r.shape == (B, C_OUT, H // 2, W // 2)

    print("KERNEL_OK")
</pallas_src>

<mosaic_0001>
module attributes {stable_mosaic.version = 11 : i64} {
  func.func @kernel(%arg0: i32, %arg1: memref<2x1xf32, #tpu.memory_space<smem>>, %arg2: memref<1x16x64xf32, #tpu.memory_space<vmem>>, %arg3: memref<192x128xf32, #tpu.memory_space<vmem>>, %arg4: memref<1x128xf32, #tpu.memory_space<vmem>>, %arg5: memref<384x128xf32, #tpu.memory_space<vmem>>, %arg6: memref<1x128xf32, #tpu.memory_space<vmem>>, %arg7: memref<64x128xf32, #tpu.memory_space<vmem>>, %arg8: memref<1x128xf32, #tpu.memory_space<vmem>>, %arg9: memref<128x8xf32, #tpu.memory_space<vmem>>, %arg10: memref<8x8xf32, #tpu.memory_space<vmem>>, %arg11: memref<1x8xf32, #tpu.memory_space<vmem>>, %arg12: memref<1x8xf32, #tpu.memory_space<vmem>>, %arg13: memref<8x8xf32, #tpu.memory_space<vmem>>, %arg14: memref<1x8xf32, #tpu.memory_space<vmem>>, %arg15: memref<8x128xf32, #tpu.memory_space<vmem>>, %arg16: memref<384x128xf32, #tpu.memory_space<vmem>>, %arg17: memref<1x128xf32, #tpu.memory_space<vmem>>, %arg18: memref<384x128xf32, #tpu.memory_space<vmem>>, %arg19: memref<1x128xf32, #tpu.memory_space<vmem>>, %arg20: memref<384x128xf32, #tpu.memory_space<vmem>>, %arg21: memref<1x128xf32, #tpu.memory_space<vmem>>, %arg22: memref<384x128xf32, #tpu.memory_space<vmem>>, %arg23: memref<1x128xf32, #tpu.memory_space<vmem>>, %arg24: memref<384x128xf32, #tpu.memory_space<vmem>>, %arg25: memref<1x128xf32, #tpu.memory_space<vmem>>, %arg26: memref<384x128xf32, #tpu.memory_space<vmem>>, %arg27: memref<1x128xf32, #tpu.memory_space<vmem>>, %arg28: memref<384x128xf32, #tpu.memory_space<vmem>>, %arg29: memref<1x128xf32, #tpu.memory_space<vmem>>, %arg30: memref<384x128xf32, #tpu.memory_space<vmem>>, %arg31: memref<1x128xf32, #tpu.memory_space<vmem>>, %arg32: memref<384x64xf32, #tpu.memory_space<vmem>>, %arg33: memref<1x64xf32, #tpu.memory_space<vmem>>, %arg34: memref<192x64xf32, #tpu.memory_space<vmem>>, %arg35: memref<1x64xf32, #tpu.memory_space<vmem>>, %arg36: memref<128x64xf32, #tpu.memory_space<vmem>>, %arg37: memref<1x64xf32, #tpu.memory_space<vmem>>, %arg38: memref<64x64xf32, #tpu.memory_space<vmem>>, %arg39: memref<1x64xf32, #tpu.memory_space<vmem>>, %arg40: memref<64x8xf32, #tpu.memory_space<vmem>>, %arg41: memref<8x8xf32, #tpu.memory_space<vmem>>, %arg42: memref<1x8xf32, #tpu.memory_space<vmem>>, %arg43: memref<1x8xf32, #tpu.memory_space<vmem>>, %arg44: memref<8x8xf32, #tpu.memory_space<vmem>>, %arg45: memref<1x8xf32, #tpu.memory_space<vmem>>, %arg46: memref<8x64xf32, #tpu.memory_space<vmem>>, %arg47: memref<1x8x64xf32, #tpu.memory_space<vmem>>) attributes {dimension_semantics = [#tpu.dimension_semantics<parallel>], iteration_bounds = array<i64: 2>, scalar_prefetch = 0 : i64, scratch_operands = 0 : i64, tpu.core_type = #tpu.core_type<tc>, window_params = [{transform_indices = @transform_0, window_bounds = array<i64: 2, 1>}, {transform_indices = @transform_1, window_bounds = array<i64: 1, 16, 64>}, {pipeline_mode = #tpu.pipeline_mode<synchronous>, transform_indices = @transform_2, window_bounds = array<i64: 192, 128>}, {pipeline_mode = #tpu.pipeline_mode<synchronous>, transform_indices = @transform_3, window_bounds = array<i64: 1, 128>}, {pipeline_mode = #tpu.pipeline_mode<synchronous>, transform_indices = @transform_4, window_bounds = array<i64: 384, 128>}, {pipeline_mode = #tpu.pipeline_mode<synchronous>, transform_indices = @transform_5, window_bounds = array<i64: 1, 128>}, {pipeline_mode = #tpu.pipeline_mode<synchronous>, transform_indices = @transform_6, window_bounds = array<i64: 64, 128>}, {pipeline_mode = #tpu.pipeline_mode<synchronous>, transform_indices = @transform_7, window_bounds = array<i64: 1, 128>}, {pipeline_mode = #tpu.pipeline_mode<synchronous>, transform_indices = @transform_8, window_bounds = array<i64: 128, 8>}, {pipeline_mode = #tpu.pipeline_mode<synchronous>, transform_indices = @transform_9, window_bounds = array<i64: 8, 8>}, {pipeline_mode = #tpu.pipeline_mode<synchronous>, transform_indices = @transform_10, window_bounds = array<i64: 1, 8>}, {pipeline_mode = #tpu.pipeline_mode<synchronous>, transform_indices = @transform_11, window_bounds = array<i64: 1, 8>}, {pipeline_mode = #tpu.pipeline_mode<synchronous>, transform_indices = @transform_12, window_bounds = array<i64: 8, 8>}, {pipeline_mode = #tpu.pipeline_mode<synchronous>, transform_indices = @transform_13, window_bounds = array<i64: 1, 8>}, {pipeline_mode = #tpu.pipeline_mode<synchronous>, transform_indices = @transform_14, window_bounds = array<i64: 8, 128>}, {pipeline_mode = #tpu.pipeline_mode<synchronous>, transform_indices = @transform_15, window_bounds = array<i64: 384, 128>}, {pipeline_mode = #tpu.pipeline_mode<synchronous>, transform_indices = @transform_16, window_bounds = array<i64: 1, 128>}, {pipeline_mode = #tpu.pipeline_mode<synchronous>, transform_indices = @transform_17, window_bounds = array<i64: 384, 128>}, {pipeline_mode = #tpu.pipeline_mode<synchronous>, transform_indices = @transform_18, window_bounds = array<i64: 1, 128>}, {pipeline_mode = #tpu.pipeline_mode<synchronous>, transform_indices = @transform_19, window_bounds = array<i64: 384, 128>}, {pipeline_mode = #tpu.pipeline_mode<synchronous>, transform_indices = @transform_20, window_bounds = array<i64: 1, 128>}, {pipeline_mode = #tpu.pipeline_mode<synchronous>, transform_indices = @transform_21, window_bounds = array<i64: 384, 128>}, {pipeline_mode = #tpu.pipeline_mode<synchronous>, transform_indices = @transform_22, window_bounds = array<i64: 1, 128>}, {pipeline_mode = #tpu.pipeline_mode<synchronous>, transform_indices = @transform_23, window_bounds = array<i64: 384, 128>}, {pipeline_mode = #tpu.pipeline_mode<synchronous>, transform_indices = @transform_24, window_bounds = array<i64: 1, 128>}, {pipeline_mode = #tpu.pipeline_mode<synchronous>, transform_indices = @transform_25, window_bounds = array<i64: 384, 128>}, {pipeline_mode = #tpu.pipeline_mode<synchronous>, transform_indices = @transform_26, window_bounds = array<i64: 1, 128>}, {pipeline_mode = #tpu.pipeline_mode<synchronous>, transform_indices = @transform_27, window_bounds = array<i64: 384, 128>}, {pipeline_mode = #tpu.pipeline_mode<synchronous>, transform_indices = @transform_28, window_bounds = array<i64: 1, 128>}, {pipeline_mode = #tpu.pipeline_mode<synchronous>, transform_indices = @transform_29, window_bounds = array<i64: 384, 128>}, {pipeline_mode = #tpu.pipeline_mode<synchronous>, transform_indices = @transform_30, window_bounds = array<i64: 1, 128>}, {pipeline_mode = #tpu.pipeline_mode<synchronous>, transform_indices = @transform_31, window_bounds = array<i64: 384, 64>}, {pipeline_mode = #tpu.pipeline_mode<synchronous>, transform_indices = @transform_32, window_bounds = array<i64: 1, 64>}, {pipeline_mode = #tpu.pipeline_mode<synchronous>, transform_indices = @transform_33, window_bounds = array<i64: 192, 64>}, {pipeline_mode = #tpu.pipeline_mode<synchronous>, transform_indices = @transform_34, window_bounds = array<i64: 1, 64>}, {pipeline_mode = #tpu.pipeline_mode<synchronous>, transform_indices = @transform_35, window_bounds = array<i64: 128, 64>}, {pipeline_mode = #tpu.pipeline_mode<synchronous>, transform_indices = @transform_36, window_bounds = array<i64: 1, 64>}, {pipeline_mode = #tpu.pipeline_mode<synchronous>, transform_indices = @transform_37, window_bounds = array<i64: 64, 64>}, {pipeline_mode = #tpu.pipeline_mode<synchronous>, transform_indices = @transform_38, window_bounds = array<i64: 1, 64>}, {pipeline_mode = #tpu.pipeline_mode<synchronous>, transform_indices = @transform_39, window_bounds = array<i64: 64, 8>}, {pipeline_mode = #tpu.pipeline_mode<synchronous>, transform_indices = @transform_40, window_bounds = array<i64: 8, 8>}, {pipeline_mode = #tpu.pipeline_mode<synchronous>, transform_indices = @transform_41, window_bounds = array<i64: 1, 8>}, {pipeline_mode = #tpu.pipeline_mode<synchronous>, transform_indices = @transform_42, window_bounds = array<i64: 1, 8>}, {pipeline_mode = #tpu.pipeline_mode<synchronous>, transform_indices = @transform_43, window_bounds = array<i64: 8, 8>}, {pipeline_mode = #tpu.pipeline_mode<synchronous>, transform_indices = @transform_44, window_bounds = array<i64: 1, 8>}, {pipeline_mode = #tpu.pipeline_mode<synchronous>, transform_indices = @transform_45, window_bounds = array<i64: 8, 64>}, {transform_indices = @transform_46, window_bounds = array<i64: 1, 8, 64>}]} {
    %0 = arith.index_cast %arg0 : i32 to index
    %c0 = arith.constant 0 : index
    %1 = memref.load %arg1[%0, %c0] : memref<2x1xf32, #tpu.memory_space<smem>>
    %c0_0 = arith.constant 0 : index
    %c0_1 = arith.constant 0 : index
    %c0_2 = arith.constant 0 : index
    %2 = vector.load %arg2[%c0_0, %c0_1, %c0_2] : memref<1x16x64xf32, #tpu.memory_space<vmem>>, vector<1x16x64xf32>
    %3 = vector.shape_cast %2 : vector<1x16x64xf32> to vector<16x64xf32>
    %c0_3 = arith.constant 0 : index
    %c0_4 = arith.constant 0 : index
    %4 = vector.load %arg3[%c0_3, %c0_4] : memref<192x128xf32, #tpu.memory_space<vmem>>, vector<192x128xf32>
    %c0_5 = arith.constant 0 : index
    %c0_6 = arith.constant 0 : index
    %5 = vector.load %arg4[%c0_5, %c0_6] : memref<1x128xf32, #tpu.memory_space<vmem>>, vector<1x128xf32>
    %c0_7 = arith.constant 0 : index
    %c0_8 = arith.constant 0 : index
    %6 = vector.load %arg5[%c0_7, %c0_8] : memref<384x128xf32, #tpu.memory_space<vmem>>, vector<384x128xf32>
    %c0_9 = arith.constant 0 : index
    %c0_10 = arith.constant 0 : index
    %7 = vector.load %arg6[%c0_9, %c0_10] : memref<1x128xf32, #tpu.memory_space<vmem>>, vector<1x128xf32>
    %c0_11 = arith.constant 0 : index
    %c0_12 = arith.constant 0 : index
    %8 = vector.load %arg7[%c0_11, %c0_12] : memref<64x128xf32, #tpu.memory_space<vmem>>, vector<64x128xf32>
    %c0_13 = arith.constant 0 : index
    %c0_14 = arith.constant 0 : index
    %9 = vector.load %arg8[%c0_13, %c0_14] : memref<1x128xf32, #tpu.memory_space<vmem>>, vector<1x128xf32>
    %c0_15 = arith.constant 0 : index
    %c0_16 = arith.constant 0 : index
    %10 = vector.load %arg9[%c0_15, %c0_16] : memref<128x8xf32, #tpu.memory_space<vmem>>, vector<128x8xf32>
    %c0_17 = arith.constant 0 : index
    %c0_18 = arith.constant 0 : index
    %11 = vector.load %arg10[%c0_17, %c0_18] : memref<8x8xf32, #tpu.memory_space<vmem>>, vector<8x8xf32>
    %c0_19 = arith.constant 0 : index
    %c0_20 = arith.constant 0 : index
    %12 = vector.load %arg11[%c0_19, %c0_20] : memref<1x8xf32, #tpu.memory_space<vmem>>, vector<1x8xf32>
    %c0_21 = arith.constant 0 : index
    %c0_22 = arith.constant 0 : index
    %13 = vector.load %arg12[%c0_21, %c0_22] : memref<1x8xf32, #tpu.memory_space<vmem>>, vector<1x8xf32>
    %c0_23 = arith.constant 0 : index
    %c0_24 = arith.constant 0 : index
    %14 = vector.load %arg13[%c0_23, %c0_24] : memref<8x8xf32, #tpu.memory_space<vmem>>, vector<8x8xf32>
    %c0_25 = arith.constant 0 : index
    %c0_26 = arith.constant 0 : index
    %15 = vector.load %arg14[%c0_25, %c0_26] : memref<1x8xf32, #tpu.memory_space<vmem>>, vector<1x8xf32>
    %c0_27 = arith.constant 0 : index
    %c0_28 = arith.constant 0 : index
    %16 = vector.load %arg15[%c0_27, %c0_28] : memref<8x128xf32, #tpu.memory_space<vmem>>, vector<8x128xf32>
    %cst = arith.constant 0.000000e+00 : f32
    %17 = vector.broadcast %cst : f32 to vector<1x64xf32>
    %18 = tpu.concatenate %17, %3, %17 in 0 : vector<1x64xf32>, vector<16x64xf32>, vector<1x64xf32> -> vector<18x64xf32>
    %19 = vector.extract_strided_slice %18 {offsets = [0, 0], sizes = [16, 64], strides = [1, 1]} : vector<18x64xf32> to vector<16x64xf32>
    %20 = vector.extract_strided_slice %18 {offsets = [1, 0], sizes = [16, 64], strides = [1, 1]} : vector<18x64xf32> to vector<16x64xf32>
    %21 = vector.extract_strided_slice %18 {offsets = [2, 0], sizes = [16, 64], strides = [1, 1]} : vector<18x64xf32> to vector<16x64xf32>
    %22 = tpu.concatenate %19, %20, %21 in 1 : vector<16x64xf32>, vector<16x64xf32>, vector<16x64xf32> -> vector<16x192xf32>
    %cst_29 = arith.constant dense<0.000000e+00> : vector<16x128xf32>
    %23 = tpu.matmul %22, %4, %cst_29 {dimension_numbers = #tpu.dot_dimension_numbers<[1], [0], [0], [1], [0, 0, 1, 1], [], []>} : vector<16x192xf32>, vector<192x128xf32>, vector<16x128xf32> -> vector<16x128xf32>
    %24 = vector.broadcast %5 : vector<1x128xf32> to vector<16x128xf32>
    %25 = arith.addf %23, %24 : vector<16x128xf32>
    %cst_30 = arith.constant 0.000000e+00 : f32
    %26 = vector.broadcast %cst_30 : f32 to vector<16x128xf32>
    %27 = arith.cmpf ogt, %25, %26 : vector<16x128xf32>
    %cst_31 = arith.constant 0.00999999977 : f32
    %28 = vector.broadcast %cst_31 : f32 to vector<16x128xf32>
    %29 = arith.mulf %28, %25 : vector<16x128xf32>
    %30 = arith.select %27, %25, %29 : vector<16x128xi1>, vector<16x128xf32>
    %cst_32 = arith.constant 0.000000e+00 : f32
    %31 = vector.broadcast %cst_32 : f32 to vector<1x128xf32>
    %32 = tpu.concatenate %31, %30, %31 in 0 : vector<1x128xf32>, vector<16x128xf32>, vector<1x128xf32> -> vector<18x128xf32>
    %33 = vector.extract_strided_slice %32 {offsets = [0, 0], sizes = [16, 128], strides = [1, 1]} : vector<18x128xf32> to vector<16x128xf32>
    %34 = vector.extract_strided_slice %32 {offsets = [1, 0], sizes = [16, 128], strides = [1, 1]} : vector<18x128xf32> to vector<16x128xf32>
    %35 = vector.extract_strided_slice %32 {offsets = [2, 0], sizes = [16, 128], strides = [1, 1]} : vector<18x128xf32> to vector<16x128xf32>
    %36 = tpu.concatenate %33, %34, %35 in 1 : vector<16x128xf32>, vector<16x128xf32>, vector<16x128xf32> -> vector<16x384xf32>
    %cst_33 = arith.constant dense<0.000000e+00> : vector<16x128xf32>
    %37 = tpu.matmul %36, %6, %cst_33 {dimension_numbers = #tpu.dot_dimension_numbers<[1], [0], [0], [1], [0, 0, 1, 1], [], []>} : vector<16x384xf32>, vector<384x128xf32>, vector<16x128xf32> -> vector<16x128xf32>
    %38 = vector.broadcast %7 : vector<1x128xf32> to vector<16x128xf32>
    %39 = arith.addf %37, %38 : vector<16x128xf32>
    %cst_34 = arith.constant 0.000000e+00 : f32
    %40 = vector.broadcast %cst_34 : f32 to vector<16x128xf32>
    %41 = arith.cmpf ogt, %39, %40 : vector<16x128xf32>
    %cst_35 = arith.constant 0.00999999977 : f32
    %42 = vector.broadcast %cst_35 : f32 to vector<16x128xf32>
    %43 = arith.mulf %42, %39 : vector<16x128xf32>
    %44 = arith.select %41, %39, %43 : vector<16x128xi1>, vector<16x128xf32>
    %cst_36 = arith.constant dense<0.000000e+00> : vector<16x128xf32>
    %45 = tpu.matmul %3, %8, %cst_36 {dimension_numbers = #tpu.dot_dimension_numbers<[1], [0], [0], [1], [0, 0, 1, 1], [], []>} : vector<16x64xf32>, vector<64x128xf32>, vector<16x128xf32> -> vector<16x128xf32>
    %46 = vector.broadcast %9 : vector<1x128xf32> to vector<16x128xf32>
    %47 = arith.addf %45, %46 : vector<16x128xf32>
    %48 = arith.addf %44, %47 : vector<16x128xf32>
    %cst_37 = arith.constant dense<0.000000e+00> : vector<128xf32>
    %49 = vector.multi_reduction <add>, %48, %cst_37 [0] : vector<16x128xf32> to vector<128xf32>
    %50 = vector.shape_cast %49 : vector<128xf32> to vector<1x128xf32>
    %cst_38 = arith.constant dense<0.000000e+00> : vector<1x8xf32>
    %51 = tpu.matmul %50, %10, %cst_38 {dimension_numbers = #tpu.dot_dimension_numbers<[1], [0], [0], [1], [0, 0, 1, 1], [], []>} : vector<1x128xf32>, vector<128x8xf32>, vector<1x8xf32> -> vector<1x8xf32>
    %cst_39 = arith.constant dense<0.000000e+00> : vector<1x8xf32>
    %52 = tpu.matmul %51, %11, %cst_39 {dimension_numbers = #tpu.dot_dimension_numbers<[1], [0], [0], [1], [0, 0, 1, 1], [], []>} : vector<1x8xf32>, vector<8x8xf32>, vector<1x8xf32> -> vector<1x8xf32>
    %53 = vector.broadcast %1 : f32 to vector<1x8xf32>
    %54 = arith.mulf %53, %12 : vector<1x8xf32>
    %55 = arith.addf %52, %54 : vector<1x8xf32>
    %56 = arith.addf %55, %13 : vector<1x8xf32>
    %cst_40 = arith.constant 0.000000e+00 : f32
    %57 = vector.broadcast %cst_40 : f32 to vector<1x8xf32>
    %58 = arith.cmpf ogt, %56, %57 : vector<1x8xf32>
    %cst_41 = arith.constant 0.00999999977 : f32
    %59 = vector.broadcast %cst_41 : f32 to vector<1x8xf32>
    %60 = arith.mulf %59, %56 : vector<1x8xf32>
    %61 = arith.select %58, %56, %60 : vector<1x8xi1>, vector<1x8xf32>
    %cst_42 = arith.constant dense<0.000000e+00> : vector<1x8xf32>
    %62 = tpu.matmul %61, %14, %cst_42 {dimension_numbers = #tpu.dot_dimension_numbers<[1], [0], [0], [1], [0, 0, 1, 1], [], []>} : vector<1x8xf32>, vector<8x8xf32>, vector<1x8xf32> -> vector<1x8xf32>
    %63 = arith.addf %62, %15 : vector<1x8xf32>
    %64 = arith.negf %63 : vector<1x8xf32>
    %65 = math.exp %64 : vector<1x8xf32>
    %cst_43 = arith.constant 1.000000e+00 : f32
    %66 = vector.broadcast %cst_43 : f32 to vector<1x8xf32>
    %67 = arith.addf %66, %65 : vector<1x8xf32>
    %68 = arith.divf %66, %67 : vector<1x8xf32>
    %cst_44 = arith.constant dense<0.000000e+00> : vector<1x128xf32>
    %69 = tpu.matmul %68, %16, %cst_44 {dimension_numbers = #tpu.dot_dimension_numbers<[1], [0], [0], [1], [0, 0, 1, 1], [], []>} : vector<1x8xf32>, vector<8x128xf32>, vector<1x128xf32> -> vector<1x128xf32>
    %70 = vector.broadcast %69 : vector<1x128xf32> to vector<16x128xf32>
    %71 = arith.mulf %48, %70 : vector<16x128xf32>
    %c0_45 = arith.constant 0 : index
    %c0_46 = arith.constant 0 : index
    %72 = vector.load %arg16[%c0_45, %c0_46] : memref<384x128xf32, #tpu.memory_space<vmem>>, vector<384x128xf32>
    %c0_47 = arith.constant 0 : index
    %c0_48 = arith.constant 0 : index
    %73 = vector.load %arg17[%c0_47, %c0_48] : memref<1x128xf32, #tpu.memory_space<vmem>>, vector<1x128xf32>
    %c0_49 = arith.constant 0 : index
    %c0_50 = arith.constant 0 : index
    %74 = vector.load %arg18[%c0_49, %c0_50] : memref<384x128xf32, #tpu.memory_space<vmem>>, vector<384x128xf32>
    %c0_51 = arith.constant 0 : index
    %c0_52 = arith.constant 0 : index
    %75 = vector.load %arg19[%c0_51, %c0_52] : memref<1x128xf32, #tpu.memory_space<vmem>>, vector<1x128xf32>
    %cst_53 = arith.constant 0.000000e+00 : f32
    %76 = vector.broadcast %cst_53 : f32 to vector<1x128xf32>
    %77 = tpu.concatenate %76, %71, %76 in 0 : vector<1x128xf32>, vector<16x128xf32>, vector<1x128xf32> -> vector<18x128xf32>
    %78 = vector.extract_strided_slice %77 {offsets = [0, 0], sizes = [16, 128], strides = [1, 1]} : vector<18x128xf32> to vector<16x128xf32>
    %79 = vector.extract_strided_slice %77 {offsets = [1, 0], sizes = [16, 128], strides = [1, 1]} : vector<18x128xf32> to vector<16x128xf32>
    %80 = vector.extract_strided_slice %77 {offsets = [2, 0], sizes = [16, 128], strides = [1, 1]} : vector<18x128xf32> to vector<16x128xf32>
    %81 = tpu.concatenate %78, %79, %80 in 1 : vector<16x128xf32>, vector<16x128xf32>, vector<16x128xf32> -> vector<16x384xf32>
    %cst_54 = arith.constant dense<0.000000e+00> : vector<16x128xf32>
    %82 = tpu.matmul %81, %72, %cst_54 {dimension_numbers = #tpu.dot_dimension_numbers<[1], [0], [0], [1], [0, 0, 1, 1], [], []>} : vector<16x384xf32>, vector<384x128xf32>, vector<16x128xf32> -> vector<16x128xf32>
    %83 = vector.broadcast %73 : vector<1x128xf32> to vector<16x128xf32>
    %84 = arith.addf %82, %83 : vector<16x128xf32>
    %cst_55 = arith.constant 0.000000e+00 : f32
    %85 = vector.broadcast %cst_55 : f32 to vector<16x128xf32>
    %86 = arith.cmpf ogt, %84, %85 : vector<16x128xf32>
    %cst_56 = arith.constant 0.00999999977 : f32
    %87 = vector.broadcast %cst_56 : f32 to vector<16x128xf32>
    %88 = arith.mulf %87, %84 : vector<16x128xf32>
    %89 = arith.select %86, %84, %88 : vector<16x128xi1>, vector<16x128xf32>
    %cst_57 = arith.constant 0.000000e+00 : f32
    %90 = vector.broadcast %cst_57 : f32 to vector<1x128xf32>
    %91 = tpu.concatenate %90, %89, %90 in 0 : vector<1x128xf32>, vector<16x128xf32>, vector<1x128xf32> -> vector<18x128xf32>
    %92 = vector.extract_strided_slice %91 {offsets = [0, 0], sizes = [16, 128], strides = [1, 1]} : vector<18x128xf32> to vector<16x128xf32>
    %93 = vector.extract_strided_slice %91 {offsets = [1, 0], sizes = [16, 128], strides = [1, 1]} : vector<18x128xf32> to vector<16x128xf32>
    %94 = vector.extract_strided_slice %91 {offsets = [2, 0], sizes = [16, 128], strides = [1, 1]} : vector<18x128xf32> to vector<16x128xf32>
    %95 = tpu.concatenate %92, %93, %94 in 1 : vector<16x128xf32>, vector<16x128xf32>, vector<16x128xf32> -> vector<16x384xf32>
    %cst_58 = arith.constant dense<0.000000e+00> : vector<16x128xf32>
    %96 = tpu.matmul %95, %74, %cst_58 {dimension_numbers = #tpu.dot_dimension_numbers<[1], [0], [0], [1], [0, 0, 1, 1], [], []>} : vector<16x384xf32>, vector<384x128xf32>, vector<16x128xf32> -> vector<16x128xf32>
    %97 = vector.broadcast %75 : vector<1x128xf32> to vector<16x128xf32>
    %98 = arith.addf %96, %97 : vector<16x128xf32>
    %cst_59 = arith.constant 0.000000e+00 : f32
    %99 = vector.broadcast %cst_59 : f32 to vector<16x128xf32>
    %100 = arith.cmpf ogt, %98, %99 : vector<16x128xf32>
    %cst_60 = arith.constant 0.00999999977 : f32
    %101 = vector.broadcast %cst_60 : f32 to vector<16x128xf32>
    %102 = arith.mulf %101, %98 : vector<16x128xf32>
    %103 = arith.select %100, %98, %102 : vector<16x128xi1>, vector<16x128xf32>
    %104 = arith.addf %103, %71 : vector<16x128xf32>
    %c0_61 = arith.constant 0 : index
    %c0_62 = arith.constant 0 : index
    %105 = vector.load %arg20[%c0_61, %c0_62] : memref<384x128xf32, #tpu.memory_space<vmem>>, vector<384x128xf32>
    %c0_63 = arith.constant 0 : index
    %c0_64 = arith.constant 0 : index
    %106 = vector.load %arg21[%c0_63, %c0_64] : memref<1x128xf32, #tpu.memory_space<vmem>>, vector<1x128xf32>
    %c0_65 = arith.constant 0 : index
    %c0_66 = arith.constant 0 : index
    %107 = vector.load %arg22[%c0_65, %c0_66] : memref<384x128xf32, #tpu.memory_space<vmem>>, vector<384x128xf32>
    %c0_67 = arith.constant 0 : index
    %c0_68 = arith.constant 0 : index
    %108 = vector.load %arg23[%c0_67, %c0_68] : memref<1x128xf32, #tpu.memory_space<vmem>>, vector<1x128xf32>
    %cst_69 = arith.constant 0.000000e+00 : f32
    %109 = vector.broadcast %cst_69 : f32 to vector<1x128xf32>
    %110 = tpu.concatenate %109, %104, %109 in 0 : vector<1x128xf32>, vector<16x128xf32>, vector<1x128xf32> -> vector<18x128xf32>
    %111 = vector.extract_strided_slice %110 {offsets = [0, 0], sizes = [16, 128], strides = [1, 1]} : vector<18x128xf32> to vector<16x128xf32>
    %112 = vector.extract_strided_slice %110 {offsets = [1, 0], sizes = [16, 128], strides = [1, 1]} : vector<18x128xf32> to vector<16x128xf32>
    %113 = vector.extract_strided_slice %110 {offsets = [2, 0], sizes = [16, 128], strides = [1, 1]} : vector<18x128xf32> to vector<16x128xf32>
    %114 = tpu.concatenate %111, %112, %113 in 1 : vector<16x128xf32>, vector<16x128xf32>, vector<16x128xf32> -> vector<16x384xf32>
    %cst_70 = arith.constant dense<0.000000e+00> : vector<16x128xf32>
    %115 = tpu.matmul %114, %105, %cst_70 {dimension_numbers = #tpu.dot_dimension_numbers<[1], [0], [0], [1], [0, 0, 1, 1], [], []>} : vector<16x384xf32>, vector<384x128xf32>, vector<16x128xf32> -> vector<16x128xf32>
    %116 = vector.broadcast %106 : vector<1x128xf32> to vector<16x128xf32>
    %117 = arith.addf %115, %116 : vector<16x128xf32>
    %cst_71 = arith.constant 0.000000e+00 : f32
    %118 = vector.broadcast %cst_71 : f32 to vector<16x128xf32>
    %119 = arith.cmpf ogt, %117, %118 : vector<16x128xf32>
    %cst_72 = arith.constant 0.00999999977 : f32
    %120 = vector.broadcast %cst_72 : f32 to vector<16x128xf32>
    %121 = arith.mulf %120, %117 : vector<16x128xf32>
    %122 = arith.select %119, %117, %121 : vector<16x128xi1>, vector<16x128xf32>
    %cst_73 = arith.constant 0.000000e+00 : f32
    %123 = vector.broadcast %cst_73 : f32 to vector<1x128xf32>
    %124 = tpu.concatenate %123, %122, %123 in 0 : vector<1x128xf32>, vector<16x128xf32>, vector<1x128xf32> -> vector<18x128xf32>
    %125 = vector.extract_strided_slice %124 {offsets = [0, 0], sizes = [16, 128], strides = [1, 1]} : vector<18x128xf32> to vector<16x128xf32>
    %126 = vector.extract_strided_slice %124 {offsets = [1, 0], sizes = [16, 128], strides = [1, 1]} : vector<18x128xf32> to vector<16x128xf32>
    %127 = vector.extract_strided_slice %124 {offsets = [2, 0], sizes = [16, 128], strides = [1, 1]} : vector<18x128xf32> to vector<16x128xf32>
    %128 = tpu.concatenate %125, %126, %127 in 1 : vector<16x128xf32>, vector<16x128xf32>, vector<16x128xf32> -> vector<16x384xf32>
    %cst_74 = arith.constant dense<0.000000e+00> : vector<16x128xf32>
    %129 = tpu.matmul %128, %107, %cst_74 {dimension_numbers = #tpu.dot_dimension_numbers<[1], [0], [0], [1], [0, 0, 1, 1], [], []>} : vector<16x384xf32>, vector<384x128xf32>, vector<16x128xf32> -> vector<16x128xf32>
    %130 = vector.broadcast %108 : vector<1x128xf32> to vector<16x128xf32>
    %131 = arith.addf %129, %130 : vector<16x128xf32>
    %cst_75 = arith.constant 0.000000e+00 : f32
    %132 = vector.broadcast %cst_75 : f32 to vector<16x128xf32>
    %133 = arith.cmpf ogt, %131, %132 : vector<16x128xf32>
    %cst_76 = arith.constant 0.00999999977 : f32
    %134 = vector.broadcast %cst_76 : f32 to vector<16x128xf32>
    %135 = arith.mulf %134, %131 : vector<16x128xf32>
    %136 = arith.select %133, %131, %135 : vector<16x128xi1>, vector<16x128xf32>
    %137 = arith.addf %136, %104 : vector<16x128xf32>
    %c0_77 = arith.constant 0 : index
    %c0_78 = arith.constant 0 : index
    %138 = vector.load %arg24[%c0_77, %c0_78] : memref<384x128xf32, #tpu.memory_space<vmem>>, vector<384x128xf32>
    %c0_79 = arith.constant 0 : index
    %c0_80 = arith.constant 0 : index
    %139 = vector.load %arg25[%c0_79, %c0_80] : memref<1x128xf32, #tpu.memory_space<vmem>>, vector<1x128xf32>
    %c0_81 = arith.constant 0 : index
    %c0_82 = arith.constant 0 : index
    %140 = vector.load %arg26[%c0_81, %c0_82] : memref<384x128xf32, #tpu.memory_space<vmem>>, vector<384x128xf32>
    %c0_83 = arith.constant 0 : index
    %c0_84 = arith.constant 0 : index
    %141 = vector.load %arg27[%c0_83, %c0_84] : memref<1x128xf32, #tpu.memory_space<vmem>>, vector<1x128xf32>
    %cst_85 = arith.constant 0.000000e+00 : f32
    %142 = vector.broadcast %cst_85 : f32 to vector<1x128xf32>
    %143 = tpu.concatenate %142, %137, %142 in 0 : vector<1x128xf32>, vector<16x128xf32>, vector<1x128xf32> -> vector<18x128xf32>
    %144 = vector.extract_strided_slice %143 {offsets = [0, 0], sizes = [16, 128], strides = [1, 1]} : vector<18x128xf32> to vector<16x128xf32>
    %145 = vector.extract_strided_slice %143 {offsets = [1, 0], sizes = [16, 128], strides = [1, 1]} : vector<18x128xf32> to vector<16x128xf32>
    %146 = vector.extract_strided_slice %143 {offsets = [2, 0], sizes = [16, 128], strides = [1, 1]} : vector<18x128xf32> to vector<16x128xf32>
    %147 = tpu.concatenate %144, %145, %146 in 1 : vector<16x128xf32>, vector<16x128xf32>, vector<16x128xf32> -> vector<16x384xf32>
    %cst_86 = arith.constant dense<0.000000e+00> : vector<16x128xf32>
    %148 = tpu.matmul %147, %138, %cst_86 {dimension_numbers = #tpu.dot_dimension_numbers<[1], [0], [0], [1], [0, 0, 1, 1], [], []>} : vector<16x384xf32>, vector<384x128xf32>, vector<16x128xf32> -> vector<16x128xf32>
    %149 = vector.broadcast %139 : vector<1x128xf32> to vector<16x128xf32>
    %150 = arith.addf %148, %149 : vector<16x128xf32>
    %cst_87 = arith.constant 0.000000e+00 : f32
    %151 = vector.broadcast %cst_87 : f32 to vector<16x128xf32>
    %152 = arith.cmpf ogt, %150, %151 : vector<16x128xf32>
    %cst_88 = arith.constant 0.00999999977 : f32
    %153 = vector.broadcast %cst_88 : f32 to vector<16x128xf32>
    %154 = arith.mulf %153, %150 : vector<16x128xf32>
    %155 = arith.select %152, %150, %154 : vector<16x128xi1>, vector<16x128xf32>
    %cst_89 = arith.constant 0.000000e+00 : f32
    %156 = vector.broadcast %cst_89 : f32 to vector<1x128xf32>
    %157 = tpu.concatenate %156, %155, %156 in 0 : vector<1x128xf32>, vector<16x128xf32>, vector<1x128xf32> -> vector<18x128xf32>
    %158 = vector.extract_strided_slice %157 {offsets = [0, 0], sizes = [16, 128], strides = [1, 1]} : vector<18x128xf32> to vector<16x128xf32>
    %159 = vector.extract_strided_slice %157 {offsets = [1, 0], sizes = [16, 128], strides = [1, 1]} : vector<18x128xf32> to vector<16x128xf32>
    %160 = vector.extract_strided_slice %157 {offsets = [2, 0], sizes = [16, 128], strides = [1, 1]} : vector<18x128xf32> to vector<16x128xf32>
    %161 = tpu.concatenate %158, %159, %160 in 1 : vector<16x128xf32>, vector<16x128xf32>, vector<16x128xf32> -> vector<16x384xf32>
    %cst_90 = arith.constant dense<0.000000e+00> : vector<16x128xf32>
    %162 = tpu.matmul %161, %140, %cst_90 {dimension_numbers = #tpu.dot_dimension_numbers<[1], [0], [0], [1], [0, 0, 1, 1], [], []>} : vector<16x384xf32>, vector<384x128xf32>, vector<16x128xf32> -> vector<16x128xf32>
    %163 = vector.broadcast %141 : vector<1x128xf32> to vector<16x128xf32>
    %164 = arith.addf %162, %163 : vector<16x128xf32>
    %cst_91 = arith.constant 0.000000e+00 : f32
    %165 = vector.broadcast %cst_91 : f32 to vector<16x128xf32>
    %166 = arith.cmpf ogt, %164, %165 : vector<16x128xf32>
    %cst_92 = arith.constant 0.00999999977 : f32
    %167 = vector.broadcast %cst_92 : f32 to vector<16x128xf32>
    %168 = arith.mulf %167, %164 : vector<16x128xf32>
    %169 = arith.select %166, %164, %168 : vector<16x128xi1>, vector<16x128xf32>
    %170 = arith.addf %169, %137 : vector<16x128xf32>
    %c0_93 = arith.constant 0 : index
    %c0_94 = arith.constant 0 : index
    %171 = vector.load %arg28[%c0_93, %c0_94] : memref<384x128xf32, #tpu.memory_space<vmem>>, vector<384x128xf32>
    %c0_95 = arith.constant 0 : index
    %c0_96 = arith.constant 0 : index
    %172 = vector.load %arg29[%c0_95, %c0_96] : memref<1x128xf32, #tpu.memory_space<vmem>>, vector<1x128xf32>
    %c0_97 = arith.constant 0 : index
    %c0_98 = arith.constant 0 : index
    %173 = vector.load %arg30[%c0_97, %c0_98] : memref<384x128xf32, #tpu.memory_space<vmem>>, vector<384x128xf32>
    %c0_99 = arith.constant 0 : index
    %c0_100 = arith.constant 0 : index
    %174 = vector.load %arg31[%c0_99, %c0_100] : memref<1x128xf32, #tpu.memory_space<vmem>>, vector<1x128xf32>
    %cst_101 = arith.constant 0.000000e+00 : f32
    %175 = vector.broadcast %cst_101 : f32 to vector<1x128xf32>
    %176 = tpu.concatenate %175, %170, %175 in 0 : vector<1x128xf32>, vector<16x128xf32>, vector<1x128xf32> -> vector<18x128xf32>
    %177 = vector.extract_strided_slice %176 {offsets = [0, 0], sizes = [16, 128], strides = [1, 1]} : vector<18x128xf32> to vector<16x128xf32>
    %178 = vector.extract_strided_slice %176 {offsets = [1, 0], sizes = [16, 128], strides = [1, 1]} : vector<18x128xf32> to vector<16x128xf32>
    %179 = vector.extract_strided_slice %176 {offsets = [2, 0], sizes = [16, 128], strides = [1, 1]} : vector<18x128xf32> to vector<16x128xf32>
    %180 = tpu.concatenate %177, %178, %179 in 1 : vector<16x128xf32>, vector<16x128xf32>, vector<16x128xf32> -> vector<16x384xf32>
    %cst_102 = arith.constant dense<0.000000e+00> : vector<16x128xf32>
    %181 = tpu.matmul %180, %171, %cst_102 {dimension_numbers = #tpu.dot_dimension_numbers<[1], [0], [0], [1], [0, 0, 1, 1], [], []>} : vector<16x384xf32>, vector<384x128xf32>, vector<16x128xf32> -> vector<16x128xf32>
    %182 = vector.broadcast %172 : vector<1x128xf32> to vector<16x128xf32>
    %183 = arith.addf %181, %182 : vector<16x128xf32>
    %cst_103 = arith.constant 0.000000e+00 : f32
    %184 = vector.broadcast %cst_103 : f32 to vector<16x128xf32>
    %185 = arith.cmpf ogt, %183, %184 : vector<16x128xf32>
    %cst_104 = arith.constant 0.00999999977 : f32
    %186 = vector.broadcast %cst_104 : f32 to vector<16x128xf32>
    %187 = arith.mulf %186, %183 : vector<16x128xf32>
    %188 = arith.select %185, %183, %187 : vector<16x128xi1>, vector<16x128xf32>
    %cst_105 = arith.constant 0.000000e+00 : f32
    %189 = vector.broadcast %cst_105 : f32 to vector<1x128xf32>
    %190 = tpu.concatenate %189, %188, %189 in 0 : vector<1x128xf32>, vector<16x128xf32>, vector<1x128xf32> -> vector<18x128xf32>
    %191 = vector.extract_strided_slice %190 {offsets = [0, 0], sizes = [16, 128], strides = [1, 1]} : vector<18x128xf32> to vector<16x128xf32>
    %192 = vector.extract_strided_slice %190 {offsets = [1, 0], sizes = [16, 128], strides = [1, 1]} : vector<18x128xf32> to vector<16x128xf32>
    %193 = vector.extract_strided_slice %190 {offsets = [2, 0], sizes = [16, 128], strides = [1, 1]} : vector<18x128xf32> to vector<16x128xf32>
    %194 = tpu.concatenate %191, %192, %193 in 1 : vector<16x128xf32>, vector<16x128xf32>, vector<16x128xf32> -> vector<16x384xf32>
    %cst_106 = arith.constant dense<0.000000e+00> : vector<16x128xf32>
    %195 = tpu.matmul %194, %173, %cst_106 {dimension_numbers = #tpu.dot_dimension_numbers<[1], [0], [0], [1], [0, 0, 1, 1], [], []>} : vector<16x384xf32>, vector<384x128xf32>, vector<16x128xf32> -> vector<16x128xf32>
    %196 = vector.broadcast %174 : vector<1x128xf32> to vector<16x128xf32>
    %197 = arith.addf %195, %196 : vector<16x128xf32>
    %cst_107 = arith.constant 0.000000e+00 : f32
    %198 = vector.broadcast %cst_107 : f32 to vector<16x128xf32>
    %199 = arith.cmpf ogt, %197, %198 : vector<16x128xf32>
    %cst_108 = arith.constant 0.00999999977 : f32
    %200 = vector.broadcast %cst_108 : f32 to vector<16x128xf32>
    %201 = arith.mulf %200, %197 : vector<16x128xf32>
    %202 = arith.select %199, %197, %201 : vector<16x128xi1>, vector<16x128xf32>
    %203 = arith.addf %202, %170 : vector<16x128xf32>
    %c0_109 = arith.constant 0 : index
    %c0_110 = arith.constant 0 : index
    %204 = vector.load %arg32[%c0_109, %c0_110] : memref<384x64xf32, #tpu.memory_space<vmem>>, vector<384x64xf32>
    %c0_111 = arith.constant 0 : index
    %c0_112 = arith.constant 0 : index
    %205 = vector.load %arg33[%c0_111, %c0_112] : memref<1x64xf32, #tpu.memory_space<vmem>>, vector<1x64xf32>
    %c0_113 = arith.constant 0 : index
    %c0_114 = arith.constant 0 : index
    %206 = vector.load %arg34[%c0_113, %c0_114] : memref<192x64xf32, #tpu.memory_space<vmem>>, vector<192x64xf32>
    %c0_115 = arith.constant 0 : index
    %c0_116 = arith.constant 0 : index
    %207 = vector.load %arg35[%c0_115, %c0_116] : memref<1x64xf32, #tpu.memory_space<vmem>>, vector<1x64xf32>
    %c0_117 = arith.constant 0 : index
    %c0_118 = arith.constant 0 : index
    %208 = vector.load %arg36[%c0_117, %c0_118] : memref<128x64xf32, #tpu.memory_space<vmem>>, vector<128x64xf32>
    %c0_119 = arith.constant 0 : index
    %c0_120 = arith.constant 0 : index
    %209 = vector.load %arg37[%c0_119, %c0_120] : memref<1x64xf32, #tpu.memory_space<vmem>>, vector<1x64xf32>
    %c0_121 = arith.constant 0 : index
    %c0_122 = arith.constant 0 : index
    %210 = vector.load %arg38[%c0_121, %c0_122] : memref<64x64xf32, #tpu.memory_space<vmem>>, vector<64x64xf32>
    %c0_123 = arith.constant 0 : index
    %c0_124 = arith.constant 0 : index
    %211 = vector.load %arg39[%c0_123, %c0_124] : memref<1x64xf32, #tpu.memory_space<vmem>>, vector<1x64xf32>
    %c0_125 = arith.constant 0 : index
    %c0_126 = arith.constant 0 : index
    %212 = vector.load %arg40[%c0_125, %c0_126] : memref<64x8xf32, #tpu.memory_space<vmem>>, vector<64x8xf32>
    %c0_127 = arith.constant 0 : index
    %c0_128 = arith.constant 0 : index
    %213 = vector.load %arg41[%c0_127, %c0_128] : memref<8x8xf32, #tpu.memory_space<vmem>>, vector<8x8xf32>
    %c0_129 = arith.constant 0 : index
    %c0_130 = arith.constant 0 : index
    %214 = vector.load %arg42[%c0_129, %c0_130] : memref<1x8xf32, #tpu.memory_space<vmem>>, vector<1x8xf32>
    %c0_131 = arith.constant 0 : index
    %c0_132 = arith.constant 0 : index
    %215 = vector.load %arg43[%c0_131, %c0_132] : memref<1x8xf32, #tpu.memory_space<vmem>>, vector<1x8xf32>
    %c0_133 = arith.constant 0 : index
    %c0_134 = arith.constant 0 : index
    %216 = vector.load %arg44[%c0_133, %c0_134] : memref<8x8xf32, #tpu.memory_space<vmem>>, vector<8x8xf32>
    %c0_135 = arith.constant 0 : index
    %c0_136 = arith.constant 0 : index
    %217 = vector.load %arg45[%c0_135, %c0_136] : memref<1x8xf32, #tpu.memory_space<vmem>>, vector<1x8xf32>
    %c0_137 = arith.constant 0 : index
    %c0_138 = arith.constant 0 : index
    %218 = vector.load %arg46[%c0_137, %c0_138] : memref<8x64xf32, #tpu.memory_space<vmem>>, vector<8x64xf32>
    %cst_139 = arith.constant 0.000000e+00 : f32
    %219 = vector.broadcast %cst_139 : f32 to vector<1x128xf32>
    %220 = tpu.concatenate %219, %203, %219 in 0 : vector<1x128xf32>, vector<16x128xf32>, vector<1x128xf32> -> vector<18x128xf32>
    %221 = tpu.iota {dimensions = array<i32: 0>} : vector<8x18xi32>
    %222 = tpu.iota {dimensions = array<i32: 1>} : vector<8x18xi32>
    %c2_i32 = arith.constant 2 : i32
    %223 = vector.broadcast %c2_i32 : i32 to vector<8x18xi32>
    %224 = arith.muli %223, %221 : vector<8x18xi32>
    %c0_i32 = arith.constant 0 : i32
    %225 = vector.broadcast %c0_i32 : i32 to vector<8x18xi32>
    %226 = arith.addi %224, %225 : vector<8x18xi32>
    %227 = arith.cmpi eq, %222, %226 : vector<8x18xi32>
    %228 = arith.extui %227 : vector<8x18xi1> to vector<8x18xi32>
    %229 = arith.sitofp %228 : vector<8x18xi32> to vector<8x18xf32>
    %cst_140 = arith.constant dense<0.000000e+00> : vector<8x128xf32>
    %230 = tpu.matmul %229, %220, %cst_140 {dimension_numbers = #tpu.dot_dimension_numbers<[1], [0], [0], [1], [0, 0, 1, 1], [], []>} : vector<8x18xf32>, vector<18x128xf32>, vector<8x128xf32> -> vector<8x128xf32>
    %c2_i32_141 = arith.constant 2 : i32
    %231 = vector.broadcast %c2_i32_141 : i32 to vector<8x18xi32>
    %232 = arith.muli %231, %221 : vector<8x18xi32>
    %c1_i32 = arith.constant 1 : i32
    %233 = vector.broadcast %c1_i32 : i32 to vector<8x18xi32>
    %234 = arith.addi %232, %233 : vector<8x18xi32>
    %235 = arith.cmpi eq, %222, %234 : vector<8x18xi32>
    %236 = arith.extui %235 : vector<8x18xi1> to vector<8x18xi32>
    %237 = arith.sitofp %236 : vector<8x18xi32> to vector<8x18xf32>
    %cst_142 = arith.constant dense<0.000000e+00> : vector<8x128xf32>
    %238 = tpu.matmul %237, %220, %cst_142 {dimension_numbers = #tpu.dot_dimension_numbers<[1], [0], [0], [1], [0, 0, 1, 1], [], []>} : vector<8x18xf32>, vector<18x128xf32>, vector<8x128xf32> -> vector<8x128xf32>
    %c2_i32_143 = arith.constant 2 : i32
    %239 = vector.broadcast %c2_i32_143 : i32 to vector<8x18xi32>
    %240 = arith.muli %239, %221 : vector<8x18xi32>
    %c2_i32_144 = arith.constant 2 : i32
    %241 = vector.broadcast %c2_i32_144 : i32 to vector<8x18xi32>
    %242 = arith.addi %240, %241 : vector<8x18xi32>
    %243 = arith.cmpi eq, %222, %242 : vector<8x18xi32>
    %244 = arith.extui %243 : vector<8x18xi1> to vector<8x18xi32>
    %245 = arith.sitofp %244 : vector<8x18xi32> to vector<8x18xf32>
    %cst_145 = arith.constant dense<0.000000e+00> : vector<8x128xf32>
    %246 = tpu.matmul %245, %220, %cst_145 {dimension_numbers = #tpu.dot_dimension_numbers<[1], [0], [0], [1], [0, 0, 1, 1], [], []>} : vector<8x18xf32>, vector<18x128xf32>, vector<8x128xf32> -> vector<8x128xf32>
    %247 = tpu.concatenate %230, %238, %246 in 1 : vector<8x128xf32>, vector<8x128xf32>, vector<8x128xf32> -> vector<8x384xf32>
    %cst_146 = arith.constant dense<0.000000e+00> : vector<8x64xf32>
    %248 = tpu.matmul %247, %204, %cst_146 {dimension_numbers = #tpu.dot_dimension_numbers<[1], [0], [0], [1], [0, 0, 1, 1], [], []>} : vector<8x384xf32>, vector<384x64xf32>, vector<8x64xf32> -> vector<8x64xf32>
    %249 = vector.broadcast %205 : vector<1x64xf32> to vector<8x64xf32>
    %250 = arith.addf %248, %249 : vector<8x64xf32>
    %cst_147 = arith.constant 0.000000e+00 : f32
    %251 = vector.broadcast %cst_147 : f32 to vector<8x64xf32>
    %252 = arith.cmpf ogt, %250, %251 : vector<8x64xf32>
    %cst_148 = arith.constant 0.00999999977 : f32
    %253 = vector.broadcast %cst_148 : f32 to vector<8x64xf32>
    %254 = arith.mulf %253, %250 : vector<8x64xf32>
    %255 = arith.select %252, %250, %254 : vector<8x64xi1>, vector<8x64xf32>
    %cst_149 = arith.constant 0.000000e+00 : f32
    %256 = vector.broadcast %cst_149 : f32 to vector<1x64xf32>
    %257 = tpu.concatenate %256, %255, %256 in 0 : vector<1x64xf32>, vector<8x64xf32>, vector<1x64xf32> -> vector<10x64xf32>
    %258 = vector.extract_strided_slice %257 {offsets = [0, 0], sizes = [8, 64], strides = [1, 1]} : vector<10x64xf32> to vector<8x64xf32>
    %259 = vector.extract_strided_slice %257 {offsets = [1, 0], sizes = [8, 64], strides = [1, 1]} : vector<10x64xf32> to vector<8x64xf32>
    %260 = vector.extract_strided_slice %257 {offsets = [2, 0], sizes = [8, 64], strides = [1, 1]} : vector<10x64xf32> to vector<8x64xf32>
    %261 = tpu.concatenate %258, %259, %260 in 1 : vector<8x64xf32>, vector<8x64xf32>, vector<8x64xf32> -> vector<8x192xf32>
    %cst_150 = arith.constant dense<0.000000e+00> : vector<8x64xf32>
    %262 = tpu.matmul %261, %206, %cst_150 {dimension_numbers = #tpu.dot_dimension_numbers<[1], [0], [0], [1], [0, 0, 1, 1], [], []>} : vector<8x192xf32>, vector<192x64xf32>, vector<8x64xf32> -> vector<8x64xf32>
    %263 = vector.broadcast %207 : vector<1x64xf32> to vector<8x64xf32>
    %264 = arith.addf %262, %263 : vector<8x64xf32>
    %265 = arith.mulf %264, %264 : vector<8x64xf32>
    %cst_151 = arith.constant dense<0.000000e+00> : vector<8x64xf32>
    %266 = tpu.matmul %265, %210, %cst_151 {dimension_numbers = #tpu.dot_dimension_numbers<[1], [0], [0], [1], [0, 0, 1, 1], [], []>} : vector<8x64xf32>, vector<64x64xf32>, vector<8x64xf32> -> vector<8x64xf32>
    %267 = vector.broadcast %211 : vector<1x64xf32> to vector<8x64xf32>
    %268 = arith.addf %267, %266 : vector<8x64xf32>
    %269 = math.rsqrt %268 : vector<8x64xf32>
    %270 = arith.mulf %264, %269 : vector<8x64xf32>
    %cst_152 = arith.constant dense<0.000000e+00> : vector<8x64xf32>
    %271 = tpu.matmul %238, %208, %cst_152 {dimension_numbers = #tpu.dot_dimension_numbers<[1], [0], [0], [1], [0, 0, 1, 1], [], []>} : vector<8x128xf32>, vector<128x64xf32>, vector<8x64xf32> -> vector<8x64xf32>
    %272 = vector.broadcast %209 : vector<1x64xf32> to vector<8x64xf32>
    %273 = arith.addf %271, %272 : vector<8x64xf32>
    %274 = arith.addf %270, %273 : vector<8x64xf32>
    %cst_153 = arith.constant dense<0.000000e+00> : vector<64xf32>
    %275 = vector.multi_reduction <add>, %274, %cst_153 [0] : vector<8x64xf32> to vector<64xf32>
    %276 = vector.shape_cast %275 : vector<64xf32> to vector<1x64xf32>
    %cst_154 = arith.constant dense<0.000000e+00> : vector<1x8xf32>
    %277 = tpu.matmul %276, %212, %cst_154 {dimension_numbers = #tpu.dot_dimension_numbers<[1], [0], [0], [1], [0, 0, 1, 1], [], []>} : vector<1x64xf32>, vector<64x8xf32>, vector<1x8xf32> -> vector<1x8xf32>
    %cst_155 = arith.constant dense<0.000000e+00> : vector<1x8xf32>
    %278 = tpu.matmul %277, %213, %cst_155 {dimension_numbers = #tpu.dot_dimension_numbers<[1], [0], [0], [1], [0, 0, 1, 1], [], []>} : vector<1x8xf32>, vector<8x8xf32>, vector<1x8xf32> -> vector<1x8xf32>
    %279 = vector.broadcast %1 : f32 to vector<1x8xf32>
    %280 = arith.mulf %279, %214 : vector<1x8xf32>
    %281 = arith.addf %278, %280 : vector<1x8xf32>
    %282 = arith.addf %281, %215 : vector<1x8xf32>
    %cst_156 = arith.constant 0.000000e+00 : f32
    %283 = vector.broadcast %cst_156 : f32 to vector<1x8xf32>
    %284 = arith.cmpf ogt, %282, %283 : vector<1x8xf32>
    %cst_157 = arith.constant 0.00999999977 : f32
    %285 = vector.broadcast %cst_157 : f32 to vector<1x8xf32>
    %286 = arith.mulf %285, %282 : vector<1x8xf32>
    %287 = arith.select %284, %282, %286 : vector<1x8xi1>, vector<1x8xf32>
    %cst_158 = arith.constant dense<0.000000e+00> : vector<1x8xf32>
    %288 = tpu.matmul %287, %216, %cst_158 {dimension_numbers = #tpu.dot_dimension_numbers<[1], [0], [0], [1], [0, 0, 1, 1], [], []>} : vector<1x8xf32>, vector<8x8xf32>, vector<1x8xf32> -> vector<1x8xf32>
    %289 = arith.addf %288, %217 : vector<1x8xf32>
    %290 = arith.negf %289 : vector<1x8xf32>
    %291 = math.exp %290 : vector<1x8xf32>
    %cst_159 = arith.constant 1.000000e+00 : f32
    %292 = vector.broadcast %cst_159 : f32 to vector<1x8xf32>
    %293 = arith.addf %292, %291 : vector<1x8xf32>
    %294 = arith.divf %292, %293 : vector<1x8xf32>
    %cst_160 = arith.constant dense<0.000000e+00> : vector<1x64xf32>
    %295 = tpu.matmul %294, %218, %cst_160 {dimension_numbers = #tpu.dot_dimension_numbers<[1], [0], [0], [1], [0, 0, 1, 1], [], []>} : vector<1x8xf32>, vector<8x64xf32>, vector<1x64xf32> -> vector<1x64xf32>
    %296 = vector.broadcast %295 : vector<1x64xf32> to vector<8x64xf32>
    %297 = arith.mulf %274, %296 : vector<8x64xf32>
    %298 = vector.shape_cast %297 : vector<8x64xf32> to vector<1x8x64xf32>
    %c0_161 = arith.constant 0 : index
    %c0_162 = arith.constant 0 : index
    %c0_163 = arith.constant 0 : index
    %299 = vector.load %arg47[%c0_161, %c0_162, %c0_163] : memref<1x8x64xf32, #tpu.memory_space<vmem>>, vector<1x8x64xf32>
    tpu.vector_store %arg47[%c0_161, %c0_162, %c0_163], %298 {strides = array<i32>} : memref<1x8x64xf32, #tpu.memory_space<vmem>>, vector<1x8x64xf32>,
    return
  }
  func.func @transform_0(%arg0: i32) -> (i32, i32) {
    %c0_i32 = arith.constant 0 : i32
    %c0_i32_0 = arith.constant 0 : i32
    %c0_i32_1 = arith.constant 0 : i32
    return %c0_i32, %c0_i32_0 : i32, i32
  }
  func.func @transform_1(%arg0: i32) -> (i32, i32, i32) {
    %c0_i32 = arith.constant 0 : i32
    %c0_i32_0 = arith.constant 0 : i32
    %c0_i32_1 = arith.constant 0 : i32
    return %arg0, %c0_i32, %c0_i32_0 : i32, i32, i32
  }
  func.func @transform_2(%arg0: i32) -> (i32, i32) {
    %c0_i32 = arith.constant 0 : i32
    %c0_i32_0 = arith.constant 0 : i32
    %c0_i32_1 = arith.constant 0 : i32
    return %c0_i32, %c0_i32_0 : i32, i32
  }
  func.func @transform_3(%arg0: i32) -> (i32, i32) {
    %c0_i32 = arith.constant 0 : i32
    %c0_i32_0 = arith.constant 0 : i32
    %c0_i32_1 = arith.constant 0 : i32
    return %c0_i32, %c0_i32_0 : i32, i32
  }
  func.func @transform_4(%arg0: i32) -> (i32, i32) {
    %c0_i32 = arith.constant 0 : i32
    %c0_i32_0 = arith.constant 0 : i32
    %c0_i32_1 = arith.constant 0 : i32
    return %c0_i32, %c0_i32_0 : i32, i32
  }
  func.func @transform_5(%arg0: i32) -> (i32, i32) {
    %c0_i32 = arith.constant 0 : i32
    %c0_i32_0 = arith.constant 0 : i32
    %c0_i32_1 = arith.constant 0 : i32
    return %c0_i32, %c0_i32_0 : i32, i32
  }
  func.func @transform_6(%arg0: i32) -> (i32, i32) {
    %c0_i32 = arith.constant 0 : i32
    %c0_i32_0 = arith.constant 0 : i32
    %c0_i32_1 = arith.constant 0 : i32
    return %c0_i32, %c0_i32_0 : i32, i32
  }
  func.func @transform_7(%arg0: i32) -> (i32, i32) {
    %c0_i32 = arith.constant 0 : i32
    %c0_i32_0 = arith.constant 0 : i32
    %c0_i32_1 = arith.constant 0 : i32
    return %c0_i32, %c0_i32_0 : i32, i32
  }
  func.func @transform_8(%arg0: i32) -> (i32, i32) {
    %c0_i32 = arith.constant 0 : i32
    %c0_i32_0 = arith.constant 0 : i32
    %c0_i32_1 = arith.constant 0 : i32
    return %c0_i32, %c0_i32_0 : i32, i32
  }
  func.func @transform_9(%arg0: i32) -> (i32, i32) {
    %c0_i32 = arith.constant 0 : i32
    %c0_i32_0 = arith.constant 0 : i32
    %c0_i32_1 = arith.constant 0 : i32
    return %c0_i32, %c0_i32_0 : i32, i32
  }
  func.func @transform_10(%arg0: i32) -> (i32, i32) {
    %c0_i32 = arith.constant 0 : i32
    %c0_i32_0 = arith.constant 0 : i32
    %c0_i32_1 = arith.constant 0 : i32
    return %c0_i32, %c0_i32_0 : i32, i32
  }
  func.func @transform_11(%arg0: i32) -> (i32, i32) {
    %c0_i32 = arith.constant 0 : i32
    %c0_i32_0 = arith.constant 0 : i32
    %c0_i32_1 = arith.constant 0 : i32
    return %c0_i32, %c0_i32_0 : i32, i32
  }
  func.func @transform_12(%arg0: i32) -> (i32, i32) {
    %c0_i32 = arith.constant 0 : i32
    %c0_i32_0 = arith.constant 0 : i32
    %c0_i32_1 = arith.constant 0 : i32
    return %c0_i32, %c0_i32_0 : i32, i32
  }
  func.func @transform_13(%arg0: i32) -> (i32, i32) {
    %c0_i32 = arith.constant 0 : i32
    %c0_i32_0 = arith.constant 0 : i32
    %c0_i32_1 = arith.constant 0 : i32
    return %c0_i32, %c0_i32_0 : i32, i32
  }
  func.func @transform_14(%arg0: i32) -> (i32, i32) {
    %c0_i32 = arith.constant 0 : i32
    %c0_i32_0 = arith.constant 0 : i32
    %c0_i32_1 = arith.constant 0 : i32
    return %c0_i32, %c0_i32_0 : i32, i32
  }
  func.func @transform_15(%arg0: i32) -> (i32, i32) {
    %c0_i32 = arith.constant 0 : i32
    %c0_i32_0 = arith.constant 0 : i32
    %c0_i32_1 = arith.constant 0 : i32
    return %c0_i32, %c0_i32_0 : i32, i32
  }
  func.func @transform_16(%arg0: i32) -> (i32, i32) {
    %c0_i32 = arith.constant 0 : i32
    %c0_i32_0 = arith.constant 0 : i32
    %c0_i32_1 = arith.constant 0 : i32
    return %c0_i32, %c0_i32_0 : i32, i32
  }
  func.func @transform_17(%arg0: i32) -> (i32, i32) {
    %c0_i32 = arith.constant 0 : i32
    %c0_i32_0 = arith.constant 0 : i32
    %c0_i32_1 = arith.constant 0 : i32
    return %c0_i32, %c0_i32_0 : i32, i32
  }
  func.func @transform_18(%arg0: i32) -> (i32, i32) {
    %c0_i32 = arith.constant 0 : i32
    %c0_i32_0 = arith.constant 0 : i32
    %c0_i32_1 = arith.constant 0 : i32
    return %c0_i32, %c0_i32_0 : i32, i32
  }
  func.func @transform_19(%arg0: i32) -> (i32, i32) {
    %c0_i32 = arith.constant 0 : i32
    %c0_i32_0 = arith.constant 0 : i32
    %c0_i32_1 = arith.constant 0 : i32
    return %c0_i32, %c0_i32_0 : i32, i32
  }
  func.func @transform_20(%arg0: i32) -> (i32, i32) {
    %c0_i32 = arith.constant 0 : i32
    %c0_i32_0 = arith.constant 0 : i32
    %c0_i32_1 = arith.constant 0 : i32
    return %c0_i32, %c0_i32_0 : i32, i32
  }
  func.func @transform_21(%arg0: i32) -> (i32, i32) {
    %c0_i32 = arith.constant 0 : i32
    %c0_i32_0 = arith.constant 0 : i32
    %c0_i32_1 = arith.constant 0 : i32
    return %c0_i32, %c0_i32_0 : i32, i32
  }
  func.func @transform_22(%arg0: i32) -> (i32, i32) {
    %c0_i32 = arith.constant 0 : i32
    %c0_i32_0 = arith.constant 0 : i32
    %c0_i32_1 = arith.constant 0 : i32
    return %c0_i32, %c0_i32_0 : i32, i32
  }
  func.func @transform_23(%arg0: i32) -> (i32, i32) {
    %c0_i32 = arith.constant 0 : i32
    %c0_i32_0 = arith.constant 0 : i32
    %c0_i32_1 = arith.constant 0 : i32
    return %c0_i32, %c0_i32_0 : i32, i32
  }
  func.func @transform_24(%arg0: i32) -> (i32, i32) {
    %c0_i32 = arith.constant 0 : i32
    %c0_i32_0 = arith.constant 0 : i32
    %c0_i32_1 = arith.constant 0 : i32
    return %c0_i32, %c0_i32_0 : i32, i32
  }
  func.func @transform_25(%arg0: i32) -> (i32, i32) {
    %c0_i32 = arith.constant 0 : i32
    %c0_i32_0 = arith.constant 0 : i32
    %c0_i32_1 = arith.constant 0 : i32
    return %c0_i32, %c0_i32_0 : i32, i32
  }
  func.func @transform_26(%arg0: i32) -> (i32, i32) {
    %c0_i32 = arith.constant 0 : i32
    %c0_i32_0 = arith.constant 0 : i32
    %c0_i32_1 = arith.constant 0 : i32
    return %c0_i32, %c0_i32_0 : i32, i32
  }
  func.func @transform_27(%arg0: i32) -> (i32, i32) {
    %c0_i32 = arith.constant 0 : i32
    %c0_i32_0 = arith.constant 0 : i32
    %c0_i32_1 = arith.constant 0 : i32
    return %c0_i32, %c0_i32_0 : i32, i32
  }
  func.func @transform_28(%arg0: i32) -> (i32, i32) {
    %c0_i32 = arith.constant 0 : i32
    %c0_i32_0 = arith.constant 0 : i32
    %c0_i32_1 = arith.constant 0 : i32
    return %c0_i32, %c0_i32_0 : i32, i32
  }
  func.func @transform_29(%arg0: i32) -> (i32, i32) {
    %c0_i32 = arith.constant 0 : i32
    %c0_i32_0 = arith.constant 0 : i32
    %c0_i32_1 = arith.constant 0 : i32
    return %c0_i32, %c0_i32_0 : i32, i32
  }
  func.func @transform_30(%arg0: i32) -> (i32, i32) {
    %c0_i32 = arith.constant 0 : i32
    %c0_i32_0 = arith.constant 0 : i32
    %c0_i32_1 = arith.constant 0 : i32
    return %c0_i32, %c0_i32_0 : i32, i32
  }
  func.func @transform_31(%arg0: i32) -> (i32, i32) {
    %c0_i32 = arith.constant 0 : i32
    %c0_i32_0 = arith.constant 0 : i32
    %c0_i32_1 = arith.constant 0 : i32
    return %c0_i32, %c0_i32_0 : i32, i32
  }
  func.func @transform_32(%arg0: i32) -> (i32, i32) {
    %c0_i32 = arith.constant 0 : i32
    %c0_i32_0 = arith.constant 0 : i32
    %c0_i32_1 = arith.constant 0 : i32
    return %c0_i32, %c0_i32_0 : i32, i32
  }
  func.func @transform_33(%arg0: i32) -> (i32, i32) {
    %c0_i32 = arith.constant 0 : i32
    %c0_i32_0 = arith.constant 0 : i32
    %c0_i32_1 = arith.constant 0 : i32
    return %c0_i32, %c0_i32_0 : i32, i32
  }
  func.func @transform_34(%arg0: i32) -> (i32, i32) {
    %c0_i32 = arith.constant 0 : i32
    %c0_i32_0 = arith.constant 0 : i32
    %c0_i32_1 = arith.constant 0 : i32
    return %c0_i32, %c0_i32_0 : i32, i32
  }
  func.func @transform_35(%arg0: i32) -> (i32, i32) {
    %c0_i32 = arith.constant 0 : i32
    %c0_i32_0 = arith.constant 0 : i32
    %c0_i32_1 = arith.constant 0 : i32
    return %c0_i32, %c0_i32_0 : i32, i32
  }
  func.func @transform_36(%arg0: i32) -> (i32, i32) {
    %c0_i32 = arith.constant 0 : i32
    %c0_i32_0 = arith.constant 0 : i32
    %c0_i32_1 = arith.constant 0 : i32
    return %c0_i32, %c0_i32_0 : i32, i32
  }
  func.func @transform_37(%arg0: i32) -> (i32, i32) {
    %c0_i32 = arith.constant 0 : i32
    %c0_i32_0 = arith.constant 0 : i32
    %c0_i32_1 = arith.constant 0 : i32
    return %c0_i32, %c0_i32_0 : i32, i32
  }
  func.func @transform_38(%arg0: i32) -> (i32, i32) {
    %c0_i32 = arith.constant 0 : i32
    %c0_i32_0 = arith.constant 0 : i32
    %c0_i32_1 = arith.constant 0 : i32
    return %c0_i32, %c0_i32_0 : i32, i32
  }
  func.func @transform_39(%arg0: i32) -> (i32, i32) {
    %c0_i32 = arith.constant 0 : i32
    %c0_i32_0 = arith.constant 0 : i32
    %c0_i32_1 = arith.constant 0 : i32
    return %c0_i32, %c0_i32_0 : i32, i32
  }
  func.func @transform_40(%arg0: i32) -> (i32, i32) {
    %c0_i32 = arith.constant 0 : i32
    %c0_i32_0 = arith.constant 0 : i32
    %c0_i32_1 = arith.constant 0 : i32
    return %c0_i32, %c0_i32_0 : i32, i32
  }
  func.func @transform_41(%arg0: i32) -> (i32, i32) {
    %c0_i32 = arith.constant 0 : i32
    %c0_i32_0 = arith.constant 0 : i32
    %c0_i32_1 = arith.constant 0 : i32
    return %c0_i32, %c0_i32_0 : i32, i32
  }
  func.func @transform_42(%arg0: i32) -> (i32, i32) {
    %c0_i32 = arith.constant 0 : i32
    %c0_i32_0 = arith.constant 0 : i32
    %c0_i32_1 = arith.constant 0 : i32
    return %c0_i32, %c0_i32_0 : i32, i32
  }
  func.func @transform_43(%arg0: i32) -> (i32, i32) {
    %c0_i32 = arith.constant 0 : i32
    %c0_i32_0 = arith.constant 0 : i32
    %c0_i32_1 = arith.constant 0 : i32
    return %c0_i32, %c0_i32_0 : i32, i32
  }
  func.func @transform_44(%arg0: i32) -> (i32, i32) {
    %c0_i32 = arith.constant 0 : i32
    %c0_i32_0 = arith.constant 0 : i32
    %c0_i32_1 = arith.constant 0 : i32
    return %c0_i32, %c0_i32_0 : i32, i32
  }
  func.func @transform_45(%arg0: i32) -> (i32, i32) {
    %c0_i32 = arith.constant 0 : i32
    %c0_i32_0 = arith.constant 0 : i32
    %c0_i32_1 = arith.constant 0 : i32
    return %c0_i32, %c0_i32_0 : i32, i32
  }
  func.func @transform_46(%arg0: i32) -> (i32, i32, i32) {
    %c0_i32 = arith.constant 0 : i32
    %c0_i32_0 = arith.constant 0 : i32
    %c0_i32_1 = arith.constant 0 : i32
    return %arg0, %c0_i32, %c0_i32_0 : i32, i32, i32
  }
}

</mosaic_0001>

<llo_original>
// kernel: fwd.1
$region0: #{fwd.1}
  #allocation0 [shape = 'u32[]', space=smem, size = 0x4, offset = 0x4, fixed_abs, tag = 'smem constant byte address 0x4 - core index']
  #allocation1 [shape = 'u32[144,128]{1,0:T(1,128)}', space=vmem, size = 0x12000, scoped, tag = 'internal scratch']
  %s0 = inlined_call_operand.smem [shape: u32[47], index: -1, kind: input, shape index: {}]
  %s1 = sld [smem:[%s0]]
  %s2 = scalar_lea.smem %s0, 1
  %s3 = sld [smem:[%s2]]
  %s4 = scalar_lea.smem %s0, 2
  %s5 = sld [smem:[%s4]]
  %s6 = scalar_lea.smem %s0, 3
  %s7 = sld [smem:[%s6]]
  %s8 = scalar_lea.smem %s0, 4
  %s9 = sld [smem:[%s8]]
  %s10 = scalar_lea.smem %s0, 5
  %s11 = sld [smem:[%s10]]
  %s12 = scalar_lea.smem %s0, 6
  %s13 = sld [smem:[%s12]]
  %s14 = scalar_lea.smem %s0, 7
  %s15 = sld [smem:[%s14]]
  %s16 = scalar_lea.smem %s0, 8
  %s17 = sld [smem:[%s16]]
  %s18 = scalar_lea.smem %s0, 9
  %s19 = sld [smem:[%s18]]
  %s20 = scalar_lea.smem %s0, 10
  %s21 = sld [smem:[%s20]]
  %s22 = scalar_lea.smem %s0, 11
  %s23 = sld [smem:[%s22]]
  %s24 = scalar_lea.smem %s0, 12
  %s25 = sld [smem:[%s24]]
  %s26 = scalar_lea.smem %s0, 13
  %s27 = sld [smem:[%s26]]
  %s28 = scalar_lea.smem %s0, 14
  %s29 = sld [smem:[%s28]]
  %s30 = scalar_lea.smem %s0, 15
  %s31 = sld [smem:[%s30]]
  %s32 = scalar_lea.smem %s0, 16
  %s33 = sld [smem:[%s32]]
  %s34 = scalar_lea.smem %s0, 17
  %s35 = sld [smem:[%s34]]
  %s36 = scalar_lea.smem %s0, 18
  %s37 = sld [smem:[%s36]]
  %s38 = scalar_lea.smem %s0, 19
  %s39 = sld [smem:[%s38]]
  %s40 = scalar_lea.smem %s0, 20
  %s41 = sld [smem:[%s40]]
  %s42 = scalar_lea.smem %s0, 21
  %s43 = sld [smem:[%s42]]
  %s44 = scalar_lea.smem %s0, 22
  %s45 = sld [smem:[%s44]]
  %s46 = scalar_lea.smem %s0, 23
  %s47 = sld [smem:[%s46]]
  %s48 = scalar_lea.smem %s0, 24
  %s49 = sld [smem:[%s48]]
  %s50 = scalar_lea.smem %s0, 25
  %s51 = sld [smem:[%s50]]
  %s52 = scalar_lea.smem %s0, 26
  %s53 = sld [smem:[%s52]]
  %s54 = scalar_lea.smem %s0, 27
  %s55 = sld [smem:[%s54]]
  %s56 = scalar_lea.smem %s0, 28
  %s57 = sld [smem:[%s56]]
  %s58 = scalar_lea.smem %s0, 29
  %s59 = sld [smem:[%s58]]
  %s60 = scalar_lea.smem %s0, 30
  %s61 = sld [smem:[%s60]]
  %s62 = scalar_lea.smem %s0, 31
  %s63 = sld [smem:[%s62]]
  %s64 = scalar_lea.smem %s0, 32
  %s65 = sld [smem:[%s64]]
  %s66 = scalar_lea.smem %s0, 33
  %s67 = sld [smem:[%s66]]
  %s68 = scalar_lea.smem %s0, 34
  %s69 = sld [smem:[%s68]]
  %s70 = scalar_lea.smem %s0, 35
  %s71 = sld [smem:[%s70]]
  %s72 = scalar_lea.smem %s0, 36
  %s73 = sld [smem:[%s72]]
  %s74 = scalar_lea.smem %s0, 37
  %s75 = sld [smem:[%s74]]
  %s76 = scalar_lea.smem %s0, 38
  %s77 = sld [smem:[%s76]]
  %s78 = scalar_lea.smem %s0, 39
  %s79 = sld [smem:[%s78]]
  %s80 = scalar_lea.smem %s0, 40
  %s81 = sld [smem:[%s80]]
  %s82 = scalar_lea.smem %s0, 41
  %s83 = sld [smem:[%s82]]
  %s84 = scalar_lea.smem %s0, 42
  %s85 = sld [smem:[%s84]]
  %s86 = scalar_lea.smem %s0, 43
  %s87 = sld [smem:[%s86]]
  %s88 = scalar_lea.smem %s0, 44
  %s89 = sld [smem:[%s88]]
  %s90 = scalar_lea.smem %s0, 45
  %s91 = sld [smem:[%s90]]
  %s92 = scalar_lea.smem %s0, 46
  %s93 = sld [smem:[%s92]]
  %s94 = sld [smem:[#allocation0]]
  $region353: #{fwd.1} parent=0
    _
  %s96 = ssub.s32 1, %s94
  %s97 = scalar_select 0, %s96, %s94
  $region1: #{fwd.1} parent=0
    #allocation2 [shape = 'u8[1024]{0}', space=smem, size = 0x400, scoped, tag = 'input window, operand 0, single buffered']
    #allocation3 [shape = 's32[2]{0}', space=sflag, size = 0x8, scoped, tag = 'scoped memory for fwd.1']
    #allocation4 [shape = 's32[2]{0}', space=sflag, size = 0x8, scoped, tag = 'scoped memory for fwd.1']
    #allocation5 [shape = 'u8[98304]{0}', space=vmem, size = 0x18000, scoped, tag = 'input window, operand 2, single buffered']
    #allocation6 [shape = 'u8[512]{0}', space=vmem, size = 0x400, scoped, tag = 'input window, operand 3, single buffered']
    #allocation7 [shape = 's32[1]{0}', space=sflag, size = 0x4, scoped, tag = 'scoped memory for fwd.1']
    #allocation8 [shape = 'u8[196608]{0}', space=vmem, size = 0x30000, scoped, tag = 'input window, operand 4, single buffered']
    #allocation9 [shape = 'u8[512]{0}', space=vmem, size = 0x400, scoped, tag = 'input window, operand 5, single buffered']
    #allocation10 [shape = 's32[1]{0}', space=sflag, size = 0x4, scoped, tag = 'scoped memory for fwd.1']
    #allocation11 [shape = 'u8[32768]{0}', space=vmem, size = 0x8000, scoped, tag = 'input window, operand 6, single buffered']
    #allocation12 [shape = 'u8[512]{0}', space=vmem, size = 0x400, scoped, tag = 'input window, operand 7, single buffered']
    #allocation13 [shape = 's32[1]{0}', space=sflag, size = 0x4, scoped, tag = 'scoped memory for fwd.1']
    #allocation14 [shape = 'u8[65536]{0}', space=vmem, size = 0x10000, scoped, tag = 'input window, operand 8, single buffered']
    #allocation15 [shape = 'u8[4096]{0}', space=vmem, size = 0x1000, scoped, tag = 'input window, operand 9, single buffered']
    #allocation16 [shape = 's32[1]{0}', space=sflag, size = 0x4, scoped, tag = 'scoped memory for fwd.1']
    #allocation17 [shape = 'u8[512]{0}', space=vmem, size = 0x400, scoped, tag = 'input window, operand 10, single buffered']
    #allocation18 [shape = 'u8[512]{0}', space=vmem, size = 0x400, scoped, tag = 'input window, operand 11, single buffered']
    #allocation19 [shape = 's32[1]{0}', space=sflag, size = 0x4, scoped, tag = 'scoped memory for fwd.1']
    #allocation20 [shape = 'u8[4096]{0}', space=vmem, size = 0x1000, scoped, tag = 'input window, operand 12, single buffered']
    #allocation21 [shape = 'u8[512]{0}', space=vmem, size = 0x400, scoped, tag = 'input window, operand 13, single buffered']
    #allocation22 [shape = 's32[1]{0}', space=sflag, size = 0x4, scoped, tag = 'scoped memory for fwd.1']
    #allocation23 [shape = 'u8[4096]{0}', space=vmem, size = 0x1000, scoped, tag = 'input window, operand 14, single buffered']
    #allocation24 [shape = 'u8[196608]{0}', space=vmem, size = 0x30000, scoped, tag = 'input window, operand 15, single buffered']
    #allocation25 [shape = 's32[1]{0}', space=sflag, size = 0x4, scoped, tag = 'scoped memory for fwd.1']
    #allocation26 [shape = 'u8[512]{0}', space=vmem, size = 0x400, scoped, tag = 'input window, operand 16, single buffered']
    #allocation27 [shape = 'u8[196608]{0}', space=vmem, size = 0x30000, scoped, tag = 'input window, operand 17, single buffered']
    #allocation28 [shape = 's32[1]{0}', space=sflag, size = 0x4, scoped, tag = 'scoped memory for fwd.1']
    #allocation29 [shape = 'u8[512]{0}', space=vmem, size = 0x400, scoped, tag = 'input window, operand 18, single buffered']
    #allocation30 [shape = 'u8[196608]{0}', space=vmem, size = 0x30000, scoped, tag = 'input window, operand 19, single buffered']
    #allocation31 [shape = 's32[1]{0}', space=sflag, size = 0x4, scoped, tag = 'scoped memory for fwd.1']
    #allocation32 [shape = 'u8[512]{0}', space=vmem, size = 0x400, scoped, tag = 'input window, operand 20, single buffered']
    #allocation33 [shape = 'u8[196608]{0}', space=vmem, size = 0x30000, scoped, tag = 'input window, operand 21, single buffered']
    #allocation34 [shape = 's32[1]{0}', space=sflag, size = 0x4, scoped, tag = 'scoped memory for fwd.1']
    #allocation35 [shape = 'u8[512]{0}', space=vmem, size = 0x400, scoped, tag = 'input window, operand 22, single buffered']
    #allocation36 [shape = 'u8[196608]{0}', space=vmem, size = 0x30000, scoped, tag = 'input window, operand 23, single buffered']
    #allocation37 [shape = 's32[1]{0}', space=sflag, size = 0x4, scoped, tag = 'scoped memory for fwd.1']
    #allocation38 [shape = 'u8[512]{0}', space=vmem, size = 0x400, scoped, tag = 'input window, operand 24, single buffered']
    #allocation39 [shape = 'u8[196608]{0}', space=vmem, size = 0x30000, scoped, tag = 'input window, operand 25, single buffered']
    #allocation40 [shape = 's32[1]{0}', space=sflag, size = 0x4, scoped, tag = 'scoped memory for fwd.1']
    #allocation41 [shape = 'u8[512]{0}', space=vmem, size = 0x400, scoped, tag = 'input window, operand 26, single buffered']
    #allocation42 [shape = 'u8[196608]{0}', space=vmem, size = 0x30000, scoped, tag = 'input window, operand 27, single buffered']
    #allocation43 [shape = 's32[1]{0}', space=sflag, size = 0x4, scoped, tag = 'scoped memory for fwd.1']
    #allocation44 [shape = 'u8[512]{0}', space=vmem, size = 0x400, scoped, tag = 'input window, operand 28, single buffered']
    #allocation45 [shape = 'u8[196608]{0}', space=vmem, size = 0x30000, scoped, tag = 'input window, operand 29, single buffered']
    #allocation46 [shape = 's32[1]{0}', space=sflag, size = 0x4, scoped, tag = 'scoped memory for fwd.1']
    #allocation47 [shape = 'u8[512]{0}', space=vmem, size = 0x400, scoped, tag = 'input window, operand 30, single buffered']
    #allocation48 [shape = 'u8[512]{0}', space=vmem, size = 0x400, scoped, tag = 'input window, operand 32, single buffered']
    #allocation49 [shape = 's32[1]{0}', space=sflag, size = 0x4, scoped, tag = 'scoped memory for fwd.1']
    #allocation50 [shape = 'u8[98304]{0}', space=vmem, size = 0x18000, scoped, tag = 'input window, operand 33, single buffered']
    #allocation51 [shape = 'u8[32768]{0}', space=vmem, size = 0x8000, scoped, tag = 'input window, operand 37, single buffered']
    #allocation52 [shape = 's32[1]{0}', space=sflag, size = 0x4, scoped, tag = 'scoped memory for fwd.1']
    #allocation53 [shape = 'u8[4096]{0}', space=vmem, size = 0x1000, scoped, tag = 'input window, operand 40, single buffered']
    %98 = vsyncpa [#allocation4], 0
    %99 = vsyncpa [#allocation3], 0
    %100 = vsyncpa [#allocation7], 0
    %101 = vsyncpa [#allocation10], 0
    %102 = vsyncpa [#allocation13], 0
    %103 = vsyncpa [#allocation16], 0
    %104 = vsyncpa [#allocation19], 0
    %105 = vsyncpa [#allocation22], 0
    %106 = vsyncpa [#allocation25], 0
    %107 = vsyncpa [#allocation28], 0
    %108 = vsyncpa [#allocation31], 0
    %109 = vsyncpa [#allocation34], 0
    %110 = vsyncpa [#allocation37], 0
    %111 = vsyncpa [#allocation40], 0
    %112 = vsyncpa [#allocation43], 0
    %113 = vsyncpa [#allocation46], 0
    %114 = vsyncpa [#allocation49], 0
    %115 = vsyncpa [#allocation52], 0
    loop: start=0, step=1, limit=4
    $region2: #{fwd.1} parent=1 // loop_pre_header
      _
    $region3: #{fwd.1} parent=1 // loop_header
      %s117 = sphi 0, %s121
      %p118 = scmp.ge.s32.totalorder %s117, 4
      %s125 = sphi 0, %s125
      %s127 = sphi 0, %s125
      %s128 = sphi 0, %s127
      %s142 = sphi 0, %s128
      %s148 = sphi 0, %s150
      %s151 = sphi 0, %s148
      %s152 = sphi 0, %s151
      %s168 = sphi 0, %s152
      %s172 = sphi 0, %s172
      %s174 = sphi 0, %s172
      %s175 = sphi 0, %s174
      %s189 = sphi 0, %s175
      %s193 = sphi 0, %s193
      %s195 = sphi 0, %s193
      %s196 = sphi 0, %s195
      %s210 = sphi 0, %s196
      %s214 = sphi 0, %s214
      %s216 = sphi 0, %s214
      %s217 = sphi 0, %s216
      %s231 = sphi 0, %s217
      %s235 = sphi 0, %s235
      %s237 = sphi 0, %s235
      %s238 = sphi 0, %s237
      %s252 = sphi 0, %s238
      %s256 = sphi 0, %s256
      %s258 = sphi 0, %s256
      %s259 = sphi 0, %s258
      %s273 = sphi 0, %s259
      %s277 = sphi 0, %s277
      %s279 = sphi 0, %s277
      %s280 = sphi 0, %s279
      %s294 = sphi 0, %s280
      %s298 = sphi 0, %s298
      %s300 = sphi 0, %s298
      %s301 = sphi 0, %s300
      %s315 = sphi 0, %s301
      %s319 = sphi 0, %s319
      %s321 = sphi 0, %s319
      %s322 = sphi 0, %s321
      %s336 = sphi 0, %s322
      %s340 = sphi 0, %s340
      %s342 = sphi 0, %s340
      %s343 = sphi 0, %s342
      %s357 = sphi 0, %s343
      %s361 = sphi 0, %s361
      %s363 = sphi 0, %s361
      %s364 = sphi 0, %s363
      %s378 = sphi 0, %s364
      %s382 = sphi 0, %s382
      %s384 = sphi 0, %s382
      %s385 = sphi 0, %s384
      %s399 = sphi 0, %s385
      %s403 = sphi 0, %s403
      %s405 = sphi 0, %s403
      %s406 = sphi 0, %s405
      %s420 = sphi 0, %s406
      %s424 = sphi 0, %s424
      %s426 = sphi 0, %s424
      %s427 = sphi 0, %s426
      %s441 = sphi 0, %s427
      %s445 = sphi 0, %s445
      %s447 = sphi 0, %s445
      %s448 = sphi 0, %s447
      %s462 = sphi 0, %s448
      %s466 = sphi 0, %s466
      %s468 = sphi 0, %s466
      %s469 = sphi 0, %s468
      %s483 = sphi 0, %s469
      %s487 = sphi 0, %s487
      %s489 = sphi 0, %s487
      %s490 = sphi 0, %s489
      %s504 = sphi 0, %s490
      %s508 = sphi 0, %s508
      %s510 = sphi 0, %s508
      %s511 = sphi 0, %s510
      %s525 = sphi 0, %s511
      %s529 = sphi 0, %s529
      %s531 = sphi 0, %s529
      %s532 = sphi 0, %s531
      %s546 = sphi 0, %s532
      %s550 = sphi 0, %s550
      %s552 = sphi 0, %s550
      %s553 = sphi 0, %s552
      %s567 = sphi 0, %s553
      %s571 = sphi 0, %s571
      %s573 = sphi 0, %s571
      %s574 = sphi 0, %s573
      %s588 = sphi 0, %s574
      %s592 = sphi 0, %s592
      %s594 = sphi 0, %s592
      %s595 = sphi 0, %s594
      %s609 = sphi 0, %s595
      %s613 = sphi 0, %s613
      %s615 = sphi 0, %s613
      %s616 = sphi 0, %s615
      %s630 = sphi 0, %s616
      %s634 = sphi 0, %s634
      %s636 = sphi 0, %s634
      %s637 = sphi 0, %s636
      %s651 = sphi 0, %s637
      %s655 = sphi 0, %s655
      %s657 = sphi 0, %s655
      %s658 = sphi 0, %s657
      %s672 = sphi 0, %s658
      %s676 = sphi 0, %s676
      %s678 = sphi 0, %s676
      %s679 = sphi 0, %s678
      %s693 = sphi 0, %s679
      %s697 = sphi 0, %s697
      %s699 = sphi 0, %s697
      %s700 = sphi 0, %s699
      %s714 = sphi 0, %s700
      %s718 = sphi 0, %s718
      %s720 = sphi 0, %s718
      %s721 = sphi 0, %s720
      %s735 = sphi 0, %s721
      %s739 = sphi 0, %s739
      %s741 = sphi 0, %s739
      %s742 = sphi 0, %s741
      %s756 = sphi 0, %s742
      %s760 = sphi 0, %s760
      %s762 = sphi 0, %s760
      %s763 = sphi 0, %s762
      %s777 = sphi 0, %s763
      %s781 = sphi 0, %s781
      %s783 = sphi 0, %s781
      %s784 = sphi 0, %s783
      %s798 = sphi 0, %s784
      %s802 = sphi 0, %s802
      %s804 = sphi 0, %s802
      %s805 = sphi 0, %s804
      %s819 = sphi 0, %s805
      %s823 = sphi 0, %s823
      %s825 = sphi 0, %s823
      %s826 = sphi 0, %s825
      %s840 = sphi 0, %s826
      %s844 = sphi 0, %s844
      %s846 = sphi 0, %s844
      %s847 = sphi 0, %s846
      %s861 = sphi 0, %s847
      %s865 = sphi 0, %s865
      %s867 = sphi 0, %s865
      %s868 = sphi 0, %s867
      %s882 = sphi 0, %s868
      %s886 = sphi 0, %s886
      %s888 = sphi 0, %s886
      %s889 = sphi 0, %s888
      %s903 = sphi 0, %s889
      %s907 = sphi 0, %s907
      %s909 = sphi 0, %s907
      %s910 = sphi 0, %s909
      %s924 = sphi 0, %s910
      %s928 = sphi 0, %s928
      %s930 = sphi 0, %s928
      %s931 = sphi 0, %s930
      %s945 = sphi 0, %s931
      %s949 = sphi 0, %s949
      %s951 = sphi 0, %s949
      %s952 = sphi 0, %s951
      %s966 = sphi 0, %s952
      %s970 = sphi 0, %s970
      %s972 = sphi 0, %s970
      %s973 = sphi 0, %s972
      %s987 = sphi 0, %s973
      %s991 = sphi 0, %s991
      %s993 = sphi 0, %s991
      %s994 = sphi 0, %s993
      %s1008 = sphi 0, %s994
      %s1012 = sphi 0, %s1012
      %s1014 = sphi 0, %s1012
      %s1015 = sphi 0, %s1014
      %s1029 = sphi 0, %s1015
      %s1033 = sphi 0, %s1033
      %s1035 = sphi 0, %s1033
      %s1036 = sphi 0, %s1035
      %s1050 = sphi 0, %s1036
      %s1054 = sphi 0, %s1054
      %s1056 = sphi 0, %s1054
      %s1057 = sphi 0, %s1056
      %s1071 = sphi 0, %s1057
      %s1075 = sphi 0, %s1075
      %s1077 = sphi 0, %s1075
      %s1078 = sphi 0, %s1077
      %s1092 = sphi 0, %s1078
      %s1098 = sphi 0, %s1100
      %s1101 = sphi 0, %s1098
      %s1102 = sphi 0, %s1101
      %s1118 = sphi 0, %s1102
    $region4: #{fwd.1} parent=1 // loop_header_branch
      %120 = sbr.rel (%p118) target = $region8
    $region5: #{fwd.1} parent=1 // loop_body
      %s122 = ssub.s32 %s117, 1
      %s123 = ssub.s32 %s117, 2
      %s124 = sadd.s32 %s117, 1
      %s126 = sadd.s32 %s125, 1
      %p129 = scmp.eq.s32.totalorder %s117, 1
      %p130 = scmp.ne.s32.totalorder %s125, %s127
      %p131 = scmp.eq.s32.totalorder %s117, 0
      %p132 = por %p130, %p131
      %p133 = scmp.ne.s32.totalorder %s125, %s127
      %p134 = scmp.eq.s32.totalorder %s122, 1
      %p135 = por %p133, %p134
      %p136 = scmp.ne.s32.totalorder %s127, %s128
      %p137 = scmp.eq.s32.totalorder %s122, 0
      %p138 = por %p136, %p137
      %p139 = scmp.ne.s32.totalorder %s127, %s128
      %p140 = scmp.eq.s32.totalorder %s123, 1
      %p141 = por %p139, %p140
      %p143 = scmp.ne.s32.totalorder %s128, %s142
      %p144 = scmp.eq.s32.totalorder %s123, 0
      %p145 = por %p143, %p144
      %s146 = ssub.s32 %s117, %s124
      %p147 = scmp.eq.s32.totalorder %s146, 0
      %s149 = sadd.s32 %s148, 1
      %s150 = scalar_select %p147, %s148, %s149
      %p153 = pneg %p147
      %p154 = scmp.eq.s32.totalorder %s117, 1
      %p155 = por %p153, %p154
      %p156 = scmp.ne.s32.totalorder %s148, %s151
      %p157 = scmp.eq.s32.totalorder %s117, 0
      %p158 = por %p156, %p157
      %p159 = scmp.ne.s32.totalorder %s148, %s151
      %p160 = scmp.eq.s32.totalorder %s122, 1
      %p161 = por %p159, %p160
      %p162 = scmp.ne.s32.totalorder %s151, %s152
      %p163 = scmp.eq.s32.totalorder %s122, 0
      %p164 = por %p162, %p163
      %p165 = scmp.ne.s32.totalorder %s151, %s152
      %p166 = scmp.eq.s32.totalorder %s123, 1
      %p167 = por %p165, %p166
      %p169 = scmp.ne.s32.totalorder %s152, %s168
      %p170 = scmp.eq.s32.totalorder %s123, 0
      %p171 = por %p169, %p170
      %s173 = sadd.s32 %s172, 1
      %p176 = scmp.eq.s32.totalorder %s117, 1
      %p177 = scmp.ne.s32.totalorder %s172, %s174
      %p178 = scmp.eq.s32.totalorder %s117, 0
      %p179 = por %p177, %p178
      %p180 = scmp.ne.s32.totalorder %s172, %s174
      %p181 = scmp.eq.s32.totalorder %s122, 1
      %p182 = por %p180, %p181
      %p183 = scmp.ne.s32.totalorder %s174, %s175
      %p184 = scmp.eq.s32.totalorder %s122, 0
      %p185 = por %p183, %p184
      %p186 = scmp.ne.s32.totalorder %s174, %s175
      %p187 = scmp.eq.s32.totalorder %s123, 1
      %p188 = por %p186, %p187
      %p190 = scmp.ne.s32.totalorder %s175, %s189
      %p191 = scmp.eq.s32.totalorder %s123, 0
      %p192 = por %p190, %p191
      %s194 = sadd.s32 %s193, 1
      %p197 = scmp.eq.s32.totalorder %s117, 1
      %p198 = scmp.ne.s32.totalorder %s193, %s195
      %p199 = scmp.eq.s32.totalorder %s117, 0
      %p200 = por %p198, %p199
      %p201 = scmp.ne.s32.totalorder %s193, %s195
      %p202 = scmp.eq.s32.totalorder %s122, 1
      %p203 = por %p201, %p202
      %p204 = scmp.ne.s32.totalorder %s195, %s196
      %p205 = scmp.eq.s32.totalorder %s122, 0
      %p206 = por %p204, %p205
      %p207 = scmp.ne.s32.totalorder %s195, %s196
      %p208 = scmp.eq.s32.totalorder %s123, 1
      %p209 = por %p207, %p208
      %p211 = scmp.ne.s32.totalorder %s196, %s210
      %p212 = scmp.eq.s32.totalorder %s123, 0
      %p213 = por %p211, %p212
      %s215 = sadd.s32 %s214, 1
      %p218 = scmp.eq.s32.totalorder %s117, 1
      %p219 = scmp.ne.s32.totalorder %s214, %s216
      %p220 = scmp.eq.s32.totalorder %s117, 0
      %p221 = por %p219, %p220
      %p222 = scmp.ne.s32.totalorder %s214, %s216
      %p223 = scmp.eq.s32.totalorder %s122, 1
      %p224 = por %p222, %p223
      %p225 = scmp.ne.s32.totalorder %s216, %s217
      %p226 = scmp.eq.s32.totalorder %s122, 0
      %p227 = por %p225, %p226
      %p228 = scmp.ne.s32.totalorder %s216, %s217
      %p229 = scmp.eq.s32.totalorder %s123, 1
      %p230 = por %p228, %p229
      %p232 = scmp.ne.s32.totalorder %s217, %s231
      %p233 = scmp.eq.s32.totalorder %s123, 0
      %p234 = por %p232, %p233
      %s236 = sadd.s32 %s235, 1
      %p239 = scmp.eq.s32.totalorder %s117, 1
      %p240 = scmp.ne.s32.totalorder %s235, %s237
      %p241 = scmp.eq.s32.totalorder %s117, 0
      %p242 = por %p240, %p241
      %p243 = scmp.ne.s32.totalorder %s235, %s237
      %p244 = scmp.eq.s32.totalorder %s122, 1
      %p245 = por %p243, %p244
      %p246 = scmp.ne.s32.totalorder %s237, %s238
      %p247 = scmp.eq.s32.totalorder %s122, 0
      %p248 = por %p246, %p247
      %p249 = scmp.ne.s32.totalorder %s237, %s238
      %p250 = scmp.eq.s32.totalorder %s123, 1
      %p251 = por %p249, %p250
      %p253 = scmp.ne.s32.totalorder %s238, %s252
      %p254 = scmp.eq.s32.totalorder %s123, 0
      %p255 = por %p253, %p254
      %s257 = sadd.s32 %s256, 1
      %p260 = scmp.eq.s32.totalorder %s117, 1
      %p261 = scmp.ne.s32.totalorder %s256, %s258
      %p262 = scmp.eq.s32.totalorder %s117, 0
      %p263 = por %p261, %p262
      %p264 = scmp.ne.s32.totalorder %s256, %s258
      %p265 = scmp.eq.s32.totalorder %s122, 1
      %p266 = por %p264, %p265
      %p267 = scmp.ne.s32.totalorder %s258, %s259
      %p268 = scmp.eq.s32.totalorder %s122, 0
      %p269 = por %p267, %p268
      %p270 = scmp.ne.s32.totalorder %s258, %s259
      %p271 = scmp.eq.s32.totalorder %s123, 1
      %p272 = por %p270, %p271
      %p274 = scmp.ne.s32.totalorder %s259, %s273
      %p275 = scmp.eq.s32.totalorder %s123, 0
      %p276 = por %p274, %p275
      %s278 = sadd.s32 %s277, 1
      %p281 = scmp.eq.s32.totalorder %s117, 1
      %p282 = scmp.ne.s32.totalorder %s277, %s279
      %p283 = scmp.eq.s32.totalorder %s117, 0
      %p284 = por %p282, %p283
      %p285 = scmp.ne.s32.totalorder %s277, %s279
      %p286 = scmp.eq.s32.totalorder %s122, 1
      %p287 = por %p285, %p286
      %p288 = scmp.ne.s32.totalorder %s279, %s280
      %p289 = scmp.eq.s32.totalorder %s122, 0
      %p290 = por %p288, %p289
      %p291 = scmp.ne.s32.totalorder %s279, %s280
      %p292 = scmp.eq.s32.totalorder %s123, 1
      %p293 = por %p291, %p292
      %p295 = scmp.ne.s32.totalorder %s280, %s294
      %p296 = scmp.eq.s32.totalorder %s123, 0
      %p297 = por %p295, %p296
      %s299 = sadd.s32 %s298, 1
      %p302 = scmp.eq.s32.totalorder %s117, 1
      %p303 = scmp.ne.s32.totalorder %s298, %s300
      %p304 = scmp.eq.s32.totalorder %s117, 0
      %p305 = por %p303, %p304
      %p306 = scmp.ne.s32.totalorder %s298, %s300
      %p307 = scmp.eq.s32.totalorder %s122, 1
      %p308 = por %p306, %p307
      %p309 = scmp.ne.s32.totalorder %s300, %s301
      %p310 = scmp.eq.s32.totalorder %s122, 0
      %p311 = por %p309, %p310
      %p312 = scmp.ne.s32.totalorder %s300, %s301
      %p313 = scmp.eq.s32.totalorder %s123, 1
      %p314 = por %p312, %p313
      %p316 = scmp.ne.s32.totalorder %s301, %s315
      %p317 = scmp.eq.s32.totalorder %s123, 0
      %p318 = por %p316, %p317
      %s320 = sadd.s32 %s319, 1
      %p323 = scmp.eq.s32.totalorder %s117, 1
      %p324 = scmp.ne.s32.totalorder %s319, %s321
      %p325 = scmp.eq.s32.totalorder %s117, 0
      %p326 = por %p324, %p325
      %p327 = scmp.ne.s32.totalorder %s319, %s321
      %p328 = scmp.eq.s32.totalorder %s122, 1
      %p329 = por %p327, %p328
      %p330 = scmp.ne.s32.totalorder %s321, %s322
      %p331 = scmp.eq.s32.totalorder %s122, 0
      %p332 = por %p330, %p331
      %p333 = scmp.ne.s32.totalorder %s321, %s322
      %p334 = scmp.eq.s32.totalorder %s123, 1
      %p335 = por %p333, %p334
      %p337 = scmp.ne.s32.totalorder %s322, %s336
      %p338 = scmp.eq.s32.totalorder %s123, 0
      %p339 = por %p337, %p338
      %s341 = sadd.s32 %s340, 1
      %p344 = scmp.eq.s32.totalorder %s117, 1
      %p345 = scmp.ne.s32.totalorder %s340, %s342
      %p346 = scmp.eq.s32.totalorder %s117, 0
      %p347 = por %p345, %p346
      %p348 = scmp.ne.s32.totalorder %s340, %s342
      %p349 = scmp.eq.s32.totalorder %s122, 1
      %p350 = por %p348, %p349
      %p351 = scmp.ne.s32.totalorder %s342, %s343
      %p352 = scmp.eq.s32.totalorder %s122, 0
      %p353 = por %p351, %p352
      %p354 = scmp.ne.s32.totalorder %s342, %s343
      %p355 = scmp.eq.s32.totalorder %s123, 1
      %p356 = por %p354, %p355
      %p358 = scmp.ne.s32.totalorder %s343, %s357
      %p359 = scmp.eq.s32.totalorder %s123, 0
      %p360 = por %p358, %p359
      %s362 = sadd.s32 %s361, 1
      %p365 = scmp.eq.s32.totalorder %s117, 1
      %p366 = scmp.ne.s32.totalorder %s361, %s363
      %p367 = scmp.eq.s32.totalorder %s117, 0
      %p368 = por %p366, %p367
      %p369 = scmp.ne.s32.totalorder %s361, %s363
      %p370 = scmp.eq.s32.totalorder %s122, 1
      %p371 = por %p369, %p370
      %p372 = scmp.ne.s32.totalorder %s363, %s364
      %p373 = scmp.eq.s32.totalorder %s122, 0
      %p374 = por %p372, %p373
      %p375 = scmp.ne.s32.totalorder %s363, %s364
      %p376 = scmp.eq.s32.totalorder %s123, 1
      %p377 = por %p375, %p376
      %p379 = scmp.ne.s32.totalorder %s364, %s378
      %p380 = scmp.eq.s32.totalorder %s123, 0
      %p381 = por %p379, %p380
      %s383 = sadd.s32 %s382, 1
      %p386 = scmp.eq.s32.totalorder %s117, 1
      %p387 = scmp.ne.s32.totalorder %s382, %s384
      %p388 = scmp.eq.s32.totalorder %s117, 0
      %p389 = por %p387, %p388
      %p390 = scmp.ne.s32.totalorder %s382, %s384
      %p391 = scmp.eq.s32.totalorder %s122, 1
      %p392 = por %p390, %p391
      %p393 = scmp.ne.s32.totalorder %s384, %s385
      %p394 = scmp.eq.s32.totalorder %s122, 0
      %p395 = por %p393, %p394
      %p396 = scmp.ne.s32.totalorder %s384, %s385
      %p397 = scmp.eq.s32.totalorder %s123, 1
      %p398 = por %p396, %p397
      %p400 = scmp.ne.s32.totalorder %s385, %s399
      %p401 = scmp.eq.s32.totalorder %s123, 0
      %p402 = por %p400, %p401
      %s404 = sadd.s32 %s403, 1
      %p407 = scmp.eq.s32.totalorder %s117, 1
      %p408 = scmp.ne.s32.totalorder %s403, %s405
      %p409 = scmp.eq.s32.totalorder %s117, 0
      %p410 = por %p408, %p409
      %p411 = scmp.ne.s32.totalorder %s403, %s405
      %p412 = scmp.eq.s32.totalorder %s122, 1
      %p413 = por %p411, %p412
      %p414 = scmp.ne.s32.totalorder %s405, %s406
      %p415 = scmp.eq.s32.totalorder %s122, 0
      %p416 = por %p414, %p415
      %p417 = scmp.ne.s32.totalorder %s405, %s406
      %p418 = scmp.eq.s32.totalorder %s123, 1
      %p419 = por %p417, %p418
      %p421 = scmp.ne.s32.totalorder %s406, %s420
      %p422 = scmp.eq.s32.totalorder %s123, 0
      %p423 = por %p421, %p422
      %s425 = sadd.s32 %s424, 1
      %p428 = scmp.eq.s32.totalorder %s117, 1
      %p429 = scmp.ne.s32.totalorder %s424, %s426
      %p430 = scmp.eq.s32.totalorder %s117, 0
      %p431 = por %p429, %p430
      %p432 = scmp.ne.s32.totalorder %s424, %s426
      %p433 = scmp.eq.s32.totalorder %s122, 1
      %p434 = por %p432, %p433
      %p435 = scmp.ne.s32.totalorder %s426, %s427
      %p436 = scmp.eq.s32.totalorder %s122, 0
      %p437 = por %p435, %p436
      %p438 = scmp.ne.s32.totalorder %s426, %s427
      %p439 = scmp.eq.s32.totalorder %s123, 1
      %p440 = por %p438, %p439
      %p442 = scmp.ne.s32.totalorder %s427, %s441
      %p443 = scmp.eq.s32.totalorder %s123, 0
      %p444 = por %p442, %p443
      %s446 = sadd.s32 %s445, 1
      %p449 = scmp.eq.s32.totalorder %s117, 1
      %p450 = scmp.ne.s32.totalorder %s445, %s447
      %p451 = scmp.eq.s32.totalorder %s117, 0
      %p452 = por %p450, %p451
      %p453 = scmp.ne.s32.totalorder %s445, %s447
      %p454 = scmp.eq.s32.totalorder %s122, 1
      %p455 = por %p453, %p454
      %p456 = scmp.ne.s32.totalorder %s447, %s448
      %p457 = scmp.eq.s32.totalorder %s122, 0
      %p458 = por %p456, %p457
      %p459 = scmp.ne.s32.totalorder %s447, %s448
      %p460 = scmp.eq.s32.totalorder %s123, 1
      %p461 = por %p459, %p460
      %p463 = scmp.ne.s32.totalorder %s448, %s462
      %p464 = scmp.eq.s32.totalorder %s123, 0
      %p465 = por %p463, %p464
      %s467 = sadd.s32 %s466, 1
      %p470 = scmp.eq.s32.totalorder %s117, 1
      %p471 = scmp.ne.s32.totalorder %s466, %s468
      %p472 = scmp.eq.s32.totalorder %s117, 0
      %p473 = por %p471, %p472
      %p474 = scmp.ne.s32.totalorder %s466, %s468
      %p475 = scmp.eq.s32.totalorder %s122, 1
      %p476 = por %p474, %p475
      %p477 = scmp.ne.s32.totalorder %s468, %s469
      %p478 = scmp.eq.s32.totalorder %s122, 0
      %p479 = por %p477, %p478
      %p480 = scmp.ne.s32.totalorder %s468, %s469
      %p481 = scmp.eq.s32.totalorder %s123, 1
      %p482 = por %p480, %p481
      %p484 = scmp.ne.s32.totalorder %s469, %s483
      %p485 = scmp.eq.s32.totalorder %s123, 0
      %p486 = por %p484, %p485
      %s488 = sadd.s32 %s487, 1
      %p491 = scmp.eq.s32.totalorder %s117, 1
      %p492 = scmp.ne.s32.totalorder %s487, %s489
      %p493 = scmp.eq.s32.totalorder %s117, 0
      %p494 = por %p492, %p493
      %p495 = scmp.ne.s32.totalorder %s487, %s489
      %p496 = scmp.eq.s32.totalorder %s122, 1
      %p497 = por %p495, %p496
      %p498 = scmp.ne.s32.totalorder %s489, %s490
      %p499 = scmp.eq.s32.totalorder %s122, 0
      %p500 = por %p498, %p499
      %p501 = scmp.ne.s32.totalorder %s489, %s490
      %p502 = scmp.eq.s32.totalorder %s123, 1
      %p503 = por %p501, %p502
      %p505 = scmp.ne.s32.totalorder %s490, %s504
      %p506 = scmp.eq.s32.totalorder %s123, 0
      %p507 = por %p505, %p506
      %s509 = sadd.s32 %s508, 1
      %p512 = scmp.eq.s32.totalorder %s117, 1
      %p513 = scmp.ne.s32.totalorder %s508, %s510
      %p514 = scmp.eq.s32.totalorder %s117, 0
      %p515 = por %p513, %p514
      %p516 = scmp.ne.s32.totalorder %s508, %s510
      %p517 = scmp.eq.s32.totalorder %s122, 1
      %p518 = por %p516, %p517
      %p519 = scmp.ne.s32.totalorder %s510, %s511
      %p520 = scmp.eq.s32.totalorder %s122, 0
      %p521 = por %p519, %p520
      %p522 = scmp.ne.s32.totalorder %s510, %s511
      %p523 = scmp.eq.s32.totalorder %s123, 1
      %p524 = por %p522, %p523
      %p526 = scmp.ne.s32.totalorder %s511, %s525
      %p527 = scmp.eq.s32.totalorder %s123, 0
      %p528 = por %p526, %p527
      %s530 = sadd.s32 %s529, 1
      %p533 = scmp.eq.s32.totalorder %s117, 1
      %p534 = scmp.ne.s32.totalorder %s529, %s531
      %p535 = scmp.eq.s32.totalorder %s117, 0
      %p536 = por %p534, %p535
      %p537 = scmp.ne.s32.totalorder %s529, %s531
      %p538 = scmp.eq.s32.totalorder %s122, 1
      %p539 = por %p537, %p538
      %p540 = scmp.ne.s32.totalorder %s531, %s532
      %p541 = scmp.eq.s32.totalorder %s122, 0
      %p542 = por %p540, %p541
      %p543 = scmp.ne.s32.totalorder %s531, %s532
      %p544 = scmp.eq.s32.totalorder %s123, 1
      %p545 = por %p543, %p544
      %p547 = scmp.ne.s32.totalorder %s532, %s546
      %p548 = scmp.eq.s32.totalorder %s123, 0
      %p549 = por %p547, %p548
      %s551 = sadd.s32 %s550, 1
      %p554 = scmp.eq.s32.totalorder %s117, 1
      %p555 = scmp.ne.s32.totalorder %s550, %s552
      %p556 = scmp.eq.s32.totalorder %s117, 0
      %p557 = por %p555, %p556
      %p558 = scmp.ne.s32.totalorder %s550, %s552
      %p559 = scmp.eq.s32.totalorder %s122, 1
      %p560 = por %p558, %p559
      %p561 = scmp.ne.s32.totalorder %s552, %s553
      %p562 = scmp.eq.s32.totalorder %s122, 0
      %p563 = por %p561, %p562
      %p564 = scmp.ne.s32.totalorder %s552, %s553
      %p565 = scmp.eq.s32.totalorder %s123, 1
      %p566 = por %p564, %p565
      %p568 = scmp.ne.s32.totalorder %s553, %s567
      %p569 = scmp.eq.s32.totalorder %s123, 0
      %p570 = por %p568, %p569
      %s572 = sadd.s32 %s571, 1
      %p575 = scmp.eq.s32.totalorder %s117, 1
      %p576 = scmp.ne.s32.totalorder %s571, %s573
      %p577 = scmp.eq.s32.totalorder %s117, 0
      %p578 = por %p576, %p577
      %p579 = scmp.ne.s32.totalorder %s571, %s573
      %p580 = scmp.eq.s32.totalorder %s122, 1
      %p581 = por %p579, %p580
      %p582 = scmp.ne.s32.totalorder %s573, %s574
      %p583 = scmp.eq.s32.totalorder %s122, 0
      %p584 = por %p582, %p583
      %p585 = scmp.ne.s32.totalorder %s573, %s574
      %p586 = scmp.eq.s32.totalorder %s123, 1
      %p587 = por %p585, %p586
      %p589 = scmp.ne.s32.totalorder %s574, %s588
      %p590 = scmp.eq.s32.totalorder %s123, 0
      %p591 = por %p589, %p590
      %s593 = sadd.s32 %s592, 1
      %p596 = scmp.eq.s32.totalorder %s117, 1
      %p597 = scmp.ne.s32.totalorder %s592, %s594
      %p598 = scmp.eq.s32.totalorder %s117, 0
      %p599 = por %p597, %p598
      %p600 = scmp.ne.s32.totalorder %s592, %s594
      %p601 = scmp.eq.s32.totalorder %s122, 1
      %p602 = por %p600, %p601
      %p603 = scmp.ne.s32.totalorder %s594, %s595
      %p604 = scmp.eq.s32.totalorder %s122, 0
      %p605 = por %p603, %p604
      %p606 = scmp.ne.s32.totalorder %s594, %s595
      %p607 = scmp.eq.s32.totalorder %s123, 1
      %p608 = por %p606, %p607
      %p610 = scmp.ne.s32.totalorder %s595, %s609
      %p611 = scmp.eq.s32.totalorder %s123, 0
      %p612 = por %p610, %p611
      %s614 = sadd.s32 %s613, 1
      %p617 = scmp.eq.s32.totalorder %s117, 1
      %p618 = scmp.ne.s32.totalorder %s613, %s615
      %p619 = scmp.eq.s32.totalorder %s117, 0
      %p620 = por %p618, %p619
      %p621 = scmp.ne.s32.totalorder %s613, %s615
      %p622 = scmp.eq.s32.totalorder %s122, 1
      %p623 = por %p621, %p622
      %p624 = scmp.ne.s32.totalorder %s615, %s616
      %p625 = scmp.eq.s32.totalorder %s122, 0
      %p626 = por %p624, %p625
      %p627 = scmp.ne.s32.totalorder %s615, %s616
      %p628 = scmp.eq.s32.totalorder %s123, 1
      %p629 = por %p627, %p628
      %p631 = scmp.ne.s32.totalorder %s616, %s630
      %p632 = scmp.eq.s32.totalorder %s123, 0
      %p633 = por %p631, %p632
      %s635 = sadd.s32 %s634, 1
      %p638 = scmp.eq.s32.totalorder %s117, 1
      %p639 = scmp.ne.s32.totalorder %s634, %s636
      %p640 = scmp.eq.s32.totalorder %s117, 0
      %p641 = por %p639, %p640
      %p642 = scmp.ne.s32.totalorder %s634, %s636
      %p643 = scmp.eq.s32.totalorder %s122, 1
      %p644 = por %p642, %p643
      %p645 = scmp.ne.s32.totalorder %s636, %s637
      %p646 = scmp.eq.s32.totalorder %s122, 0
      %p647 = por %p645, %p646
      %p648 = scmp.ne.s32.totalorder %s636, %s637
      %p649 = scmp.eq.s32.totalorder %s123, 1
      %p650 = por %p648, %p649
      %p652 = scmp.ne.s32.totalorder %s637, %s651
      %p653 = scmp.eq.s32.totalorder %s123, 0
      %p654 = por %p652, %p653
      %s656 = sadd.s32 %s655, 1
      %p659 = scmp.eq.s32.totalorder %s117, 1
      %p660 = scmp.ne.s32.totalorder %s655, %s657
      %p661 = scmp.eq.s32.totalorder %s117, 0
      %p662 = por %p660, %p661
      %p663 = scmp.ne.s32.totalorder %s655, %s657
      %p664 = scmp.eq.s32.totalorder %s122, 1
      %p665 = por %p663, %p664
      %p666 = scmp.ne.s32.totalorder %s657, %s658
      %p667 = scmp.eq.s32.totalorder %s122, 0
      %p668 = por %p666, %p667
      %p669 = scmp.ne.s32.totalorder %s657, %s658
      %p670 = scmp.eq.s32.totalorder %s123, 1
      %p671 = por %p669, %p670
      %p673 = scmp.ne.s32.totalorder %s658, %s672
      %p674 = scmp.eq.s32.totalorder %s123, 0
      %p675 = por %p673, %p674
      %s677 = sadd.s32 %s676, 1
      %p680 = scmp.eq.s32.totalorder %s117, 1
      %p681 = scmp.ne.s32.totalorder %s676, %s678
      %p682 = scmp.eq.s32.totalorder %s117, 0
      %p683 = por %p681, %p682
      %p684 = scmp.ne.s32.totalorder %s676, %s678
      %p685 = scmp.eq.s32.totalorder %s122, 1
      %p686 = por %p684, %p685
      %p687 = scmp.ne.s32.totalorder %s678, %s679
      %p688 = scmp.eq.s32.totalorder %s122, 0
      %p689 = por %p687, %p688
      %p690 = scmp.ne.s32.totalorder %s678, %s679
      %p691 = scmp.eq.s32.totalorder %s123, 1
      %p692 = por %p690, %p691
      %p694 = scmp.ne.s32.totalorder %s679, %s693
      %p695 = scmp.eq.s32.totalorder %s123, 0
      %p696 = por %p694, %p695
      %s698 = sadd.s32 %s697, 1
      %p701 = scmp.eq.s32.totalorder %s117, 1
      %p702 = scmp.ne.s32.totalorder %s697, %s699
      %p703 = scmp.eq.s32.totalorder %s117, 0
      %p704 = por %p702, %p703
      %p705 = scmp.ne.s32.totalorder %s697, %s699
      %p706 = scmp.eq.s32.totalorder %s122, 1
      %p707 = por %p705, %p706
      %p708 = scmp.ne.s32.totalorder %s699, %s700
      %p709 = scmp.eq.s32.totalorder %s122, 0
      %p710 = por %p708, %p709
      %p711 = scmp.ne.s32.totalorder %s699, %s700
      %p712 = scmp.eq.s32.totalorder %s123, 1
      %p713 = por %p711, %p712
      %p715 = scmp.ne.s32.totalorder %s700, %s714
      %p716 = scmp.eq.s32.totalorder %s123, 0
      %p717 = por %p715, %p716
      %s719 = sadd.s32 %s718, 1
      %p722 = scmp.eq.s32.totalorder %s117, 1
      %p723 = scmp.ne.s32.totalorder %s718, %s720
      %p724 = scmp.eq.s32.totalorder %s117, 0
      %p725 = por %p723, %p724
      %p726 = scmp.ne.s32.totalorder %s718, %s720
      %p727 = scmp.eq.s32.totalorder %s122, 1
      %p728 = por %p726, %p727
      %p729 = scmp.ne.s32.totalorder %s720, %s721
      %p730 = scmp.eq.s32.totalorder %s122, 0
      %p731 = por %p729, %p730
      %p732 = scmp.ne.s32.totalorder %s720, %s721
      %p733 = scmp.eq.s32.totalorder %s123, 1
      %p734 = por %p732, %p733
      %p736 = scmp.ne.s32.totalorder %s721, %s735
      %p737 = scmp.eq.s32.totalorder %s123, 0
      %p738 = por %p736, %p737
      %s740 = sadd.s32 %s739, 1
      %p743 = scmp.eq.s32.totalorder %s117, 1
      %p744 = scmp.ne.s32.totalorder %s739, %s741
      %p745 = scmp.eq.s32.totalorder %s117, 0
      %p746 = por %p744, %p745
      %p747 = scmp.ne.s32.totalorder %s739, %s741
      %p748 = scmp.eq.s32.totalorder %s122, 1
      %p749 = por %p747, %p748
      %p750 = scmp.ne.s32.totalorder %s741, %s742
      %p751 = scmp.eq.s32.totalorder %s122, 0
      %p752 = por %p750, %p751
      %p753 = scmp.ne.s32.totalorder %s741, %s742
      %p754 = scmp.eq.s32.totalorder %s123, 1
      %p755 = por %p753, %p754
      %p757 = scmp.ne.s32.totalorder %s742, %s756
      %p758 = scmp.eq.s32.totalorder %s123, 0
      %p759 = por %p757, %p758
      %s761 = sadd.s32 %s760, 1
      %p764 = scmp.eq.s32.totalorder %s117, 1
      %p765 = scmp.ne.s32.totalorder %s760, %s762
      %p766 = scmp.eq.s32.totalorder %s117, 0
      %p767 = por %p765, %p766
      %p768 = scmp.ne.s32.totalorder %s760, %s762
      %p769 = scmp.eq.s32.totalorder %s122, 1
      %p770 = por %p768, %p769
      %p771 = scmp.ne.s32.totalorder %s762, %s763
      %p772 = scmp.eq.s32.totalorder %s122, 0
      %p773 = por %p771, %p772
      %p774 = scmp.ne.s32.totalorder %s762, %s763
      %p775 = scmp.eq.s32.totalorder %s123, 1
      %p776 = por %p774, %p775
      %p778 = scmp.ne.s32.totalorder %s763, %s777
      %p779 = scmp.eq.s32.totalorder %s123, 0
      %p780 = por %p778, %p779
      %s782 = sadd.s32 %s781, 1
      %p785 = scmp.eq.s32.totalorder %s117, 1
      %p786 = scmp.ne.s32.totalorder %s781, %s783
      %p787 = scmp.eq.s32.totalorder %s117, 0
      %p788 = por %p786, %p787
      %p789 = scmp.ne.s32.totalorder %s781, %s783
      %p790 = scmp.eq.s32.totalorder %s122, 1
      %p791 = por %p789, %p790
      %p792 = scmp.ne.s32.totalorder %s783, %s784
      %p793 = scmp.eq.s32.totalorder %s122, 0
      %p794 = por %p792, %p793
      %p795 = scmp.ne.s32.totalorder %s783, %s784
      %p796 = scmp.eq.s32.totalorder %s123, 1
      %p797 = por %p795, %p796
      %p799 = scmp.ne.s32.totalorder %s784, %s798
      %p800 = scmp.eq.s32.totalorder %s123, 0
      %p801 = por %p799, %p800
      %s803 = sadd.s32 %s802, 1
      %p806 = scmp.eq.s32.totalorder %s117, 1
      %p807 = scmp.ne.s32.totalorder %s802, %s804
      %p808 = scmp.eq.s32.totalorder %s117, 0
      %p809 = por %p807, %p808
      %p810 = scmp.ne.s32.totalorder %s802, %s804
      %p811 = scmp.eq.s32.totalorder %s122, 1
      %p812 = por %p810, %p811
      %p813 = scmp.ne.s32.totalorder %s804, %s805
      %p814 = scmp.eq.s32.totalorder %s122, 0
      %p815 = por %p813, %p814
      %p816 = scmp.ne.s32.totalorder %s804, %s805
      %p817 = scmp.eq.s32.totalorder %s123, 1
      %p818 = por %p816, %p817
      %p820 = scmp.ne.s32.totalorder %s805, %s819
      %p821 = scmp.eq.s32.totalorder %s123, 0
      %p822 = por %p820, %p821
      %s824 = sadd.s32 %s823, 1
      %p827 = scmp.eq.s32.totalorder %s117, 1
      %p828 = scmp.ne.s32.totalorder %s823, %s825
      %p829 = scmp.eq.s32.totalorder %s117, 0
      %p830 = por %p828, %p829
      %p831 = scmp.ne.s32.totalorder %s823, %s825
      %p832 = scmp.eq.s32.totalorder %s122, 1
      %p833 = por %p831, %p832
      %p834 = scmp.ne.s32.totalorder %s825, %s826
      %p835 = scmp.eq.s32.totalorder %s122, 0
      %p836 = por %p834, %p835
      %p837 = scmp.ne.s32.totalorder %s825, %s826
      %p838 = scmp.eq.s32.totalorder %s123, 1
      %p839 = por %p837, %p838
      %p841 = scmp.ne.s32.totalorder %s826, %s840
      %p842 = scmp.eq.s32.totalorder %s123, 0
      %p843 = por %p841, %p842
      %s845 = sadd.s32 %s844, 1
      %p848 = scmp.eq.s32.totalorder %s117, 1
      %p849 = scmp.ne.s32.totalorder %s844, %s846
      %p850 = scmp.eq.s32.totalorder %s117, 0
      %p851 = por %p849, %p850
      %p852 = scmp.ne.s32.totalorder %s844, %s846
      %p853 = scmp.eq.s32.totalorder %s122, 1
      %p854 = por %p852, %p853
      %p855 = scmp.ne.s32.totalorder %s846, %s847
      %p856 = scmp.eq.s32.totalorder %s122, 0
      %p857 = por %p855, %p856
      %p858 = scmp.ne.s32.totalorder %s846, %s847
      %p859 = scmp.eq.s32.totalorder %s123, 1
      %p860 = por %p858, %p859
      %p862 = scmp.ne.s32.totalorder %s847, %s861
      %p863 = scmp.eq.s32.totalorder %s123, 0
      %p864 = por %p862, %p863
      %s866 = sadd.s32 %s865, 1
      %p869 = scmp.eq.s32.totalorder %s117, 1
      %p870 = scmp.ne.s32.totalorder %s865, %s867
      %p871 = scmp.eq.s32.totalorder %s117, 0
      %p872 = por %p870, %p871
      %p873 = scmp.ne.s32.totalorder %s865, %s867
      %p874 = scmp.eq.s32.totalorder %s122, 1
      %p875 = por %p873, %p874
      %p876 = scmp.ne.s32.totalorder %s867, %s868
      %p877 = scmp.eq.s32.totalorder %s122, 0
      %p878 = por %p876, %p877
      %p879 = scmp.ne.s32.totalorder %s867, %s868
      %p880 = scmp.eq.s32.totalorder %s123, 1
      %p881 = por %p879, %p880
      %p883 = scmp.ne.s32.totalorder %s868, %s882
      %p884 = scmp.eq.s32.totalorder %s123, 0
      %p885 = por %p883, %p884
      %s887 = sadd.s32 %s886, 1
      %p890 = scmp.eq.s32.totalorder %s117, 1
      %p891 = scmp.ne.s32.totalorder %s886, %s888
      %p892 = scmp.eq.s32.totalorder %s117, 0
      %p893 = por %p891, %p892
      %p894 = scmp.ne.s32.totalorder %s886, %s888
      %p895 = scmp.eq.s32.totalorder %s122, 1
      %p896 = por %p894, %p895
      %p897 = scmp.ne.s32.totalorder %s888, %s889
      %p898 = scmp.eq.s32.totalorder %s122, 0
      %p899 = por %p897, %p898
      %p900 = scmp.ne.s32.totalorder %s888, %s889
      %p901 = scmp.eq.s32.totalorder %s123, 1
      %p902 = por %p900, %p901
      %p904 = scmp.ne.s32.totalorder %s889, %s903
      %p905 = scmp.eq.s32.totalorder %s123, 0
      %p906 = por %p904, %p905
      %s908 = sadd.s32 %s907, 1
      %p911 = scmp.eq.s32.totalorder %s117, 1
      %p912 = scmp.ne.s32.totalorder %s907, %s909
      %p913 = scmp.eq.s32.totalorder %s117, 0
      %p914 = por %p912, %p913
      %p915 = scmp.ne.s32.totalorder %s907, %s909
      %p916 = scmp.eq.s32.totalorder %s122, 1
      %p917 = por %p915, %p916
      %p918 = scmp.ne.s32.totalorder %s909, %s910
      %p919 = scmp.eq.s32.totalorder %s122, 0
      %p920 = por %p918, %p919
      %p921 = scmp.ne.s32.totalorder %s909, %s910
      %p922 = scmp.eq.s32.totalorder %s123, 1
      %p923 = por %p921, %p922
      %p925 = scmp.ne.s32.totalorder %s910, %s924
      %p926 = scmp.eq.s32.totalorder %s123, 0
      %p927 = por %p925, %p926
      %s929 = sadd.s32 %s928, 1
      %p932 = scmp.eq.s32.totalorder %s117, 1
      %p933 = scmp.ne.s32.totalorder %s928, %s930
      %p934 = scmp.eq.s32.totalorder %s117, 0
      %p935 = por %p933, %p934
      %p936 = scmp.ne.s32.totalorder %s928, %s930
      %p937 = scmp.eq.s32.totalorder %s122, 1
      %p938 = por %p936, %p937
      %p939 = scmp.ne.s32.totalorder %s930, %s931
      %p940 = scmp.eq.s32.totalorder %s122, 0
      %p941 = por %p939, %p940
      %p942 = scmp.ne.s32.totalorder %s930, %s931
      %p943 = scmp.eq.s32.totalorder %s123, 1
      %p944 = por %p942, %p943
      %p946 = scmp.ne.s32.totalorder %s931, %s945
      %p947 = scmp.eq.s32.totalorder %s123, 0
      %p948 = por %p946, %p947
      %s950 = sadd.s32 %s949, 1
      %p953 = scmp.eq.s32.totalorder %s117, 1
      %p954 = scmp.ne.s32.totalorder %s949, %s951
      %p955 = scmp.eq.s32.totalorder %s117, 0
      %p956 = por %p954, %p955
      %p957 = scmp.ne.s32.totalorder %s949, %s951
      %p958 = scmp.eq.s32.totalorder %s122, 1
      %p959 = por %p957, %p958
      %p960 = scmp.ne.s32.totalorder %s951, %s952
      %p961 = scmp.eq.s32.totalorder %s122, 0
      %p962 = por %p960, %p961
      %p963 = scmp.ne.s32.totalorder %s951, %s952
      %p964 = scmp.eq.s32.totalorder %s123, 1
      %p965 = por %p963, %p964
      %p967 = scmp.ne.s32.totalorder %s952, %s966
      %p968 = scmp.eq.s32.totalorder %s123, 0
      %p969 = por %p967, %p968
      %s971 = sadd.s32 %s970, 1
      %p974 = scmp.eq.s32.totalorder %s117, 1
      %p975 = scmp.ne.s32.totalorder %s970, %s972
      %p976 = scmp.eq.s32.totalorder %s117, 0
      %p977 = por %p975, %p976
      %p978 = scmp.ne.s32.totalorder %s970, %s972
      %p979 = scmp.eq.s32.totalorder %s122, 1
      %p980 = por %p978, %p979
      %p981 = scmp.ne.s32.totalorder %s972, %s973
      %p982 = scmp.eq.s32.totalorder %s122, 0
      %p983 = por %p981, %p982
      %p984 = scmp.ne.s32.totalorder %s972, %s973
      %p985 = scmp.eq.s32.totalorder %s123, 1
      %p986 = por %p984, %p985
      %p988 = scmp.ne.s32.totalorder %s973, %s987
      %p989 = scmp.eq.s32.totalorder %s123, 0
      %p990 = por %p988, %p989
      %s992 = sadd.s32 %s991, 1
      %p995 = scmp.eq.s32.totalorder %s117, 1
      %p996 = scmp.ne.s32.totalorder %s991, %s993
      %p997 = scmp.eq.s32.totalorder %s117, 0
      %p998 = por %p996, %p997
      %p999 = scmp.ne.s32.totalorder %s991, %s993
      %p1000 = scmp.eq.s32.totalorder %s122, 1
      %p1001 = por %p999, %p1000
      %p1002 = scmp.ne.s32.totalorder %s993, %s994
      %p1003 = scmp.eq.s32.totalorder %s122, 0
      %p1004 = por %p1002, %p1003
      %p1005 = scmp.ne.s32.totalorder %s993, %s994
      %p1006 = scmp.eq.s32.totalorder %s123, 1
      %p1007 = por %p1005, %p1006
      %p1009 = scmp.ne.s32.totalorder %s994, %s1008
      %p1010 = scmp.eq.s32.totalorder %s123, 0
      %p1011 = por %p1009, %p1010
      %s1013 = sadd.s32 %s1012, 1
      %p1016 = scmp.eq.s32.totalorder %s117, 1
      %p1017 = scmp.ne.s32.totalorder %s1012, %s1014
      %p1018 = scmp.eq.s32.totalorder %s117, 0
      %p1019 = por %p1017, %p1018
      %p1020 = scmp.ne.s32.totalorder %s1012, %s1014
      %p1021 = scmp.eq.s32.totalorder %s122, 1
      %p1022 = por %p1020, %p1021
      %p1023 = scmp.ne.s32.totalorder %s1014, %s1015
      %p1024 = scmp.eq.s32.totalorder %s122, 0
      %p1025 = por %p1023, %p1024
      %p1026 = scmp.ne.s32.totalorder %s1014, %s1015
      %p1027 = scmp.eq.s32.totalorder %s123, 1
      %p1028 = por %p1026, %p1027
      %p1030 = scmp.ne.s32.totalorder %s1015, %s1029
      %p1031 = scmp.eq.s32.totalorder %s123, 0
      %p1032 = por %p1030, %p1031
      %s1034 = sadd.s32 %s1033, 1
      %p1037 = scmp.eq.s32.totalorder %s117, 1
      %p1038 = scmp.ne.s32.totalorder %s1033, %s1035
      %p1039 = scmp.eq.s32.totalorder %s117, 0
      %p1040 = por %p1038, %p1039
      %p1041 = scmp.ne.s32.totalorder %s1033, %s1035
      %p1042 = scmp.eq.s32.totalorder %s122, 1
      %p1043 = por %p1041, %p1042
      %p1044 = scmp.ne.s32.totalorder %s1035, %s1036
      %p1045 = scmp.eq.s32.totalorder %s122, 0
      %p1046 = por %p1044, %p1045
      %p1047 = scmp.ne.s32.totalorder %s1035, %s1036
      %p1048 = scmp.eq.s32.totalorder %s123, 1
      %p1049 = por %p1047, %p1048
      %p1051 = scmp.ne.s32.totalorder %s1036, %s1050
      %p1052 = scmp.eq.s32.totalorder %s123, 0
      %p1053 = por %p1051, %p1052
      %s1055 = sadd.s32 %s1054, 1
      %p1058 = scmp.eq.s32.totalorder %s117, 1
      %p1059 = scmp.ne.s32.totalorder %s1054, %s1056
      %p1060 = scmp.eq.s32.totalorder %s117, 0
      %p1061 = por %p1059, %p1060
      %p1062 = scmp.ne.s32.totalorder %s1054, %s1056
      %p1063 = scmp.eq.s32.totalorder %s122, 1
      %p1064 = por %p1062, %p1063
      %p1065 = scmp.ne.s32.totalorder %s1056, %s1057
      %p1066 = scmp.eq.s32.totalorder %s122, 0
      %p1067 = por %p1065, %p1066
      %p1068 = scmp.ne.s32.totalorder %s1056, %s1057
      %p1069 = scmp.eq.s32.totalorder %s123, 1
      %p1070 = por %p1068, %p1069
      %p1072 = scmp.ne.s32.totalorder %s1057, %s1071
      %p1073 = scmp.eq.s32.totalorder %s123, 0
      %p1074 = por %p1072, %p1073
      %s1076 = sadd.s32 %s1075, 1
      %p1079 = scmp.eq.s32.totalorder %s117, 1
      %p1080 = scmp.ne.s32.totalorder %s1075, %s1077
      %p1081 = scmp.eq.s32.totalorder %s117, 0
      %p1082 = por %p1080, %p1081
      %p1083 = scmp.ne.s32.totalorder %s1075, %s1077
      %p1084 = scmp.eq.s32.totalorder %s122, 1
      %p1085 = por %p1083, %p1084
      %p1086 = scmp.ne.s32.totalorder %s1077, %s1078
      %p1087 = scmp.eq.s32.totalorder %s122, 0
      %p1088 = por %p1086, %p1087
      %p1089 = scmp.ne.s32.totalorder %s1077, %s1078
      %p1090 = scmp.eq.s32.totalorder %s123, 1
      %p1091 = por %p1089, %p1090
      %p1093 = scmp.ne.s32.totalorder %s1078, %s1092
      %p1094 = scmp.eq.s32.totalorder %s123, 0
      %p1095 = por %p1093, %p1094
      %s1096 = ssub.s32 %s117, %s124
      %p1097 = scmp.eq.s32.totalorder %s1096, 0
      %s1099 = sadd.s32 %s1098, 1
      %s1100 = scalar_select %p1097, %s1098, %s1099
      %p1103 = pneg %p1097
      %p1104 = scmp.eq.s32.totalorder %s117, 1
      %p1105 = por %p1103, %p1104
      %p1106 = scmp.ne.s32.totalorder %s1098, %s1101
      %p1107 = scmp.eq.s32.totalorder %s117, 0
      %p1108 = por %p1106, %p1107
      %p1109 = scmp.ne.s32.totalorder %s1098, %s1101
      %p1110 = scmp.eq.s32.totalorder %s122, 1
      %p1111 = por %p1109, %p1110
      %p1112 = scmp.ne.s32.totalorder %s1101, %s1102
      %p1113 = scmp.eq.s32.totalorder %s122, 0
      %p1114 = por %p1112, %p1113
      %p1115 = scmp.ne.s32.totalorder %s1101, %s1102
      %p1116 = scmp.eq.s32.totalorder %s123, 1
      %p1117 = por %p1115, %p1116
      %p1119 = scmp.ne.s32.totalorder %s1102, %s1118
      %p1120 = scmp.eq.s32.totalorder %s123, 0
      %p1121 = por %p1119, %p1120
      %p1122 = scmp.le.s32.totalorder 1, %s117
      %p1123 = scmp.lt.s32.totalorder %s117, 3
      %p1124 = pnand %p1122, %p1123
      %p1125 = pneg %p1124
      // Predicated region
      $region9: #{fwd.1} parent=5 // pred_check
        _
      $region10: #{fwd.1} parent=5 // pred_check_branch
        %1127 = sbr.rel (%p1124) target = $region12
      $region11: #{fwd.1} parent=5 // pred_region
        %s1128 = ssub.s32 %s117, 1
        // Predicated region
        $region13: #{fwd.1} parent=11 // pred_check
          %p1129 = pneg %p138
        $region14: #{fwd.1} parent=11 // pred_check_branch
          %1131 = sbr.rel (%p1129) target = $region16
        $region15: #{fwd.1} parent=11 // pred_region
          %s1133 = ssub.s32 32, 32
          %1134 = vsyncadd [#allocation4], %s1133
          %s1136 = sshll.u32 %s1, 4
          %s1137 = int_to_ptr.vmem [resolvable:$true] %s1136
          %1139 = dma.vmem_to_smem %s1137, 32, [#allocation2], [#allocation4]
        $region16: #{fwd.1} parent=11 // pred_fallthru
          _
        // Predicated region
        $region17: #{fwd.1} parent=11 // pred_check
          %p1140 = pneg %p185
        $region18: #{fwd.1} parent=11 // pred_check_branch
          %1142 = sbr.rel (%p1140) target = $region20
        $region19: #{fwd.1} parent=11 // pred_region
          %s1144 = ssub.s32 3072, 3072
          %1145 = vsyncadd [#allocation3], %s1144
          %s1146 = sshll.u32 [#allocation5], 4
          %s1147 = int_to_ptr.vmem [resolvable:$true] %s1146
          %1152 = dma.hbm_to_vmem [thread:$0]  %s5, 3072, %s1147, [#allocation3], 128, 128, 8
        $region20: #{fwd.1} parent=11 // pred_fallthru
          _
        // Predicated region
        $region21: #{fwd.1} parent=11 // pred_check
          %p1153 = pneg %p206
        $region22: #{fwd.1} parent=11 // pred_check_branch
          %1155 = sbr.rel (%p1153) target = $region24
        $region23: #{fwd.1} parent=11 // pred_region
          %s1157 = ssub.s32 16, 16
          %1158 = vsyncadd [#allocation7], %s1157
          %s1160 = sshll.u32 [#allocation6], 4
          %s1161 = int_to_ptr.vmem [resolvable:$true] %s1160
          %1163 = dma.hbm_to_vmem [thread:$0]  %s7, 16, %s1161, [#allocation7]
        $region24: #{fwd.1} parent=11 // pred_fallthru
          _
        // Predicated region
        $region25: #{fwd.1} parent=11 // pred_check
          %p1164 = pneg %p227
        $region26: #{fwd.1} parent=11 // pred_check_branch
          %1166 = sbr.rel (%p1164) target = $region28
        $region27: #{fwd.1} parent=11 // pred_region
          %s1168 = ssub.s32 6144, 6144
          %1169 = vsyncadd [#allocation7], %s1168
          %s1170 = sshll.u32 [#allocation8], 4
          %s1171 = int_to_ptr.vmem [resolvable:$true] %s1170
          %1176 = dma.hbm_to_vmem [thread:$0]  %s9, 6144, %s1171, [#allocation7], 128, 128, 8
        $region28: #{fwd.1} parent=11 // pred_fallthru
          _
        // Predicated region
        $region29: #{fwd.1} parent=11 // pred_check
          %p1177 = pneg %p248
        $region30: #{fwd.1} parent=11 // pred_check_branch
          %1179 = sbr.rel (%p1177) target = $region32
        $region31: #{fwd.1} parent=11 // pred_region
          %s1181 = ssub.s32 16, 16
          %1182 = vsyncadd [#allocation10], %s1181
          %s1184 = sshll.u32 [#allocation9], 4
          %s1185 = int_to_ptr.vmem [resolvable:$true] %s1184
          %1187 = dma.hbm_to_vmem [thread:$0]  %s11, 16, %s1185, [#allocation10]
        $region32: #{fwd.1} parent=11 // pred_fallthru
          _
        // Predicated region
        $region33: #{fwd.1} parent=11 // pred_check
          %p1188 = pneg %p269
        $region34: #{fwd.1} parent=11 // pred_check_branch
          %1190 = sbr.rel (%p1188) target = $region36
        $region35: #{fwd.1} parent=11 // pred_region
          %s1192 = ssub.s32 1024, 1024
          %1193 = vsyncadd [#allocation10], %s1192
          %s1194 = sshll.u32 [#allocation11], 4
          %s1195 = int_to_ptr.vmem [resolvable:$true] %s1194
          %1200 = dma.hbm_to_vmem [thread:$0]  %s13, 1024, %s1195, [#allocation10], 128, 128, 8
        $region36: #{fwd.1} parent=11 // pred_fallthru
          _
        // Predicated region
        $region37: #{fwd.1} parent=11 // pred_check
          %p1201 = pneg %p290
        $region38: #{fwd.1} parent=11 // pred_check_branch
          %1203 = sbr.rel (%p1201) target = $region40
        $region39: #{fwd.1} parent=11 // pred_region
          %s1205 = ssub.s32 16, 16
          %1206 = vsyncadd [#allocation13], %s1205
          %s1208 = sshll.u32 [#allocation12], 4
          %s1209 = int_to_ptr.vmem [resolvable:$true] %s1208
          %1211 = dma.hbm_to_vmem [thread:$0]  %s15, 16, %s1209, [#allocation13]
        $region40: #{fwd.1} parent=11 // pred_fallthru
          _
        // Predicated region
        $region41: #{fwd.1} parent=11 // pred_check
          %p1212 = pneg %p311
        $region42: #{fwd.1} parent=11 // pred_check_branch
          %1214 = sbr.rel (%p1212) target = $region44
        $region43: #{fwd.1} parent=11 // pred_region
          %s1216 = ssub.s32 2048, 2048
          %1217 = vsyncadd [#allocation13], %s1216
          %s1218 = sshll.u32 [#allocation14], 4
          %s1219 = int_to_ptr.vmem [resolvable:$true] %s1218
          %1224 = dma.hbm_to_vmem [thread:$0]  %s17, 2048, %s1219, [#allocation13], 128, 128, 8
        $region44: #{fwd.1} parent=11 // pred_fallthru
          _
        // Predicated region
        $region45: #{fwd.1} parent=11 // pred_check
          %p1225 = pneg %p332
        $region46: #{fwd.1} parent=11 // pred_check_branch
          %1227 = sbr.rel (%p1225) target = $region48
        $region47: #{fwd.1} parent=11 // pred_region
          %s1229 = ssub.s32 128, 128
          %1230 = vsyncadd [#allocation16], %s1229
          %s1232 = sshll.u32 [#allocation15], 4
          %s1233 = int_to_ptr.vmem [resolvable:$true] %s1232
          %1235 = dma.hbm_to_vmem [thread:$0]  %s19, 128, %s1233, [#allocation16]
        $region48: #{fwd.1} parent=11 // pred_fallthru
          _
        // Predicated region
        $region49: #{fwd.1} parent=11 // pred_check
          %p1236 = pneg %p353
        $region50: #{fwd.1} parent=11 // pred_check_branch
          %1238 = sbr.rel (%p1236) target = $region52
        $region51: #{fwd.1} parent=11 // pred_region
          %s1240 = ssub.s32 16, 16
          %1241 = vsyncadd [#allocation16], %s1240
          %s1243 = sshll.u32 [#allocation17], 4
          %s1244 = int_to_ptr.vmem [resolvable:$true] %s1243
          %1246 = dma.hbm_to_vmem [thread:$0]  %s21, 16, %s1244, [#allocation16]
        $region52: #{fwd.1} parent=11 // pred_fallthru
          _
        // Predicated region
        $region53: #{fwd.1} parent=11 // pred_check
          %p1247 = pneg %p374
        $region54: #{fwd.1} parent=11 // pred_check_branch
          %1249 = sbr.rel (%p1247) target = $region56
        $region55: #{fwd.1} parent=11 // pred_region
          %s1251 = ssub.s32 16, 16
          %1252 = vsyncadd [#allocation19], %s1251
          %s1254 = sshll.u32 [#allocation18], 4
          %s1255 = int_to_ptr.vmem [resolvable:$true] %s1254
          %1257 = dma.hbm_to_vmem [thread:$0]  %s23, 16, %s1255, [#allocation19]
        $region56: #{fwd.1} parent=11 // pred_fallthru
          _
        // Predicated region
        $region57: #{fwd.1} parent=11 // pred_check
          %p1258 = pneg %p395
        $region58: #{fwd.1} parent=11 // pred_check_branch
          %1260 = sbr.rel (%p1258) target = $region60
        $region59: #{fwd.1} parent=11 // pred_region
          %s1262 = ssub.s32 128, 128
          %1263 = vsyncadd [#allocation19], %s1262
          %s1265 = sshll.u32 [#allocation20], 4
          %s1266 = int_to_ptr.vmem [resolvable:$true] %s1265
          %1268 = dma.hbm_to_vmem [thread:$0]  %s25, 128, %s1266, [#allocation19]
        $region60: #{fwd.1} parent=11 // pred_fallthru
          _
        // Predicated region
        $region61: #{fwd.1} parent=11 // pred_check
          %p1269 = pneg %p416
        $region62: #{fwd.1} parent=11 // pred_check_branch
          %1271 = sbr.rel (%p1269) target = $region64
        $region63: #{fwd.1} parent=11 // pred_region
          %s1273 = ssub.s32 16, 16
          %1274 = vsyncadd [#allocation22], %s1273
          %s1276 = sshll.u32 [#allocation21], 4
          %s1277 = int_to_ptr.vmem [resolvable:$true] %s1276
          %1279 = dma.hbm_to_vmem [thread:$0]  %s27, 16, %s1277, [#allocation22]
        $region64: #{fwd.1} parent=11 // pred_fallthru
          _
        // Predicated region
        $region65: #{fwd.1} parent=11 // pred_check
          %p1280 = pneg %p437
        $region66: #{fwd.1} parent=11 // pred_check_branch
          %1282 = sbr.rel (%p1280) target = $region68
        $region67: #{fwd.1} parent=11 // pred_region
          %s1284 = ssub.s32 128, 128
          %1285 = vsyncadd [#allocation22], %s1284
          %s1287 = sshll.u32 [#allocation23], 4
          %s1288 = int_to_ptr.vmem [resolvable:$true] %s1287
          %1290 = dma.hbm_to_vmem [thread:$0]  %s29, 128, %s1288, [#allocation22]
        $region68: #{fwd.1} parent=11 // pred_fallthru
          _
        // Predicated region
        $region69: #{fwd.1} parent=11 // pred_check
          %p1291 = pneg %p458
        $region70: #{fwd.1} parent=11 // pred_check_branch
          %1293 = sbr.rel (%p1291) target = $region72
        $region71: #{fwd.1} parent=11 // pred_region
          %s1295 = ssub.s32 6144, 6144
          %1296 = vsyncadd [#allocation25], %s1295
          %s1297 = sshll.u32 [#allocation24], 4
          %s1298 = int_to_ptr.vmem [resolvable:$true] %s1297
          %1303 = dma.hbm_to_vmem [thread:$0]  %s31, 6144, %s1298, [#allocation25], 128, 128, 8
        $region72: #{fwd.1} parent=11 // pred_fallthru
          _
        // Predicated region
        $region73: #{fwd.1} parent=11 // pred_check
          %p1304 = pneg %p479
        $region74: #{fwd.1} parent=11 // pred_check_branch
          %1306 = sbr.rel (%p1304) target = $region76
        $region75: #{fwd.1} parent=11 // pred_region
          %s1308 = ssub.s32 16, 16
          %1309 = vsyncadd [#allocation25], %s1308
          %s1311 = sshll.u32 [#allocation26], 4
          %s1312 = int_to_ptr.vmem [resolvable:$true] %s1311
          %1314 = dma.hbm_to_vmem [thread:$0]  %s33, 16, %s1312, [#allocation25]
        $region76: #{fwd.1} parent=11 // pred_fallthru
          _
        // Predicated region
        $region77: #{fwd.1} parent=11 // pred_check
          %p1315 = pneg %p500
        $region78: #{fwd.1} parent=11 // pred_check_branch
          %1317 = sbr.rel (%p1315) target = $region80
        $region79: #{fwd.1} parent=11 // pred_region
          %s1319 = ssub.s32 6144, 6144
          %1320 = vsyncadd [#allocation28], %s1319
          %s1321 = sshll.u32 [#allocation27], 4
          %s1322 = int_to_ptr.vmem [resolvable:$true] %s1321
          %1327 = dma.hbm_to_vmem [thread:$0]  %s35, 6144, %s1322, [#allocation28], 128, 128, 8
        $region80: #{fwd.1} parent=11 // pred_fallthru
          _
        // Predicated region
        $region81: #{fwd.1} parent=11 // pred_check
          %p1328 = pneg %p521
        $region82: #{fwd.1} parent=11 // pred_check_branch
          %1330 = sbr.rel (%p1328) target = $region84
        $region83: #{fwd.1} parent=11 // pred_region
          %s1332 = ssub.s32 16, 16
          %1333 = vsyncadd [#allocation28], %s1332
          %s1335 = sshll.u32 [#allocation29], 4
          %s1336 = int_to_ptr.vmem [resolvable:$true] %s1335
          %1338 = dma.hbm_to_vmem [thread:$0]  %s37, 16, %s1336, [#allocation28]
        $region84: #{fwd.1} parent=11 // pred_fallthru
          _
        // Predicated region
        $region85: #{fwd.1} parent=11 // pred_check
          %p1339 = pneg %p542
        $region86: #{fwd.1} parent=11 // pred_check_branch
          %1341 = sbr.rel (%p1339) target = $region88
        $region87: #{fwd.1} parent=11 // pred_region
          %s1343 = ssub.s32 6144, 6144
          %1344 = vsyncadd [#allocation31], %s1343
          %s1345 = sshll.u32 [#allocation30], 4
          %s1346 = int_to_ptr.vmem [resolvable:$true] %s1345
          %1351 = dma.hbm_to_vmem [thread:$0]  %s39, 6144, %s1346, [#allocation31], 128, 128, 8
        $region88: #{fwd.1} parent=11 // pred_fallthru
          _
        // Predicated region
        $region89: #{fwd.1} parent=11 // pred_check
          %p1352 = pneg %p563
        $region90: #{fwd.1} parent=11 // pred_check_branch
          %1354 = sbr.rel (%p1352) target = $region92
        $region91: #{fwd.1} parent=11 // pred_region
          %s1356 = ssub.s32 16, 16
          %1357 = vsyncadd [#allocation31], %s1356
          %s1359 = sshll.u32 [#allocation32], 4
          %s1360 = int_to_ptr.vmem [resolvable:$true] %s1359
          %1362 = dma.hbm_to_vmem [thread:$0]  %s41, 16, %s1360, [#allocation31]
        $region92: #{fwd.1} parent=11 // pred_fallthru
          _
        // Predicated region
        $region93: #{fwd.1} parent=11 // pred_check
          %p1363 = pneg %p584
        $region94: #{fwd.1} parent=11 // pred_check_branch
          %1365 = sbr.rel (%p1363) target = $region96
        $region95: #{fwd.1} parent=11 // pred_region
          %s1367 = ssub.s32 6144, 6144
          %1368 = vsyncadd [#allocation34], %s1367
          %s1369 = sshll.u32 [#allocation33], 4
          %s1370 = int_to_ptr.vmem [resolvable:$true] %s1369
          %1375 = dma.hbm_to_vmem [thread:$0]  %s43, 6144, %s1370, [#allocation34], 128, 128, 8
        $region96: #{fwd.1} parent=11 // pred_fallthru
          _
        // Predicated region
        $region97: #{fwd.1} parent=11 // pred_check
          %p1376 = pneg %p605
        $region98: #{fwd.1} parent=11 // pred_check_branch
          %1378 = sbr.rel (%p1376) target = $region100
        $region99: #{fwd.1} parent=11 // pred_region
          %s1380 = ssub.s32 16, 16
          %1381 = vsyncadd [#allocation34], %s1380
          %s1383 = sshll.u32 [#allocation35], 4
          %s1384 = int_to_ptr.vmem [resolvable:$true] %s1383
          %1386 = dma.hbm_to_vmem [thread:$0]  %s45, 16, %s1384, [#allocation34]
        $region100: #{fwd.1} parent=11 // pred_fallthru
          _
        // Predicated region
        $region101: #{fwd.1} parent=11 // pred_check
          %p1387 = pneg %p626
        $region102: #{fwd.1} parent=11 // pred_check_branch
          %1389 = sbr.rel (%p1387) target = $region104
        $region103: #{fwd.1} parent=11 // pred_region
          %s1391 = ssub.s32 6144, 6144
          %1392 = vsyncadd [#allocation37], %s1391
          %s1393 = sshll.u32 [#allocation36], 4
          %s1394 = int_to_ptr.vmem [resolvable:$true] %s1393
          %1399 = dma.hbm_to_vmem [thread:$0]  %s47, 6144, %s1394, [#allocation37], 128, 128, 8
        $region104: #{fwd.1} parent=11 // pred_fallthru
          _
        // Predicated region
        $region105: #{fwd.1} parent=11 // pred_check
          %p1400 = pneg %p647
        $region106: #{fwd.1} parent=11 // pred_check_branch
          %1402 = sbr.rel (%p1400) target = $region108
        $region107: #{fwd.1} parent=11 // pred_region
          %s1404 = ssub.s32 16, 16
          %1405 = vsyncadd [#allocation37], %s1404
          %s1407 = sshll.u32 [#allocation38], 4
          %s1408 = int_to_ptr.vmem [resolvable:$true] %s1407
          %1410 = dma.hbm_to_vmem [thread:$0]  %s49, 16, %s1408, [#allocation37]
        $region108: #{fwd.1} parent=11 // pred_fallthru
          _
        // Predicated region
        $region109: #{fwd.1} parent=11 // pred_check
          %p1411 = pneg %p668
        $region110: #{fwd.1} parent=11 // pred_check_branch
          %1413 = sbr.rel (%p1411) target = $region112
        $region111: #{fwd.1} parent=11 // pred_region
          %s1415 = ssub.s32 6144, 6144
          %1416 = vsyncadd [#allocation40], %s1415
          %s1417 = sshll.u32 [#allocation39], 4
          %s1418 = int_to_ptr.vmem [resolvable:$true] %s1417
          %1423 = dma.hbm_to_vmem [thread:$0]  %s51, 6144, %s1418, [#allocation40], 128, 128, 8
        $region112: #{fwd.1} parent=11 // pred_fallthru
          _
        // Predicated region
        $region113: #{fwd.1} parent=11 // pred_check
          %p1424 = pneg %p689
        $region114: #{fwd.1} parent=11 // pred_check_branch
          %1426 = sbr.rel (%p1424) target = $region116
        $region115: #{fwd.1} parent=11 // pred_region
          %s1428 = ssub.s32 16, 16
          %1429 = vsyncadd [#allocation40], %s1428
          %s1431 = sshll.u32 [#allocation41], 4
          %s1432 = int_to_ptr.vmem [resolvable:$true] %s1431
          %1434 = dma.hbm_to_vmem [thread:$0]  %s53, 16, %s1432, [#allocation40]
        $region116: #{fwd.1} parent=11 // pred_fallthru
          _
        // Predicated region
        $region117: #{fwd.1} parent=11 // pred_check
          %p1435 = pneg %p710
        $region118: #{fwd.1} parent=11 // pred_check_branch
          %1437 = sbr.rel (%p1435) target = $region120
        $region119: #{fwd.1} parent=11 // pred_region
          %s1439 = ssub.s32 6144, 6144
          %1440 = vsyncadd [#allocation43], %s1439
          %s1441 = sshll.u32 [#allocation42], 4
          %s1442 = int_to_ptr.vmem [resolvable:$true] %s1441
          %1447 = dma.hbm_to_vmem [thread:$0]  %s55, 6144, %s1442, [#allocation43], 128, 128, 8
        $region120: #{fwd.1} parent=11 // pred_fallthru
          _
        // Predicated region
        $region121: #{fwd.1} parent=11 // pred_check
          %p1448 = pneg %p731
        $region122: #{fwd.1} parent=11 // pred_check_branch
          %1450 = sbr.rel (%p1448) target = $region124
        $region123: #{fwd.1} parent=11 // pred_region
          %s1452 = ssub.s32 16, 16
          %1453 = vsyncadd [#allocation43], %s1452
          %s1455 = sshll.u32 [#allocation44], 4
          %s1456 = int_to_ptr.vmem [resolvable:$true] %s1455
          %1458 = dma.hbm_to_vmem [thread:$0]  %s57, 16, %s1456, [#allocation43]
        $region124: #{fwd.1} parent=11 // pred_fallthru
          _
        // Predicated region
        $region125: #{fwd.1} parent=11 // pred_check
          %p1459 = pneg %p752
        $region126: #{fwd.1} parent=11 // pred_check_branch
          %1461 = sbr.rel (%p1459) target = $region128
        $region127: #{fwd.1} parent=11 // pred_region
          %s1463 = ssub.s32 6144, 6144
          %1464 = vsyncadd [#allocation46], %s1463
          %s1465 = sshll.u32 [#allocation45], 4
          %s1466 = int_to_ptr.vmem [resolvable:$true] %s1465
          %1471 = dma.hbm_to_vmem [thread:$0]  %s59, 6144, %s1466, [#allocation46], 128, 128, 8
        $region128: #{fwd.1} parent=11 // pred_fallthru
          _
        // Predicated region
        $region129: #{fwd.1} parent=11 // pred_check
          %p1472 = pneg %p773
        $region130: #{fwd.1} parent=11 // pred_check_branch
          %1474 = sbr.rel (%p1472) target = $region132
        $region131: #{fwd.1} parent=11 // pred_region
          %s1476 = ssub.s32 16, 16
          %1477 = vsyncadd [#allocation46], %s1476
          %s1479 = sshll.u32 [#allocation47], 4
          %s1480 = int_to_ptr.vmem [resolvable:$true] %s1479
          %1482 = dma.hbm_to_vmem [thread:$0]  %s61, 16, %s1480, [#allocation46]
        $region132: #{fwd.1} parent=11 // pred_fallthru
          _
        // Predicated region
        $region133: #{fwd.1} parent=11 // pred_check
          %p1483 = pneg %p794
        $region134: #{fwd.1} parent=11 // pred_check_branch
          %1485 = sbr.rel (%p1483) target = $region136
        $region135: #{fwd.1} parent=11 // pred_region
          _
        $region136: #{fwd.1} parent=11 // pred_fallthru
          _
        // Predicated region
        $region137: #{fwd.1} parent=11 // pred_check
          %p1486 = pneg %p815
        $region138: #{fwd.1} parent=11 // pred_check_branch
          %1488 = sbr.rel (%p1486) target = $region140
        $region139: #{fwd.1} parent=11 // pred_region
          %s1490 = ssub.s32 16, 16
          %1491 = vsyncadd [#allocation49], %s1490
          %s1493 = sshll.u32 [#allocation48], 4
          %s1494 = int_to_ptr.vmem [resolvable:$true] %s1493
          %1496 = dma.hbm_to_vmem [thread:$0]  %s65, 16, %s1494, [#allocation49]
        $region140: #{fwd.1} parent=11 // pred_fallthru
          _
        // Predicated region
        $region141: #{fwd.1} parent=11 // pred_check
          %p1497 = pneg %p836
        $region142: #{fwd.1} parent=11 // pred_check_branch
          %1499 = sbr.rel (%p1497) target = $region144
        $region143: #{fwd.1} parent=11 // pred_region
          %s1501 = ssub.s32 3072, 3072
          %1502 = vsyncadd [#allocation49], %s1501
          %s1503 = sshll.u32 [#allocation50], 4
          %s1504 = int_to_ptr.vmem [resolvable:$true] %s1503
          %1509 = dma.hbm_to_vmem [thread:$0]  %s67, 3072, %s1504, [#allocation49], 128, 128, 8
        $region144: #{fwd.1} parent=11 // pred_fallthru
          _
        // Predicated region
        $region145: #{fwd.1} parent=11 // pred_check
          %p1510 = pneg %p857
        $region146: #{fwd.1} parent=11 // pred_check_branch
          %1512 = sbr.rel (%p1510) target = $region148
        $region147: #{fwd.1} parent=11 // pred_region
          _
        $region148: #{fwd.1} parent=11 // pred_fallthru
          _
        // Predicated region
        $region149: #{fwd.1} parent=11 // pred_check
          %p1513 = pneg %p878
        $region150: #{fwd.1} parent=11 // pred_check_branch
          %1515 = sbr.rel (%p1513) target = $region152
        $region151: #{fwd.1} parent=11 // pred_region
          _
        $region152: #{fwd.1} parent=11 // pred_fallthru
          _
        // Predicated region
        $region153: #{fwd.1} parent=11 // pred_check
          %p1516 = pneg %p899
        $region154: #{fwd.1} parent=11 // pred_check_branch
          %1518 = sbr.rel (%p1516) target = $region156
        $region155: #{fwd.1} parent=11 // pred_region
          _
        $region156: #{fwd.1} parent=11 // pred_fallthru
          _
        // Predicated region
        $region157: #{fwd.1} parent=11 // pred_check
          %p1519 = pneg %p920
        $region158: #{fwd.1} parent=11 // pred_check_branch
          %1521 = sbr.rel (%p1519) target = $region160
        $region159: #{fwd.1} parent=11 // pred_region
          %s1523 = ssub.s32 1024, 1024
          %1524 = vsyncadd [#allocation52], %s1523
          %s1525 = sshll.u32 [#allocation51], 4
          %s1526 = int_to_ptr.vmem [resolvable:$true] %s1525
          %1531 = dma.hbm_to_vmem [thread:$0]  %s75, 1024, %s1526, [#allocation52], 128, 128, 8
        $region160: #{fwd.1} parent=11 // pred_fallthru
          _
        // Predicated region
        $region161: #{fwd.1} parent=11 // pred_check
          %p1532 = pneg %p941
        $region162: #{fwd.1} parent=11 // pred_check_branch
          %1534 = sbr.rel (%p1532) target = $region164
        $region163: #{fwd.1} parent=11 // pred_region
          _
        $region164: #{fwd.1} parent=11 // pred_fallthru
          _
        // Predicated region
        $region165: #{fwd.1} parent=11 // pred_check
          %p1535 = pneg %p962
        $region166: #{fwd.1} parent=11 // pred_check_branch
          %1537 = sbr.rel (%p1535) target = $region168
        $region167: #{fwd.1} parent=11 // pred_region
          _
        $region168: #{fwd.1} parent=11 // pred_fallthru
          _
        // Predicated region
        $region169: #{fwd.1} parent=11 // pred_check
          %p1538 = pneg %p983
        $region170: #{fwd.1} parent=11 // pred_check_branch
          %1540 = sbr.rel (%p1538) target = $region172
        $region171: #{fwd.1} parent=11 // pred_region
          %s1542 = ssub.s32 128, 128
          %1543 = vsyncadd [#allocation52], %s1542
          %s1545 = sshll.u32 [#allocation53], 4
          %s1546 = int_to_ptr.vmem [resolvable:$true] %s1545
          %1548 = dma.hbm_to_vmem [thread:$0]  %s81, 128, %s1546, [#allocation52]
        $region172: #{fwd.1} parent=11 // pred_fallthru
          _
        // Predicated region
        $region173: #{fwd.1} parent=11 // pred_check
          %p1549 = pneg %p1004
        $region174: #{fwd.1} parent=11 // pred_check_branch
          %1551 = sbr.rel (%p1549) target = $region176
        $region175: #{fwd.1} parent=11 // pred_region
          _
        $region176: #{fwd.1} parent=11 // pred_fallthru
          _
        // Predicated region
        $region177: #{fwd.1} parent=11 // pred_check
          %p1552 = pneg %p1025
        $region178: #{fwd.1} parent=11 // pred_check_branch
          %1554 = sbr.rel (%p1552) target = $region180
        $region179: #{fwd.1} parent=11 // pred_region
          _
        $region180: #{fwd.1} parent=11 // pred_fallthru
          _
        // Predicated region
        $region181: #{fwd.1} parent=11 // pred_check
          %p1555 = pneg %p1046
        $region182: #{fwd.1} parent=11 // pred_check_branch
          %1557 = sbr.rel (%p1555) target = $region184
        $region183: #{fwd.1} parent=11 // pred_region
          _
        $region184: #{fwd.1} parent=11 // pred_fallthru
          _
        // Predicated region
        $region185: #{fwd.1} parent=11 // pred_check
          %p1558 = pneg %p1067
        $region186: #{fwd.1} parent=11 // pred_check_branch
          %1560 = sbr.rel (%p1558) target = $region188
        $region187: #{fwd.1} parent=11 // pred_region
          _
        $region188: #{fwd.1} parent=11 // pred_fallthru
          _
        // Predicated region
        $region189: #{fwd.1} parent=11 // pred_check
          %p1561 = pneg %p1088
        $region190: #{fwd.1} parent=11 // pred_check_branch
          %1563 = sbr.rel (%p1561) target = $region192
        $region191: #{fwd.1} parent=11 // pred_region
          _
        $region192: #{fwd.1} parent=11 // pred_fallthru
          _
      $region12: #{fwd.1} parent=5 // pred_fallthru
        _
      %p1564 = scmp.lt.s32.totalorder %s117, 2
      // Predicated region
      $region193: #{fwd.1} parent=5 // pred_check
        %p1565 = pneg %p1564
      $region194: #{fwd.1} parent=5 // pred_check_branch
        %1567 = sbr.rel (%p1565) target = $region196
      $region195: #{fwd.1} parent=5 // pred_region
        // Predicated region
        $region197: #{fwd.1} parent=195 // pred_check
          %p1568 = pneg %p158
        $region198: #{fwd.1} parent=195 // pred_check_branch
          %1570 = sbr.rel (%p1568) target = $region200
        $region199: #{fwd.1} parent=195 // pred_region
          %p1571 = scmp.lt.s32.totalorder %s117, 1
          %s1572 = scalar_select %p1571, %s117, 1
          %s1573 = smul.addr %s1572, 2
          %s1574 = smul.addr %s1573, 8
          %s1575 = scalar_lea.vmem %s3, %s1574
        $region200: #{fwd.1} parent=195 // pred_fallthru
          _
      $region196: #{fwd.1} parent=5 // pred_fallthru
        _
      %p1576 = scmp.le.s32.totalorder 1, %s117
      %p1577 = scmp.lt.s32.totalorder %s117, 3
      %p1578 = pnand %p1576, %p1577
      %p1579 = pneg %p1578
      // Predicated region
      $region201: #{fwd.1} parent=5 // pred_check
        _
      $region202: #{fwd.1} parent=5 // pred_check_branch
        %1581 = sbr.rel (%p1578) target = $region204
      $region203: #{fwd.1} parent=5 // pred_region
        %s1582 = ssub.s32 %s117, 1
        // Predicated region
        $region205: #{fwd.1} parent=203 // pred_check
          %p1583 = pneg %p138
        $region206: #{fwd.1} parent=203 // pred_check_branch
          %1585 = sbr.rel (%p1583) target = $region208
        $region207: #{fwd.1} parent=203 // pred_region
          %1586 = dma.done [#allocation4], 32
        $region208: #{fwd.1} parent=203 // pred_fallthru
          _
        // Predicated region
        $region209: #{fwd.1} parent=203 // pred_check
          %p1587 = pneg %p185
        $region210: #{fwd.1} parent=203 // pred_check_branch
          %1589 = sbr.rel (%p1587) target = $region212
        $region211: #{fwd.1} parent=203 // pred_region
          %1590 = dma.done [#allocation3], 3072
        $region212: #{fwd.1} parent=203 // pred_fallthru
          _
        // Predicated region
        $region213: #{fwd.1} parent=203 // pred_check
          %p1591 = pneg %p206
        $region214: #{fwd.1} parent=203 // pred_check_branch
          %1593 = sbr.rel (%p1591) target = $region216
        $region215: #{fwd.1} parent=203 // pred_region
          %1594 = dma.done [#allocation7], 16
        $region216: #{fwd.1} parent=203 // pred_fallthru
          _
        // Predicated region
        $region217: #{fwd.1} parent=203 // pred_check
          %p1595 = pneg %p227
        $region218: #{fwd.1} parent=203 // pred_check_branch
          %1597 = sbr.rel (%p1595) target = $region220
        $region219: #{fwd.1} parent=203 // pred_region
          %1598 = dma.done [#allocation7], 6144
        $region220: #{fwd.1} parent=203 // pred_fallthru
          _
        // Predicated region
        $region221: #{fwd.1} parent=203 // pred_check
          %p1599 = pneg %p248
        $region222: #{fwd.1} parent=203 // pred_check_branch
          %1601 = sbr.rel (%p1599) target = $region224
        $region223: #{fwd.1} parent=203 // pred_region
          %1602 = dma.done [#allocation10], 16
        $region224: #{fwd.1} parent=203 // pred_fallthru
          _
        // Predicated region
        $region225: #{fwd.1} parent=203 // pred_check
          %p1603 = pneg %p269
        $region226: #{fwd.1} parent=203 // pred_check_branch
          %1605 = sbr.rel (%p1603) target = $region228
        $region227: #{fwd.1} parent=203 // pred_region
          %1606 = dma.done [#allocation10], 1024
        $region228: #{fwd.1} parent=203 // pred_fallthru
          _
        // Predicated region
        $region229: #{fwd.1} parent=203 // pred_check
          %p1607 = pneg %p290
        $region230: #{fwd.1} parent=203 // pred_check_branch
          %1609 = sbr.rel (%p1607) target = $region232
        $region231: #{fwd.1} parent=203 // pred_region
          %1610 = dma.done [#allocation13], 16
        $region232: #{fwd.1} parent=203 // pred_fallthru
          _
        // Predicated region
        $region233: #{fwd.1} parent=203 // pred_check
          %p1611 = pneg %p311
        $region234: #{fwd.1} parent=203 // pred_check_branch
          %1613 = sbr.rel (%p1611) target = $region236
        $region235: #{fwd.1} parent=203 // pred_region
          %1614 = dma.done [#allocation13], 2048
        $region236: #{fwd.1} parent=203 // pred_fallthru
          _
        // Predicated region
        $region237: #{fwd.1} parent=203 // pred_check
          %p1615 = pneg %p332
        $region238: #{fwd.1} parent=203 // pred_check_branch
          %1617 = sbr.rel (%p1615) target = $region240
        $region239: #{fwd.1} parent=203 // pred_region
          %1618 = dma.done [#allocation16], 128
        $region240: #{fwd.1} parent=203 // pred_fallthru
          _
        // Predicated region
        $region241: #{fwd.1} parent=203 // pred_check
          %p1619 = pneg %p353
        $region242: #{fwd.1} parent=203 // pred_check_branch
          %1621 = sbr.rel (%p1619) target = $region244
        $region243: #{fwd.1} parent=203 // pred_region
          %1622 = dma.done [#allocation16], 16
        $region244: #{fwd.1} parent=203 // pred_fallthru
          _
        // Predicated region
        $region245: #{fwd.1} parent=203 // pred_check
          %p1623 = pneg %p374
        $region246: #{fwd.1} parent=203 // pred_check_branch
          %1625 = sbr.rel (%p1623) target = $region248
        $region247: #{fwd.1} parent=203 // pred_region
          %1626 = dma.done [#allocation19], 16
        $region248: #{fwd.1} parent=203 // pred_fallthru
          _
        // Predicated region
        $region249: #{fwd.1} parent=203 // pred_check
          %p1627 = pneg %p395
        $region250: #{fwd.1} parent=203 // pred_check_branch
          %1629 = sbr.rel (%p1627) target = $region252
        $region251: #{fwd.1} parent=203 // pred_region
          %1630 = dma.done [#allocation19], 128
        $region252: #{fwd.1} parent=203 // pred_fallthru
          _
        // Predicated region
        $region253: #{fwd.1} parent=203 // pred_check
          %p1631 = pneg %p416
        $region254: #{fwd.1} parent=203 // pred_check_branch
          %1633 = sbr.rel (%p1631) target = $region256
        $region255: #{fwd.1} parent=203 // pred_region
          %1634 = dma.done [#allocation22], 16
        $region256: #{fwd.1} parent=203 // pred_fallthru
          _
        // Predicated region
        $region257: #{fwd.1} parent=203 // pred_check
          %p1635 = pneg %p437
        $region258: #{fwd.1} parent=203 // pred_check_branch
          %1637 = sbr.rel (%p1635) target = $region260
        $region259: #{fwd.1} parent=203 // pred_region
          %1638 = dma.done [#allocation22], 128
        $region260: #{fwd.1} parent=203 // pred_fallthru
          _
        // Predicated region
        $region261: #{fwd.1} parent=203 // pred_check
          %p1639 = pneg %p458
        $region262: #{fwd.1} parent=203 // pred_check_branch
          %1641 = sbr.rel (%p1639) target = $region264
        $region263: #{fwd.1} parent=203 // pred_region
          %1642 = dma.done [#allocation25], 6144
        $region264: #{fwd.1} parent=203 // pred_fallthru
          _
        // Predicated region
        $region265: #{fwd.1} parent=203 // pred_check
          %p1643 = pneg %p479
        $region266: #{fwd.1} parent=203 // pred_check_branch
          %1645 = sbr.rel (%p1643) target = $region268
        $region267: #{fwd.1} parent=203 // pred_region
          %1646 = dma.done [#allocation25], 16
        $region268: #{fwd.1} parent=203 // pred_fallthru
          _
        // Predicated region
        $region269: #{fwd.1} parent=203 // pred_check
          %p1647 = pneg %p500
        $region270: #{fwd.1} parent=203 // pred_check_branch
          %1649 = sbr.rel (%p1647) target = $region272
        $region271: #{fwd.1} parent=203 // pred_region
          %1650 = dma.done [#allocation28], 6144
        $region272: #{fwd.1} parent=203 // pred_fallthru
          _
        // Predicated region
        $region273: #{fwd.1} parent=203 // pred_check
          %p1651 = pneg %p521
        $region274: #{fwd.1} parent=203 // pred_check_branch
          %1653 = sbr.rel (%p1651) target = $region276
        $region275: #{fwd.1} parent=203 // pred_region
          %1654 = dma.done [#allocation28], 16
        $region276: #{fwd.1} parent=203 // pred_fallthru
          _
        // Predicated region
        $region277: #{fwd.1} parent=203 // pred_check
          %p1655 = pneg %p542
        $region278: #{fwd.1} parent=203 // pred_check_branch
          %1657 = sbr.rel (%p1655) target = $region280
        $region279: #{fwd.1} parent=203 // pred_region
          %1658 = dma.done [#allocation31], 6144
        $region280: #{fwd.1} parent=203 // pred_fallthru
          _
        // Predicated region
        $region281: #{fwd.1} parent=203 // pred_check
          %p1659 = pneg %p563
        $region282: #{fwd.1} parent=203 // pred_check_branch
          %1661 = sbr.rel (%p1659) target = $region284
        $region283: #{fwd.1} parent=203 // pred_region
          %1662 = dma.done [#allocation31], 16
        $region284: #{fwd.1} parent=203 // pred_fallthru
          _
        // Predicated region
        $region285: #{fwd.1} parent=203 // pred_check
          %p1663 = pneg %p584
        $region286: #{fwd.1} parent=203 // pred_check_branch
          %1665 = sbr.rel (%p1663) target = $region288
        $region287: #{fwd.1} parent=203 // pred_region
          %1666 = dma.done [#allocation34], 6144
        $region288: #{fwd.1} parent=203 // pred_fallthru
          _
        // Predicated region
        $region289: #{fwd.1} parent=203 // pred_check
          %p1667 = pneg %p605
        $region290: #{fwd.1} parent=203 // pred_check_branch
          %1669 = sbr.rel (%p1667) target = $region292
        $region291: #{fwd.1} parent=203 // pred_region
          %1670 = dma.done [#allocation34], 16
        $region292: #{fwd.1} parent=203 // pred_fallthru
          _
        // Predicated region
        $region293: #{fwd.1} parent=203 // pred_check
          %p1671 = pneg %p626
        $region294: #{fwd.1} parent=203 // pred_check_branch
          %1673 = sbr.rel (%p1671) target = $region296
        $region295: #{fwd.1} parent=203 // pred_region
          %1674 = dma.done [#allocation37], 6144
        $region296: #{fwd.1} parent=203 // pred_fallthru
          _
        // Predicated region
        $region297: #{fwd.1} parent=203 // pred_check
          %p1675 = pneg %p647
        $region298: #{fwd.1} parent=203 // pred_check_branch
          %1677 = sbr.rel (%p1675) target = $region300
        $region299: #{fwd.1} parent=203 // pred_region
          %1678 = dma.done [#allocation37], 16
        $region300: #{fwd.1} parent=203 // pred_fallthru
          _
        // Predicated region
        $region301: #{fwd.1} parent=203 // pred_check
          %p1679 = pneg %p668
        $region302: #{fwd.1} parent=203 // pred_check_branch
          %1681 = sbr.rel (%p1679) target = $region304
        $region303: #{fwd.1} parent=203 // pred_region
          %1682 = dma.done [#allocation40], 6144
        $region304: #{fwd.1} parent=203 // pred_fallthru
          _
        // Predicated region
        $region305: #{fwd.1} parent=203 // pred_check
          %p1683 = pneg %p689
        $region306: #{fwd.1} parent=203 // pred_check_branch
          %1685 = sbr.rel (%p1683) target = $region308
        $region307: #{fwd.1} parent=203 // pred_region
          %1686 = dma.done [#allocation40], 16
        $region308: #{fwd.1} parent=203 // pred_fallthru
          _
        // Predicated region
        $region309: #{fwd.1} parent=203 // pred_check
          %p1687 = pneg %p710
        $region310: #{fwd.1} parent=203 // pred_check_branch
          %1689 = sbr.rel (%p1687) target = $region312
        $region311: #{fwd.1} parent=203 // pred_region
          %1690 = dma.done [#allocation43], 6144
        $region312: #{fwd.1} parent=203 // pred_fallthru
          _
        // Predicated region
        $region313: #{fwd.1} parent=203 // pred_check
          %p1691 = pneg %p731
        $region314: #{fwd.1} parent=203 // pred_check_branch
          %1693 = sbr.rel (%p1691) target = $region316
        $region315: #{fwd.1} parent=203 // pred_region
          %1694 = dma.done [#allocation43], 16
        $region316: #{fwd.1} parent=203 // pred_fallthru
          _
        // Predicated region
        $region317: #{fwd.1} parent=203 // pred_check
          %p1695 = pneg %p752
        $region318: #{fwd.1} parent=203 // pred_check_branch
          %1697 = sbr.rel (%p1695) target = $region320
        $region319: #{fwd.1} parent=203 // pred_region
          %1698 = dma.done [#allocation46], 6144
        $region320: #{fwd.1} parent=203 // pred_fallthru
          _
        // Predicated region
        $region321: #{fwd.1} parent=203 // pred_check
          %p1699 = pneg %p773
        $region322: #{fwd.1} parent=203 // pred_check_branch
          %1701 = sbr.rel (%p1699) target = $region324
        $region323: #{fwd.1} parent=203 // pred_region
          %1702 = dma.done [#allocation46], 16
        $region324: #{fwd.1} parent=203 // pred_fallthru
          _
        // Predicated region
        $region325: #{fwd.1} parent=203 // pred_check
          %p1703 = pneg %p815
        $region326: #{fwd.1} parent=203 // pred_check_branch
          %1705 = sbr.rel (%p1703) target = $region328
        $region327: #{fwd.1} parent=203 // pred_region
          %1706 = dma.done [#allocation49], 16
        $region328: #{fwd.1} parent=203 // pred_fallthru
          _
        // Predicated region
        $region329: #{fwd.1} parent=203 // pred_check
          %p1707 = pneg %p836
        $region330: #{fwd.1} parent=203 // pred_check_branch
          %1709 = sbr.rel (%p1707) target = $region332
        $region331: #{fwd.1} parent=203 // pred_region
          %1710 = dma.done [#allocation49], 3072
        $region332: #{fwd.1} parent=203 // pred_fallthru
          _
        // Predicated region
        $region333: #{fwd.1} parent=203 // pred_check
          %p1711 = pneg %p920
        $region334: #{fwd.1} parent=203 // pred_check_branch
          %1713 = sbr.rel (%p1711) target = $region336
        $region335: #{fwd.1} parent=203 // pred_region
          %1714 = dma.done [#allocation52], 1024
        $region336: #{fwd.1} parent=203 // pred_fallthru
          _
        // Predicated region
        $region337: #{fwd.1} parent=203 // pred_check
          %p1715 = pneg %p983
        $region338: #{fwd.1} parent=203 // pred_check_branch
          %1717 = sbr.rel (%p1715) target = $region340
        $region339: #{fwd.1} parent=203 // pred_region
          %1718 = dma.done [#allocation52], 128
        $region340: #{fwd.1} parent=203 // pred_fallthru
          _
        %1719 = sfence
        %p1720 = pneg %p138
        %p1721 = pneg %p135
        %p1722 = scmp.lt.s32.totalorder %s122, 1
        %s1723 = scalar_select %p1722, %s122, 1
        %s1724 = smul.addr %s1723, 2
        %s1725 = smul.addr %s1724, 8
        %s1726 = scalar_lea.vmem %s3, %s1725
        %p1727 = pneg %p164
        %p1728 = pneg %p161
        %p1729 = pneg %p185
        %p1730 = pneg %p182
        %p1731 = pneg %p206
        %p1732 = pneg %p203
        %p1733 = pneg %p227
        %p1734 = pneg %p224
        %p1735 = pneg %p248
        %p1736 = pneg %p245
        %p1737 = pneg %p269
        %p1738 = pneg %p266
        %p1739 = pneg %p290
        %p1740 = pneg %p287
        %p1741 = pneg %p311
        %p1742 = pneg %p308
        %p1743 = pneg %p332
        %p1744 = pneg %p329
        %p1745 = pneg %p353
        %p1746 = pneg %p350
        %p1747 = pneg %p374
        %p1748 = pneg %p371
        %p1749 = pneg %p395
        %p1750 = pneg %p392
        %p1751 = pneg %p416
        %p1752 = pneg %p413
        %p1753 = pneg %p437
        %p1754 = pneg %p434
        %p1755 = pneg %p458
        %p1756 = pneg %p455
        %p1757 = pneg %p479
        %p1758 = pneg %p476
        %p1759 = pneg %p500
        %p1760 = pneg %p497
        %p1761 = pneg %p521
        %p1762 = pneg %p518
        %p1763 = pneg %p542
        %p1764 = pneg %p539
        %p1765 = pneg %p563
        %p1766 = pneg %p560
        %p1767 = pneg %p584
        %p1768 = pneg %p581
        %p1769 = pneg %p605
        %p1770 = pneg %p602
        %p1771 = pneg %p626
        %p1772 = pneg %p623
        %p1773 = pneg %p647
        %p1774 = pneg %p644
        %p1775 = pneg %p668
        %p1776 = pneg %p665
        %p1777 = pneg %p689
        %p1778 = pneg %p686
        %p1779 = pneg %p710
        %p1780 = pneg %p707
        %p1781 = pneg %p731
        %p1782 = pneg %p728
        %p1783 = pneg %p752
        %p1784 = pneg %p749
        %p1785 = pneg %p773
        %p1786 = pneg %p770
        %p1787 = pneg %p794
        %p1788 = pneg %p791
        %p1789 = pneg %p815
        %p1790 = pneg %p812
        %p1791 = pneg %p836
        %p1792 = pneg %p833
        %p1793 = pneg %p857
        %p1794 = pneg %p854
        %p1795 = pneg %p878
        %p1796 = pneg %p875
        %p1797 = pneg %p899
        %p1798 = pneg %p896
        %p1799 = pneg %p920
        %p1800 = pneg %p917
        %p1801 = pneg %p941
        %p1802 = pneg %p938
        %p1803 = pneg %p962
        %p1804 = pneg %p959
        %p1805 = pneg %p983
        %p1806 = pneg %p980
        %p1807 = pneg %p1004
        %p1808 = pneg %p1001
        %p1809 = pneg %p1025
        %p1810 = pneg %p1022
        %p1811 = pneg %p1046
        %p1812 = pneg %p1043
        %p1813 = pneg %p1067
        %p1814 = pneg %p1064
        %p1815 = pneg %p1088
        %p1816 = pneg %p1085
        %p1817 = pneg %p1114
        %p1818 = pneg %p1111
        %p1819 = scmp.lt.s32.totalorder %s122, 1
        %s1820 = scalar_select %p1819, %s122, 1
        %s1821 = smul.addr %s1820, 8
        %s1822 = scalar_lea.vmem %s93, %s1821
        %p1823 = scmp.lt.s32.totalorder %s122, 1
        %s1824 = scalar_select %p1823, %s122, 1
        %s1825 = smul.addr %s1824, 2
        %s1826 = smul.addr %s1825, 8
        %s1827 = scalar_lea.vmem %s3, %s1826
        %p1828 = scmp.lt.s32.totalorder %s122, 1
        %s1829 = scalar_select %p1828, %s122, 1
        %s1830 = smul.addr %s1829, 8
        %s1831 = scalar_lea.vmem %s93, %s1830
        %s1832 = smul.u32 %s122, 128
        %s1833 = sld [smem:[#allocation2 + %s1832]]
        %v1834 = vld [vmem:[%s1827] sm:$0xff]
        %v1835 = vld [vmem:[%s1827 + $0x8] sm:$0xff]
        %v1836 = vld [vmem:[#allocation5] sm:$0xff]
        %v1837 = vld [vmem:[#allocation5 + $0x8] sm:$0xff]
        %v1838 = vld [vmem:[#allocation5 + $0x10] sm:$0xff]
        %v1839 = vld [vmem:[#allocation5 + $0x18] sm:$0xff]
        %v1840 = vld [vmem:[#allocation5 + $0x20] sm:$0xff]
        %v1841 = vld [vmem:[#allocation5 + $0x28] sm:$0xff]
        %v1842 = vld [vmem:[#allocation5 + $0x30] sm:$0xff]
        %v1843 = vld [vmem:[#allocation5 + $0x38] sm:$0xff]
        %v1844 = vld [vmem:[#allocation5 + $0x40] sm:$0xff]
        %v1845 = vld [vmem:[#allocation5 + $0x48] sm:$0xff]
        %v1846 = vld [vmem:[#allocation5 + $0x50] sm:$0xff]
        %v1847 = vld [vmem:[#allocation5 + $0x58] sm:$0xff]
        %v1848 = vld [vmem:[#allocation5 + $0x60] sm:$0xff]
        %v1849 = vld [vmem:[#allocation5 + $0x68] sm:$0xff]
        %v1850 = vld [vmem:[#allocation5 + $0x70] sm:$0xff]
        %v1851 = vld [vmem:[#allocation5 + $0x78] sm:$0xff]
        %v1852 = vld [vmem:[#allocation5 + $0x80] sm:$0xff]
        %v1853 = vld [vmem:[#allocation5 + $0x88] sm:$0xff]
        %v1854 = vld [vmem:[#allocation5 + $0x90] sm:$0xff]
        %v1855 = vld [vmem:[#allocation5 + $0x98] sm:$0xff]
        %v1856 = vld [vmem:[#allocation5 + $0xa0] sm:$0xff]
        %v1857 = vld [vmem:[#allocation5 + $0xa8] sm:$0xff]
        %v1858 = vld [vmem:[#allocation5 + $0xb0] sm:$0xff]
        %v1859 = vld [vmem:[#allocation5 + $0xb8] sm:$0xff]
        %v1860 = vld [vmem:[#allocation6] sm:$0x1]
        %v1861 = vld [vmem:[#allocation8] sm:$0xff]
        %v1862 = vld [vmem:[#allocation8 + $0x8] sm:$0xff]
        %v1863 = vld [vmem:[#allocation8 + $0x10] sm:$0xff]
        %v1864 = vld [vmem:[#allocation8 + $0x18] sm:$0xff]
        %v1865 = vld [vmem:[#allocation8 + $0x20] sm:$0xff]
        %v1866 = vld [vmem:[#allocation8 + $0x28] sm:$0xff]
        %v1867 = vld [vmem:[#allocation8 + $0x30] sm:$0xff]
        %v1868 = vld [vmem:[#allocation8 + $0x38] sm:$0xff]
        %v1869 = vld [vmem:[#allocation8 + $0x40] sm:$0xff]
        %v1870 = vld [vmem:[#allocation8 + $0x48] sm:$0xff]
        %v1871 = vld [vmem:[#allocation8 + $0x50] sm:$0xff]
        %v1872 = vld [vmem:[#allocation8 + $0x58] sm:$0xff]
        %v1873 = vld [vmem:[#allocation8 + $0x60] sm:$0xff]
        %v1874 = vld [vmem:[#allocation8 + $0x68] sm:$0xff]
        %v1875 = vld [vmem:[#allocation8 + $0x70] sm:$0xff]
        %v1876 = vld [vmem:[#allocation8 + $0x78] sm:$0xff]
        %v1877 = vld [vmem:[#allocation8 + $0x80] sm:$0xff]
        %v1878 = vld [vmem:[#allocation8 + $0x88] sm:$0xff]
        %v1879 = vld [vmem:[#allocation8 + $0x90] sm:$0xff]
        %v1880 = vld [vmem:[#allocation8 + $0x98] sm:$0xff]
        %v1881 = vld [vmem:[#allocation8 + $0xa0] sm:$0xff]
        %v1882 = vld [vmem:[#allocation8 + $0xa8] sm:$0xff]
        %v1883 = vld [vmem:[#allocation8 + $0xb0] sm:$0xff]
        %v1884 = vld [vmem:[#allocation8 + $0xb8] sm:$0xff]
        %v1885 = vld [vmem:[#allocation8 + $0xc0] sm:$0xff]
        %v1886 = vld [vmem:[#allocation8 + $0xc8] sm:$0xff]
        %v1887 = vld [vmem:[#allocation8 + $0xd0] sm:$0xff]
        %v1888 = vld [vmem:[#allocation8 + $0xd8] sm:$0xff]
        %v1889 = vld [vmem:[#allocation8 + $0xe0] sm:$0xff]
        %v1890 = vld [vmem:[#allocation8 + $0xe8] sm:$0xff]
        %v1891 = vld [vmem:[#allocation8 + $0xf0] sm:$0xff]
        %v1892 = vld [vmem:[#allocation8 + $0xf8] sm:$0xff]
        %v1893 = vld [vmem:[#allocation8 + $0x100] sm:$0xff]
        %v1894 = vld [vmem:[#allocation8 + $0x108] sm:$0xff]
        %v1895 = vld [vmem:[#allocation8 + $0x110] sm:$0xff]
        %v1896 = vld [vmem:[#allocation8 + $0x118] sm:$0xff]
        %v1897 = vld [vmem:[#allocation8 + $0x120] sm:$0xff]
        %v1898 = vld [vmem:[#allocation8 + $0x128] sm:$0xff]
        %v1899 = vld [vmem:[#allocation8 + $0x130] sm:$0xff]
        %v1900 = vld [vmem:[#allocation8 + $0x138] sm:$0xff]
        %v1901 = vld [vmem:[#allocation8 + $0x140] sm:$0xff]
        %v1902 = vld [vmem:[#allocation8 + $0x148] sm:$0xff]
        %v1903 = vld [vmem:[#allocation8 + $0x150] sm:$0xff]
        %v1904 = vld [vmem:[#allocation8 + $0x158] sm:$0xff]
        %v1905 = vld [vmem:[#allocation8 + $0x160] sm:$0xff]
        %v1906 = vld [vmem:[#allocation8 + $0x168] sm:$0xff]
        %v1907 = vld [vmem:[#allocation8 + $0x170] sm:$0xff]
        %v1908 = vld [vmem:[#allocation8 + $0x178] sm:$0xff]
        %v1909 = vld [vmem:[#allocation9] sm:$0x1]
        %v1910 = vld [vmem:[#allocation11] sm:$0xff]
        %v1911 = vld [vmem:[#allocation11 + $0x8] sm:$0xff]
        %v1912 = vld [vmem:[#allocation11 + $0x10] sm:$0xff]
        %v1913 = vld [vmem:[#allocation11 + $0x18] sm:$0xff]
        %v1914 = vld [vmem:[#allocation11 + $0x20] sm:$0xff]
        %v1915 = vld [vmem:[#allocation11 + $0x28] sm:$0xff]
        %v1916 = vld [vmem:[#allocation11 + $0x30] sm:$0xff]
        %v1917 = vld [vmem:[#allocation11 + $0x38] sm:$0xff]
        %v1918 = vld [vmem:[#allocation12] sm:$0x1]
        %v1919 = vld [vmem:[#allocation14] sm:$0xff]
        %v1920 = vld [vmem:[#allocation14 + $0x8] sm:$0xff]
        %v1921 = vld [vmem:[#allocation14 + $0x10] sm:$0xff]
        %v1922 = vld [vmem:[#allocation14 + $0x18] sm:$0xff]
        %v1923 = vld [vmem:[#allocation14 + $0x20] sm:$0xff]
        %v1924 = vld [vmem:[#allocation14 + $0x28] sm:$0xff]
        %v1925 = vld [vmem:[#allocation14 + $0x30] sm:$0xff]
        %v1926 = vld [vmem:[#allocation14 + $0x38] sm:$0xff]
        %v1927 = vld [vmem:[#allocation14 + $0x40] sm:$0xff]
        %v1928 = vld [vmem:[#allocation14 + $0x48] sm:$0xff]
        %v1929 = vld [vmem:[#allocation14 + $0x50] sm:$0xff]
        %v1930 = vld [vmem:[#allocation14 + $0x58] sm:$0xff]
        %v1931 = vld [vmem:[#allocation14 + $0x60] sm:$0xff]
        %v1932 = vld [vmem:[#allocation14 + $0x68] sm:$0xff]
        %v1933 = vld [vmem:[#allocation14 + $0x70] sm:$0xff]
        %v1934 = vld [vmem:[#allocation14 + $0x78] sm:$0xff]
        %v1935 = vld [vmem:[#allocation15] sm:$0xff]
        %v1936 = vld [vmem:[#allocation17] sm:$0x1]
        %v1937 = vld [vmem:[#allocation18] sm:$0x1]
        %v1938 = vld [vmem:[#allocation20] sm:$0xff]
        %v1939 = vld [vmem:[#allocation21] sm:$0x1]
        %v1940 = vld [vmem:[#allocation23] sm:$0xff]
        %vm1943 = vcmask 1040384
        %v1944 = vrot.slane %v1834, 7
        %v1945 = vrot.slane %v1835, 7
        %v1946 = vsel %vm1943, %v1944, %v1945
        %v1950 = vsel %vm1943, 0.0, %v1944
        %v1951 = vsel %vm1943, %v1945, 0.0
        %vm1954 = vcmask 1046528
        %v1955 = vrot.slane %v1950, 1
        %v1956 = vrot.slane %v1946, 1
        %v1957 = vsel %vm1954, %v1955, %v1956
        %v1958 = vrot.slane %v1951, 1
        %v1959 = vsel %vm1954, %v1956, %v1958
        %1960 = vrot.lane.b32.xlu0 %v1957, 64
        %v1961 = vpop.permute.xlu0 %1960
        %1962 = vrot.lane.b32.xlu0 %v1959, 64
        %v1963 = vpop.permute.xlu0 %1962
        %vm1966 = vcmask 1045504
        %v1967 = vrot.slane %v1950, 2
        %v1968 = vrot.slane %v1946, 2
        %v1969 = vsel %vm1966, %v1967, %v1968
        %v1970 = vrot.slane %v1951, 2
        %v1971 = vsel %vm1966, %v1968, %v1970
        %vm1972 = vcmask 523264
        %v1973 = vsel %vm1972, %v1950, %v1961
        %v1974 = vsel %vm1972, %v1946, %v1963
        %v1976 = vlaneseq
        %v1977 = vshrl.u32 %v1976, 7
        %v1978 = vsub.s32 0, %v1977
        %v1979 = vrot.slane %v1860, %v1978
        %v1981 = vsel %vm1972, %v1969, 0
        %v1983 = vsel %vm1972, %v1971, 0
        %1985 = vmatprep.subr.mxu0 0.0
        %1986 = vmatpush1.msra.mxu0 %v1836
        %1987 = vmatprep.subr.mxu0 0.0
        %1988 = vmatpush1.msra.mxu0 %v1837
        %1989 = vmatprep.subr.mxu0 0.0
        %1990 = vmatpush1.msra.mxu0 %v1838
        %1991 = vmatprep.subr.mxu0 0.0
        %1992 = vmatpush1.msra.mxu0 %v1839
        %1993 = vmatprep.subr.mxu0 0.0
        %1994 = vmatpush1.msra.mxu0 %v1840
        %1995 = vmatprep.subr.mxu0 0.0
        %1996 = vmatpush1.msra.mxu0 %v1841
        %1997 = vmatprep.subr.mxu0 0.0
        %1998 = vmatpush1.msra.mxu0 %v1842
        %1999 = vmatprep.subr.mxu0 0.0
        %2000 = vmatpush1.msra.mxu0 %v1843
        %2001 = vmatprep.subr.mxu0 0.0
        %2002 = vmatpush1.msra.mxu0 %v1844
        %2003 = vmatprep.subr.mxu0 0.0
        %2004 = vmatpush1.msra.mxu0 %v1845
        %2005 = vmatprep.subr.mxu0 0.0
        %2006 = vmatpush1.msra.mxu0 %v1846
        %2007 = vmatprep.subr.mxu0 0.0
        %2008 = vmatpush1.msra.mxu0 %v1847
        %2009 = vmatprep.subr.mxu0 0.0
        %2010 = vmatpush1.msra.mxu0 %v1848
        %2011 = vmatprep.subr.mxu0 0.0
        %2012 = vmatpush1.msra.mxu0 %v1849
        %2013 = vmatprep.subr.mxu0 0.0
        %2014 = vmatpush1.msra.mxu0 %v1850
        %2015 = vmatprep.subr.mxu0 0.0
        %2016 = vmatpush1.msra.mxu0 %v1851
        %2017 = vmatprep.subr.mxu0 0.0
        %2018 = vmatpush1.msra.mxu0 %v1852
        %2019 = vmatprep.subr.mxu0 0.0
        %2020 = vmatpush1.msra.mxu0 %v1853
        %2021 = vmatprep.subr.mxu0 0.0
        %2022 = vmatpush1.msra.mxu0 %v1854
        %2023 = vmatprep.subr.mxu0 0.0
        %2024 = vmatpush1.msra.mxu0 %v1855
        %2025 = vmatprep.subr.mxu0 0.0
        %2026 = vmatpush1.msra.mxu0 %v1856
        %2027 = vmatprep.subr.mxu0 0.0
        %2028 = vmatpush1.msra.mxu0 %v1857
        %2029 = vmatprep.subr.mxu0 0.0
        %2030 = vmatpush1.msra.mxu0 %v1858
        %2031 = vmatprep.subr.mxu0 0.0
        %2032 = vmatpush1.msra.mxu0 %v1859
        %2033 = vmatprep.subr.mxu0 0.0
        %2034 = vmatpush1.msra.mxu0 0.0
        %2035 = vmatprep.subr.mxu0 0.0
        %2036 = vmatpush1.msra.mxu0 0.0
        %2037 = vmatprep.subr.mxu0 0.0
        %2038 = vmatpush1.msra.mxu0 0.0
        %2039 = vmatprep.subr.mxu0 0.0
        %2040 = vmatpush1.msra.mxu0 0.0
        %2041 = vmatprep.subr.mxu0 0.0
        %2042 = vmatpush1.msra.mxu0 0.0
        %2043 = vmatprep.subr.mxu0 0.0
        %2044 = vmatpush1.msra.mxu0 0.0
        %2045 = vmatprep.subr.mxu0 0.0
        %2046 = vmatpush1.msra.mxu0 0.0
        %2047 = vmatprep.subr.mxu0 0.0
        %2048 = vmatpush1.msra.mxu0 0.0
        %2049 = vmatprep.mubr.f32.mxu0 %v1981
        %2050 = vmatmul.mubr.f32.gmra.mrb[0].mxu0 %v1973
        %v2051 = vpop.f32.mrb[0].mxu0
        %v2052 = vadd.f32 %v1979, %v2051
        %v2053 = vpop.f32.mrb[0].mxu0
        %2054 = vmatprep.mubr.f32.mxu0 %v1983
        %2055 = vmatmul.mubr.f32.gmra.mrb[0].mxu0 %v1974
        %v2056 = vpop.f32.mrb[0].mxu0
        %v2057 = vadd.f32 %v1979, %v2056
        %v2058 = vpop.f32.mrb[0].mxu0
        %2059 = vdwg.mxu0
        %vm2060 = vcmp.gt.f32.partialorder %v2052, 0.0
        %vm2061 = vcmp.gt.f32.partialorder %v2057, 0.0
        %v2062 = vmul.f32 %v2052, 0.01
        %v2063 = vmul.f32 %v2057, 0.01
        %v2064 = vsel %vm2060, %v2052, %v2062
        %v2065 = vsel %vm2061, %v2057, %v2063
        %v2068 = vrot.slane %v2064, 7
        %v2069 = vrot.slane %v2065, 7
        %v2070 = vsel %vm1943, %v2068, %v2069
        %v2074 = vsel %vm1943, 0.0, %v2068
        %v2075 = vsel %vm1943, %v2069, 0.0
        %v2078 = vrot.slane %v2074, 1
        %v2079 = vrot.slane %v2070, 1
        %v2080 = vsel %vm1954, %v2078, %v2079
        %v2081 = vrot.slane %v2075, 1
        %v2082 = vsel %vm1954, %v2079, %v2081
        %v2085 = vrot.slane %v2074, 2
        %v2086 = vrot.slane %v2070, 2
        %v2087 = vsel %vm1966, %v2085, %v2086
        %v2088 = vrot.slane %v2075, 2
        %v2089 = vsel %vm1966, %v2086, %v2088
        %v2093 = vlaneseq
        %v2094 = vshrl.u32 %v2093, 7
        %v2095 = vsub.s32 0, %v2094
        %v2096 = vrot.slane %v1909, %v2095
        %2098 = vmatprep.subr.mxu0 0.0
        %2099 = vmatpush1.msra.mxu0 %v1861
        %2100 = vmatprep.subr.mxu0 0.0
        %2101 = vmatpush1.msra.mxu0 %v1862
        %2102 = vmatprep.subr.mxu0 0.0
        %2103 = vmatpush1.msra.mxu0 %v1863
        %2104 = vmatprep.subr.mxu0 0.0
        %2105 = vmatpush1.msra.mxu0 %v1864
        %2106 = vmatprep.subr.mxu0 0.0
        %2107 = vmatpush1.msra.mxu0 %v1865
        %2108 = vmatprep.subr.mxu0 0.0
        %2109 = vmatpush1.msra.mxu0 %v1866
        %2110 = vmatprep.subr.mxu0 0.0
        %2111 = vmatpush1.msra.mxu0 %v1867
        %2112 = vmatprep.subr.mxu0 0.0
        %2113 = vmatpush1.msra.mxu0 %v1868
        %2114 = vmatprep.subr.mxu0 0.0
        %2115 = vmatpush1.msra.mxu0 %v1869
        %2116 = vmatprep.subr.mxu0 0.0
        %2117 = vmatpush1.msra.mxu0 %v1870
        %2118 = vmatprep.subr.mxu0 0.0
        %2119 = vmatpush1.msra.mxu0 %v1871
        %2120 = vmatprep.subr.mxu0 0.0
        %2121 = vmatpush1.msra.mxu0 %v1872
        %2122 = vmatprep.subr.mxu0 0.0
        %2123 = vmatpush1.msra.mxu0 %v1873
        %2124 = vmatprep.subr.mxu0 0.0
        %2125 = vmatpush1.msra.mxu0 %v1874
        %2126 = vmatprep.subr.mxu0 0.0
        %2127 = vmatpush1.msra.mxu0 %v1875
        %2128 = vmatprep.subr.mxu0 0.0
        %2129 = vmatpush1.msra.mxu0 %v1876
        %2130 = vmatprep.subr.mxu0 0.0
        %2131 = vmatpush1.msra.mxu0 %v1877
        %2132 = vmatprep.subr.mxu0 0.0
        %2133 = vmatpush1.msra.mxu0 %v1878
        %2134 = vmatprep.subr.mxu0 0.0
        %2135 = vmatpush1.msra.mxu0 %v1879
        %2136 = vmatprep.subr.mxu0 0.0
        %2137 = vmatpush1.msra.mxu0 %v1880
        %2138 = vmatprep.subr.mxu0 0.0
        %2139 = vmatpush1.msra.mxu0 %v1881
        %2140 = vmatprep.subr.mxu0 0.0
        %2141 = vmatpush1.msra.mxu0 %v1882
        %2142 = vmatprep.subr.mxu0 0.0
        %2143 = vmatpush1.msra.mxu0 %v1883
        %2144 = vmatprep.subr.mxu0 0.0
        %2145 = vmatpush1.msra.mxu0 %v1884
        %2146 = vmatprep.subr.mxu0 0.0
        %2147 = vmatpush1.msra.mxu0 %v1885
        %2148 = vmatprep.subr.mxu0 0.0
        %2149 = vmatpush1.msra.mxu0 %v1886
        %2150 = vmatprep.subr.mxu0 0.0
        %2151 = vmatpush1.msra.mxu0 %v1887
        %2152 = vmatprep.subr.mxu0 0.0
        %2153 = vmatpush1.msra.mxu0 %v1888
        %2154 = vmatprep.subr.mxu0 0.0
        %2155 = vmatpush1.msra.mxu0 %v1889
        %2156 = vmatprep.subr.mxu0 0.0
        %2157 = vmatpush1.msra.mxu0 %v1890
        %2158 = vmatprep.subr.mxu0 0.0
        %2159 = vmatpush1.msra.mxu0 %v1891
        %2160 = vmatprep.subr.mxu0 0.0
        %2161 = vmatpush1.msra.mxu0 %v1892
        %2162 = vmatprep.mubr.f32.mxu0 %v2080
        %2163 = vmatmul.mubr.f32.gmra.mrb[0].mxu0 %v2074
        %v2164 = vpop.f32.mrb[0].mxu0
        %v2165 = vadd.f32 %v2096, %v2164
        %v2166 = vpop.f32.mrb[0].mxu0
        %2167 = vmatprep.mubr.f32.mxu0 %v2082
        %2168 = vmatmul.mubr.f32.gmra.mrb[0].mxu0 %v2070
        %v2169 = vpop.f32.mrb[0].mxu0
        %v2170 = vadd.f32 %v2096, %v2169
        %v2171 = vpop.f32.mrb[0].mxu0
        %2172 = vdwg.mxu0
        %2173 = vmatprep.subr.mxu0 0.0
        %2174 = vmatpush1.msra.mxu0 %v1893
        %2175 = vmatprep.subr.mxu0 0.0
        %2176 = vmatpush1.msra.mxu0 %v1894
        %2177 = vmatprep.subr.mxu0 0.0
        %2178 = vmatpush1.msra.mxu0 %v1895
        %2179 = vmatprep.subr.mxu0 0.0
        %2180 = vmatpush1.msra.mxu0 %v1896
        %2181 = vmatprep.subr.mxu0 0.0
        %2182 = vmatpush1.msra.mxu0 %v1897
        %2183 = vmatprep.subr.mxu0 0.0
        %2184 = vmatpush1.msra.mxu0 %v1898
        %2185 = vmatprep.subr.mxu0 0.0
        %2186 = vmatpush1.msra.mxu0 %v1899
        %2187 = vmatprep.subr.mxu0 0.0
        %2188 = vmatpush1.msra.mxu0 %v1900
        %2189 = vmatprep.subr.mxu0 0.0
        %2190 = vmatpush1.msra.mxu0 %v1901
        %2191 = vmatprep.subr.mxu0 0.0
        %2192 = vmatpush1.msra.mxu0 %v1902
        %2193 = vmatprep.subr.mxu0 0.0
        %2194 = vmatpush1.msra.mxu0 %v1903
        %2195 = vmatprep.subr.mxu0 0.0
        %2196 = vmatpush1.msra.mxu0 %v1904
        %2197 = vmatprep.subr.mxu0 0.0
        %2198 = vmatpush1.msra.mxu0 %v1905
        %2199 = vmatprep.subr.mxu0 0.0
        %2200 = vmatpush1.msra.mxu0 %v1906
        %2201 = vmatprep.subr.mxu0 0.0
        %2202 = vmatpush1.msra.mxu0 %v1907
        %2203 = vmatprep.subr.mxu0 0.0
        %2204 = vmatpush1.msra.mxu0 %v1908
        %2205 = vmatprep.subr.mxu0 0.0
        %2206 = vmatpush1.msra.mxu0 0.0
        %2207 = vmatprep.subr.mxu0 0.0
        %2208 = vmatpush1.msra.mxu0 0.0
        %2209 = vmatprep.subr.mxu0 0.0
        %2210 = vmatpush1.msra.mxu0 0.0
        %2211 = vmatprep.subr.mxu0 0.0
        %2212 = vmatpush1.msra.mxu0 0.0
        %2213 = vmatprep.subr.mxu0 0.0
        %2214 = vmatpush1.msra.mxu0 0.0
        %2215 = vmatprep.subr.mxu0 0.0
        %2216 = vmatpush1.msra.mxu0 0.0
        %2217 = vmatprep.subr.mxu0 0.0
        %2218 = vmatpush1.msra.mxu0 0.0
        %2219 = vmatprep.subr.mxu0 0.0
        %2220 = vmatpush1.msra.mxu0 0.0
        %2221 = vmatprep.subr.mxu0 0.0
        %2222 = vmatpush1.msra.mxu0 0.0
        %2223 = vmatprep.subr.mxu0 0.0
        %2224 = vmatpush1.msra.mxu0 0.0
        %2225 = vmatprep.subr.mxu0 0.0
        %2226 = vmatpush1.msra.mxu0 0.0
        %2227 = vmatprep.subr.mxu0 0.0
        %2228 = vmatpush1.msra.mxu0 0.0
        %2229 = vmatprep.subr.mxu0 0.0
        %2230 = vmatpush1.msra.mxu0 0.0
        %2231 = vmatprep.subr.mxu0 0.0
        %2232 = vmatpush1.msra.mxu0 0.0
        %2233 = vmatprep.subr.mxu0 0.0
        %2234 = vmatpush1.msra.mxu0 0.0
        %2235 = vmatprep.subr.mxu0 0.0
        %2236 = vmatpush1.msra.mxu0 0.0
        %2237 = vmatprep.mubr.f32.mxu0 0.0
        %2238 = vmatmul.mubr.f32.gmra.mrb[0].mxu0 %v2087
        %v2239 = vpop.f32.mrb[0].mxu0
        %v2240 = vadd.f32 %v2165, %v2239
        %v2241 = vpop.f32.mrb[0].mxu0
        %2242 = vmatprep.mubr.f32.mxu0 0.0
        %2243 = vmatmul.mubr.f32.gmra.mrb[0].mxu0 %v2089
        %v2244 = vpop.f32.mrb[0].mxu0
        %v2245 = vadd.f32 %v2170, %v2244
        %v2246 = vpop.f32.mrb[0].mxu0
        %2247 = vdwg.mxu0
        %vm2248 = vcmp.gt.f32.partialorder %v2240, 0.0
        %vm2249 = vcmp.gt.f32.partialorder %v2245, 0.0
        %v2250 = vmul.f32 %v2240, 0.01
        %v2251 = vmul.f32 %v2245, 0.01
        %v2252 = vsel %vm2248, %v2240, %v2250
        %v2253 = vsel %vm2249, %v2245, %v2251
        %v2255 = vlaneseq
        %v2256 = vshrl.u32 %v2255, 7
        %v2257 = vsub.s32 0, %v2256
        %v2258 = vrot.slane %v1918, %v2257
        %v2260 = vsel %vm1972, %v1834, 0
        %v2262 = vsel %vm1972, %v1835, 0
        %2264 = vmatprep.subr.mxu0 0.0
        %2265 = vmatpush1.msra.mxu0 %v1910
        %2266 = vmatprep.subr.mxu0 0.0
        %2267 = vmatpush1.msra.mxu0 %v1911
        %2268 = vmatprep.subr.mxu0 0.0
        %2269 = vmatpush1.msra.mxu0 %v1912
        %2270 = vmatprep.subr.mxu0 0.0
        %2271 = vmatpush1.msra.mxu0 %v1913
        %2272 = vmatprep.subr.mxu0 0.0
        %2273 = vmatpush1.msra.mxu0 %v1914
        %2274 = vmatprep.subr.mxu0 0.0
        %2275 = vmatpush1.msra.mxu0 %v1915
        %2276 = vmatprep.subr.mxu0 0.0
        %2277 = vmatpush1.msra.mxu0 %v1916
        %2278 = vmatprep.subr.mxu0 0.0
        %2279 = vmatpush1.msra.mxu0 %v1917
        %2280 = vmatprep.subr.mxu0 0.0
        %2281 = vmatpush1.msra.mxu0 0.0
        %2282 = vmatprep.subr.mxu0 0.0
        %2283 = vmatpush1.msra.mxu0 0.0
        %2284 = vmatprep.subr.mxu0 0.0
        %2285 = vmatpush1.msra.mxu0 0.0
        %2286 = vmatprep.subr.mxu0 0.0
        %2287 = vmatpush1.msra.mxu0 0.0
        %2288 = vmatprep.subr.mxu0 0.0
        %2289 = vmatpush1.msra.mxu0 0.0
        %2290 = vmatprep.subr.mxu0 0.0
        %2291 = vmatpush1.msra.mxu0 0.0
        %2292 = vmatprep.subr.mxu0 0.0
        %2293 = vmatpush1.msra.mxu0 0.0
        %2294 = vmatprep.subr.mxu0 0.0
        %2295 = vmatpush1.msra.mxu0 0.0
        %2296 = vmatprep.subr.mxu0 0.0
        %2297 = vmatpush1.msra.mxu0 0.0
        %2298 = vmatprep.subr.mxu0 0.0
        %2299 = vmatpush1.msra.mxu0 0.0
        %2300 = vmatprep.subr.mxu0 0.0
        %2301 = vmatpush1.msra.mxu0 0.0
        %2302 = vmatprep.subr.mxu0 0.0
        %2303 = vmatpush1.msra.mxu0 0.0
        %2304 = vmatprep.subr.mxu0 0.0
        %2305 = vmatpush1.msra.mxu0 0.0
        %2306 = vmatprep.subr.mxu0 0.0
        %2307 = vmatpush1.msra.mxu0 0.0
        %2308 = vmatprep.subr.mxu0 0.0
        %2309 = vmatpush1.msra.mxu0 0.0
        %2310 = vmatprep.subr.mxu0 0.0
        %2311 = vmatpush1.msra.mxu0 0.0
        %2312 = vmatprep.subr.mxu0 0.0
        %2313 = vmatpush1.msra.mxu0 0.0
        %2314 = vmatprep.subr.mxu0 0.0
        %2315 = vmatpush1.msra.mxu0 0.0
        %2316 = vmatprep.subr.mxu0 0.0
        %2317 = vmatpush1.msra.mxu0 0.0
        %2318 = vmatprep.subr.mxu0 0.0
        %2319 = vmatpush1.msra.mxu0 0.0
        %2320 = vmatprep.subr.mxu0 0.0
        %2321 = vmatpush1.msra.mxu0 0.0
        %2322 = vmatprep.subr.mxu0 0.0
        %2323 = vmatpush1.msra.mxu0 0.0
        %2324 = vmatprep.subr.mxu0 0.0
        %2325 = vmatpush1.msra.mxu0 0.0
        %2326 = vmatprep.subr.mxu0 0.0
        %2327 = vmatpush1.msra.mxu0 0.0
        %2328 = vmatprep.mubr.f32.mxu0 0.0
        %2329 = vmatmul.mubr.f32.gmra.mrb[0].mxu0 %v2260
        %v2330 = vpop.f32.mrb[0].mxu0
        %v2331 = vadd.f32 %v2258, %v2330
        %v2332 = vpop.f32.mrb[0].mxu0
        %2333 = vmatprep.mubr.f32.mxu0 0.0
        %2334 = vmatmul.mubr.f32.gmra.mrb[0].mxu0 %v2262
        %v2335 = vpop.f32.mrb[0].mxu0
        %v2336 = vadd.f32 %v2258, %v2335
        %v2337 = vpop.f32.mrb[0].mxu0
        %2338 = vdwg.mxu0
        %v2339 = vadd.f32 %v2252, %v2331
        %v2340 = vadd.f32 %v2253, %v2336
        %v2341 = vadd.f32 %v2339, %v2340
        %v2342 = vrot.slane %v2341, 4
        %v2343 = vadd.f32 %v2341, %v2342
        %v2344 = vrot.slane %v2343, 2
        %v2345 = vadd.f32 %v2343, %v2344
        %v2346 = vrot.slane %v2345, 1
        %v2347 = vadd.f32 %v2345, %v2346
        %2348 = vmatprep.subr.mxu0 0.0
        %2349 = vmatpush1.msra.mxu0 %v1919
        %2350 = vmatprep.subr.mxu0 0.0
        %2351 = vmatpush1.msra.mxu0 %v1920
        %2352 = vmatprep.subr.mxu0 0.0
        %2353 = vmatpush1.msra.mxu0 %v1921
        %2354 = vmatprep.subr.mxu0 0.0
        %2355 = vmatpush1.msra.mxu0 %v1922
        %2356 = vmatprep.subr.mxu0 0.0
        %2357 = vmatpush1.msra.mxu0 %v1923
        %2358 = vmatprep.subr.mxu0 0.0
        %2359 = vmatpush1.msra.mxu0 %v1924
        %2360 = vmatprep.subr.mxu0 0.0
        %2361 = vmatpush1.msra.mxu0 %v1925
        %2362 = vmatprep.subr.mxu0 0.0
        %2363 = vmatpush1.msra.mxu0 %v1926
        %2364 = vmatprep.subr.mxu0 0.0
        %2365 = vmatpush1.msra.mxu0 %v1927
        %2366 = vmatprep.subr.mxu0 0.0
        %2367 = vmatpush1.msra.mxu0 %v1928
        %2368 = vmatprep.subr.mxu0 0.0
        %2369 = vmatpush1.msra.mxu0 %v1929
        %2370 = vmatprep.subr.mxu0 0.0
        %2371 = vmatpush1.msra.mxu0 %v1930
        %2372 = vmatprep.subr.mxu0 0.0
        %2373 = vmatpush1.msra.mxu0 %v1931
        %2374 = vmatprep.subr.mxu0 0.0
        %2375 = vmatpush1.msra.mxu0 %v1932
        %2376 = vmatprep.subr.mxu0 0.0
        %2377 = vmatpush1.msra.mxu0 %v1933
        %2378 = vmatprep.subr.mxu0 0.0
        %2379 = vmatpush1.msra.mxu0 %v1934
        %2380 = vmatprep.subr.mxu0 0.0
        %2381 = vmatpush1.msra.mxu0 0.0
        %2382 = vmatprep.subr.mxu0 0.0
        %2383 = vmatpush1.msra.mxu0 0.0
        %2384 = vmatprep.subr.mxu0 0.0
        %2385 = vmatpush1.msra.mxu0 0.0
        %2386 = vmatprep.subr.mxu0 0.0
        %2387 = vmatpush1.msra.mxu0 0.0
        %2388 = vmatprep.subr.mxu0 0.0
        %2389 = vmatpush1.msra.mxu0 0.0
        %2390 = vmatprep.subr.mxu0 0.0
        %2391 = vmatpush1.msra.mxu0 0.0
        %2392 = vmatprep.subr.mxu0 0.0
        %2393 = vmatpush1.msra.mxu0 0.0
        %2394 = vmatprep.subr.mxu0 0.0
        %2395 = vmatpush1.msra.mxu0 0.0
        %2396 = vmatprep.subr.mxu0 0.0
        %2397 = vmatpush1.msra.mxu0 0.0
        %2398 = vmatprep.subr.mxu0 0.0
        %2399 = vmatpush1.msra.mxu0 0.0
        %2400 = vmatprep.subr.mxu0 0.0
        %2401 = vmatpush1.msra.mxu0 0.0
        %2402 = vmatprep.subr.mxu0 0.0
        %2403 = vmatpush1.msra.mxu0 0.0
        %2404 = vmatprep.subr.mxu0 0.0
        %2405 = vmatpush1.msra.mxu0 0.0
        %2406 = vmatprep.subr.mxu0 0.0
        %2407 = vmatpush1.msra.mxu0 0.0
        %2408 = vmatprep.subr.mxu0 0.0
        %2409 = vmatpush1.msra.mxu0 0.0
        %2410 = vmatprep.subr.mxu0 0.0
        %2411 = vmatpush1.msra.mxu0 0.0
        %2412 = vmatprep.mubr.f32.mxu0 0.0
        %2413 = vmatmul.mubr.f32.gmra.mrb[0].mxu0 %v2347
        %v2414 = vpop.f32.mrb[0].mxu0
        %v2415 = vadd.f32 0.0, %v2414
        %v2416 = vpop.f32.mrb[0].mxu0
        %2417 = vdwg.mxu0
        %v2418 = vstv %s1833
        %v2419 = vmul.f32 %v2418, %v1936
        %vm2420 = vcmask 64512
        %v2422 = vsel %vm2420, %v2415, 0
        %2424 = vmatprep.subr.mxu0 0.0
        %2425 = vmatpush1.msra.mxu0 %v1935
        %2426 = vmatprep.subr.mxu0 0.0
        %2427 = vmatpush1.msra.mxu0 0.0
        %2428 = vmatprep.subr.mxu0 0.0
        %2429 = vmatpush1.msra.mxu0 0.0
        %2430 = vmatprep.subr.mxu0 0.0
        %2431 = vmatpush1.msra.mxu0 0.0
        %2432 = vmatprep.subr.mxu0 0.0
        %2433 = vmatpush1.msra.mxu0 0.0
        %2434 = vmatprep.subr.mxu0 0.0
        %2435 = vmatpush1.msra.mxu0 0.0
        %2436 = vmatprep.subr.mxu0 0.0
        %2437 = vmatpush1.msra.mxu0 0.0
        %2438 = vmatprep.subr.mxu0 0.0
        %2439 = vmatpush1.msra.mxu0 0.0
        %2440 = vmatprep.subr.mxu0 0.0
        %2441 = vmatpush1.msra.mxu0 0.0
        %2442 = vmatprep.subr.mxu0 0.0
        %2443 = vmatpush1.msra.mxu0 0.0
        %2444 = vmatprep.subr.mxu0 0.0
        %2445 = vmatpush1.msra.mxu0 0.0
        %2446 = vmatprep.subr.mxu0 0.0
        %2447 = vmatpush1.msra.mxu0 0.0
        %2448 = vmatprep.subr.mxu0 0.0
        %2449 = vmatpush1.msra.mxu0 0.0
        %2450 = vmatprep.subr.mxu0 0.0
        %2451 = vmatpush1.msra.mxu0 0.0
        %2452 = vmatprep.subr.mxu0 0.0
        %2453 = vmatpush1.msra.mxu0 0.0
        %2454 = vmatprep.subr.mxu0 0.0
        %2455 = vmatpush1.msra.mxu0 0.0
        %2456 = vmatprep.subr.mxu0 0.0
        %2457 = vmatpush1.msra.mxu0 0.0
        %2458 = vmatprep.subr.mxu0 0.0
        %2459 = vmatpush1.msra.mxu0 0.0
        %2460 = vmatprep.subr.mxu0 0.0
        %2461 = vmatpush1.msra.mxu0 0.0
        %2462 = vmatprep.subr.mxu0 0.0
        %2463 = vmatpush1.msra.mxu0 0.0
        %2464 = vmatprep.subr.mxu0 0.0
        %2465 = vmatpush1.msra.mxu0 0.0
        %2466 = vmatprep.subr.mxu0 0.0
        %2467 = vmatpush1.msra.mxu0 0.0
        %2468 = vmatprep.subr.mxu0 0.0
        %2469 = vmatpush1.msra.mxu0 0.0
        %2470 = vmatprep.subr.mxu0 0.0
        %2471 = vmatpush1.msra.mxu0 0.0
        %2472 = vmatprep.subr.mxu0 0.0
        %2473 = vmatpush1.msra.mxu0 0.0
        %2474 = vmatprep.subr.mxu0 0.0
        %2475 = vmatpush1.msra.mxu0 0.0
        %2476 = vmatprep.subr.mxu0 0.0
        %2477 = vmatpush1.msra.mxu0 0.0
        %2478 = vmatprep.subr.mxu0 0.0
        %2479 = vmatpush1.msra.mxu0 0.0
        %2480 = vmatprep.subr.mxu0 0.0
        %2481 = vmatpush1.msra.mxu0 0.0
        %2482 = vmatprep.subr.mxu0 0.0
        %2483 = vmatpush1.msra.mxu0 0.0
        %2484 = vmatprep.subr.mxu0 0.0
        %2485 = vmatpush1.msra.mxu0 0.0
        %2486 = vmatprep.subr.mxu0 0.0
        %2487 = vmatpush1.msra.mxu0 0.0
        %2488 = vmatprep.mubr.f32.mxu0 0.0
        %2489 = vmatmul.mubr.f32.gmra.mrb[0].mxu0 %v2422
        %v2490 = vpop.f32.mrb[0].mxu0
        %v2491 = vadd.f32 %v2419, %v2490
        %v2492 = vpop.f32.mrb[0].mxu0
        %2493 = vdwg.mxu0
        %v2494 = vadd.f32 %v2491, %v1937
        %vm2495 = vcmp.gt.f32.partialorder %v2494, 0.0
        %v2496 = vmul.f32 %v2494, 0.01
        %v2497 = vsel %vm2495, %v2494, %v2496
        %v2499 = vsel %vm2420, %v2497, 0
        %2501 = vmatprep.subr.mxu0 0.0
        %2502 = vmatpush1.msra.mxu0 %v1938
        %2503 = vmatprep.subr.mxu0 0.0
        %2504 = vmatpush1.msra.mxu0 0.0
        %2505 = vmatprep.subr.mxu0 0.0
        %2506 = vmatpush1.msra.mxu0 0.0
        %2507 = vmatprep.subr.mxu0 0.0
        %2508 = vmatpush1.msra.mxu0 0.0
        %2509 = vmatprep.subr.mxu0 0.0
        %2510 = vmatpush1.msra.mxu0 0.0
        %2511 = vmatprep.subr.mxu0 0.0
        %2512 = vmatpush1.msra.mxu0 0.0
        %2513 = vmatprep.subr.mxu0 0.0
        %2514 = vmatpush1.msra.mxu0 0.0
        %2515 = vmatprep.subr.mxu0 0.0
        %2516 = vmatpush1.msra.mxu0 0.0
        %2517 = vmatprep.subr.mxu0 0.0
        %2518 = vmatpush1.msra.mxu0 0.0
        %2519 = vmatprep.subr.mxu0 0.0
        %2520 = vmatpush1.msra.mxu0 0.0
        %2521 = vmatprep.subr.mxu0 0.0
        %2522 = vmatpush1.msra.mxu0 0.0
        %2523 = vmatprep.subr.mxu0 0.0
        %2524 = vmatpush1.msra.mxu0 0.0
        %2525 = vmatprep.subr.mxu0 0.0
        %2526 = vmatpush1.msra.mxu0 0.0
        %2527 = vmatprep.subr.mxu0 0.0
        %2528 = vmatpush1.msra.mxu0 0.0
        %2529 = vmatprep.subr.mxu0 0.0
        %2530 = vmatpush1.msra.mxu0 0.0
        %2531 = vmatprep.subr.mxu0 0.0
        %2532 = vmatpush1.msra.mxu0 0.0
        %2533 = vmatprep.subr.mxu0 0.0
        %2534 = vmatpush1.msra.mxu0 0.0
        %2535 = vmatprep.subr.mxu0 0.0
        %2536 = vmatpush1.msra.mxu0 0.0
        %2537 = vmatprep.subr.mxu0 0.0
        %2538 = vmatpush1.msra.mxu0 0.0
        %2539 = vmatprep.subr.mxu0 0.0
        %2540 = vmatpush1.msra.mxu0 0.0
        %2541 = vmatprep.subr.mxu0 0.0
        %2542 = vmatpush1.msra.mxu0 0.0
        %2543 = vmatprep.subr.mxu0 0.0
        %2544 = vmatpush1.msra.mxu0 0.0
        %2545 = vmatprep.subr.mxu0 0.0
        %2546 = vmatpush1.msra.mxu0 0.0
        %2547 = vmatprep.subr.mxu0 0.0
        %2548 = vmatpush1.msra.mxu0 0.0
        %2549 = vmatprep.subr.mxu0 0.0
        %2550 = vmatpush1.msra.mxu0 0.0
        %2551 = vmatprep.subr.mxu0 0.0
        %2552 = vmatpush1.msra.mxu0 0.0
        %2553 = vmatprep.subr.mxu0 0.0
        %2554 = vmatpush1.msra.mxu0 0.0
        %2555 = vmatprep.subr.mxu0 0.0
        %2556 = vmatpush1.msra.mxu0 0.0
        %2557 = vmatprep.subr.mxu0 0.0
        %2558 = vmatpush1.msra.mxu0 0.0
        %2559 = vmatprep.subr.mxu0 0.0
        %2560 = vmatpush1.msra.mxu0 0.0
        %2561 = vmatprep.subr.mxu0 0.0
        %2562 = vmatpush1.msra.mxu0 0.0
        %2563 = vmatprep.subr.mxu0 0.0
        %2564 = vmatpush1.msra.mxu0 0.0
        %2565 = vmatprep.mubr.f32.mxu0 0.0
        %2566 = vmatmul.mubr.f32.gmra.mrb[0].mxu0 %v2499
        %v2567 = vpop.f32.mrb[0].mxu0
        %v2568 = vadd.f32 %v1939, %v2567
        %v2569 = vpop.f32.mrb[0].mxu0
        %2570 = vdwg.mxu0
        %v2571 = vxor.u32 %v2568, 2147483648
        %v2572 = vmul.f32 %v2571, 1.442695
        %v2573 = vpow.pop %v2572
        %v2574 = vadd.f32 %v2573, 1.0
        %v2575 = vrcp.pop %v2574
        %v2576 = vmul.f32 1.0, %v2575
        %v2578 = vsel %vm2420, %v2576, 0
        %2580 = vmatprep.subr.mxu0 0.0
        %2581 = vmatpush1.msra.mxu0 %v1940
        %2582 = vmatprep.subr.mxu0 0.0
        %2583 = vmatpush1.msra.mxu0 0.0
        %2584 = vmatprep.subr.mxu0 0.0
        %2585 = vmatpush1.msra.mxu0 0.0
        %2586 = vmatprep.subr.mxu0 0.0
        %2587 = vmatpush1.msra.mxu0 0.0
        %2588 = vmatprep.subr.mxu0 0.0
        %2589 = vmatpush1.msra.mxu0 0.0
        %2590 = vmatprep.subr.mxu0 0.0
        %2591 = vmatpush1.msra.mxu0 0.0
        %2592 = vmatprep.subr.mxu0 0.0
        %2593 = vmatpush1.msra.mxu0 0.0
        %2594 = vmatprep.subr.mxu0 0.0
        %2595 = vmatpush1.msra.mxu0 0.0
        %2596 = vmatprep.subr.mxu0 0.0
        %2597 = vmatpush1.msra.mxu0 0.0
        %2598 = vmatprep.subr.mxu0 0.0
        %2599 = vmatpush1.msra.mxu0 0.0
        %2600 = vmatprep.subr.mxu0 0.0
        %2601 = vmatpush1.msra.mxu0 0.0
        %2602 = vmatprep.subr.mxu0 0.0
        %2603 = vmatpush1.msra.mxu0 0.0
        %2604 = vmatprep.subr.mxu0 0.0
        %2605 = vmatpush1.msra.mxu0 0.0
        %2606 = vmatprep.subr.mxu0 0.0
        %2607 = vmatpush1.msra.mxu0 0.0
        %2608 = vmatprep.subr.mxu0 0.0
        %2609 = vmatpush1.msra.mxu0 0.0
        %2610 = vmatprep.subr.mxu0 0.0
        %2611 = vmatpush1.msra.mxu0 0.0
        %2612 = vmatprep.subr.mxu0 0.0
        %2613 = vmatpush1.msra.mxu0 0.0
        %2614 = vmatprep.subr.mxu0 0.0
        %2615 = vmatpush1.msra.mxu0 0.0
        %2616 = vmatprep.subr.mxu0 0.0
        %2617 = vmatpush1.msra.mxu0 0.0
        %2618 = vmatprep.subr.mxu0 0.0
        %2619 = vmatpush1.msra.mxu0 0.0
        %2620 = vmatprep.subr.mxu0 0.0
        %2621 = vmatpush1.msra.mxu0 0.0
        %2622 = vmatprep.subr.mxu0 0.0
        %2623 = vmatpush1.msra.mxu0 0.0
        %2624 = vmatprep.subr.mxu0 0.0
        %2625 = vmatpush1.msra.mxu0 0.0
        %2626 = vmatprep.subr.mxu0 0.0
        %2627 = vmatpush1.msra.mxu0 0.0
        %2628 = vmatprep.subr.mxu0 0.0
        %2629 = vmatpush1.msra.mxu0 0.0
        %2630 = vmatprep.subr.mxu0 0.0
        %2631 = vmatpush1.msra.mxu0 0.0
        %2632 = vmatprep.subr.mxu0 0.0
        %2633 = vmatpush1.msra.mxu0 0.0
        %2634 = vmatprep.subr.mxu0 0.0
        %2635 = vmatpush1.msra.mxu0 0.0
        %2636 = vmatprep.subr.mxu0 0.0
        %2637 = vmatpush1.msra.mxu0 0.0
        %2638 = vmatprep.subr.mxu0 0.0
        %2639 = vmatpush1.msra.mxu0 0.0
        %2640 = vmatprep.subr.mxu0 0.0
        %2641 = vmatpush1.msra.mxu0 0.0
        %2642 = vmatprep.subr.mxu0 0.0
        %2643 = vmatpush1.msra.mxu0 0.0
        %2644 = vmatprep.mubr.f32.mxu0 0.0
        %2645 = vmatmul.mubr.f32.gmra.mrb[0].mxu0 %v2578
        %v2646 = vpop.f32.mrb[0].mxu0
        %v2647 = vadd.f32 0.0, %v2646
        %v2648 = vpop.f32.mrb[0].mxu0
        %2649 = vdwg.mxu0
        %v2650 = vlaneseq
        %v2651 = vshrl.u32 %v2650, 7
        %v2652 = vsub.s32 0, %v2651
        %v2653 = vrot.slane %v2647, %v2652
        %v2654 = vmul.f32 %v2339, %v2653
        %v2655 = vmul.f32 %v2340, %v2653
        %v2656 = vld [vmem:[#allocation24] sm:$0xff]
        %v2657 = vld [vmem:[#allocation24 + $0x8] sm:$0xff]
        %v2658 = vld [vmem:[#allocation24 + $0x10] sm:$0xff]
        %v2659 = vld [vmem:[#allocation24 + $0x18] sm:$0xff]
        %v2660 = vld [vmem:[#allocation24 + $0x20] sm:$0xff]
        %v2661 = vld [vmem:[#allocation24 + $0x28] sm:$0xff]
        %v2662 = vld [vmem:[#allocation24 + $0x30] sm:$0xff]
        %v2663 = vld [vmem:[#allocation24 + $0x38] sm:$0xff]
        %v2664 = vld [vmem:[#allocation24 + $0x40] sm:$0xff]
        %v2665 = vld [vmem:[#allocation24 + $0x48] sm:$0xff]
        %v2666 = vld [vmem:[#allocation24 + $0x50] sm:$0xff]
        %v2667 = vld [vmem:[#allocation24 + $0x58] sm:$0xff]
        %v2668 = vld [vmem:[#allocation24 + $0x60] sm:$0xff]
        %v2669 = vld [vmem:[#allocation24 + $0x68] sm:$0xff]
        %v2670 = vld [vmem:[#allocation24 + $0x70] sm:$0xff]
        %v2671 = vld [vmem:[#allocation24 + $0x78] sm:$0xff]
        %v2672 = vld [vmem:[#allocation24 + $0x80] sm:$0xff]
        %v2673 = vld [vmem:[#allocation24 + $0x88] sm:$0xff]
        %v2674 = vld [vmem:[#allocation24 + $0x90] sm:$0xff]
        %v2675 = vld [vmem:[#allocation24 + $0x98] sm:$0xff]
        %v2676 = vld [vmem:[#allocation24 + $0xa0] sm:$0xff]
        %v2677 = vld [vmem:[#allocation24 + $0xa8] sm:$0xff]
        %v2678 = vld [vmem:[#allocation24 + $0xb0] sm:$0xff]
        %v2679 = vld [vmem:[#allocation24 + $0xb8] sm:$0xff]
        %v2680 = vld [vmem:[#allocation24 + $0xc0] sm:$0xff]
        %v2681 = vld [vmem:[#allocation24 + $0xc8] sm:$0xff]
        %v2682 = vld [vmem:[#allocation24 + $0xd0] sm:$0xff]
        %v2683 = vld [vmem:[#allocation24 + $0xd8] sm:$0xff]
        %v2684 = vld [vmem:[#allocation24 + $0xe0] sm:$0xff]
        %v2685 = vld [vmem:[#allocation24 + $0xe8] sm:$0xff]
        %v2686 = vld [vmem:[#allocation24 + $0xf0] sm:$0xff]
        %v2687 = vld [vmem:[#allocation24 + $0xf8] sm:$0xff]
        %v2688 = vld [vmem:[#allocation24 + $0x100] sm:$0xff]
        %v2689 = vld [vmem:[#allocation24 + $0x108] sm:$0xff]
        %v2690 = vld [vmem:[#allocation24 + $0x110] sm:$0xff]
        %v2691 = vld [vmem:[#allocation24 + $0x118] sm:$0xff]
        %v2692 = vld [vmem:[#allocation24 + $0x120] sm:$0xff]
        %v2693 = vld [vmem:[#allocation24 + $0x128] sm:$0xff]
        %v2694 = vld [vmem:[#allocation24 + $0x130] sm:$0xff]
        %v2695 = vld [vmem:[#allocation24 + $0x138] sm:$0xff]
        %v2696 = vld [vmem:[#allocation24 + $0x140] sm:$0xff]
        %v2697 = vld [vmem:[#allocation24 + $0x148] sm:$0xff]
        %v2698 = vld [vmem:[#allocation24 + $0x150] sm:$0xff]
        %v2699 = vld [vmem:[#allocation24 + $0x158] sm:$0xff]
        %v2700 = vld [vmem:[#allocation24 + $0x160] sm:$0xff]
        %v2701 = vld [vmem:[#allocation24 + $0x168] sm:$0xff]
        %v2702 = vld [vmem:[#allocation24 + $0x170] sm:$0xff]
        %v2703 = vld [vmem:[#allocation24 + $0x178] sm:$0xff]
        %v2704 = vld [vmem:[#allocation26] sm:$0x1]
        %v2705 = vld [vmem:[#allocation27] sm:$0xff]
        %v2706 = vld [vmem:[#allocation27 + $0x8] sm:$0xff]
        %v2707 = vld [vmem:[#allocation27 + $0x10] sm:$0xff]
        %v2708 = vld [vmem:[#allocation27 + $0x18] sm:$0xff]
        %v2709 = vld [vmem:[#allocation27 + $0x20] sm:$0xff]
        %v2710 = vld [vmem:[#allocation27 + $0x28] sm:$0xff]
        %v2711 = vld [vmem:[#allocation27 + $0x30] sm:$0xff]
        %v2712 = vld [vmem:[#allocation27 + $0x38] sm:$0xff]
        %v2713 = vld [vmem:[#allocation27 + $0x40] sm:$0xff]
        %v2714 = vld [vmem:[#allocation27 + $0x48] sm:$0xff]
        %v2715 = vld [vmem:[#allocation27 + $0x50] sm:$0xff]
        %v2716 = vld [vmem:[#allocation27 + $0x58] sm:$0xff]
        %v2717 = vld [vmem:[#allocation27 + $0x60] sm:$0xff]
        %v2718 = vld [vmem:[#allocation27 + $0x68] sm:$0xff]
        %v2719 = vld [vmem:[#allocation27 + $0x70] sm:$0xff]
        %v2720 = vld [vmem:[#allocation27 + $0x78] sm:$0xff]
        %v2721 = vld [vmem:[#allocation27 + $0x80] sm:$0xff]
        %v2722 = vld [vmem:[#allocation27 + $0x88] sm:$0xff]
        %v2723 = vld [vmem:[#allocation27 + $0x90] sm:$0xff]
        %v2724 = vld [vmem:[#allocation27 + $0x98] sm:$0xff]
        %v2725 = vld [vmem:[#allocation27 + $0xa0] sm:$0xff]
        %v2726 = vld [vmem:[#allocation27 + $0xa8] sm:$0xff]
        %v2727 = vld [vmem:[#allocation27 + $0xb0] sm:$0xff]
        %v2728 = vld [vmem:[#allocation27 + $0xb8] sm:$0xff]
        %v2729 = vld [vmem:[#allocation27 + $0xc0] sm:$0xff]
        %v2730 = vld [vmem:[#allocation27 + $0xc8] sm:$0xff]
        %v2731 = vld [vmem:[#allocation27 + $0xd0] sm:$0xff]
        %v2732 = vld [vmem:[#allocation27 + $0xd8] sm:$0xff]
        %v2733 = vld [vmem:[#allocation27 + $0xe0] sm:$0xff]
        %v2734 = vld [vmem:[#allocation27 + $0xe8] sm:$0xff]
        %v2735 = vld [vmem:[#allocation27 + $0xf0] sm:$0xff]
        %v2736 = vld [vmem:[#allocation27 + $0xf8] sm:$0xff]
        %v2737 = vld [vmem:[#allocation27 + $0x100] sm:$0xff]
        %v2738 = vld [vmem:[#allocation27 + $0x108] sm:$0xff]
        %v2739 = vld [vmem:[#allocation27 + $0x110] sm:$0xff]
        %v2740 = vld [vmem:[#allocation27 + $0x118] sm:$0xff]
        %v2741 = vld [vmem:[#allocation27 + $0x120] sm:$0xff]
        %v2742 = vld [vmem:[#allocation27 + $0x128] sm:$0xff]
        %v2743 = vld [vmem:[#allocation27 + $0x130] sm:$0xff]
        %v2744 = vld [vmem:[#allocation27 + $0x138] sm:$0xff]
        %v2745 = vld [vmem:[#allocation27 + $0x140] sm:$0xff]
        %v2746 = vld [vmem:[#allocation27 + $0x148] sm:$0xff]
        %v2747 = vld [vmem:[#allocation27 + $0x150] sm:$0xff]
        %v2748 = vld [vmem:[#allocation27 + $0x158] sm:$0xff]
        %v2749 = vld [vmem:[#allocation27 + $0x160] sm:$0xff]
        %v2750 = vld [vmem:[#allocation27 + $0x168] sm:$0xff]
        %v2751 = vld [vmem:[#allocation27 + $0x170] sm:$0xff]
        %v2752 = vld [vmem:[#allocation27 + $0x178] sm:$0xff]
        %v2753 = vld [vmem:[#allocation29] sm:$0x1]
        %v2756 = vrot.slane %v2654, 7
        %v2757 = vrot.slane %v2655, 7
        %v2758 = vsel %vm1943, %v2756, %v2757
        %v2762 = vsel %vm1943, 0.0, %v2756
        %v2763 = vsel %vm1943, %v2757, 0.0
        %v2766 = vrot.slane %v2762, 1
        %v2767 = vrot.slane %v2758, 1
        %v2768 = vsel %vm1954, %v2766, %v2767
        %v2769 = vrot.slane %v2763, 1
        %v2770 = vsel %vm1954, %v2767, %v2769
        %v2773 = vrot.slane %v2762, 2
        %v2774 = vrot.slane %v2758, 2
        %v2775 = vsel %vm1966, %v2773, %v2774
        %v2776 = vrot.slane %v2763, 2
        %v2777 = vsel %vm1966, %v2774, %v2776
        %v2781 = vlaneseq
        %v2782 = vshrl.u32 %v2781, 7
        %v2783 = vsub.s32 0, %v2782
        %v2784 = vrot.slane %v2704, %v2783
        %2786 = vmatprep.subr.mxu0 0.0
        %2787 = vmatpush1.msra.mxu0 %v2656
        %2788 = vmatprep.subr.mxu0 0.0
        %2789 = vmatpush1.msra.mxu0 %v2657
        %2790 = vmatprep.subr.mxu0 0.0
        %2791 = vmatpush1.msra.mxu0 %v2658
        %2792 = vmatprep.subr.mxu0 0.0
        %2793 = vmatpush1.msra.mxu0 %v2659
        %2794 = vmatprep.subr.mxu0 0.0
        %2795 = vmatpush1.msra.mxu0 %v2660
        %2796 = vmatprep.subr.mxu0 0.0
        %2797 = vmatpush1.msra.mxu0 %v2661
        %2798 = vmatprep.subr.mxu0 0.0
        %2799 = vmatpush1.msra.mxu0 %v2662
        %2800 = vmatprep.subr.mxu0 0.0
        %2801 = vmatpush1.msra.mxu0 %v2663
        %2802 = vmatprep.subr.mxu0 0.0
        %2803 = vmatpush1.msra.mxu0 %v2664
        %2804 = vmatprep.subr.mxu0 0.0
        %2805 = vmatpush1.msra.mxu0 %v2665
        %2806 = vmatprep.subr.mxu0 0.0
        %2807 = vmatpush1.msra.mxu0 %v2666
        %2808 = vmatprep.subr.mxu0 0.0
        %2809 = vmatpush1.msra.mxu0 %v2667
        %2810 = vmatprep.subr.mxu0 0.0
        %2811 = vmatpush1.msra.mxu0 %v2668
        %2812 = vmatprep.subr.mxu0 0.0
        %2813 = vmatpush1.msra.mxu0 %v2669
        %2814 = vmatprep.subr.mxu0 0.0
        %2815 = vmatpush1.msra.mxu0 %v2670
        %2816 = vmatprep.subr.mxu0 0.0
        %2817 = vmatpush1.msra.mxu0 %v2671
        %2818 = vmatprep.subr.mxu0 0.0
        %2819 = vmatpush1.msra.mxu0 %v2672
        %2820 = vmatprep.subr.mxu0 0.0
        %2821 = vmatpush1.msra.mxu0 %v2673
        %2822 = vmatprep.subr.mxu0 0.0
        %2823 = vmatpush1.msra.mxu0 %v2674
        %2824 = vmatprep.subr.mxu0 0.0
        %2825 = vmatpush1.msra.mxu0 %v2675
        %2826 = vmatprep.subr.mxu0 0.0
        %2827 = vmatpush1.msra.mxu0 %v2676
        %2828 = vmatprep.subr.mxu0 0.0
        %2829 = vmatpush1.msra.mxu0 %v2677
        %2830 = vmatprep.subr.mxu0 0.0
        %2831 = vmatpush1.msra.mxu0 %v2678
        %2832 = vmatprep.subr.mxu0 0.0
        %2833 = vmatpush1.msra.mxu0 %v2679
        %2834 = vmatprep.subr.mxu0 0.0
        %2835 = vmatpush1.msra.mxu0 %v2680
        %2836 = vmatprep.subr.mxu0 0.0
        %2837 = vmatpush1.msra.mxu0 %v2681
        %2838 = vmatprep.subr.mxu0 0.0
        %2839 = vmatpush1.msra.mxu0 %v2682
        %2840 = vmatprep.subr.mxu0 0.0
        %2841 = vmatpush1.msra.mxu0 %v2683
        %2842 = vmatprep.subr.mxu0 0.0
        %2843 = vmatpush1.msra.mxu0 %v2684
        %2844 = vmatprep.subr.mxu0 0.0
        %2845 = vmatpush1.msra.mxu0 %v2685
        %2846 = vmatprep.subr.mxu0 0.0
        %2847 = vmatpush1.msra.mxu0 %v2686
        %2848 = vmatprep.subr.mxu0 0.0
        %2849 = vmatpush1.msra.mxu0 %v2687
        %2850 = vmatprep.mubr.f32.mxu0 %v2768
        %2851 = vmatmul.mubr.f32.gmra.mrb[0].mxu0 %v2762
        %v2852 = vpop.f32.mrb[0].mxu0
        %v2853 = vadd.f32 %v2784, %v2852
        %v2854 = vpop.f32.mrb[0].mxu0
        %2855 = vmatprep.mubr.f32.mxu0 %v2770
        %2856 = vmatmul.mubr.f32.gmra.mrb[0].mxu0 %v2758
        %v2857 = vpop.f32.mrb[0].mxu0
        %v2858 = vadd.f32 %v2784, %v2857
        %v2859 = vpop.f32.mrb[0].mxu0
        %2860 = vdwg.mxu0
        %2861 = vmatprep.subr.mxu0 0.0
        %2862 = vmatpush1.msra.mxu0 %v2688
        %2863 = vmatprep.subr.mxu0 0.0
        %2864 = vmatpush1.msra.mxu0 %v2689
        %2865 = vmatprep.subr.mxu0 0.0
        %2866 = vmatpush1.msra.mxu0 %v2690
        %2867 = vmatprep.subr.mxu0 0.0
        %2868 = vmatpush1.msra.mxu0 %v2691
        %2869 = vmatprep.subr.mxu0 0.0
        %2870 = vmatpush1.msra.mxu0 %v2692
        %2871 = vmatprep.subr.mxu0 0.0
        %2872 = vmatpush1.msra.mxu0 %v2693
        %2873 = vmatprep.subr.mxu0 0.0
        %2874 = vmatpush1.msra.mxu0 %v2694
        %2875 = vmatprep.subr.mxu0 0.0
        %2876 = vmatpush1.msra.mxu0 %v2695
        %2877 = vmatprep.subr.mxu0 0.0
        %2878 = vmatpush1.msra.mxu0 %v2696
        %2879 = vmatprep.subr.mxu0 0.0
        %2880 = vmatpush1.msra.mxu0 %v2697
        %2881 = vmatprep.subr.mxu0 0.0
        %2882 = vmatpush1.msra.mxu0 %v2698
        %2883 = vmatprep.subr.mxu0 0.0
        %2884 = vmatpush1.msra.mxu0 %v2699
        %2885 = vmatprep.subr.mxu0 0.0
        %2886 = vmatpush1.msra.mxu0 %v2700
        %2887 = vmatprep.subr.mxu0 0.0
        %2888 = vmatpush1.msra.mxu0 %v2701
        %2889 = vmatprep.subr.mxu0 0.0
        %2890 = vmatpush1.msra.mxu0 %v2702
        %2891 = vmatprep.subr.mxu0 0.0
        %2892 = vmatpush1.msra.mxu0 %v2703
        %2893 = vmatprep.subr.mxu0 0.0
        %2894 = vmatpush1.msra.mxu0 0.0
        %2895 = vmatprep.subr.mxu0 0.0
        %2896 = vmatpush1.msra.mxu0 0.0
        %2897 = vmatprep.subr.mxu0 0.0
        %2898 = vmatpush1.msra.mxu0 0.0
        %2899 = vmatprep.subr.mxu0 0.0
        %2900 = vmatpush1.msra.mxu0 0.0
        %2901 = vmatprep.subr.mxu0 0.0
        %2902 = vmatpush1.msra.mxu0 0.0
        %2903 = vmatprep.subr.mxu0 0.0
        %2904 = vmatpush1.msra.mxu0 0.0
        %2905 = vmatprep.subr.mxu0 0.0
        %2906 = vmatpush1.msra.mxu0 0.0
        %2907 = vmatprep.subr.mxu0 0.0
        %2908 = vmatpush1.msra.mxu0 0.0
        %2909 = vmatprep.subr.mxu0 0.0
        %2910 = vmatpush1.msra.mxu0 0.0
        %2911 = vmatprep.subr.mxu0 0.0
        %2912 = vmatpush1.msra.mxu0 0.0
        %2913 = vmatprep.subr.mxu0 0.0
        %2914 = vmatpush1.msra.mxu0 0.0
        %2915 = vmatprep.subr.mxu0 0.0
        %2916 = vmatpush1.msra.mxu0 0.0
        %2917 = vmatprep.subr.mxu0 0.0
        %2918 = vmatpush1.msra.mxu0 0.0
        %2919 = vmatprep.subr.mxu0 0.0
        %2920 = vmatpush1.msra.mxu0 0.0
        %2921 = vmatprep.subr.mxu0 0.0
        %2922 = vmatpush1.msra.mxu0 0.0
        %2923 = vmatprep.subr.mxu0 0.0
        %2924 = vmatpush1.msra.mxu0 0.0
        %2925 = vmatprep.mubr.f32.mxu0 0.0
        %2926 = vmatmul.mubr.f32.gmra.mrb[0].mxu0 %v2775
        %v2927 = vpop.f32.mrb[0].mxu0
        %v2928 = vadd.f32 %v2853, %v2927
        %v2929 = vpop.f32.mrb[0].mxu0
        %2930 = vmatprep.mubr.f32.mxu0 0.0
        %2931 = vmatmul.mubr.f32.gmra.mrb[0].mxu0 %v2777
        %v2932 = vpop.f32.mrb[0].mxu0
        %v2933 = vadd.f32 %v2858, %v2932
        %v2934 = vpop.f32.mrb[0].mxu0
        %2935 = vdwg.mxu0
        %vm2936 = vcmp.gt.f32.partialorder %v2928, 0.0
        %vm2937 = vcmp.gt.f32.partialorder %v2933, 0.0
        %v2938 = vmul.f32 %v2928, 0.01
        %v2939 = vmul.f32 %v2933, 0.01
        %v2940 = vsel %vm2936, %v2928, %v2938
        %v2941 = vsel %vm2937, %v2933, %v2939
        %v2944 = vrot.slane %v2940, 7
        %v2945 = vrot.slane %v2941, 7
        %v2946 = vsel %vm1943, %v2944, %v2945
        %v2950 = vsel %vm1943, 0.0, %v2944
        %v2951 = vsel %vm1943, %v2945, 0.0
        %v2954 = vrot.slane %v2950, 1
        %v2955 = vrot.slane %v2946, 1
        %v2956 = vsel %vm1954, %v2954, %v2955
        %v2957 = vrot.slane %v2951, 1
        %v2958 = vsel %vm1954, %v2955, %v2957
        %v2961 = vrot.slane %v2950, 2
        %v2962 = vrot.slane %v2946, 2
        %v2963 = vsel %vm1966, %v2961, %v2962
        %v2964 = vrot.slane %v2951, 2
        %v2965 = vsel %vm1966, %v2962, %v2964
        %v2969 = vlaneseq
        %v2970 = vshrl.u32 %v2969, 7
        %v2971 = vsub.s32 0, %v2970
        %v2972 = vrot.slane %v2753, %v2971
        %2974 = vmatprep.subr.mxu0 0.0
        %2975 = vmatpush1.msra.mxu0 %v2705
        %2976 = vmatprep.subr.mxu0 0.0
        %2977 = vmatpush1.msra.mxu0 %v2706
        %2978 = vmatprep.subr.mxu0 0.0
        %2979 = vmatpush1.msra.mxu0 %v2707
        %2980 = vmatprep.subr.mxu0 0.0
        %2981 = vmatpush1.msra.mxu0 %v2708
        %2982 = vmatprep.subr.mxu0 0.0
        %2983 = vmatpush1.msra.mxu0 %v2709
        %2984 = vmatprep.subr.mxu0 0.0
        %2985 = vmatpush1.msra.mxu0 %v2710
        %2986 = vmatprep.subr.mxu0 0.0
        %2987 = vmatpush1.msra.mxu0 %v2711
        %2988 = vmatprep.subr.mxu0 0.0
        %2989 = vmatpush1.msra.mxu0 %v2712
        %2990 = vmatprep.subr.mxu0 0.0
        %2991 = vmatpush1.msra.mxu0 %v2713
        %2992 = vmatprep.subr.mxu0 0.0
        %2993 = vmatpush1.msra.mxu0 %v2714
        %2994 = vmatprep.subr.mxu0 0.0
        %2995 = vmatpush1.msra.mxu0 %v2715
        %2996 = vmatprep.subr.mxu0 0.0
        %2997 = vmatpush1.msra.mxu0 %v2716
        %2998 = vmatprep.subr.mxu0 0.0
        %2999 = vmatpush1.msra.mxu0 %v2717
        %3000 = vmatprep.subr.mxu0 0.0
        %3001 = vmatpush1.msra.mxu0 %v2718
        %3002 = vmatprep.subr.mxu0 0.0
        %3003 = vmatpush1.msra.mxu0 %v2719
        %3004 = vmatprep.subr.mxu0 0.0
        %3005 = vmatpush1.msra.mxu0 %v2720
        %3006 = vmatprep.subr.mxu0 0.0
        %3007 = vmatpush1.msra.mxu0 %v2721
        %3008 = vmatprep.subr.mxu0 0.0
        %3009 = vmatpush1.msra.mxu0 %v2722
        %3010 = vmatprep.subr.mxu0 0.0
        %3011 = vmatpush1.msra.mxu0 %v2723
        %3012 = vmatprep.subr.mxu0 0.0
        %3013 = vmatpush1.msra.mxu0 %v2724
        %3014 = vmatprep.subr.mxu0 0.0
        %3015 = vmatpush1.msra.mxu0 %v2725
        %3016 = vmatprep.subr.mxu0 0.0
        %3017 = vmatpush1.msra.mxu0 %v2726
        %3018 = vmatprep.subr.mxu0 0.0
        %3019 = vmatpush1.msra.mxu0 %v2727
        %3020 = vmatprep.subr.mxu0 0.0
        %3021 = vmatpush1.msra.mxu0 %v2728
        %3022 = vmatprep.subr.mxu0 0.0
        %3023 = vmatpush1.msra.mxu0 %v2729
        %3024 = vmatprep.subr.mxu0 0.0
        %3025 = vmatpush1.msra.mxu0 %v2730
        %3026 = vmatprep.subr.mxu0 0.0
        %3027 = vmatpush1.msra.mxu0 %v2731
        %3028 = vmatprep.subr.mxu0 0.0
        %3029 = vmatpush1.msra.mxu0 %v2732
        %3030 = vmatprep.subr.mxu0 0.0
        %3031 = vmatpush1.msra.mxu0 %v2733
        %3032 = vmatprep.subr.mxu0 0.0
        %3033 = vmatpush1.msra.mxu0 %v2734
        %3034 = vmatprep.subr.mxu0 0.0
        %3035 = vmatpush1.msra.mxu0 %v2735
        %3036 = vmatprep.subr.mxu0 0.0
        %3037 = vmatpush1.msra.mxu0 %v2736
        %3038 = vmatprep.mubr.f32.mxu0 %v2956
        %3039 = vmatmul.mubr.f32.gmra.mrb[0].mxu0 %v2950
        %v3040 = vpop.f32.mrb[0].mxu0
        %v3041 = vadd.f32 %v2972, %v3040
        %v3042 = vpop.f32.mrb[0].mxu0
        %3043 = vmatprep.mubr.f32.mxu0 %v2958
        %3044 = vmatmul.mubr.f32.gmra.mrb[0].mxu0 %v2946
        %v3045 = vpop.f32.mrb[0].mxu0
        %v3046 = vadd.f32 %v2972, %v3045
        %v3047 = vpop.f32.mrb[0].mxu0
        %3048 = vdwg.mxu0
        %3049 = vmatprep.subr.mxu0 0.0
        %3050 = vmatpush1.msra.mxu0 %v2737
        %3051 = vmatprep.subr.mxu0 0.0
        %3052 = vmatpush1.msra.mxu0 %v2738
        %3053 = vmatprep.subr.mxu0 0.0
        %3054 = vmatpush1.msra.mxu0 %v2739
        %3055 = vmatprep.subr.mxu0 0.0
        %3056 = vmatpush1.msra.mxu0 %v2740
        %3057 = vmatprep.subr.mxu0 0.0
        %3058 = vmatpush1.msra.mxu0 %v2741
        %3059 = vmatprep.subr.mxu0 0.0
        %3060 = vmatpush1.msra.mxu0 %v2742
        %3061 = vmatprep.subr.mxu0 0.0
        %3062 = vmatpush1.msra.mxu0 %v2743
        %3063 = vmatprep.subr.mxu0 0.0
        %3064 = vmatpush1.msra.mxu0 %v2744
        %3065 = vmatprep.subr.mxu0 0.0
        %3066 = vmatpush1.msra.mxu0 %v2745
        %3067 = vmatprep.subr.mxu0 0.0
        %3068 = vmatpush1.msra.mxu0 %v2746
        %3069 = vmatprep.subr.mxu0 0.0
        %3070 = vmatpush1.msra.mxu0 %v2747
        %3071 = vmatprep.subr.mxu0 0.0
        %3072 = vmatpush1.msra.mxu0 %v2748
        %3073 = vmatprep.subr.mxu0 0.0
        %3074 = vmatpush1.msra.mxu0 %v2749
        %3075 = vmatprep.subr.mxu0 0.0
        %3076 = vmatpush1.msra.mxu0 %v2750
        %3077 = vmatprep.subr.mxu0 0.0
        %3078 = vmatpush1.msra.mxu0 %v2751
        %3079 = vmatprep.subr.mxu0 0.0
        %3080 = vmatpush1.msra.mxu0 %v2752
        %3081 = vmatprep.subr.mxu0 0.0
        %3082 = vmatpush1.msra.mxu0 0.0
        %3083 = vmatprep.subr.mxu0 0.0
        %3084 = vmatpush1.msra.mxu0 0.0
        %3085 = vmatprep.subr.mxu0 0.0
        %3086 = vmatpush1.msra.mxu0 0.0
        %3087 = vmatprep.subr.mxu0 0.0
        %3088 = vmatpush1.msra.mxu0 0.0
        %3089 = vmatprep.subr.mxu0 0.0
        %3090 = vmatpush1.msra.mxu0 0.0
        %3091 = vmatprep.subr.mxu0 0.0
        %3092 = vmatpush1.msra.mxu0 0.0
        %3093 = vmatprep.subr.mxu0 0.0
        %3094 = vmatpush1.msra.mxu0 0.0
        %3095 = vmatprep.subr.mxu0 0.0
        %3096 = vmatpush1.msra.mxu0 0.0
        %3097 = vmatprep.subr.mxu0 0.0
        %3098 = vmatpush1.msra.mxu0 0.0
        %3099 = vmatprep.subr.mxu0 0.0
        %3100 = vmatpush1.msra.mxu0 0.0
        %3101 = vmatprep.subr.mxu0 0.0
        %3102 = vmatpush1.msra.mxu0 0.0
        %3103 = vmatprep.subr.mxu0 0.0
        %3104 = vmatpush1.msra.mxu0 0.0
        %3105 = vmatprep.subr.mxu0 0.0
        %3106 = vmatpush1.msra.mxu0 0.0
        %3107 = vmatprep.subr.mxu0 0.0
        %3108 = vmatpush1.msra.mxu0 0.0
        %3109 = vmatprep.subr.mxu0 0.0
        %3110 = vmatpush1.msra.mxu0 0.0
        %3111 = vmatprep.subr.mxu0 0.0
        %3112 = vmatpush1.msra.mxu0 0.0
        %3113 = vmatprep.mubr.f32.mxu0 0.0
        %3114 = vmatmul.mubr.f32.gmra.mrb[0].mxu0 %v2963
        %v3115 = vpop.f32.mrb[0].mxu0
        %v3116 = vadd.f32 %v3041, %v3115
        %v3117 = vpop.f32.mrb[0].mxu0
        %3118 = vmatprep.mubr.f32.mxu0 0.0
        %3119 = vmatmul.mubr.f32.gmra.mrb[0].mxu0 %v2965
        %v3120 = vpop.f32.mrb[0].mxu0
        %v3121 = vadd.f32 %v3046, %v3120
        %v3122 = vpop.f32.mrb[0].mxu0
        %3123 = vdwg.mxu0
        %vm3124 = vcmp.gt.f32.partialorder %v3116, 0.0
        %vm3125 = vcmp.gt.f32.partialorder %v3121, 0.0
        %v3126 = vmul.f32 %v3116, 0.01
        %v3127 = vmul.f32 %v3121, 0.01
        %v3128 = vsel %vm3124, %v3116, %v3126
        %v3129 = vsel %vm3125, %v3121, %v3127
        %v3130 = vadd.f32 %v3128, %v2654
        %v3131 = vadd.f32 %v3129, %v2655
        %v3132 = vld [vmem:[#allocation30] sm:$0xff]
        %v3133 = vld [vmem:[#allocation30 + $0x8] sm:$0xff]
        %v3134 = vld [vmem:[#allocation30 + $0x10] sm:$0xff]
        %v3135 = vld [vmem:[#allocation30 + $0x18] sm:$0xff]
        %v3136 = vld [vmem:[#allocation30 + $0x20] sm:$0xff]
        %v3137 = vld [vmem:[#allocation30 + $0x28] sm:$0xff]
        %v3138 = vld [vmem:[#allocation30 + $0x30] sm:$0xff]
        %v3139 = vld [vmem:[#allocation30 + $0x38] sm:$0xff]
        %v3140 = vld [vmem:[#allocation30 + $0x40] sm:$0xff]
        %v3141 = vld [vmem:[#allocation30 + $0x48] sm:$0xff]
        %v3142 = vld [vmem:[#allocation30 + $0x50] sm:$0xff]
        %v3143 = vld [vmem:[#allocation30 + $0x58] sm:$0xff]
        %v3144 = vld [vmem:[#allocation30 + $0x60] sm:$0xff]
        %v3145 = vld [vmem:[#allocation30 + $0x68] sm:$0xff]
        %v3146 = vld [vmem:[#allocation30 + $0x70] sm:$0xff]
        %v3147 = vld [vmem:[#allocation30 + $0x78] sm:$0xff]
        %v3148 = vld [vmem:[#allocation30 + $0x80] sm:$0xff]
        %v3149 = vld [vmem:[#allocation30 + $0x88] sm:$0xff]
        %v3150 = vld [vmem:[#allocation30 + $0x90] sm:$0xff]
        %v3151 = vld [vmem:[#allocation30 + $0x98] sm:$0xff]
        %v3152 = vld [vmem:[#allocation30 + $0xa0] sm:$0xff]
        %v3153 = vld [vmem:[#allocation30 + $0xa8] sm:$0xff]
        %v3154 = vld [vmem:[#allocation30 + $0xb0] sm:$0xff]
        %v3155 = vld [vmem:[#allocation30 + $0xb8] sm:$0xff]
        %v3156 = vld [vmem:[#allocation30 + $0xc0] sm:$0xff]
        %v3157 = vld [vmem:[#allocation30 + $0xc8] sm:$0xff]
        %v3158 = vld [vmem:[#allocation30 + $0xd0] sm:$0xff]
        %v3159 = vld [vmem:[#allocation30 + $0xd8] sm:$0xff]
        %v3160 = vld [vmem:[#allocation30 + $0xe0] sm:$0xff]
        %v3161 = vld [vmem:[#allocation30 + $0xe8] sm:$0xff]
        %v3162 = vld [vmem:[#allocation30 + $0xf0] sm:$0xff]
        %v3163 = vld [vmem:[#allocation30 + $0xf8] sm:$0xff]
        %v3164 = vld [vmem:[#allocation30 + $0x100] sm:$0xff]
        %v3165 = vld [vmem:[#allocation30 + $0x108] sm:$0xff]
        %v3166 = vld [vmem:[#allocation30 + $0x110] sm:$0xff]
        %v3167 = vld [vmem:[#allocation30 + $0x118] sm:$0xff]
        %v3168 = vld [vmem:[#allocation30 + $0x120] sm:$0xff]
        %v3169 = vld [vmem:[#allocation30 + $0x128] sm:$0xff]
        %v3170 = vld [vmem:[#allocation30 + $0x130] sm:$0xff]
        %v3171 = vld [vmem:[#allocation30 + $0x138] sm:$0xff]
        %v3172 = vld [vmem:[#allocation30 + $0x140] sm:$0xff]
        %v3173 = vld [vmem:[#allocation30 + $0x148] sm:$0xff]
        %v3174 = vld [vmem:[#allocation30 + $0x150] sm:$0xff]
        %v3175 = vld [vmem:[#allocation30 + $0x158] sm:$0xff]
        %v3176 = vld [vmem:[#allocation30 + $0x160] sm:$0xff]
        %v3177 = vld [vmem:[#allocation30 + $0x168] sm:$0xff]
        %v3178 = vld [vmem:[#allocation30 + $0x170] sm:$0xff]
        %v3179 = vld [vmem:[#allocation30 + $0x178] sm:$0xff]
        %v3180 = vld [vmem:[#allocation32] sm:$0x1]
        %v3181 = vld [vmem:[#allocation33] sm:$0xff]
        %v3182 = vld [vmem:[#allocation33 + $0x8] sm:$0xff]
        %v3183 = vld [vmem:[#allocation33 + $0x10] sm:$0xff]
        %v3184 = vld [vmem:[#allocation33 + $0x18] sm:$0xff]
        %v3185 = vld [vmem:[#allocation33 + $0x20] sm:$0xff]
        %v3186 = vld [vmem:[#allocation33 + $0x28] sm:$0xff]
        %v3187 = vld [vmem:[#allocation33 + $0x30] sm:$0xff]
        %v3188 = vld [vmem:[#allocation33 + $0x38] sm:$0xff]
        %v3189 = vld [vmem:[#allocation33 + $0x40] sm:$0xff]
        %v3190 = vld [vmem:[#allocation33 + $0x48] sm:$0xff]
        %v3191 = vld [vmem:[#allocation33 + $0x50] sm:$0xff]
        %v3192 = vld [vmem:[#allocation33 + $0x58] sm:$0xff]
        %v3193 = vld [vmem:[#allocation33 + $0x60] sm:$0xff]
        %v3194 = vld [vmem:[#allocation33 + $0x68] sm:$0xff]
        %v3195 = vld [vmem:[#allocation33 + $0x70] sm:$0xff]
        %v3196 = vld [vmem:[#allocation33 + $0x78] sm:$0xff]
        %v3197 = vld [vmem:[#allocation33 + $0x80] sm:$0xff]
        %v3198 = vld [vmem:[#allocation33 + $0x88] sm:$0xff]
        %v3199 = vld [vmem:[#allocation33 + $0x90] sm:$0xff]
        %v3200 = vld [vmem:[#allocation33 + $0x98] sm:$0xff]
        %v3201 = vld [vmem:[#allocation33 + $0xa0] sm:$0xff]
        %v3202 = vld [vmem:[#allocation33 + $0xa8] sm:$0xff]
        %v3203 = vld [vmem:[#allocation33 + $0xb0] sm:$0xff]
        %v3204 = vld [vmem:[#allocation33 + $0xb8] sm:$0xff]
        %v3205 = vld [vmem:[#allocation33 + $0xc0] sm:$0xff]
        %v3206 = vld [vmem:[#allocation33 + $0xc8] sm:$0xff]
        %v3207 = vld [vmem:[#allocation33 + $0xd0] sm:$0xff]
        %v3208 = vld [vmem:[#allocation33 + $0xd8] sm:$0xff]
        %v3209 = vld [vmem:[#allocation33 + $0xe0] sm:$0xff]
        %v3210 = vld [vmem:[#allocation33 + $0xe8] sm:$0xff]
        %v3211 = vld [vmem:[#allocation33 + $0xf0] sm:$0xff]
        %v3212 = vld [vmem:[#allocation33 + $0xf8] sm:$0xff]
        %v3213 = vld [vmem:[#allocation33 + $0x100] sm:$0xff]
        %v3214 = vld [vmem:[#allocation33 + $0x108] sm:$0xff]
        %v3215 = vld [vmem:[#allocation33 + $0x110] sm:$0xff]
        %v3216 = vld [vmem:[#allocation33 + $0x118] sm:$0xff]
        %v3217 = vld [vmem:[#allocation33 + $0x120] sm:$0xff]
        %v3218 = vld [vmem:[#allocation33 + $0x128] sm:$0xff]
        %v3219 = vld [vmem:[#allocation33 + $0x130] sm:$0xff]
        %v3220 = vld [vmem:[#allocation33 + $0x138] sm:$0xff]
        %v3221 = vld [vmem:[#allocation33 + $0x140] sm:$0xff]
        %v3222 = vld [vmem:[#allocation33 + $0x148] sm:$0xff]
        %v3223 = vld [vmem:[#allocation33 + $0x150] sm:$0xff]
        %v3224 = vld [vmem:[#allocation33 + $0x158] sm:$0xff]
        %v3225 = vld [vmem:[#allocation33 + $0x160] sm:$0xff]
        %v3226 = vld [vmem:[#allocation33 + $0x168] sm:$0xff]
        %v3227 = vld [vmem:[#allocation33 + $0x170] sm:$0xff]
        %v3228 = vld [vmem:[#allocation33 + $0x178] sm:$0xff]
        %v3229 = vld [vmem:[#allocation35] sm:$0x1]
        %v3232 = vrot.slane %v3130, 7
        %v3233 = vrot.slane %v3131, 7
        %v3234 = vsel %vm1943, %v3232, %v3233
        %v3238 = vsel %vm1943, 0.0, %v3232
        %v3239 = vsel %vm1943, %v3233, 0.0
        %v3242 = vrot.slane %v3238, 1
        %v3243 = vrot.slane %v3234, 1
        %v3244 = vsel %vm1954, %v3242, %v3243
        %v3245 = vrot.slane %v3239, 1
        %v3246 = vsel %vm1954, %v3243, %v3245
        %v3249 = vrot.slane %v3238, 2
        %v3250 = vrot.slane %v3234, 2
        %v3251 = vsel %vm1966, %v3249, %v3250
        %v3252 = vrot.slane %v3239, 2
        %v3253 = vsel %vm1966, %v3250, %v3252
        %v3257 = vlaneseq
        %v3258 = vshrl.u32 %v3257, 7
        %v3259 = vsub.s32 0, %v3258
        %v3260 = vrot.slane %v3180, %v3259
        %3262 = vmatprep.subr.mxu0 0.0
        %3263 = vmatpush1.msra.mxu0 %v3132
        %3264 = vmatprep.subr.mxu0 0.0
        %3265 = vmatpush1.msra.mxu0 %v3133
        %3266 = vmatprep.subr.mxu0 0.0
        %3267 = vmatpush1.msra.mxu0 %v3134
        %3268 = vmatprep.subr.mxu0 0.0
        %3269 = vmatpush1.msra.mxu0 %v3135
        %3270 = vmatprep.subr.mxu0 0.0
        %3271 = vmatpush1.msra.mxu0 %v3136
        %3272 = vmatprep.subr.mxu0 0.0
        %3273 = vmatpush1.msra.mxu0 %v3137
        %3274 = vmatprep.subr.mxu0 0.0
        %3275 = vmatpush1.msra.mxu0 %v3138
        %3276 = vmatprep.subr.mxu0 0.0
        %3277 = vmatpush1.msra.mxu0 %v3139
        %3278 = vmatprep.subr.mxu0 0.0
        %3279 = vmatpush1.msra.mxu0 %v3140
        %3280 = vmatprep.subr.mxu0 0.0
        %3281 = vmatpush1.msra.mxu0 %v3141
        %3282 = vmatprep.subr.mxu0 0.0
        %3283 = vmatpush1.msra.mxu0 %v3142
        %3284 = vmatprep.subr.mxu0 0.0
        %3285 = vmatpush1.msra.mxu0 %v3143
        %3286 = vmatprep.subr.mxu0 0.0
        %3287 = vmatpush1.msra.mxu0 %v3144
        %3288 = vmatprep.subr.mxu0 0.0
        %3289 = vmatpush1.msra.mxu0 %v3145
        %3290 = vmatprep.subr.mxu0 0.0
        %3291 = vmatpush1.msra.mxu0 %v3146
        %3292 = vmatprep.subr.mxu0 0.0
        %3293 = vmatpush1.msra.mxu0 %v3147
        %3294 = vmatprep.subr.mxu0 0.0
        %3295 = vmatpush1.msra.mxu0 %v3148
        %3296 = vmatprep.subr.mxu0 0.0
        %3297 = vmatpush1.msra.mxu0 %v3149
        %3298 = vmatprep.subr.mxu0 0.0
        %3299 = vmatpush1.msra.mxu0 %v3150
        %3300 = vmatprep.subr.mxu0 0.0
        %3301 = vmatpush1.msra.mxu0 %v3151
        %3302 = vmatprep.subr.mxu0 0.0
        %3303 = vmatpush1.msra.mxu0 %v3152
        %3304 = vmatprep.subr.mxu0 0.0
        %3305 = vmatpush1.msra.mxu0 %v3153
        %3306 = vmatprep.subr.mxu0 0.0
        %3307 = vmatpush1.msra.mxu0 %v3154
        %3308 = vmatprep.subr.mxu0 0.0
        %3309 = vmatpush1.msra.mxu0 %v3155
        %3310 = vmatprep.subr.mxu0 0.0
        %3311 = vmatpush1.msra.mxu0 %v3156
        %3312 = vmatprep.subr.mxu0 0.0
        %3313 = vmatpush1.msra.mxu0 %v3157
        %3314 = vmatprep.subr.mxu0 0.0
        %3315 = vmatpush1.msra.mxu0 %v3158
        %3316 = vmatprep.subr.mxu0 0.0
        %3317 = vmatpush1.msra.mxu0 %v3159
        %3318 = vmatprep.subr.mxu0 0.0
        %3319 = vmatpush1.msra.mxu0 %v3160
        %3320 = vmatprep.subr.mxu0 0.0
        %3321 = vmatpush1.msra.mxu0 %v3161
        %3322 = vmatprep.subr.mxu0 0.0
        %3323 = vmatpush1.msra.mxu0 %v3162
        %3324 = vmatprep.subr.mxu0 0.0
        %3325 = vmatpush1.msra.mxu0 %v3163
        %3326 = vmatprep.mubr.f32.mxu0 %v3244
        %3327 = vmatmul.mubr.f32.gmra.mrb[0].mxu0 %v3238
        %v3328 = vpop.f32.mrb[0].mxu0
        %v3329 = vadd.f32 %v3260, %v3328
        %v3330 = vpop.f32.mrb[0].mxu0
        %3331 = vmatprep.mubr.f32.mxu0 %v3246
        %3332 = vmatmul.mubr.f32.gmra.mrb[0].mxu0 %v3234
        %v3333 = vpop.f32.mrb[0].mxu0
        %v3334 = vadd.f32 %v3260, %v3333
        %v3335 = vpop.f32.mrb[0].mxu0
        %3336 = vdwg.mxu0
        %3337 = vmatprep.subr.mxu0 0.0
        %3338 = vmatpush1.msra.mxu0 %v3164
        %3339 = vmatprep.subr.mxu0 0.0
        %3340 = vmatpush1.msra.mxu0 %v3165
        %3341 = vmatprep.subr.mxu0 0.0
        %3342 = vmatpush1.msra.mxu0 %v3166
        %3343 = vmatprep.subr.mxu0 0.0
        %3344 = vmatpush1.msra.mxu0 %v3167
        %3345 = vmatprep.subr.mxu0 0.0
        %3346 = vmatpush1.msra.mxu0 %v3168
        %3347 = vmatprep.subr.mxu0 0.0
        %3348 = vmatpush1.msra.mxu0 %v3169
        %3349 = vmatprep.subr.mxu0 0.0
        %3350 = vmatpush1.msra.mxu0 %v3170
        %3351 = vmatprep.subr.mxu0 0.0
        %3352 = vmatpush1.msra.mxu0 %v3171
        %3353 = vmatprep.subr.mxu0 0.0
        %3354 = vmatpush1.msra.mxu0 %v3172
        %3355 = vmatprep.subr.mxu0 0.0
        %3356 = vmatpush1.msra.mxu0 %v3173
        %3357 = vmatprep.subr.mxu0 0.0
        %3358 = vmatpush1.msra.mxu0 %v3174
        %3359 = vmatprep.subr.mxu0 0.0
        %3360 = vmatpush1.msra.mxu0 %v3175
        %3361 = vmatprep.subr.mxu0 0.0
        %3362 = vmatpush1.msra.mxu0 %v3176
        %3363 = vmatprep.subr.mxu0 0.0
        %3364 = vmatpush1.msra.mxu0 %v3177
        %3365 = vmatprep.subr.mxu0 0.0
        %3366 = vmatpush1.msra.mxu0 %v3178
        %3367 = vmatprep.subr.mxu0 0.0
        %3368 = vmatpush1.msra.mxu0 %v3179
        %3369 = vmatprep.subr.mxu0 0.0
        %3370 = vmatpush1.msra.mxu0 0.0
        %3371 = vmatprep.subr.mxu0 0.0
        %3372 = vmatpush1.msra.mxu0 0.0
        %3373 = vmatprep.subr.mxu0 0.0
        %3374 = vmatpush1.msra.mxu0 0.0
        %3375 = vmatprep.subr.mxu0 0.0
        %3376 = vmatpush1.msra.mxu0 0.0
        %3377 = vmatprep.subr.mxu0 0.0
        %3378 = vmatpush1.msra.mxu0 0.0
        %3379 = vmatprep.subr.mxu0 0.0
        %3380 = vmatpush1.msra.mxu0 0.0
        %3381 = vmatprep.subr.mxu0 0.0
        %3382 = vmatpush1.msra.mxu0 0.0
        %3383 = vmatprep.subr.mxu0 0.0
        %3384 = vmatpush1.msra.mxu0 0.0
        %3385 = vmatprep.subr.mxu0 0.0
        %3386 = vmatpush1.msra.mxu0 0.0
        %3387 = vmatprep.subr.mxu0 0.0
        %3388 = vmatpush1.msra.mxu0 0.0
        %3389 = vmatprep.subr.mxu0 0.0
        %3390 = vmatpush1.msra.mxu0 0.0
        %3391 = vmatprep.subr.mxu0 0.0
        %3392 = vmatpush1.msra.mxu0 0.0
        %3393 = vmatprep.subr.mxu0 0.0
        %3394 = vmatpush1.msra.mxu0 0.0
        %3395 = vmatprep.subr.mxu0 0.0
        %3396 = vmatpush1.msra.mxu0 0.0
        %3397 = vmatprep.subr.mxu0 0.0
        %3398 = vmatpush1.msra.mxu0 0.0
        %3399 = vmatprep.subr.mxu0 0.0
        %3400 = vmatpush1.msra.mxu0 0.0
        %3401 = vmatprep.mubr.f32.mxu0 0.0
        %3402 = vmatmul.mubr.f32.gmra.mrb[0].mxu0 %v3251
        %v3403 = vpop.f32.mrb[0].mxu0
        %v3404 = vadd.f32 %v3329, %v3403
        %v3405 = vpop.f32.mrb[0].mxu0
        %3406 = vmatprep.mubr.f32.mxu0 0.0
        %3407 = vmatmul.mubr.f32.gmra.mrb[0].mxu0 %v3253
        %v3408 = vpop.f32.mrb[0].mxu0
        %v3409 = vadd.f32 %v3334, %v3408
        %v3410 = vpop.f32.mrb[0].mxu0
        %3411 = vdwg.mxu0
        %vm3412 = vcmp.gt.f32.partialorder %v3404, 0.0
        %vm3413 = vcmp.gt.f32.partialorder %v3409, 0.0
        %v3414 = vmul.f32 %v3404, 0.01
        %v3415 = vmul.f32 %v3409, 0.01
        %v3416 = vsel %vm3412, %v3404, %v3414
        %v3417 = vsel %vm3413, %v3409, %v3415
        %v3420 = vrot.slane %v3416, 7
        %v3421 = vrot.slane %v3417, 7
        %v3422 = vsel %vm1943, %v3420, %v3421
        %v3426 = vsel %vm1943, 0.0, %v3420
        %v3427 = vsel %vm1943, %v3421, 0.0
        %v3430 = vrot.slane %v3426, 1
        %v3431 = vrot.slane %v3422, 1
        %v3432 = vsel %vm1954, %v3430, %v3431
        %v3433 = vrot.slane %v3427, 1
        %v3434 = vsel %vm1954, %v3431, %v3433
        %v3437 = vrot.slane %v3426, 2
        %v3438 = vrot.slane %v3422, 2
        %v3439 = vsel %vm1966, %v3437, %v3438
        %v3440 = vrot.slane %v3427, 2
        %v3441 = vsel %vm1966, %v3438, %v3440
        %v3445 = vlaneseq
        %v3446 = vshrl.u32 %v3445, 7
        %v3447 = vsub.s32 0, %v3446
        %v3448 = vrot.slane %v3229, %v3447
        %3450 = vmatprep.subr.mxu0 0.0
        %3451 = vmatpush1.msra.mxu0 %v3181
        %3452 = vmatprep.subr.mxu0 0.0
        %3453 = vmatpush1.msra.mxu0 %v3182
        %3454 = vmatprep.subr.mxu0 0.0
        %3455 = vmatpush1.msra.mxu0 %v3183
        %3456 = vmatprep.subr.mxu0 0.0
        %3457 = vmatpush1.msra.mxu0 %v3184
        %3458 = vmatprep.subr.mxu0 0.0
        %3459 = vmatpush1.msra.mxu0 %v3185
        %3460 = vmatprep.subr.mxu0 0.0
        %3461 = vmatpush1.msra.mxu0 %v3186
        %3462 = vmatprep.subr.mxu0 0.0
        %3463 = vmatpush1.msra.mxu0 %v3187
        %3464 = vmatprep.subr.mxu0 0.0
        %3465 = vmatpush1.msra.mxu0 %v3188
        %3466 = vmatprep.subr.mxu0 0.0
        %3467 = vmatpush1.msra.mxu0 %v3189
        %3468 = vmatprep.subr.mxu0 0.0
        %3469 = vmatpush1.msra.mxu0 %v3190
        %3470 = vmatprep.subr.mxu0 0.0
        %3471 = vmatpush1.msra.mxu0 %v3191
        %3472 = vmatprep.subr.mxu0 0.0
        %3473 = vmatpush1.msra.mxu0 %v3192
        %3474 = vmatprep.subr.mxu0 0.0
        %3475 = vmatpush1.msra.mxu0 %v3193
        %3476 = vmatprep.subr.mxu0 0.0
        %3477 = vmatpush1.msra.mxu0 %v3194
        %3478 = vmatprep.subr.mxu0 0.0
        %3479 = vmatpush1.msra.mxu0 %v3195
        %3480 = vmatprep.subr.mxu0 0.0
        %3481 = vmatpush1.msra.mxu0 %v3196
        %3482 = vmatprep.subr.mxu0 0.0
        %3483 = vmatpush1.msra.mxu0 %v3197
        %3484 = vmatprep.subr.mxu0 0.0
        %3485 = vmatpush1.msra.mxu0 %v3198
        %3486 = vmatprep.subr.mxu0 0.0
        %3487 = vmatpush1.msra.mxu0 %v3199
        %3488 = vmatprep.subr.mxu0 0.0
        %3489 = vmatpush1.msra.mxu0 %v3200
        %3490 = vmatprep.subr.mxu0 0.0
        %3491 = vmatpush1.msra.mxu0 %v3201
        %3492 = vmatprep.subr.mxu0 0.0
        %3493 = vmatpush1.msra.mxu0 %v3202
        %3494 = vmatprep.subr.mxu0 0.0
        %3495 = vmatpush1.msra.mxu0 %v3203
        %3496 = vmatprep.subr.mxu0 0.0
        %3497 = vmatpush1.msra.mxu0 %v3204
        %3498 = vmatprep.subr.mxu0 0.0
        %3499 = vmatpush1.msra.mxu0 %v3205
        %3500 = vmatprep.subr.mxu0 0.0
        %3501 = vmatpush1.msra.mxu0 %v3206
        %3502 = vmatprep.subr.mxu0 0.0
        %3503 = vmatpush1.msra.mxu0 %v3207
        %3504 = vmatprep.subr.mxu0 0.0
        %3505 = vmatpush1.msra.mxu0 %v3208
        %3506 = vmatprep.subr.mxu0 0.0
        %3507 = vmatpush1.msra.mxu0 %v3209
        %3508 = vmatprep.subr.mxu0 0.0
        %3509 = vmatpush1.msra.mxu0 %v3210
        %3510 = vmatprep.subr.mxu0 0.0
        %3511 = vmatpush1.msra.mxu0 %v3211
        %3512 = vmatprep.subr.mxu0 0.0
        %3513 = vmatpush1.msra.mxu0 %v3212
        %3514 = vmatprep.mubr.f32.mxu0 %v3432
        %3515 = vmatmul.mubr.f32.gmra.mrb[0].mxu0 %v3426
        %v3516 = vpop.f32.mrb[0].mxu0
        %v3517 = vadd.f32 %v3448, %v3516
        %v3518 = vpop.f32.mrb[0].mxu0
        %3519 = vmatprep.mubr.f32.mxu0 %v3434
        %3520 = vmatmul.mubr.f32.gmra.mrb[0].mxu0 %v3422
        %v3521 = vpop.f32.mrb[0].mxu0
        %v3522 = vadd.f32 %v3448, %v3521
        %v3523 = vpop.f32.mrb[0].mxu0
        %3524 = vdwg.mxu0
        %3525 = vmatprep.subr.mxu0 0.0
        %3526 = vmatpush1.msra.mxu0 %v3213
        %3527 = vmatprep.subr.mxu0 0.0
        %3528 = vmatpush1.msra.mxu0 %v3214
        %3529 = vmatprep.subr.mxu0 0.0
        %3530 = vmatpush1.msra.mxu0 %v3215
        %3531 = vmatprep.subr.mxu0 0.0
        %3532 = vmatpush1.msra.mxu0 %v3216
        %3533 = vmatprep.subr.mxu0 0.0
        %3534 = vmatpush1.msra.mxu0 %v3217
        %3535 = vmatprep.subr.mxu0 0.0
        %3536 = vmatpush1.msra.mxu0 %v3218
        %3537 = vmatprep.subr.mxu0 0.0
        %3538 = vmatpush1.msra.mxu0 %v3219
        %3539 = vmatprep.subr.mxu0 0.0
        %3540 = vmatpush1.msra.mxu0 %v3220
        %3541 = vmatprep.subr.mxu0 0.0
        %3542 = vmatpush1.msra.mxu0 %v3221
        %3543 = vmatprep.subr.mxu0 0.0
        %3544 = vmatpush1.msra.mxu0 %v3222
        %3545 = vmatprep.subr.mxu0 0.0
        %3546 = vmatpush1.msra.mxu0 %v3223
        %3547 = vmatprep.subr.mxu0 0.0
        %3548 = vmatpush1.msra.mxu0 %v3224
        %3549 = vmatprep.subr.mxu0 0.0
        %3550 = vmatpush1.msra.mxu0 %v3225
        %3551 = vmatprep.subr.mxu0 0.0
        %3552 = vmatpush1.msra.mxu0 %v3226
        %3553 = vmatprep.subr.mxu0 0.0
        %3554 = vmatpush1.msra.mxu0 %v3227
        %3555 = vmatprep.subr.mxu0 0.0
        %3556 = vmatpush1.msra.mxu0 %v3228
        %3557 = vmatprep.subr.mxu0 0.0
        %3558 = vmatpush1.msra.mxu0 0.0
        %3559 = vmatprep.subr.mxu0 0.0
        %3560 = vmatpush1.msra.mxu0 0.0
        %3561 = vmatprep.subr.mxu0 0.0
        %3562 = vmatpush1.msra.mxu0 0.0
        %3563 = vmatprep.subr.mxu0 0.0
        %3564 = vmatpush1.msra.mxu0 0.0
        %3565 = vmatprep.subr.mxu0 0.0
        %3566 = vmatpush1.msra.mxu0 0.0
        %3567 = vmatprep.subr.mxu0 0.0
        %3568 = vmatpush1.msra.mxu0 0.0
        %3569 = vmatprep.subr.mxu0 0.0
        %3570 = vmatpush1.msra.mxu0 0.0
        %3571 = vmatprep.subr.mxu0 0.0
        %3572 = vmatpush1.msra.mxu0 0.0
        %3573 = vmatprep.subr.mxu0 0.0
        %3574 = vmatpush1.msra.mxu0 0.0
        %3575 = vmatprep.subr.mxu0 0.0
        %3576 = vmatpush1.msra.mxu0 0.0
        %3577 = vmatprep.subr.mxu0 0.0
        %3578 = vmatpush1.msra.mxu0 0.0
        %3579 = vmatprep.subr.mxu0 0.0
        %3580 = vmatpush1.msra.mxu0 0.0
        %3581 = vmatprep.subr.mxu0 0.0
        %3582 = vmatpush1.msra.mxu0 0.0
        %3583 = vmatprep.subr.mxu0 0.0
        %3584 = vmatpush1.msra.mxu0 0.0
        %3585 = vmatprep.subr.mxu0 0.0
        %3586 = vmatpush1.msra.mxu0 0.0
        %3587 = vmatprep.subr.mxu0 0.0
        %3588 = vmatpush1.msra.mxu0 0.0
        %3589 = vmatprep.mubr.f32.mxu0 0.0
        %3590 = vmatmul.mubr.f32.gmra.mrb[0].mxu0 %v3439
        %v3591 = vpop.f32.mrb[0].mxu0
        %v3592 = vadd.f32 %v3517, %v3591
        %v3593 = vpop.f32.mrb[0].mxu0
        %3594 = vmatprep.mubr.f32.mxu0 0.0
        %3595 = vmatmul.mubr.f32.gmra.mrb[0].mxu0 %v3441
        %v3596 = vpop.f32.mrb[0].mxu0
        %v3597 = vadd.f32 %v3522, %v3596
        %v3598 = vpop.f32.mrb[0].mxu0
        %3599 = vdwg.mxu0
        %vm3600 = vcmp.gt.f32.partialorder %v3592, 0.0
        %vm3601 = vcmp.gt.f32.partialorder %v3597, 0.0
        %v3602 = vmul.f32 %v3592, 0.01
        %v3603 = vmul.f32 %v3597, 0.01
        %v3604 = vsel %vm3600, %v3592, %v3602
        %v3605 = vsel %vm3601, %v3597, %v3603
        %v3606 = vadd.f32 %v3604, %v3130
        %v3607 = vadd.f32 %v3605, %v3131
        %v3608 = vld [vmem:[#allocation36] sm:$0xff]
        %v3609 = vld [vmem:[#allocation36 + $0x8] sm:$0xff]
        %v3610 = vld [vmem:[#allocation36 + $0x10] sm:$0xff]
        %v3611 = vld [vmem:[#allocation36 + $0x18] sm:$0xff]
        %v3612 = vld [vmem:[#allocation36 + $0x20] sm:$0xff]
        %v3613 = vld [vmem:[#allocation36 + $0x28] sm:$0xff]
        %v3614 = vld [vmem:[#allocation36 + $0x30] sm:$0xff]
        %v3615 = vld [vmem:[#allocation36 + $0x38] sm:$0xff]
        %v3616 = vld [vmem:[#allocation36 + $0x40] sm:$0xff]
        %v3617 = vld [vmem:[#allocation36 + $0x48] sm:$0xff]
        %v3618 = vld [vmem:[#allocation36 + $0x50] sm:$0xff]
        %v3619 = vld [vmem:[#allocation36 + $0x58] sm:$0xff]
        %v3620 = vld [vmem:[#allocation36 + $0x60] sm:$0xff]
        %v3621 = vld [vmem:[#allocation36 + $0x68] sm:$0xff]
        %v3622 = vld [vmem:[#allocation36 + $0x70] sm:$0xff]
        %v3623 = vld [vmem:[#allocation36 + $0x78] sm:$0xff]
        %v3624 = vld [vmem:[#allocation36 + $0x80] sm:$0xff]
        %v3625 = vld [vmem:[#allocation36 + $0x88] sm:$0xff]
        %v3626 = vld [vmem:[#allocation36 + $0x90] sm:$0xff]
        %v3627 = vld [vmem:[#allocation36 + $0x98] sm:$0xff]
        %v3628 = vld [vmem:[#allocation36 + $0xa0] sm:$0xff]
        %v3629 = vld [vmem:[#allocation36 + $0xa8] sm:$0xff]
        %v3630 = vld [vmem:[#allocation36 + $0xb0] sm:$0xff]
        %v3631 = vld [vmem:[#allocation36 + $0xb8] sm:$0xff]
        %v3632 = vld [vmem:[#allocation36 + $0xc0] sm:$0xff]
        %v3633 = vld [vmem:[#allocation36 + $0xc8] sm:$0xff]
        %v3634 = vld [vmem:[#allocation36 + $0xd0] sm:$0xff]
        %v3635 = vld [vmem:[#allocation36 + $0xd8] sm:$0xff]
        %v3636 = vld [vmem:[#allocation36 + $0xe0] sm:$0xff]
        %v3637 = vld [vmem:[#allocation36 + $0xe8] sm:$0xff]
        %v3638 = vld [vmem:[#allocation36 + $0xf0] sm:$0xff]
        %v3639 = vld [vmem:[#allocation36 + $0xf8] sm:$0xff]
        %v3640 = vld [vmem:[#allocation36 + $0x100] sm:$0xff]
        %v3641 = vld [vmem:[#allocation36 + $0x108] sm:$0xff]
        %v3642 = vld [vmem:[#allocation36 + $0x110] sm:$0xff]
        %v3643 = vld [vmem:[#allocation36 + $0x118] sm:$0xff]
        %v3644 = vld [vmem:[#allocation36 + $0x120] sm:$0xff]
        %v3645 = vld [vmem:[#allocation36 + $0x128] sm:$0xff]
        %v3646 = vld [vmem:[#allocation36 + $0x130] sm:$0xff]
        %v3647 = vld [vmem:[#allocation36 + $0x138] sm:$0xff]
        %v3648 = vld [vmem:[#allocation36 + $0x140] sm:$0xff]
        %v3649 = vld [vmem:[#allocation36 + $0x148] sm:$0xff]
        %v3650 = vld [vmem:[#allocation36 + $0x150] sm:$0xff]
        %v3651 = vld [vmem:[#allocation36 + $0x158] sm:$0xff]
        %v3652 = vld [vmem:[#allocation36 + $0x160] sm:$0xff]
        %v3653 = vld [vmem:[#allocation36 + $0x168] sm:$0xff]
        %v3654 = vld [vmem:[#allocation36 + $0x170] sm:$0xff]
        %v3655 = vld [vmem:[#allocation36 + $0x178] sm:$0xff]
        %v3656 = vld [vmem:[#allocation38] sm:$0x1]
        %v3657 = vld [vmem:[#allocation39] sm:$0xff]
        %v3658 = vld [vmem:[#allocation39 + $0x8] sm:$0xff]
        %v3659 = vld [vmem:[#allocation39 + $0x10] sm:$0xff]
        %v3660 = vld [vmem:[#allocation39 + $0x18] sm:$0xff]
        %v3661 = vld [vmem:[#allocation39 + $0x20] sm:$0xff]
        %v3662 = vld [vmem:[#allocation39 + $0x28] sm:$0xff]
        %v3663 = vld [vmem:[#allocation39 + $0x30] sm:$0xff]
        %v3664 = vld [vmem:[#allocation39 + $0x38] sm:$0xff]
        %v3665 = vld [vmem:[#allocation39 + $0x40] sm:$0xff]
        %v3666 = vld [vmem:[#allocation39 + $0x48] sm:$0xff]
        %v3667 = vld [vmem:[#allocation39 + $0x50] sm:$0xff]
        %v3668 = vld [vmem:[#allocation39 + $0x58] sm:$0xff]
        %v3669 = vld [vmem:[#allocation39 + $0x60] sm:$0xff]
        %v3670 = vld [vmem:[#allocation39 + $0x68] sm:$0xff]
        %v3671 = vld [vmem:[#allocation39 + $0x70] sm:$0xff]
        %v3672 = vld [vmem:[#allocation39 + $0x78] sm:$0xff]
        %v3673 = vld [vmem:[#allocation39 + $0x80] sm:$0xff]
        %v3674 = vld [vmem:[#allocation39 + $0x88] sm:$0xff]
        %v3675 = vld [vmem:[#allocation39 + $0x90] sm:$0xff]
        %v3676 = vld [vmem:[#allocation39 + $0x98] sm:$0xff]
        %v3677 = vld [vmem:[#allocation39 + $0xa0] sm:$0xff]
        %v3678 = vld [vmem:[#allocation39 + $0xa8] sm:$0xff]
        %v3679 = vld [vmem:[#allocation39 + $0xb0] sm:$0xff]
        %v3680 = vld [vmem:[#allocation39 + $0xb8] sm:$0xff]
        %v3681 = vld [vmem:[#allocation39 + $0xc0] sm:$0xff]
        %v3682 = vld [vmem:[#allocation39 + $0xc8] sm:$0xff]
        %v3683 = vld [vmem:[#allocation39 + $0xd0] sm:$0xff]
        %v3684 = vld [vmem:[#allocation39 + $0xd8] sm:$0xff]
        %v3685 = vld [vmem:[#allocation39 + $0xe0] sm:$0xff]
        %v3686 = vld [vmem:[#allocation39 + $0xe8] sm:$0xff]
        %v3687 = vld [vmem:[#allocation39 + $0xf0] sm:$0xff]
        %v3688 = vld [vmem:[#allocation39 + $0xf8] sm:$0xff]
        %v3689 = vld [vmem:[#allocation39 + $0x100] sm:$0xff]
        %v3690 = vld [vmem:[#allocation39 + $0x108] sm:$0xff]
        %v3691 = vld [vmem:[#allocation39 + $0x110] sm:$0xff]
        %v3692 = vld [vmem:[#allocation39 + $0x118] sm:$0xff]
        %v3693 = vld [vmem:[#allocation39 + $0x120] sm:$0xff]
        %v3694 = vld [vmem:[#allocation39 + $0x128] sm:$0xff]
        %v3695 = vld [vmem:[#allocation39 + $0x130] sm:$0xff]
        %v3696 = vld [vmem:[#allocation39 + $0x138] sm:$0xff]
        %v3697 = vld [vmem:[#allocation39 + $0x140] sm:$0xff]
        %v3698 = vld [vmem:[#allocation39 + $0x148] sm:$0xff]
        %v3699 = vld [vmem:[#allocation39 + $0x150] sm:$0xff]
        %v3700 = vld [vmem:[#allocation39 + $0x158] sm:$0xff]
        %v3701 = vld [vmem:[#allocation39 + $0x160] sm:$0xff]
        %v3702 = vld [vmem:[#allocation39 + $0x168] sm:$0xff]
        %v3703 = vld [vmem:[#allocation39 + $0x170] sm:$0xff]
        %v3704 = vld [vmem:[#allocation39 + $0x178] sm:$0xff]
        %v3705 = vld [vmem:[#allocation41] sm:$0x1]
        %v3708 = vrot.slane %v3606, 7
        %v3709 = vrot.slane %v3607, 7
        %v3710 = vsel %vm1943, %v3708, %v3709
        %v3714 = vsel %vm1943, 0.0, %v3708
        %v3715 = vsel %vm1943, %v3709, 0.0
        %v3718 = vrot.slane %v3714, 1
        %v3719 = vrot.slane %v3710, 1
        %v3720 = vsel %vm1954, %v3718, %v3719
        %v3721 = vrot.slane %v3715, 1
        %v3722 = vsel %vm1954, %v3719, %v3721
        %v3725 = vrot.slane %v3714, 2
        %v3726 = vrot.slane %v3710, 2
        %v3727 = vsel %vm1966, %v3725, %v3726
        %v3728 = vrot.slane %v3715, 2
        %v3729 = vsel %vm1966, %v3726, %v3728
        %v3733 = vlaneseq
        %v3734 = vshrl.u32 %v3733, 7
        %v3735 = vsub.s32 0, %v3734
        %v3736 = vrot.slane %v3656, %v3735
        %3738 = vmatprep.subr.mxu0 0.0
        %3739 = vmatpush1.msra.mxu0 %v3608
        %3740 = vmatprep.subr.mxu0 0.0
        %3741 = vmatpush1.msra.mxu0 %v3609
        %3742 = vmatprep.subr.mxu0 0.0
        %3743 = vmatpush1.msra.mxu0 %v3610
        %3744 = vmatprep.subr.mxu0 0.0
        %3745 = vmatpush1.msra.mxu0 %v3611
        %3746 = vmatprep.subr.mxu0 0.0
        %3747 = vmatpush1.msra.mxu0 %v3612
        %3748 = vmatprep.subr.mxu0 0.0
        %3749 = vmatpush1.msra.mxu0 %v3613
        %3750 = vmatprep.subr.mxu0 0.0
        %3751 = vmatpush1.msra.mxu0 %v3614
        %3752 = vmatprep.subr.mxu0 0.0
        %3753 = vmatpush1.msra.mxu0 %v3615
        %3754 = vmatprep.subr.mxu0 0.0
        %3755 = vmatpush1.msra.mxu0 %v3616
        %3756 = vmatprep.subr.mxu0 0.0
        %3757 = vmatpush1.msra.mxu0 %v3617
        %3758 = vmatprep.subr.mxu0 0.0
        %3759 = vmatpush1.msra.mxu0 %v3618
        %3760 = vmatprep.subr.mxu0 0.0
        %3761 = vmatpush1.msra.mxu0 %v3619
        %3762 = vmatprep.subr.mxu0 0.0
        %3763 = vmatpush1.msra.mxu0 %v3620
        %3764 = vmatprep.subr.mxu0 0.0
        %3765 = vmatpush1.msra.mxu0 %v3621
        %3766 = vmatprep.subr.mxu0 0.0
        %3767 = vmatpush1.msra.mxu0 %v3622
        %3768 = vmatprep.subr.mxu0 0.0
        %3769 = vmatpush1.msra.mxu0 %v3623
        %3770 = vmatprep.subr.mxu0 0.0
        %3771 = vmatpush1.msra.mxu0 %v3624
        %3772 = vmatprep.subr.mxu0 0.0
        %3773 = vmatpush1.msra.mxu0 %v3625
        %3774 = vmatprep.subr.mxu0 0.0
        %3775 = vmatpush1.msra.mxu0 %v3626
        %3776 = vmatprep.subr.mxu0 0.0
        %3777 = vmatpush1.msra.mxu0 %v3627
        %3778 = vmatprep.subr.mxu0 0.0
        %3779 = vmatpush1.msra.mxu0 %v3628
        %3780 = vmatprep.subr.mxu0 0.0
        %3781 = vmatpush1.msra.mxu0 %v3629
        %3782 = vmatprep.subr.mxu0 0.0
        %3783 = vmatpush1.msra.mxu0 %v3630
        %3784 = vmatprep.subr.mxu0 0.0
        %3785 = vmatpush1.msra.mxu0 %v3631
        %3786 = vmatprep.subr.mxu0 0.0
        %3787 = vmatpush1.msra.mxu0 %v3632
        %3788 = vmatprep.subr.mxu0 0.0
        %3789 = vmatpush1.msra.mxu0 %v3633
        %3790 = vmatprep.subr.mxu0 0.0
        %3791 = vmatpush1.msra.mxu0 %v3634
        %3792 = vmatprep.subr.mxu0 0.0
        %3793 = vmatpush1.msra.mxu0 %v3635
        %3794 = vmatprep.subr.mxu0 0.0
        %3795 = vmatpush1.msra.mxu0 %v3636
        %3796 = vmatprep.subr.mxu0 0.0
        %3797 = vmatpush1.msra.mxu0 %v3637
        %3798 = vmatprep.subr.mxu0 0.0
        %3799 = vmatpush1.msra.mxu0 %v3638
        %3800 = vmatprep.subr.mxu0 0.0
        %3801 = vmatpush1.msra.mxu0 %v3639
        %3802 = vmatprep.mubr.f32.mxu0 %v3720
        %3803 = vmatmul.mubr.f32.gmra.mrb[0].mxu0 %v3714
        %v3804 = vpop.f32.mrb[0].mxu0
        %v3805 = vadd.f32 %v3736, %v3804
        %v3806 = vpop.f32.mrb[0].mxu0
        %3807 = vmatprep.mubr.f32.mxu0 %v3722
        %3808 = vmatmul.mubr.f32.gmra.mrb[0].mxu0 %v3710
        %v3809 = vpop.f32.mrb[0].mxu0
        %v3810 = vadd.f32 %v3736, %v3809
        %v3811 = vpop.f32.mrb[0].mxu0
        %3812 = vdwg.mxu0
        %3813 = vmatprep.subr.mxu0 0.0
        %3814 = vmatpush1.msra.mxu0 %v3640
        %3815 = vmatprep.subr.mxu0 0.0
        %3816 = vmatpush1.msra.mxu0 %v3641
        %3817 = vmatprep.subr.mxu0 0.0
        %3818 = vmatpush1.msra.mxu0 %v3642
        %3819 = vmatprep.subr.mxu0 0.0
        %3820 = vmatpush1.msra.mxu0 %v3643
        %3821 = vmatprep.subr.mxu0 0.0
        %3822 = vmatpush1.msra.mxu0 %v3644
        %3823 = vmatprep.subr.mxu0 0.0
        %3824 = vmatpush1.msra.mxu0 %v3645
        %3825 = vmatprep.subr.mxu0 0.0
        %3826 = vmatpush1.msra.mxu0 %v3646
        %3827 = vmatprep.subr.mxu0 0.0
        %3828 = vmatpush1.msra.mxu0 %v3647
        %3829 = vmatprep.subr.mxu0 0.0
        %3830 = vmatpush1.msra.mxu0 %v3648
        %3831 = vmatprep.subr.mxu0 0.0
        %3832 = vmatpush1.msra.mxu0 %v3649
        %3833 = vmatprep.subr.mxu0 0.0
        %3834 = vmatpush1.msra.mxu0 %v3650
        %3835 = vmatprep.subr.mxu0 0.0
        %3836 = vmatpush1.msra.mxu0 %v3651
        %3837 = vmatprep.subr.mxu0 0.0
        %3838 = vmatpush1.msra.mxu0 %v3652
        %3839 = vmatprep.subr.mxu0 0.0
        %3840 = vmatpush1.msra.mxu0 %v3653
        %3841 = vmatprep.subr.mxu0 0.0
        %3842 = vmatpush1.msra.mxu0 %v3654
        %3843 = vmatprep.subr.mxu0 0.0
        %3844 = vmatpush1.msra.mxu0 %v3655
        %3845 = vmatprep.subr.mxu0 0.0
        %3846 = vmatpush1.msra.mxu0 0.0
        %3847 = vmatprep.subr.mxu0 0.0
        %3848 = vmatpush1.msra.mxu0 0.0
        %3849 = vmatprep.subr.mxu0 0.0
        %3850 = vmatpush1.msra.mxu0 0.0
        %3851 = vmatprep.subr.mxu0 0.0
        %3852 = vmatpush1.msra.mxu0 0.0
        %3853 = vmatprep.subr.mxu0 0.0
        %3854 = vmatpush1.msra.mxu0 0.0
        %3855 = vmatprep.subr.mxu0 0.0
        %3856 = vmatpush1.msra.mxu0 0.0
        %3857 = vmatprep.subr.mxu0 0.0
        %3858 = vmatpush1.msra.mxu0 0.0
        %3859 = vmatprep.subr.mxu0 0.0
        %3860 = vmatpush1.msra.mxu0 0.0
        %3861 = vmatprep.subr.mxu0 0.0
        %3862 = vmatpush1.msra.mxu0 0.0
        %3863 = vmatprep.subr.mxu0 0.0
        %3864 = vmatpush1.msra.mxu0 0.0
        %3865 = vmatprep.subr.mxu0 0.0
        %3866 = vmatpush1.msra.mxu0 0.0
        %3867 = vmatprep.subr.mxu0 0.0
        %3868 = vmatpush1.msra.mxu0 0.0
        %3869 = vmatprep.subr.mxu0 0.0
        %3870 = vmatpush1.msra.mxu0 0.0
        %3871 = vmatprep.subr.mxu0 0.0
        %3872 = vmatpush1.msra.mxu0 0.0
        %3873 = vmatprep.subr.mxu0 0.0
        %3874 = vmatpush1.msra.mxu0 0.0
        %3875 = vmatprep.subr.mxu0 0.0
        %3876 = vmatpush1.msra.mxu0 0.0
        %3877 = vmatprep.mubr.f32.mxu0 0.0
        %3878 = vmatmul.mubr.f32.gmra.mrb[0].mxu0 %v3727
        %v3879 = vpop.f32.mrb[0].mxu0
        %v3880 = vadd.f32 %v3805, %v3879
        %v3881 = vpop.f32.mrb[0].mxu0
        %3882 = vmatprep.mubr.f32.mxu0 0.0
        %3883 = vmatmul.mubr.f32.gmra.mrb[0].mxu0 %v3729
        %v3884 = vpop.f32.mrb[0].mxu0
        %v3885 = vadd.f32 %v3810, %v3884
        %v3886 = vpop.f32.mrb[0].mxu0
        %3887 = vdwg.mxu0
        %vm3888 = vcmp.gt.f32.partialorder %v3880, 0.0
        %vm3889 = vcmp.gt.f32.partialorder %v3885, 0.0
        %v3890 = vmul.f32 %v3880, 0.01
        %v3891 = vmul.f32 %v3885, 0.01
        %v3892 = vsel %vm3888, %v3880, %v3890
        %v3893 = vsel %vm3889, %v3885, %v3891
        %v3896 = vrot.slane %v3892, 7
        %v3897 = vrot.slane %v3893, 7
        %v3898 = vsel %vm1943, %v3896, %v3897
        %v3902 = vsel %vm1943, 0.0, %v3896
        %v3903 = vsel %vm1943, %v3897, 0.0
        %v3906 = vrot.slane %v3902, 1
        %v3907 = vrot.slane %v3898, 1
        %v3908 = vsel %vm1954, %v3906, %v3907
        %v3909 = vrot.slane %v3903, 1
        %v3910 = vsel %vm1954, %v3907, %v3909
        %v3913 = vrot.slane %v3902, 2
        %v3914 = vrot.slane %v3898, 2
        %v3915 = vsel %vm1966, %v3913, %v3914
        %v3916 = vrot.slane %v3903, 2
        %v3917 = vsel %vm1966, %v3914, %v3916
        %v3921 = vlaneseq
        %v3922 = vshrl.u32 %v3921, 7
        %v3923 = vsub.s32 0, %v3922
        %v3924 = vrot.slane %v3705, %v3923
        %3926 = vmatprep.subr.mxu0 0.0
        %3927 = vmatpush1.msra.mxu0 %v3657
        %3928 = vmatprep.subr.mxu0 0.0
        %3929 = vmatpush1.msra.mxu0 %v3658
        %3930 = vmatprep.subr.mxu0 0.0
        %3931 = vmatpush1.msra.mxu0 %v3659
        %3932 = vmatprep.subr.mxu0 0.0
        %3933 = vmatpush1.msra.mxu0 %v3660
        %3934 = vmatprep.subr.mxu0 0.0
        %3935 = vmatpush1.msra.mxu0 %v3661
        %3936 = vmatprep.subr.mxu0 0.0
        %3937 = vmatpush1.msra.mxu0 %v3662
        %3938 = vmatprep.subr.mxu0 0.0
        %3939 = vmatpush1.msra.mxu0 %v3663
        %3940 = vmatprep.subr.mxu0 0.0
        %3941 = vmatpush1.msra.mxu0 %v3664
        %3942 = vmatprep.subr.mxu0 0.0
        %3943 = vmatpush1.msra.mxu0 %v3665
        %3944 = vmatprep.subr.mxu0 0.0
        %3945 = vmatpush1.msra.mxu0 %v3666
        %3946 = vmatprep.subr.mxu0 0.0
        %3947 = vmatpush1.msra.mxu0 %v3667
        %3948 = vmatprep.subr.mxu0 0.0
        %3949 = vmatpush1.msra.mxu0 %v3668
        %3950 = vmatprep.subr.mxu0 0.0
        %3951 = vmatpush1.msra.mxu0 %v3669
        %3952 = vmatprep.subr.mxu0 0.0
        %3953 = vmatpush1.msra.mxu0 %v3670
        %3954 = vmatprep.subr.mxu0 0.0
        %3955 = vmatpush1.msra.mxu0 %v3671
        %3956 = vmatprep.subr.mxu0 0.0
        %3957 = vmatpush1.msra.mxu0 %v3672
        %3958 = vmatprep.subr.mxu0 0.0
        %3959 = vmatpush1.msra.mxu0 %v3673
        %3960 = vmatprep.subr.mxu0 0.0
        %3961 = vmatpush1.msra.mxu0 %v3674
        %3962 = vmatprep.subr.mxu0 0.0
        %3963 = vmatpush1.msra.mxu0 %v3675
        %3964 = vmatprep.subr.mxu0 0.0
        %3965 = vmatpush1.msra.mxu0 %v3676
        %3966 = vmatprep.subr.mxu0 0.0
        %3967 = vmatpush1.msra.mxu0 %v3677
        %3968 = vmatprep.subr.mxu0 0.0
        %3969 = vmatpush1.msra.mxu0 %v3678
        %3970 = vmatprep.subr.mxu0 0.0
        %3971 = vmatpush1.msra.mxu0 %v3679
        %3972 = vmatprep.subr.mxu0 0.0
        %3973 = vmatpush1.msra.mxu0 %v3680
        %3974 = vmatprep.subr.mxu0 0.0
        %3975 = vmatpush1.msra.mxu0 %v3681
        %3976 = vmatprep.subr.mxu0 0.0
        %3977 = vmatpush1.msra.mxu0 %v3682
        %3978 = vmatprep.subr.mxu0 0.0
        %3979 = vmatpush1.msra.mxu0 %v3683
        %3980 = vmatprep.subr.mxu0 0.0
        %3981 = vmatpush1.msra.mxu0 %v3684
        %3982 = vmatprep.subr.mxu0 0.0
        %3983 = vmatpush1.msra.mxu0 %v3685
        %3984 = vmatprep.subr.mxu0 0.0
        %3985 = vmatpush1.msra.mxu0 %v3686
        %3986 = vmatprep.subr.mxu0 0.0
        %3987 = vmatpush1.msra.mxu0 %v3687
        %3988 = vmatprep.subr.mxu0 0.0
        %3989 = vmatpush1.msra.mxu0 %v3688
        %3990 = vmatprep.mubr.f32.mxu0 %v3908
        %3991 = vmatmul.mubr.f32.gmra.mrb[0].mxu0 %v3902
        %v3992 = vpop.f32.mrb[0].mxu0
        %v3993 = vadd.f32 %v3924, %v3992
        %v3994 = vpop.f32.mrb[0].mxu0
        %3995 = vmatprep.mubr.f32.mxu0 %v3910
        %3996 = vmatmul.mubr.f32.gmra.mrb[0].mxu0 %v3898
        %v3997 = vpop.f32.mrb[0].mxu0
        %v3998 = vadd.f32 %v3924, %v3997
        %v3999 = vpop.f32.mrb[0].mxu0
        %4000 = vdwg.mxu0
        %4001 = vmatprep.subr.mxu0 0.0
        %4002 = vmatpush1.msra.mxu0 %v3689
        %4003 = vmatprep.subr.mxu0 0.0
        %4004 = vmatpush1.msra.mxu0 %v3690
        %4005 = vmatprep.subr.mxu0 0.0
        %4006 = vmatpush1.msra.mxu0 %v3691
        %4007 = vmatprep.subr.mxu0 0.0
        %4008 = vmatpush1.msra.mxu0 %v3692
        %4009 = vmatprep.subr.mxu0 0.0
        %4010 = vmatpush1.msra.mxu0 %v3693
        %4011 = vmatprep.subr.mxu0 0.0
        %4012 = vmatpush1.msra.mxu0 %v3694
        %4013 = vmatprep.subr.mxu0 0.0
        %4014 = vmatpush1.msra.mxu0 %v3695
        %4015 = vmatprep.subr.mxu0 0.0
        %4016 = vmatpush1.msra.mxu0 %v3696
        %4017 = vmatprep.subr.mxu0 0.0
        %4018 = vmatpush1.msra.mxu0 %v3697
        %4019 = vmatprep.subr.mxu0 0.0
        %4020 = vmatpush1.msra.mxu0 %v3698
        %4021 = vmatprep.subr.mxu0 0.0
        %4022 = vmatpush1.msra.mxu0 %v3699
        %4023 = vmatprep.subr.mxu0 0.0
        %4024 = vmatpush1.msra.mxu0 %v3700
        %4025 = vmatprep.subr.mxu0 0.0
        %4026 = vmatpush1.msra.mxu0 %v3701
        %4027 = vmatprep.subr.mxu0 0.0
        %4028 = vmatpush1.msra.mxu0 %v3702
        %4029 = vmatprep.subr.mxu0 0.0
        %4030 = vmatpush1.msra.mxu0 %v3703
        %4031 = vmatprep.subr.mxu0 0.0
        %4032 = vmatpush1.msra.mxu0 %v3704
        %4033 = vmatprep.subr.mxu0 0.0
        %4034 = vmatpush1.msra.mxu0 0.0
        %4035 = vmatprep.subr.mxu0 0.0
        %4036 = vmatpush1.msra.mxu0 0.0
        %4037 = vmatprep.subr.mxu0 0.0
        %4038 = vmatpush1.msra.mxu0 0.0
        %4039 = vmatprep.subr.mxu0 0.0
        %4040 = vmatpush1.msra.mxu0 0.0
        %4041 = vmatprep.subr.mxu0 0.0
        %4042 = vmatpush1.msra.mxu0 0.0
        %4043 = vmatprep.subr.mxu0 0.0
        %4044 = vmatpush1.msra.mxu0 0.0
        %4045 = vmatprep.subr.mxu0 0.0
        %4046 = vmatpush1.msra.mxu0 0.0
        %4047 = vmatprep.subr.mxu0 0.0
        %4048 = vmatpush1.msra.mxu0 0.0
        %4049 = vmatprep.subr.mxu0 0.0
        %4050 = vmatpush1.msra.mxu0 0.0
        %4051 = vmatprep.subr.mxu0 0.0
        %4052 = vmatpush1.msra.mxu0 0.0
        %4053 = vmatprep.subr.mxu0 0.0
        %4054 = vmatpush1.msra.mxu0 0.0
        %4055 = vmatprep.subr.mxu0 0.0
        %4056 = vmatpush1.msra.mxu0 0.0
        %4057 = vmatprep.subr.mxu0 0.0
        %4058 = vmatpush1.msra.mxu0 0.0
        %4059 = vmatprep.subr.mxu0 0.0
        %4060 = vmatpush1.msra.mxu0 0.0
        %4061 = vmatprep.subr.mxu0 0.0
        %4062 = vmatpush1.msra.mxu0 0.0
        %4063 = vmatprep.subr.mxu0 0.0
        %4064 = vmatpush1.msra.mxu0 0.0
        %4065 = vmatprep.mubr.f32.mxu0 0.0
        %4066 = vmatmul.mubr.f32.gmra.mrb[0].mxu0 %v3915
        %v4067 = vpop.f32.mrb[0].mxu0
        %v4068 = vadd.f32 %v3993, %v4067
        %v4069 = vpop.f32.mrb[0].mxu0
        %4070 = vmatprep.mubr.f32.mxu0 0.0
        %4071 = vmatmul.mubr.f32.gmra.mrb[0].mxu0 %v3917
        %v4072 = vpop.f32.mrb[0].mxu0
        %v4073 = vadd.f32 %v3998, %v4072
        %v4074 = vpop.f32.mrb[0].mxu0
        %4075 = vdwg.mxu0
        %vm4076 = vcmp.gt.f32.partialorder %v4068, 0.0
        %vm4077 = vcmp.gt.f32.partialorder %v4073, 0.0
        %v4078 = vmul.f32 %v4068, 0.01
        %v4079 = vmul.f32 %v4073, 0.01
        %v4080 = vsel %vm4076, %v4068, %v4078
        %v4081 = vsel %vm4077, %v4073, %v4079
        %v4082 = vadd.f32 %v4080, %v3606
        %v4083 = vadd.f32 %v4081, %v3607
        %v4084 = vld [vmem:[#allocation42] sm:$0xff]
        %v4085 = vld [vmem:[#allocation42 + $0x8] sm:$0xff]
        %v4086 = vld [vmem:[#allocation42 + $0x10] sm:$0xff]
        %v4087 = vld [vmem:[#allocation42 + $0x18] sm:$0xff]
        %v4088 = vld [vmem:[#allocation42 + $0x20] sm:$0xff]
        %v4089 = vld [vmem:[#allocation42 + $0x28] sm:$0xff]
        %v4090 = vld [vmem:[#allocation42 + $0x30] sm:$0xff]
        %v4091 = vld [vmem:[#allocation42 + $0x38] sm:$0xff]
        %v4092 = vld [vmem:[#allocation42 + $0x40] sm:$0xff]
        %v4093 = vld [vmem:[#allocation42 + $0x48] sm:$0xff]
        %v4094 = vld [vmem:[#allocation42 + $0x50] sm:$0xff]
        %v4095 = vld [vmem:[#allocation42 + $0x58] sm:$0xff]
        %v4096 = vld [vmem:[#allocation42 + $0x60] sm:$0xff]
        %v4097 = vld [vmem:[#allocation42 + $0x68] sm:$0xff]
        %v4098 = vld [vmem:[#allocation42 + $0x70] sm:$0xff]
        %v4099 = vld [vmem:[#allocation42 + $0x78] sm:$0xff]
        %v4100 = vld [vmem:[#allocation42 + $0x80] sm:$0xff]
        %v4101 = vld [vmem:[#allocation42 + $0x88] sm:$0xff]
        %v4102 = vld [vmem:[#allocation42 + $0x90] sm:$0xff]
        %v4103 = vld [vmem:[#allocation42 + $0x98] sm:$0xff]
        %v4104 = vld [vmem:[#allocation42 + $0xa0] sm:$0xff]
        %v4105 = vld [vmem:[#allocation42 + $0xa8] sm:$0xff]
        %v4106 = vld [vmem:[#allocation42 + $0xb0] sm:$0xff]
        %v4107 = vld [vmem:[#allocation42 + $0xb8] sm:$0xff]
        %v4108 = vld [vmem:[#allocation42 + $0xc0] sm:$0xff]
        %v4109 = vld [vmem:[#allocation42 + $0xc8] sm:$0xff]
        %v4110 = vld [vmem:[#allocation42 + $0xd0] sm:$0xff]
        %v4111 = vld [vmem:[#allocation42 + $0xd8] sm:$0xff]
        %v4112 = vld [vmem:[#allocation42 + $0xe0] sm:$0xff]
        %v4113 = vld [vmem:[#allocation42 + $0xe8] sm:$0xff]
        %v4114 = vld [vmem:[#allocation42 + $0xf0] sm:$0xff]
        %v4115 = vld [vmem:[#allocation42 + $0xf8] sm:$0xff]
        %v4116 = vld [vmem:[#allocation42 + $0x100] sm:$0xff]
        %v4117 = vld [vmem:[#allocation42 + $0x108] sm:$0xff]
        %v4118 = vld [vmem:[#allocation42 + $0x110] sm:$0xff]
        %v4119 = vld [vmem:[#allocation42 + $0x118] sm:$0xff]
        %v4120 = vld [vmem:[#allocation42 + $0x120] sm:$0xff]
        %v4121 = vld [vmem:[#allocation42 + $0x128] sm:$0xff]
        %v4122 = vld [vmem:[#allocation42 + $0x130] sm:$0xff]
        %v4123 = vld [vmem:[#allocation42 + $0x138] sm:$0xff]
        %v4124 = vld [vmem:[#allocation42 + $0x140] sm:$0xff]
        %v4125 = vld [vmem:[#allocation42 + $0x148] sm:$0xff]
        %v4126 = vld [vmem:[#allocation42 + $0x150] sm:$0xff]
        %v4127 = vld [vmem:[#allocation42 + $0x158] sm:$0xff]
        %v4128 = vld [vmem:[#allocation42 + $0x160] sm:$0xff]
        %v4129 = vld [vmem:[#allocation42 + $0x168] sm:$0xff]
        %v4130 = vld [vmem:[#allocation42 + $0x170] sm:$0xff]
        %v4131 = vld [vmem:[#allocation42 + $0x178] sm:$0xff]
        %v4132 = vld [vmem:[#allocation44] sm:$0x1]
        %v4133 = vld [vmem:[#allocation45] sm:$0xff]
        %v4134 = vld [vmem:[#allocation45 + $0x8] sm:$0xff]
        %v4135 = vld [vmem:[#allocation45 + $0x10] sm:$0xff]
        %v4136 = vld [vmem:[#allocation45 + $0x18] sm:$0xff]
        %v4137 = vld [vmem:[#allocation45 + $0x20] sm:$0xff]
        %v4138 = vld [vmem:[#allocation45 + $0x28] sm:$0xff]
        %v4139 = vld [vmem:[#allocation45 + $0x30] sm:$0xff]
        %v4140 = vld [vmem:[#allocation45 + $0x38] sm:$0xff]
        %v4141 = vld [vmem:[#allocation45 + $0x40] sm:$0xff]
        %v4142 = vld [vmem:[#allocation45 + $0x48] sm:$0xff]
        %v4143 = vld [vmem:[#allocation45 + $0x50] sm:$0xff]
        %v4144 = vld [vmem:[#allocation45 + $0x58] sm:$0xff]
        %v4145 = vld [vmem:[#allocation45 + $0x60] sm:$0xff]
        %v4146 = vld [vmem:[#allocation45 + $0x68] sm:$0xff]
        %v4147 = vld [vmem:[#allocation45 + $0x70] sm:$0xff]
        %v4148 = vld [vmem:[#allocation45 + $0x78] sm:$0xff]
        %v4149 = vld [vmem:[#allocation45 + $0x80] sm:$0xff]
        %v4150 = vld [vmem:[#allocation45 + $0x88] sm:$0xff]
        %v4151 = vld [vmem:[#allocation45 + $0x90] sm:$0xff]
        %v4152 = vld [vmem:[#allocation45 + $0x98] sm:$0xff]
        %v4153 = vld [vmem:[#allocation45 + $0xa0] sm:$0xff]
        %v4154 = vld [vmem:[#allocation45 + $0xa8] sm:$0xff]
        %v4155 = vld [vmem:[#allocation45 + $0xb0] sm:$0xff]
        %v4156 = vld [vmem:[#allocation45 + $0xb8] sm:$0xff]
        %v4157 = vld [vmem:[#allocation45 + $0xc0] sm:$0xff]
        %v4158 = vld [vmem:[#allocation45 + $0xc8] sm:$0xff]
        %v4159 = vld [vmem:[#allocation45 + $0xd0] sm:$0xff]
        %v4160 = vld [vmem:[#allocation45 + $0xd8] sm:$0xff]
        %v4161 = vld [vmem:[#allocation45 + $0xe0] sm:$0xff]
        %v4162 = vld [vmem:[#allocation45 + $0xe8] sm:$0xff]
        %v4163 = vld [vmem:[#allocation45 + $0xf0] sm:$0xff]
        %v4164 = vld [vmem:[#allocation45 + $0xf8] sm:$0xff]
        %v4165 = vld [vmem:[#allocation45 + $0x100] sm:$0xff]
        %v4166 = vld [vmem:[#allocation45 + $0x108] sm:$0xff]
        %v4167 = vld [vmem:[#allocation45 + $0x110] sm:$0xff]
        %v4168 = vld [vmem:[#allocation45 + $0x118] sm:$0xff]
        %v4169 = vld [vmem:[#allocation45 + $0x120] sm:$0xff]
        %v4170 = vld [vmem:[#allocation45 + $0x128] sm:$0xff]
        %v4171 = vld [vmem:[#allocation45 + $0x130] sm:$0xff]
        %v4172 = vld [vmem:[#allocation45 + $0x138] sm:$0xff]
        %v4173 = vld [vmem:[#allocation45 + $0x140] sm:$0xff]
        %v4174 = vld [vmem:[#allocation45 + $0x148] sm:$0xff]
        %v4175 = vld [vmem:[#allocation45 + $0x150] sm:$0xff]
        %v4176 = vld [vmem:[#allocation45 + $0x158] sm:$0xff]
        %v4177 = vld [vmem:[#allocation45 + $0x160] sm:$0xff]
        %v4178 = vld [vmem:[#allocation45 + $0x168] sm:$0xff]
        %v4179 = vld [vmem:[#allocation45 + $0x170] sm:$0xff]
        %v4180 = vld [vmem:[#allocation45 + $0x178] sm:$0xff]
        %v4181 = vld [vmem:[#allocation47] sm:$0x1]
        %v4184 = vrot.slane %v4082, 7
        %v4185 = vrot.slane %v4083, 7
        %v4186 = vsel %vm1943, %v4184, %v4185
        %v4190 = vsel %vm1943, 0.0, %v4184
        %v4191 = vsel %vm1943, %v4185, 0.0
        %v4194 = vrot.slane %v4190, 1
        %v4195 = vrot.slane %v4186, 1
        %v4196 = vsel %vm1954, %v4194, %v4195
        %v4197 = vrot.slane %v4191, 1
        %v4198 = vsel %vm1954, %v4195, %v4197
        %v4201 = vrot.slane %v4190, 2
        %v4202 = vrot.slane %v4186, 2
        %v4203 = vsel %vm1966, %v4201, %v4202
        %v4204 = vrot.slane %v4191, 2
        %v4205 = vsel %vm1966, %v4202, %v4204
        %v4209 = vlaneseq
        %v4210 = vshrl.u32 %v4209, 7
        %v4211 = vsub.s32 0, %v4210
        %v4212 = vrot.slane %v4132, %v4211
        %4214 = vmatprep.subr.mxu0 0.0
        %4215 = vmatpush1.msra.mxu0 %v4084
        %4216 = vmatprep.subr.mxu0 0.0
        %4217 = vmatpush1.msra.mxu0 %v4085
        %4218 = vmatprep.subr.mxu0 0.0
        %4219 = vmatpush1.msra.mxu0 %v4086
        %4220 = vmatprep.subr.mxu0 0.0
        %4221 = vmatpush1.msra.mxu0 %v4087
        %4222 = vmatprep.subr.mxu0 0.0
        %4223 = vmatpush1.msra.mxu0 %v4088
        %4224 = vmatprep.subr.mxu0 0.0
        %4225 = vmatpush1.msra.mxu0 %v4089
        %4226 = vmatprep.subr.mxu0 0.0
        %4227 = vmatpush1.msra.mxu0 %v4090
        %4228 = vmatprep.subr.mxu0 0.0
        %4229 = vmatpush1.msra.mxu0 %v4091
        %4230 = vmatprep.subr.mxu0 0.0
        %4231 = vmatpush1.msra.mxu0 %v4092
        %4232 = vmatprep.subr.mxu0 0.0
        %4233 = vmatpush1.msra.mxu0 %v4093
        %4234 = vmatprep.subr.mxu0 0.0
        %4235 = vmatpush1.msra.mxu0 %v4094
        %4236 = vmatprep.subr.mxu0 0.0
        %4237 = vmatpush1.msra.mxu0 %v4095
        %4238 = vmatprep.subr.mxu0 0.0
        %4239 = vmatpush1.msra.mxu0 %v4096
        %4240 = vmatprep.subr.mxu0 0.0
        %4241 = vmatpush1.msra.mxu0 %v4097
        %4242 = vmatprep.subr.mxu0 0.0
        %4243 = vmatpush1.msra.mxu0 %v4098
        %4244 = vmatprep.subr.mxu0 0.0
        %4245 = vmatpush1.msra.mxu0 %v4099
        %4246 = vmatprep.subr.mxu0 0.0
        %4247 = vmatpush1.msra.mxu0 %v4100
        %4248 = vmatprep.subr.mxu0 0.0
        %4249 = vmatpush1.msra.mxu0 %v4101
        %4250 = vmatprep.subr.mxu0 0.0
        %4251 = vmatpush1.msra.mxu0 %v4102
        %4252 = vmatprep.subr.mxu0 0.0
        %4253 = vmatpush1.msra.mxu0 %v4103
        %4254 = vmatprep.subr.mxu0 0.0
        %4255 = vmatpush1.msra.mxu0 %v4104
        %4256 = vmatprep.subr.mxu0 0.0
        %4257 = vmatpush1.msra.mxu0 %v4105
        %4258 = vmatprep.subr.mxu0 0.0
        %4259 = vmatpush1.msra.mxu0 %v4106
        %4260 = vmatprep.subr.mxu0 0.0
        %4261 = vmatpush1.msra.mxu0 %v4107
        %4262 = vmatprep.subr.mxu0 0.0
        %4263 = vmatpush1.msra.mxu0 %v4108
        %4264 = vmatprep.subr.mxu0 0.0
        %4265 = vmatpush1.msra.mxu0 %v4109
        %4266 = vmatprep.subr.mxu0 0.0
        %4267 = vmatpush1.msra.mxu0 %v4110
        %4268 = vmatprep.subr.mxu0 0.0
        %4269 = vmatpush1.msra.mxu0 %v4111
        %4270 = vmatprep.subr.mxu0 0.0
        %4271 = vmatpush1.msra.mxu0 %v4112
        %4272 = vmatprep.subr.mxu0 0.0
        %4273 = vmatpush1.msra.mxu0 %v4113
        %4274 = vmatprep.subr.mxu0 0.0
        %4275 = vmatpush1.msra.mxu0 %v4114
        %4276 = vmatprep.subr.mxu0 0.0
        %4277 = vmatpush1.msra.mxu0 %v4115
        %4278 = vmatprep.mubr.f32.mxu0 %v4196
        %4279 = vmatmul.mubr.f32.gmra.mrb[0].mxu0 %v4190
        %v4280 = vpop.f32.mrb[0].mxu0
        %v4281 = vadd.f32 %v4212, %v4280
        %v4282 = vpop.f32.mrb[0].mxu0
        %4283 = vmatprep.mubr.f32.mxu0 %v4198
        %4284 = vmatmul.mubr.f32.gmra.mrb[0].mxu0 %v4186
        %v4285 = vpop.f32.mrb[0].mxu0
        %v4286 = vadd.f32 %v4212, %v4285
        %v4287 = vpop.f32.mrb[0].mxu0
        %4288 = vdwg.mxu0
        %4289 = vmatprep.subr.mxu0 0.0
        %4290 = vmatpush1.msra.mxu0 %v4116
        %4291 = vmatprep.subr.mxu0 0.0
        %4292 = vmatpush1.msra.mxu0 %v4117
        %4293 = vmatprep.subr.mxu0 0.0
        %4294 = vmatpush1.msra.mxu0 %v4118
        %4295 = vmatprep.subr.mxu0 0.0
        %4296 = vmatpush1.msra.mxu0 %v4119
        %4297 = vmatprep.subr.mxu0 0.0
        %4298 = vmatpush1.msra.mxu0 %v4120
        %4299 = vmatprep.subr.mxu0 0.0
        %4300 = vmatpush1.msra.mxu0 %v4121
        %4301 = vmatprep.subr.mxu0 0.0
        %4302 = vmatpush1.msra.mxu0 %v4122
        %4303 = vmatprep.subr.mxu0 0.0
        %4304 = vmatpush1.msra.mxu0 %v4123
        %4305 = vmatprep.subr.mxu0 0.0
        %4306 = vmatpush1.msra.mxu0 %v4124
        %4307 = vmatprep.subr.mxu0 0.0
        %4308 = vmatpush1.msra.mxu0 %v4125
        %4309 = vmatprep.subr.mxu0 0.0
        %4310 = vmatpush1.msra.mxu0 %v4126
        %4311 = vmatprep.subr.mxu0 0.0
        %4312 = vmatpush1.msra.mxu0 %v4127
        %4313 = vmatprep.subr.mxu0 0.0
        %4314 = vmatpush1.msra.mxu0 %v4128
        %4315 = vmatprep.subr.mxu0 0.0
        %4316 = vmatpush1.msra.mxu0 %v4129
        %4317 = vmatprep.subr.mxu0 0.0
        %4318 = vmatpush1.msra.mxu0 %v4130
        %4319 = vmatprep.subr.mxu0 0.0
        %4320 = vmatpush1.msra.mxu0 %v4131
        %4321 = vmatprep.subr.mxu0 0.0
        %4322 = vmatpush1.msra.mxu0 0.0
        %4323 = vmatprep.subr.mxu0 0.0
        %4324 = vmatpush1.msra.mxu0 0.0
        %4325 = vmatprep.subr.mxu0 0.0
        %4326 = vmatpush1.msra.mxu0 0.0
        %4327 = vmatprep.subr.mxu0 0.0
        %4328 = vmatpush1.msra.mxu0 0.0
        %4329 = vmatprep.subr.mxu0 0.0
        %4330 = vmatpush1.msra.mxu0 0.0
        %4331 = vmatprep.subr.mxu0 0.0
        %4332 = vmatpush1.msra.mxu0 0.0
        %4333 = vmatprep.subr.mxu0 0.0
        %4334 = vmatpush1.msra.mxu0 0.0
        %4335 = vmatprep.subr.mxu0 0.0
        %4336 = vmatpush1.msra.mxu0 0.0
        %4337 = vmatprep.subr.mxu0 0.0
        %4338 = vmatpush1.msra.mxu0 0.0
        %4339 = vmatprep.subr.mxu0 0.0
        %4340 = vmatpush1.msra.mxu0 0.0
        %4341 = vmatprep.subr.mxu0 0.0
        %4342 = vmatpush1.msra.mxu0 0.0
        %4343 = vmatprep.subr.mxu0 0.0
        %4344 = vmatpush1.msra.mxu0 0.0
        %4345 = vmatprep.subr.mxu0 0.0
        %4346 = vmatpush1.msra.mxu0 0.0
        %4347 = vmatprep.subr.mxu0 0.0
        %4348 = vmatpush1.msra.mxu0 0.0
        %4349 = vmatprep.subr.mxu0 0.0
        %4350 = vmatpush1.msra.mxu0 0.0
        %4351 = vmatprep.subr.mxu0 0.0
        %4352 = vmatpush1.msra.mxu0 0.0
        %4353 = vmatprep.mubr.f32.mxu0 0.0
        %4354 = vmatmul.mubr.f32.gmra.mrb[0].mxu0 %v4203
        %v4355 = vpop.f32.mrb[0].mxu0
        %v4356 = vadd.f32 %v4281, %v4355
        %v4357 = vpop.f32.mrb[0].mxu0
        %4358 = vmatprep.mubr.f32.mxu0 0.0
        %4359 = vmatmul.mubr.f32.gmra.mrb[0].mxu0 %v4205
        %v4360 = vpop.f32.mrb[0].mxu0
        %v4361 = vadd.f32 %v4286, %v4360
        %v4362 = vpop.f32.mrb[0].mxu0
        %4363 = vdwg.mxu0
        %vm4364 = vcmp.gt.f32.partialorder %v4356, 0.0
        %vm4365 = vcmp.gt.f32.partialorder %v4361, 0.0
        %v4366 = vmul.f32 %v4356, 0.01
        %v4367 = vmul.f32 %v4361, 0.01
        %v4368 = vsel %vm4364, %v4356, %v4366
        %v4369 = vsel %vm4365, %v4361, %v4367
        %v4372 = vrot.slane %v4368, 7
        %v4373 = vrot.slane %v4369, 7
        %v4374 = vsel %vm1943, %v4372, %v4373
        %v4378 = vsel %vm1943, 0.0, %v4372
        %v4379 = vsel %vm1943, %v4373, 0.0
        %v4382 = vrot.slane %v4378, 1
        %v4383 = vrot.slane %v4374, 1
        %v4384 = vsel %vm1954, %v4382, %v4383
        %v4385 = vrot.slane %v4379, 1
        %v4386 = vsel %vm1954, %v4383, %v4385
        %v4389 = vrot.slane %v4378, 2
        %v4390 = vrot.slane %v4374, 2
        %v4391 = vsel %vm1966, %v4389, %v4390
        %v4392 = vrot.slane %v4379, 2
        %v4393 = vsel %vm1966, %v4390, %v4392
        %v4397 = vlaneseq
        %v4398 = vshrl.u32 %v4397, 7
        %v4399 = vsub.s32 0, %v4398
        %v4400 = vrot.slane %v4181, %v4399
        %4402 = vmatprep.subr.mxu0 0.0
        %4403 = vmatpush1.msra.mxu0 %v4133
        %4404 = vmatprep.subr.mxu0 0.0
        %4405 = vmatpush1.msra.mxu0 %v4134
        %4406 = vmatprep.subr.mxu0 0.0
        %4407 = vmatpush1.msra.mxu0 %v4135
        %4408 = vmatprep.subr.mxu0 0.0
        %4409 = vmatpush1.msra.mxu0 %v4136
        %4410 = vmatprep.subr.mxu0 0.0
        %4411 = vmatpush1.msra.mxu0 %v4137
        %4412 = vmatprep.subr.mxu0 0.0
        %4413 = vmatpush1.msra.mxu0 %v4138
        %4414 = vmatprep.subr.mxu0 0.0
        %4415 = vmatpush1.msra.mxu0 %v4139
        %4416 = vmatprep.subr.mxu0 0.0
        %4417 = vmatpush1.msra.mxu0 %v4140
        %4418 = vmatprep.subr.mxu0 0.0
        %4419 = vmatpush1.msra.mxu0 %v4141
        %4420 = vmatprep.subr.mxu0 0.0
        %4421 = vmatpush1.msra.mxu0 %v4142
        %4422 = vmatprep.subr.mxu0 0.0
        %4423 = vmatpush1.msra.mxu0 %v4143
        %4424 = vmatprep.subr.mxu0 0.0
        %4425 = vmatpush1.msra.mxu0 %v4144
        %4426 = vmatprep.subr.mxu0 0.0
        %4427 = vmatpush1.msra.mxu0 %v4145
        %4428 = vmatprep.subr.mxu0 0.0
        %4429 = vmatpush1.msra.mxu0 %v4146
        %4430 = vmatprep.subr.mxu0 0.0
        %4431 = vmatpush1.msra.mxu0 %v4147
        %4432 = vmatprep.subr.mxu0 0.0
        %4433 = vmatpush1.msra.mxu0 %v4148
        %4434 = vmatprep.subr.mxu0 0.0
        %4435 = vmatpush1.msra.mxu0 %v4149
        %4436 = vmatprep.subr.mxu0 0.0
        %4437 = vmatpush1.msra.mxu0 %v4150
        %4438 = vmatprep.subr.mxu0 0.0
        %4439 = vmatpush1.msra.mxu0 %v4151
        %4440 = vmatprep.subr.mxu0 0.0
        %4441 = vmatpush1.msra.mxu0 %v4152
        %4442 = vmatprep.subr.mxu0 0.0
        %4443 = vmatpush1.msra.mxu0 %v4153
        %4444 = vmatprep.subr.mxu0 0.0
        %4445 = vmatpush1.msra.mxu0 %v4154
        %4446 = vmatprep.subr.mxu0 0.0
        %4447 = vmatpush1.msra.mxu0 %v4155
        %4448 = vmatprep.subr.mxu0 0.0
        %4449 = vmatpush1.msra.mxu0 %v4156
        %4450 = vmatprep.subr.mxu0 0.0
        %4451 = vmatpush1.msra.mxu0 %v4157
        %4452 = vmatprep.subr.mxu0 0.0
        %4453 = vmatpush1.msra.mxu0 %v4158
        %4454 = vmatprep.subr.mxu0 0.0
        %4455 = vmatpush1.msra.mxu0 %v4159
        %4456 = vmatprep.subr.mxu0 0.0
        %4457 = vmatpush1.msra.mxu0 %v4160
        %4458 = vmatprep.subr.mxu0 0.0
        %4459 = vmatpush1.msra.mxu0 %v4161
        %4460 = vmatprep.subr.mxu0 0.0
        %4461 = vmatpush1.msra.mxu0 %v4162
        %4462 = vmatprep.subr.mxu0 0.0
        %4463 = vmatpush1.msra.mxu0 %v4163
        %4464 = vmatprep.subr.mxu0 0.0
        %4465 = vmatpush1.msra.mxu0 %v4164
        %4466 = vmatprep.mubr.f32.mxu0 %v4384
        %4467 = vmatmul.mubr.f32.gmra.mrb[0].mxu0 %v4378
        %v4468 = vpop.f32.mrb[0].mxu0
        %v4469 = vadd.f32 %v4400, %v4468
        %v4470 = vpop.f32.mrb[0].mxu0
        %4471 = vmatprep.mubr.f32.mxu0 %v4386
        %4472 = vmatmul.mubr.f32.gmra.mrb[0].mxu0 %v4374
        %v4473 = vpop.f32.mrb[0].mxu0
        %v4474 = vadd.f32 %v4400, %v4473
        %v4475 = vpop.f32.mrb[0].mxu0
        %4476 = vdwg.mxu0
        %4477 = vmatprep.subr.mxu0 0.0
        %4478 = vmatpush1.msra.mxu0 %v4165
        %4479 = vmatprep.subr.mxu0 0.0
        %4480 = vmatpush1.msra.mxu0 %v4166
        %4481 = vmatprep.subr.mxu0 0.0
        %4482 = vmatpush1.msra.mxu0 %v4167
        %4483 = vmatprep.subr.mxu0 0.0
        %4484 = vmatpush1.msra.mxu0 %v4168
        %4485 = vmatprep.subr.mxu0 0.0
        %4486 = vmatpush1.msra.mxu0 %v4169
        %4487 = vmatprep.subr.mxu0 0.0
        %4488 = vmatpush1.msra.mxu0 %v4170
        %4489 = vmatprep.subr.mxu0 0.0
        %4490 = vmatpush1.msra.mxu0 %v4171
        %4491 = vmatprep.subr.mxu0 0.0
        %4492 = vmatpush1.msra.mxu0 %v4172
        %4493 = vmatprep.subr.mxu0 0.0
        %4494 = vmatpush1.msra.mxu0 %v4173
        %4495 = vmatprep.subr.mxu0 0.0
        %4496 = vmatpush1.msra.mxu0 %v4174
        %4497 = vmatprep.subr.mxu0 0.0
        %4498 = vmatpush1.msra.mxu0 %v4175
        %4499 = vmatprep.subr.mxu0 0.0
        %4500 = vmatpush1.msra.mxu0 %v4176
        %4501 = vmatprep.subr.mxu0 0.0
        %4502 = vmatpush1.msra.mxu0 %v4177
        %4503 = vmatprep.subr.mxu0 0.0
        %4504 = vmatpush1.msra.mxu0 %v4178
        %4505 = vmatprep.subr.mxu0 0.0
        %4506 = vmatpush1.msra.mxu0 %v4179
        %4507 = vmatprep.subr.mxu0 0.0
        %4508 = vmatpush1.msra.mxu0 %v4180
        %4509 = vmatprep.subr.mxu0 0.0
        %4510 = vmatpush1.msra.mxu0 0.0
        %4511 = vmatprep.subr.mxu0 0.0
        %4512 = vmatpush1.msra.mxu0 0.0
        %4513 = vmatprep.subr.mxu0 0.0
        %4514 = vmatpush1.msra.mxu0 0.0
        %4515 = vmatprep.subr.mxu0 0.0
        %4516 = vmatpush1.msra.mxu0 0.0
        %4517 = vmatprep.subr.mxu0 0.0
        %4518 = vmatpush1.msra.mxu0 0.0
        %4519 = vmatprep.subr.mxu0 0.0
        %4520 = vmatpush1.msra.mxu0 0.0
        %4521 = vmatprep.subr.mxu0 0.0
        %4522 = vmatpush1.msra.mxu0 0.0
        %4523 = vmatprep.subr.mxu0 0.0
        %4524 = vmatpush1.msra.mxu0 0.0
        %4525 = vmatprep.subr.mxu0 0.0
        %4526 = vmatpush1.msra.mxu0 0.0
        %4527 = vmatprep.subr.mxu0 0.0
        %4528 = vmatpush1.msra.mxu0 0.0
        %4529 = vmatprep.subr.mxu0 0.0
        %4530 = vmatpush1.msra.mxu0 0.0
        %4531 = vmatprep.subr.mxu0 0.0
        %4532 = vmatpush1.msra.mxu0 0.0
        %4533 = vmatprep.subr.mxu0 0.0
        %4534 = vmatpush1.msra.mxu0 0.0
        %4535 = vmatprep.subr.mxu0 0.0
        %4536 = vmatpush1.msra.mxu0 0.0
        %4537 = vmatprep.subr.mxu0 0.0
        %4538 = vmatpush1.msra.mxu0 0.0
        %4539 = vmatprep.subr.mxu0 0.0
        %4540 = vmatpush1.msra.mxu0 0.0
        %4541 = vmatprep.mubr.f32.mxu0 0.0
        %4542 = vmatmul.mubr.f32.gmra.mrb[0].mxu0 %v4391
        %v4543 = vpop.f32.mrb[0].mxu0
        %v4544 = vadd.f32 %v4469, %v4543
        %v4545 = vpop.f32.mrb[0].mxu0
        %4546 = vmatprep.mubr.f32.mxu0 0.0
        %4547 = vmatmul.mubr.f32.gmra.mrb[0].mxu0 %v4393
        %v4548 = vpop.f32.mrb[0].mxu0
        %v4549 = vadd.f32 %v4474, %v4548
        %v4550 = vpop.f32.mrb[0].mxu0
        %4551 = vdwg.mxu0
        %vm4552 = vcmp.gt.f32.partialorder %v4544, 0.0
        %vm4553 = vcmp.gt.f32.partialorder %v4549, 0.0
        %v4554 = vmul.f32 %v4544, 0.01
        %v4555 = vmul.f32 %v4549, 0.01
        %v4556 = vsel %vm4552, %v4544, %v4554
        %v4557 = vsel %vm4553, %v4549, %v4555
        %v4558 = vadd.f32 %v4556, %v4082
        %v4559 = vadd.f32 %v4557, %v4083
        %v4560 = vld [vmem:[%s63] sm:$0xff]
        %v4561 = vld [vmem:[%s63 + $0x8] sm:$0xff]
        %v4562 = vld [vmem:[%s63 + $0x10] sm:$0xff]
        %v4563 = vld [vmem:[%s63 + $0x18] sm:$0xff]
        %v4564 = vld [vmem:[%s63 + $0x20] sm:$0xff]
        %v4565 = vld [vmem:[%s63 + $0x28] sm:$0xff]
        %v4566 = vld [vmem:[%s63 + $0x30] sm:$0xff]
        %v4567 = vld [vmem:[%s63 + $0x38] sm:$0xff]
        %v4568 = vld [vmem:[%s63 + $0x40] sm:$0xff]
        %v4569 = vld [vmem:[%s63 + $0x48] sm:$0xff]
        %v4570 = vld [vmem:[%s63 + $0x50] sm:$0xff]
        %v4571 = vld [vmem:[%s63 + $0x58] sm:$0xff]
        %v4572 = vld [vmem:[%s63 + $0x60] sm:$0xff]
        %v4573 = vld [vmem:[%s63 + $0x68] sm:$0xff]
        %v4574 = vld [vmem:[%s63 + $0x70] sm:$0xff]
        %v4575 = vld [vmem:[%s63 + $0x78] sm:$0xff]
        %v4576 = vld [vmem:[%s63 + $0x80] sm:$0xff]
        %v4577 = vld [vmem:[%s63 + $0x88] sm:$0xff]
        %v4578 = vld [vmem:[%s63 + $0x90] sm:$0xff]
        %v4579 = vld [vmem:[%s63 + $0x98] sm:$0xff]
        %v4580 = vld [vmem:[%s63 + $0xa0] sm:$0xff]
        %v4581 = vld [vmem:[%s63 + $0xa8] sm:$0xff]
        %v4582 = vld [vmem:[%s63 + $0xb0] sm:$0xff]
        %v4583 = vld [vmem:[%s63 + $0xb8] sm:$0xff]
        %v4584 = vld [vmem:[%s63 + $0xc0] sm:$0xff]
        %v4585 = vld [vmem:[%s63 + $0xc8] sm:$0xff]
        %v4586 = vld [vmem:[%s63 + $0xd0] sm:$0xff]
        %v4587 = vld [vmem:[%s63 + $0xd8] sm:$0xff]
        %v4588 = vld [vmem:[%s63 + $0xe0] sm:$0xff]
        %v4589 = vld [vmem:[%s63 + $0xe8] sm:$0xff]
        %v4590 = vld [vmem:[%s63 + $0xf0] sm:$0xff]
        %v4591 = vld [vmem:[%s63 + $0xf8] sm:$0xff]
        %v4592 = vld [vmem:[%s63 + $0x100] sm:$0xff]
        %v4593 = vld [vmem:[%s63 + $0x108] sm:$0xff]
        %v4594 = vld [vmem:[%s63 + $0x110] sm:$0xff]
        %v4595 = vld [vmem:[%s63 + $0x118] sm:$0xff]
        %v4596 = vld [vmem:[%s63 + $0x120] sm:$0xff]
        %v4597 = vld [vmem:[%s63 + $0x128] sm:$0xff]
        %v4598 = vld [vmem:[%s63 + $0x130] sm:$0xff]
        %v4599 = vld [vmem:[%s63 + $0x138] sm:$0xff]
        %v4600 = vld [vmem:[%s63 + $0x140] sm:$0xff]
        %v4601 = vld [vmem:[%s63 + $0x148] sm:$0xff]
        %v4602 = vld [vmem:[%s63 + $0x150] sm:$0xff]
        %v4603 = vld [vmem:[%s63 + $0x158] sm:$0xff]
        %v4604 = vld [vmem:[%s63 + $0x160] sm:$0xff]
        %v4605 = vld [vmem:[%s63 + $0x168] sm:$0xff]
        %v4606 = vld [vmem:[%s63 + $0x170] sm:$0xff]
        %v4607 = vld [vmem:[%s63 + $0x178] sm:$0xff]
        %v4608 = vld [vmem:[#allocation48] sm:$0x1]
        %v4609 = vld [vmem:[#allocation50] sm:$0xff]
        %v4610 = vld [vmem:[#allocation50 + $0x8] sm:$0xff]
        %v4611 = vld [vmem:[#allocation50 + $0x10] sm:$0xff]
        %v4612 = vld [vmem:[#allocation50 + $0x18] sm:$0xff]
        %v4613 = vld [vmem:[#allocation50 + $0x20] sm:$0xff]
        %v4614 = vld [vmem:[#allocation50 + $0x28] sm:$0xff]
        %v4615 = vld [vmem:[#allocation50 + $0x30] sm:$0xff]
        %v4616 = vld [vmem:[#allocation50 + $0x38] sm:$0xff]
        %v4617 = vld [vmem:[#allocation50 + $0x40] sm:$0xff]
        %v4618 = vld [vmem:[#allocation50 + $0x48] sm:$0xff]
        %v4619 = vld [vmem:[#allocation50 + $0x50] sm:$0xff]
        %v4620 = vld [vmem:[#allocation50 + $0x58] sm:$0xff]
        %v4621 = vld [vmem:[#allocation50 + $0x60] sm:$0xff]
        %v4622 = vld [vmem:[#allocation50 + $0x68] sm:$0xff]
        %v4623 = vld [vmem:[#allocation50 + $0x70] sm:$0xff]
        %v4624 = vld [vmem:[#allocation50 + $0x78] sm:$0xff]
        %v4625 = vld [vmem:[#allocation50 + $0x80] sm:$0xff]
        %v4626 = vld [vmem:[#allocation50 + $0x88] sm:$0xff]
        %v4627 = vld [vmem:[#allocation50 + $0x90] sm:$0xff]
        %v4628 = vld [vmem:[#allocation50 + $0x98] sm:$0xff]
        %v4629 = vld [vmem:[#allocation50 + $0xa0] sm:$0xff]
        %v4630 = vld [vmem:[#allocation50 + $0xa8] sm:$0xff]
        %v4631 = vld [vmem:[#allocation50 + $0xb0] sm:$0xff]
        %v4632 = vld [vmem:[#allocation50 + $0xb8] sm:$0xff]
        %v4633 = vld [vmem:[%s69] sm:$0x1]
        %v4634 = vld [vmem:[%s71] sm:$0xff]
        %v4635 = vld [vmem:[%s71 + $0x8] sm:$0xff]
        %v4636 = vld [vmem:[%s71 + $0x10] sm:$0xff]
        %v4637 = vld [vmem:[%s71 + $0x18] sm:$0xff]
        %v4638 = vld [vmem:[%s71 + $0x20] sm:$0xff]
        %v4639 = vld [vmem:[%s71 + $0x28] sm:$0xff]
        %v4640 = vld [vmem:[%s71 + $0x30] sm:$0xff]
        %v4641 = vld [vmem:[%s71 + $0x38] sm:$0xff]
        %v4642 = vld [vmem:[%s71 + $0x40] sm:$0xff]
        %v4643 = vld [vmem:[%s71 + $0x48] sm:$0xff]
        %v4644 = vld [vmem:[%s71 + $0x50] sm:$0xff]
        %v4645 = vld [vmem:[%s71 + $0x58] sm:$0xff]
        %v4646 = vld [vmem:[%s71 + $0x60] sm:$0xff]
        %v4647 = vld [vmem:[%s71 + $0x68] sm:$0xff]
        %v4648 = vld [vmem:[%s71 + $0x70] sm:$0xff]
        %v4649 = vld [vmem:[%s71 + $0x78] sm:$0xff]
        %v4650 = vld [vmem:[%s73] sm:$0x1]
        %v4651 = vld [vmem:[#allocation51] sm:$0xff]
        %v4652 = vld [vmem:[#allocation51 + $0x8] sm:$0xff]
        %v4653 = vld [vmem:[#allocation51 + $0x10] sm:$0xff]
        %v4654 = vld [vmem:[#allocation51 + $0x18] sm:$0xff]
        %v4655 = vld [vmem:[#allocation51 + $0x20] sm:$0xff]
        %v4656 = vld [vmem:[#allocation51 + $0x28] sm:$0xff]
        %v4657 = vld [vmem:[#allocation51 + $0x30] sm:$0xff]
        %v4658 = vld [vmem:[#allocation51 + $0x38] sm:$0xff]
        %v4659 = vld [vmem:[%s77] sm:$0x1]
        %v4660 = vld [vmem:[%s79] sm:$0xff]
        %v4661 = vld [vmem:[%s79 + $0x8] sm:$0xff]
        %v4662 = vld [vmem:[%s79 + $0x10] sm:$0xff]
        %v4663 = vld [vmem:[%s79 + $0x18] sm:$0xff]
        %v4664 = vld [vmem:[%s79 + $0x20] sm:$0xff]
        %v4665 = vld [vmem:[%s79 + $0x28] sm:$0xff]
        %v4666 = vld [vmem:[%s79 + $0x30] sm:$0xff]
        %v4667 = vld [vmem:[%s79 + $0x38] sm:$0xff]
        %v4668 = vld [vmem:[#allocation53] sm:$0xff]
        %v4669 = vld [vmem:[%s83] sm:$0x1]
        %v4670 = vld [vmem:[%s85] sm:$0x1]
        %v4671 = vld [vmem:[%s87] sm:$0xff]
        %v4672 = vld [vmem:[%s89] sm:$0x1]
        %v4673 = vld [vmem:[%s91] sm:$0xff]
        %v4676 = vrot.slane %v4558, 7
        %v4677 = vrot.slane %v4559, 7
        %v4678 = vsel %vm1943, %v4676, %v4677
        %v4682 = vsel %vm1943, 0.0, %v4676
        %v4683 = vsel %vm1943, %v4677, 0.0
        %v4684 = vlaneseq
        %v4685 = vshrl.u32 %v4684, 7
        %v4686 = vlaneseq
        %v4687 = vand.u32 %v4686, 127
        %v4688 = vmul.u32 %v4685, 2
        %vm4689 = vcmp.eq.s32.totalorder %v4687, %v4688
        %v4690 = vsel %vm4689, 1, 0
        %v4691 = vcvt.s32.f32 %v4690
        %vm4692 = vcmask 146432
        %v4694 = vsel %vm4692, %v4691, 0
        %vm4696 = vcmask 1041408
        %v4698 = vsel %vm4696, %v4683, 0
        %4700 = vmatprep.subr.mxu0 0.0
        %4701 = vmatpush1.msra.mxu0 %v4682
        %4702 = vmatprep.subr.mxu0 0.0
        %4703 = vmatpush1.msra.mxu0 %v4678
        %4704 = vmatprep.subr.mxu0 0.0
        %4705 = vmatpush1.msra.mxu0 %v4698
        %4706 = vmatprep.subr.mxu0 0.0
        %4707 = vmatpush1.msra.mxu0 0.0
        %4708 = vmatprep.subr.mxu0 0.0
        %4709 = vmatpush1.msra.mxu0 0.0
        %4710 = vmatprep.subr.mxu0 0.0
        %4711 = vmatpush1.msra.mxu0 0.0
        %4712 = vmatprep.subr.mxu0 0.0
        %4713 = vmatpush1.msra.mxu0 0.0
        %4714 = vmatprep.subr.mxu0 0.0
        %4715 = vmatpush1.msra.mxu0 0.0
        %4716 = vmatprep.subr.mxu0 0.0
        %4717 = vmatpush1.msra.mxu0 0.0
        %4718 = vmatprep.subr.mxu0 0.0
        %4719 = vmatpush1.msra.mxu0 0.0
        %4720 = vmatprep.subr.mxu0 0.0
        %4721 = vmatpush1.msra.mxu0 0.0
        %4722 = vmatprep.subr.mxu0 0.0
        %4723 = vmatpush1.msra.mxu0 0.0
        %4724 = vmatprep.subr.mxu0 0.0
        %4725 = vmatpush1.msra.mxu0 0.0
        %4726 = vmatprep.subr.mxu0 0.0
        %4727 = vmatpush1.msra.mxu0 0.0
        %4728 = vmatprep.subr.mxu0 0.0
        %4729 = vmatpush1.msra.mxu0 0.0
        %4730 = vmatprep.subr.mxu0 0.0
        %4731 = vmatpush1.msra.mxu0 0.0
        %4732 = vmatprep.subr.mxu0 0.0
        %4733 = vmatpush1.msra.mxu0 0.0
        %4734 = vmatprep.subr.mxu0 0.0
        %4735 = vmatpush1.msra.mxu0 0.0
        %4736 = vmatprep.subr.mxu0 0.0
        %4737 = vmatpush1.msra.mxu0 0.0
        %4738 = vmatprep.subr.mxu0 0.0
        %4739 = vmatpush1.msra.mxu0 0.0
        %4740 = vmatprep.subr.mxu0 0.0
        %4741 = vmatpush1.msra.mxu0 0.0
        %4742 = vmatprep.subr.mxu0 0.0
        %4743 = vmatpush1.msra.mxu0 0.0
        %4744 = vmatprep.subr.mxu0 0.0
        %4745 = vmatpush1.msra.mxu0 0.0
        %4746 = vmatprep.subr.mxu0 0.0
        %4747 = vmatpush1.msra.mxu0 0.0
        %4748 = vmatprep.subr.mxu0 0.0
        %4749 = vmatpush1.msra.mxu0 0.0
        %4750 = vmatprep.subr.mxu0 0.0
        %4751 = vmatpush1.msra.mxu0 0.0
        %4752 = vmatprep.subr.mxu0 0.0
        %4753 = vmatpush1.msra.mxu0 0.0
        %4754 = vmatprep.subr.mxu0 0.0
        %4755 = vmatpush1.msra.mxu0 0.0
        %4756 = vmatprep.subr.mxu0 0.0
        %4757 = vmatpush1.msra.mxu0 0.0
        %4758 = vmatprep.subr.mxu0 0.0
        %4759 = vmatpush1.msra.mxu0 0.0
        %4760 = vmatprep.subr.mxu0 0.0
        %4761 = vmatpush1.msra.mxu0 0.0
        %4762 = vmatprep.subr.mxu0 0.0
        %4763 = vmatpush1.msra.mxu0 0.0
        %4764 = vmatprep.mubr.f32.mxu0 0.0
        %4765 = vmatmul.mubr.f32.gmra.mrb[0].mxu0 %v4694
        %v4766 = vpop.f32.mrb[0].mxu0
        %v4767 = vadd.f32 0.0, %v4766
        %v4768 = vpop.f32.mrb[0].mxu0
        %4769 = vdwg.mxu0
        %v4770 = vadd.s32 %v4688, 1
        %vm4771 = vcmp.eq.s32.totalorder %v4687, %v4770
        %v4772 = vsel %vm4771, 1, 0
        %v4773 = vcvt.s32.f32 %v4772
        %v4775 = vsel %vm4692, %v4773, 0
        %4777 = vmatprep.subr.mxu0 0.0
        %4778 = vmatpush1.msra.mxu0 %v4682
        %4779 = vmatprep.subr.mxu0 0.0
        %4780 = vmatpush1.msra.mxu0 %v4678
        %4781 = vmatprep.subr.mxu0 0.0
        %4782 = vmatpush1.msra.mxu0 %v4698
        %4783 = vmatprep.subr.mxu0 0.0
        %4784 = vmatpush1.msra.mxu0 0.0
        %4785 = vmatprep.subr.mxu0 0.0
        %4786 = vmatpush1.msra.mxu0 0.0
        %4787 = vmatprep.subr.mxu0 0.0
        %4788 = vmatpush1.msra.mxu0 0.0
        %4789 = vmatprep.subr.mxu0 0.0
        %4790 = vmatpush1.msra.mxu0 0.0
        %4791 = vmatprep.subr.mxu0 0.0
        %4792 = vmatpush1.msra.mxu0 0.0
        %4793 = vmatprep.subr.mxu0 0.0
        %4794 = vmatpush1.msra.mxu0 0.0
        %4795 = vmatprep.subr.mxu0 0.0
        %4796 = vmatpush1.msra.mxu0 0.0
        %4797 = vmatprep.subr.mxu0 0.0
        %4798 = vmatpush1.msra.mxu0 0.0
        %4799 = vmatprep.subr.mxu0 0.0
        %4800 = vmatpush1.msra.mxu0 0.0
        %4801 = vmatprep.subr.mxu0 0.0
        %4802 = vmatpush1.msra.mxu0 0.0
        %4803 = vmatprep.subr.mxu0 0.0
        %4804 = vmatpush1.msra.mxu0 0.0
        %4805 = vmatprep.subr.mxu0 0.0
        %4806 = vmatpush1.msra.mxu0 0.0
        %4807 = vmatprep.subr.mxu0 0.0
        %4808 = vmatpush1.msra.mxu0 0.0
        %4809 = vmatprep.subr.mxu0 0.0
        %4810 = vmatpush1.msra.mxu0 0.0
        %4811 = vmatprep.subr.mxu0 0.0
        %4812 = vmatpush1.msra.mxu0 0.0
        %4813 = vmatprep.subr.mxu0 0.0
        %4814 = vmatpush1.msra.mxu0 0.0
        %4815 = vmatprep.subr.mxu0 0.0
        %4816 = vmatpush1.msra.mxu0 0.0
        %4817 = vmatprep.subr.mxu0 0.0
        %4818 = vmatpush1.msra.mxu0 0.0
        %4819 = vmatprep.subr.mxu0 0.0
        %4820 = vmatpush1.msra.mxu0 0.0
        %4821 = vmatprep.subr.mxu0 0.0
        %4822 = vmatpush1.msra.mxu0 0.0
        %4823 = vmatprep.subr.mxu0 0.0
        %4824 = vmatpush1.msra.mxu0 0.0
        %4825 = vmatprep.subr.mxu0 0.0
        %4826 = vmatpush1.msra.mxu0 0.0
        %4827 = vmatprep.subr.mxu0 0.0
        %4828 = vmatpush1.msra.mxu0 0.0
        %4829 = vmatprep.subr.mxu0 0.0
        %4830 = vmatpush1.msra.mxu0 0.0
        %4831 = vmatprep.subr.mxu0 0.0
        %4832 = vmatpush1.msra.mxu0 0.0
        %4833 = vmatprep.subr.mxu0 0.0
        %4834 = vmatpush1.msra.mxu0 0.0
        %4835 = vmatprep.subr.mxu0 0.0
        %4836 = vmatpush1.msra.mxu0 0.0
        %4837 = vmatprep.subr.mxu0 0.0
        %4838 = vmatpush1.msra.mxu0 0.0
        %4839 = vmatprep.subr.mxu0 0.0
        %4840 = vmatpush1.msra.mxu0 0.0
        %4841 = vmatprep.mubr.f32.mxu0 0.0
        %4842 = vmatmul.mubr.f32.gmra.mrb[0].mxu0 %v4775
        %v4843 = vpop.f32.mrb[0].mxu0
        %v4844 = vadd.f32 0.0, %v4843
        %v4845 = vpop.f32.mrb[0].mxu0
        %4846 = vdwg.mxu0
        %v4847 = vadd.s32 %v4688, 2
        %vm4848 = vcmp.eq.s32.totalorder %v4687, %v4847
        %v4849 = vsel %vm4848, 1, 0
        %v4850 = vcvt.s32.f32 %v4849
        %v4852 = vsel %vm4692, %v4850, 0
        %4854 = vmatprep.subr.mxu0 0.0
        %4855 = vmatpush1.msra.mxu0 %v4682
        %4856 = vmatprep.subr.mxu0 0.0
        %4857 = vmatpush1.msra.mxu0 %v4678
        %4858 = vmatprep.subr.mxu0 0.0
        %4859 = vmatpush1.msra.mxu0 %v4698
        %4860 = vmatprep.subr.mxu0 0.0
        %4861 = vmatpush1.msra.mxu0 0.0
        %4862 = vmatprep.subr.mxu0 0.0
        %4863 = vmatpush1.msra.mxu0 0.0
        %4864 = vmatprep.subr.mxu0 0.0
        %4865 = vmatpush1.msra.mxu0 0.0
        %4866 = vmatprep.subr.mxu0 0.0
        %4867 = vmatpush1.msra.mxu0 0.0
        %4868 = vmatprep.subr.mxu0 0.0
        %4869 = vmatpush1.msra.mxu0 0.0
        %4870 = vmatprep.subr.mxu0 0.0
        %4871 = vmatpush1.msra.mxu0 0.0
        %4872 = vmatprep.subr.mxu0 0.0
        %4873 = vmatpush1.msra.mxu0 0.0
        %4874 = vmatprep.subr.mxu0 0.0
        %4875 = vmatpush1.msra.mxu0 0.0
        %4876 = vmatprep.subr.mxu0 0.0
        %4877 = vmatpush1.msra.mxu0 0.0
        %4878 = vmatprep.subr.mxu0 0.0
        %4879 = vmatpush1.msra.mxu0 0.0
        %4880 = vmatprep.subr.mxu0 0.0
        %4881 = vmatpush1.msra.mxu0 0.0
        %4882 = vmatprep.subr.mxu0 0.0
        %4883 = vmatpush1.msra.mxu0 0.0
        %4884 = vmatprep.subr.mxu0 0.0
        %4885 = vmatpush1.msra.mxu0 0.0
        %4886 = vmatprep.subr.mxu0 0.0
        %4887 = vmatpush1.msra.mxu0 0.0
        %4888 = vmatprep.subr.mxu0 0.0
        %4889 = vmatpush1.msra.mxu0 0.0
        %4890 = vmatprep.subr.mxu0 0.0
        %4891 = vmatpush1.msra.mxu0 0.0
        %4892 = vmatprep.subr.mxu0 0.0
        %4893 = vmatpush1.msra.mxu0 0.0
        %4894 = vmatprep.subr.mxu0 0.0
        %4895 = vmatpush1.msra.mxu0 0.0
        %4896 = vmatprep.subr.mxu0 0.0
        %4897 = vmatpush1.msra.mxu0 0.0
        %4898 = vmatprep.subr.mxu0 0.0
        %4899 = vmatpush1.msra.mxu0 0.0
        %4900 = vmatprep.subr.mxu0 0.0
        %4901 = vmatpush1.msra.mxu0 0.0
        %4902 = vmatprep.subr.mxu0 0.0
        %4903 = vmatpush1.msra.mxu0 0.0
        %4904 = vmatprep.subr.mxu0 0.0
        %4905 = vmatpush1.msra.mxu0 0.0
        %4906 = vmatprep.subr.mxu0 0.0
        %4907 = vmatpush1.msra.mxu0 0.0
        %4908 = vmatprep.subr.mxu0 0.0
        %4909 = vmatpush1.msra.mxu0 0.0
        %4910 = vmatprep.subr.mxu0 0.0
        %4911 = vmatpush1.msra.mxu0 0.0
        %4912 = vmatprep.subr.mxu0 0.0
        %4913 = vmatpush1.msra.mxu0 0.0
        %4914 = vmatprep.subr.mxu0 0.0
        %4915 = vmatpush1.msra.mxu0 0.0
        %4916 = vmatprep.subr.mxu0 0.0
        %4917 = vmatpush1.msra.mxu0 0.0
        %4918 = vmatprep.mubr.f32.mxu0 0.0
        %4919 = vmatmul.mubr.f32.gmra.mrb[0].mxu0 %v4852
        %v4920 = vpop.f32.mrb[0].mxu0
        %v4921 = vadd.f32 0.0, %v4920
        %v4922 = vpop.f32.mrb[0].mxu0
        %4923 = vdwg.mxu0
        %v4925 = vlaneseq
        %v4926 = vshrl.u32 %v4925, 7
        %v4927 = vsub.s32 0, %v4926
        %v4928 = vrot.slane %v4608, %v4927
        %4930 = vmatprep.subr.mxu0 0.0
        %4931 = vmatpush1.msra.mxu0 %v4560
        %4932 = vmatprep.subr.mxu0 0.0
        %4933 = vmatpush1.msra.mxu0 %v4561
        %4934 = vmatprep.subr.mxu0 0.0
        %4935 = vmatpush1.msra.mxu0 %v4562
        %4936 = vmatprep.subr.mxu0 0.0
        %4937 = vmatpush1.msra.mxu0 %v4563
        %4938 = vmatprep.subr.mxu0 0.0
        %4939 = vmatpush1.msra.mxu0 %v4564
        %4940 = vmatprep.subr.mxu0 0.0
        %4941 = vmatpush1.msra.mxu0 %v4565
        %4942 = vmatprep.subr.mxu0 0.0
        %4943 = vmatpush1.msra.mxu0 %v4566
        %4944 = vmatprep.subr.mxu0 0.0
        %4945 = vmatpush1.msra.mxu0 %v4567
        %4946 = vmatprep.subr.mxu0 0.0
        %4947 = vmatpush1.msra.mxu0 %v4568
        %4948 = vmatprep.subr.mxu0 0.0
        %4949 = vmatpush1.msra.mxu0 %v4569
        %4950 = vmatprep.subr.mxu0 0.0
        %4951 = vmatpush1.msra.mxu0 %v4570
        %4952 = vmatprep.subr.mxu0 0.0
        %4953 = vmatpush1.msra.mxu0 %v4571
        %4954 = vmatprep.subr.mxu0 0.0
        %4955 = vmatpush1.msra.mxu0 %v4572
        %4956 = vmatprep.subr.mxu0 0.0
        %4957 = vmatpush1.msra.mxu0 %v4573
        %4958 = vmatprep.subr.mxu0 0.0
        %4959 = vmatpush1.msra.mxu0 %v4574
        %4960 = vmatprep.subr.mxu0 0.0
        %4961 = vmatpush1.msra.mxu0 %v4575
        %4962 = vmatprep.subr.mxu0 0.0
        %4963 = vmatpush1.msra.mxu0 %v4576
        %4964 = vmatprep.subr.mxu0 0.0
        %4965 = vmatpush1.msra.mxu0 %v4577
        %4966 = vmatprep.subr.mxu0 0.0
        %4967 = vmatpush1.msra.mxu0 %v4578
        %4968 = vmatprep.subr.mxu0 0.0
        %4969 = vmatpush1.msra.mxu0 %v4579
        %4970 = vmatprep.subr.mxu0 0.0
        %4971 = vmatpush1.msra.mxu0 %v4580
        %4972 = vmatprep.subr.mxu0 0.0
        %4973 = vmatpush1.msra.mxu0 %v4581
        %4974 = vmatprep.subr.mxu0 0.0
        %4975 = vmatpush1.msra.mxu0 %v4582
        %4976 = vmatprep.subr.mxu0 0.0
        %4977 = vmatpush1.msra.mxu0 %v4583
        %4978 = vmatprep.subr.mxu0 0.0
        %4979 = vmatpush1.msra.mxu0 %v4584
        %4980 = vmatprep.subr.mxu0 0.0
        %4981 = vmatpush1.msra.mxu0 %v4585
        %4982 = vmatprep.subr.mxu0 0.0
        %4983 = vmatpush1.msra.mxu0 %v4586
        %4984 = vmatprep.subr.mxu0 0.0
        %4985 = vmatpush1.msra.mxu0 %v4587
        %4986 = vmatprep.subr.mxu0 0.0
        %4987 = vmatpush1.msra.mxu0 %v4588
        %4988 = vmatprep.subr.mxu0 0.0
        %4989 = vmatpush1.msra.mxu0 %v4589
        %4990 = vmatprep.subr.mxu0 0.0
        %4991 = vmatpush1.msra.mxu0 %v4590
        %4992 = vmatprep.subr.mxu0 0.0
        %4993 = vmatpush1.msra.mxu0 %v4591
        %4994 = vmatprep.mubr.f32.mxu0 %v4844
        %4995 = vmatmul.mubr.f32.gmra.mrb[0].mxu0 %v4767
        %v4996 = vpop.f32.mrb[0].mxu0
        %v4997 = vadd.f32 %v4928, %v4996
        %v4998 = vpop.f32.mrb[0].mxu0
        %4999 = vdwg.mxu0
        %5000 = vmatprep.subr.mxu0 0.0
        %5001 = vmatpush1.msra.mxu0 %v4592
        %5002 = vmatprep.subr.mxu0 0.0
        %5003 = vmatpush1.msra.mxu0 %v4593
        %5004 = vmatprep.subr.mxu0 0.0
        %5005 = vmatpush1.msra.mxu0 %v4594
        %5006 = vmatprep.subr.mxu0 0.0
        %5007 = vmatpush1.msra.mxu0 %v4595
        %5008 = vmatprep.subr.mxu0 0.0
        %5009 = vmatpush1.msra.mxu0 %v4596
        %5010 = vmatprep.subr.mxu0 0.0
        %5011 = vmatpush1.msra.mxu0 %v4597
        %5012 = vmatprep.subr.mxu0 0.0
        %5013 = vmatpush1.msra.mxu0 %v4598
        %5014 = vmatprep.subr.mxu0 0.0
        %5015 = vmatpush1.msra.mxu0 %v4599
        %5016 = vmatprep.subr.mxu0 0.0
        %5017 = vmatpush1.msra.mxu0 %v4600
        %5018 = vmatprep.subr.mxu0 0.0
        %5019 = vmatpush1.msra.mxu0 %v4601
        %5020 = vmatprep.subr.mxu0 0.0
        %5021 = vmatpush1.msra.mxu0 %v4602
        %5022 = vmatprep.subr.mxu0 0.0
        %5023 = vmatpush1.msra.mxu0 %v4603
        %5024 = vmatprep.subr.mxu0 0.0
        %5025 = vmatpush1.msra.mxu0 %v4604
        %5026 = vmatprep.subr.mxu0 0.0
        %5027 = vmatpush1.msra.mxu0 %v4605
        %5028 = vmatprep.subr.mxu0 0.0
        %5029 = vmatpush1.msra.mxu0 %v4606
        %5030 = vmatprep.subr.mxu0 0.0
        %5031 = vmatpush1.msra.mxu0 %v4607
        %5032 = vmatprep.subr.mxu0 0.0
        %5033 = vmatpush1.msra.mxu0 0.0
        %5034 = vmatprep.subr.mxu0 0.0
        %5035 = vmatpush1.msra.mxu0 0.0
        %5036 = vmatprep.subr.mxu0 0.0
        %5037 = vmatpush1.msra.mxu0 0.0
        %5038 = vmatprep.subr.mxu0 0.0
        %5039 = vmatpush1.msra.mxu0 0.0
        %5040 = vmatprep.subr.mxu0 0.0
        %5041 = vmatpush1.msra.mxu0 0.0
        %5042 = vmatprep.subr.mxu0 0.0
        %5043 = vmatpush1.msra.mxu0 0.0
        %5044 = vmatprep.subr.mxu0 0.0
        %5045 = vmatpush1.msra.mxu0 0.0
        %5046 = vmatprep.subr.mxu0 0.0
        %5047 = vmatpush1.msra.mxu0 0.0
        %5048 = vmatprep.subr.mxu0 0.0
        %5049 = vmatpush1.msra.mxu0 0.0
        %5050 = vmatprep.subr.mxu0 0.0
        %5051 = vmatpush1.msra.mxu0 0.0
        %5052 = vmatprep.subr.mxu0 0.0
        %5053 = vmatpush1.msra.mxu0 0.0
        %5054 = vmatprep.subr.mxu0 0.0
        %5055 = vmatpush1.msra.mxu0 0.0
        %5056 = vmatprep.subr.mxu0 0.0
        %5057 = vmatpush1.msra.mxu0 0.0
        %5058 = vmatprep.subr.mxu0 0.0
        %5059 = vmatpush1.msra.mxu0 0.0
        %5060 = vmatprep.subr.mxu0 0.0
        %5061 = vmatpush1.msra.mxu0 0.0
        %5062 = vmatprep.subr.mxu0 0.0
        %5063 = vmatpush1.msra.mxu0 0.0
        %5064 = vmatprep.mubr.f32.mxu0 0.0
        %5065 = vmatmul.mubr.f32.gmra.mrb[0].mxu0 %v4921
        %v5066 = vpop.f32.mrb[0].mxu0
        %v5067 = vadd.f32 %v4997, %v5066
        %v5068 = vpop.f32.mrb[0].mxu0
        %5069 = vdwg.mxu0
        %vm5070 = vcmp.gt.f32.partialorder %v5067, 0.0
        %v5071 = vmul.f32 %v5067, 0.01
        %v5072 = vsel %vm5070, %v5067, %v5071
        %v5074 = vrot.slane %v5072, 7
        %v5076 = vsel %vm1943, 0.0, %v5074
        %v5077 = vsel %vm1943, %v5074, 0.0
        %v5080 = vrot.slane %v5076, 1
        %v5081 = vrot.slane %v5077, 1
        %v5082 = vsel %vm1954, %v5080, %v5081
        %5083 = vrot.lane.b32.xlu0 %v5082, 64
        %v5084 = vpop.permute.xlu0 %5083
        %v5086 = vrot.slane %v5076, 2
        %v5087 = vrot.slane %v5077, 2
        %v5088 = vsel %vm1966, %v5086, %v5087
        %v5089 = vsel %vm1972, %v5076, %v5084
        %v5091 = vlaneseq
        %v5092 = vshrl.u32 %v5091, 7
        %v5093 = vsub.s32 0, %v5092
        %v5094 = vrot.slane %v4633, %v5093
        %v5096 = vsel %vm1972, %v5088, 0
        %5098 = vmatprep.subr.mxu0 0.0
        %5099 = vmatpush1.msra.mxu0 %v4609
        %5100 = vmatprep.subr.mxu0 0.0
        %5101 = vmatpush1.msra.mxu0 %v4610
        %5102 = vmatprep.subr.mxu0 0.0
        %5103 = vmatpush1.msra.mxu0 %v4611
        %5104 = vmatprep.subr.mxu0 0.0
        %5105 = vmatpush1.msra.mxu0 %v4612
        %5106 = vmatprep.subr.mxu0 0.0
        %5107 = vmatpush1.msra.mxu0 %v4613
        %5108 = vmatprep.subr.mxu0 0.0
        %5109 = vmatpush1.msra.mxu0 %v4614
        %5110 = vmatprep.subr.mxu0 0.0
        %5111 = vmatpush1.msra.mxu0 %v4615
        %5112 = vmatprep.subr.mxu0 0.0
        %5113 = vmatpush1.msra.mxu0 %v4616
        %5114 = vmatprep.subr.mxu0 0.0
        %5115 = vmatpush1.msra.mxu0 %v4617
        %5116 = vmatprep.subr.mxu0 0.0
        %5117 = vmatpush1.msra.mxu0 %v4618
        %5118 = vmatprep.subr.mxu0 0.0
        %5119 = vmatpush1.msra.mxu0 %v4619
        %5120 = vmatprep.subr.mxu0 0.0
        %5121 = vmatpush1.msra.mxu0 %v4620
        %5122 = vmatprep.subr.mxu0 0.0
        %5123 = vmatpush1.msra.mxu0 %v4621
        %5124 = vmatprep.subr.mxu0 0.0
        %5125 = vmatpush1.msra.mxu0 %v4622
        %5126 = vmatprep.subr.mxu0 0.0
        %5127 = vmatpush1.msra.mxu0 %v4623
        %5128 = vmatprep.subr.mxu0 0.0
        %5129 = vmatpush1.msra.mxu0 %v4624
        %5130 = vmatprep.subr.mxu0 0.0
        %5131 = vmatpush1.msra.mxu0 %v4625
        %5132 = vmatprep.subr.mxu0 0.0
        %5133 = vmatpush1.msra.mxu0 %v4626
        %5134 = vmatprep.subr.mxu0 0.0
        %5135 = vmatpush1.msra.mxu0 %v4627
        %5136 = vmatprep.subr.mxu0 0.0
        %5137 = vmatpush1.msra.mxu0 %v4628
        %5138 = vmatprep.subr.mxu0 0.0
        %5139 = vmatpush1.msra.mxu0 %v4629
        %5140 = vmatprep.subr.mxu0 0.0
        %5141 = vmatpush1.msra.mxu0 %v4630
        %5142 = vmatprep.subr.mxu0 0.0
        %5143 = vmatpush1.msra.mxu0 %v4631
        %5144 = vmatprep.subr.mxu0 0.0
        %5145 = vmatpush1.msra.mxu0 %v4632
        %5146 = vmatprep.subr.mxu0 0.0
        %5147 = vmatpush1.msra.mxu0 0.0
        %5148 = vmatprep.subr.mxu0 0.0
        %5149 = vmatpush1.msra.mxu0 0.0
        %5150 = vmatprep.subr.mxu0 0.0
        %5151 = vmatpush1.msra.mxu0 0.0
        %5152 = vmatprep.subr.mxu0 0.0
        %5153 = vmatpush1.msra.mxu0 0.0
        %5154 = vmatprep.subr.mxu0 0.0
        %5155 = vmatpush1.msra.mxu0 0.0
        %5156 = vmatprep.subr.mxu0 0.0
        %5157 = vmatpush1.msra.mxu0 0.0
        %5158 = vmatprep.subr.mxu0 0.0
        %5159 = vmatpush1.msra.mxu0 0.0
        %5160 = vmatprep.subr.mxu0 0.0
        %5161 = vmatpush1.msra.mxu0 0.0
        %5162 = vmatprep.mubr.f32.mxu0 %v5096
        %5163 = vmatmul.mubr.f32.gmra.mrb[0].mxu0 %v5089
        %v5164 = vpop.f32.mrb[0].mxu0
        %v5165 = vadd.f32 %v5094, %v5164
        %v5166 = vpop.f32.mrb[0].mxu0
        %5167 = vdwg.mxu0
        %v5168 = vmul.f32 %v5165, %v5165
        %v5170 = vsel %vm1972, %v5168, 0
        %5172 = vmatprep.subr.mxu0 0.0
        %5173 = vmatpush1.msra.mxu0 %v4651
        %5174 = vmatprep.subr.mxu0 0.0
        %5175 = vmatpush1.msra.mxu0 %v4652
        %5176 = vmatprep.subr.mxu0 0.0
        %5177 = vmatpush1.msra.mxu0 %v4653
        %5178 = vmatprep.subr.mxu0 0.0
        %5179 = vmatpush1.msra.mxu0 %v4654
        %5180 = vmatprep.subr.mxu0 0.0
        %5181 = vmatpush1.msra.mxu0 %v4655
        %5182 = vmatprep.subr.mxu0 0.0
        %5183 = vmatpush1.msra.mxu0 %v4656
        %5184 = vmatprep.subr.mxu0 0.0
        %5185 = vmatpush1.msra.mxu0 %v4657
        %5186 = vmatprep.subr.mxu0 0.0
        %5187 = vmatpush1.msra.mxu0 %v4658
        %5188 = vmatprep.subr.mxu0 0.0
        %5189 = vmatpush1.msra.mxu0 0.0
        %5190 = vmatprep.subr.mxu0 0.0
        %5191 = vmatpush1.msra.mxu0 0.0
        %5192 = vmatprep.subr.mxu0 0.0
        %5193 = vmatpush1.msra.mxu0 0.0
        %5194 = vmatprep.subr.mxu0 0.0
        %5195 = vmatpush1.msra.mxu0 0.0
        %5196 = vmatprep.subr.mxu0 0.0
        %5197 = vmatpush1.msra.mxu0 0.0
        %5198 = vmatprep.subr.mxu0 0.0
        %5199 = vmatpush1.msra.mxu0 0.0
        %5200 = vmatprep.subr.mxu0 0.0
        %5201 = vmatpush1.msra.mxu0 0.0
        %5202 = vmatprep.subr.mxu0 0.0
        %5203 = vmatpush1.msra.mxu0 0.0
        %5204 = vmatprep.subr.mxu0 0.0
        %5205 = vmatpush1.msra.mxu0 0.0
        %5206 = vmatprep.subr.mxu0 0.0
        %5207 = vmatpush1.msra.mxu0 0.0
        %5208 = vmatprep.subr.mxu0 0.0
        %5209 = vmatpush1.msra.mxu0 0.0
        %5210 = vmatprep.subr.mxu0 0.0
        %5211 = vmatpush1.msra.mxu0 0.0
        %5212 = vmatprep.subr.mxu0 0.0
        %5213 = vmatpush1.msra.mxu0 0.0
        %5214 = vmatprep.subr.mxu0 0.0
        %5215 = vmatpush1.msra.mxu0 0.0
        %5216 = vmatprep.subr.mxu0 0.0
        %5217 = vmatpush1.msra.mxu0 0.0
        %5218 = vmatprep.subr.mxu0 0.0
        %5219 = vmatpush1.msra.mxu0 0.0
        %5220 = vmatprep.subr.mxu0 0.0
        %5221 = vmatpush1.msra.mxu0 0.0
        %5222 = vmatprep.subr.mxu0 0.0
        %5223 = vmatpush1.msra.mxu0 0.0
        %5224 = vmatprep.subr.mxu0 0.0
        %5225 = vmatpush1.msra.mxu0 0.0
        %5226 = vmatprep.subr.mxu0 0.0
        %5227 = vmatpush1.msra.mxu0 0.0
        %5228 = vmatprep.subr.mxu0 0.0
        %5229 = vmatpush1.msra.mxu0 0.0
        %5230 = vmatprep.subr.mxu0 0.0
        %5231 = vmatpush1.msra.mxu0 0.0
        %5232 = vmatprep.subr.mxu0 0.0
        %5233 = vmatpush1.msra.mxu0 0.0
        %5234 = vmatprep.subr.mxu0 0.0
        %5235 = vmatpush1.msra.mxu0 0.0
        %5236 = vmatprep.mubr.f32.mxu0 0.0
        %5237 = vmatmul.mubr.f32.gmra.mrb[0].mxu0 %v5170
        %v5238 = vpop.f32.mrb[0].mxu0
        %v5239 = vadd.f32 0.0, %v5238
        %v5240 = vpop.f32.mrb[0].mxu0
        %5241 = vdwg.mxu0
        %v5243 = vlaneseq
        %v5244 = vshrl.u32 %v5243, 7
        %v5245 = vsub.s32 0, %v5244
        %v5246 = vrot.slane %v4659, %v5245
        %v5248 = vadd.f32 %v5246, %v5239
        %v5249 = vrsqrt.pop %v5248
        %v5250 = vmul.f32 %v5165, %v5249
        %v5252 = vlaneseq
        %v5253 = vshrl.u32 %v5252, 7
        %v5254 = vsub.s32 0, %v5253
        %v5255 = vrot.slane %v4650, %v5254
        %5257 = vmatprep.subr.mxu0 0.0
        %5258 = vmatpush1.msra.mxu0 %v4634
        %5259 = vmatprep.subr.mxu0 0.0
        %5260 = vmatpush1.msra.mxu0 %v4635
        %5261 = vmatprep.subr.mxu0 0.0
        %5262 = vmatpush1.msra.mxu0 %v4636
        %5263 = vmatprep.subr.mxu0 0.0
        %5264 = vmatpush1.msra.mxu0 %v4637
        %5265 = vmatprep.subr.mxu0 0.0
        %5266 = vmatpush1.msra.mxu0 %v4638
        %5267 = vmatprep.subr.mxu0 0.0
        %5268 = vmatpush1.msra.mxu0 %v4639
        %5269 = vmatprep.subr.mxu0 0.0
        %5270 = vmatpush1.msra.mxu0 %v4640
        %5271 = vmatprep.subr.mxu0 0.0
        %5272 = vmatpush1.msra.mxu0 %v4641
        %5273 = vmatprep.subr.mxu0 0.0
        %5274 = vmatpush1.msra.mxu0 %v4642
        %5275 = vmatprep.subr.mxu0 0.0
        %5276 = vmatpush1.msra.mxu0 %v4643
        %5277 = vmatprep.subr.mxu0 0.0
        %5278 = vmatpush1.msra.mxu0 %v4644
        %5279 = vmatprep.subr.mxu0 0.0
        %5280 = vmatpush1.msra.mxu0 %v4645
        %5281 = vmatprep.subr.mxu0 0.0
        %5282 = vmatpush1.msra.mxu0 %v4646
        %5283 = vmatprep.subr.mxu0 0.0
        %5284 = vmatpush1.msra.mxu0 %v4647
        %5285 = vmatprep.subr.mxu0 0.0
        %5286 = vmatpush1.msra.mxu0 %v4648
        %5287 = vmatprep.subr.mxu0 0.0
        %5288 = vmatpush1.msra.mxu0 %v4649
        %5289 = vmatprep.subr.mxu0 0.0
        %5290 = vmatpush1.msra.mxu0 0.0
        %5291 = vmatprep.subr.mxu0 0.0
        %5292 = vmatpush1.msra.mxu0 0.0
        %5293 = vmatprep.subr.mxu0 0.0
        %5294 = vmatpush1.msra.mxu0 0.0
        %5295 = vmatprep.subr.mxu0 0.0
        %5296 = vmatpush1.msra.mxu0 0.0
        %5297 = vmatprep.subr.mxu0 0.0
        %5298 = vmatpush1.msra.mxu0 0.0
        %5299 = vmatprep.subr.mxu0 0.0
        %5300 = vmatpush1.msra.mxu0 0.0
        %5301 = vmatprep.subr.mxu0 0.0
        %5302 = vmatpush1.msra.mxu0 0.0
        %5303 = vmatprep.subr.mxu0 0.0
        %5304 = vmatpush1.msra.mxu0 0.0
        %5305 = vmatprep.subr.mxu0 0.0
        %5306 = vmatpush1.msra.mxu0 0.0
        %5307 = vmatprep.subr.mxu0 0.0
        %5308 = vmatpush1.msra.mxu0 0.0
        %5309 = vmatprep.subr.mxu0 0.0
        %5310 = vmatpush1.msra.mxu0 0.0
        %5311 = vmatprep.subr.mxu0 0.0
        %5312 = vmatpush1.msra.mxu0 0.0
        %5313 = vmatprep.subr.mxu0 0.0
        %5314 = vmatpush1.msra.mxu0 0.0
        %5315 = vmatprep.subr.mxu0 0.0
        %5316 = vmatpush1.msra.mxu0 0.0
        %5317 = vmatprep.subr.mxu0 0.0
        %5318 = vmatpush1.msra.mxu0 0.0
        %5319 = vmatprep.subr.mxu0 0.0
        %5320 = vmatpush1.msra.mxu0 0.0
        %5321 = vmatprep.mubr.f32.mxu0 0.0
        %5322 = vmatmul.mubr.f32.gmra.mrb[0].mxu0 %v4844
        %v5323 = vpop.f32.mrb[0].mxu0
        %v5324 = vadd.f32 %v5255, %v5323
        %v5325 = vpop.f32.mrb[0].mxu0
        %5326 = vdwg.mxu0
        %v5327 = vadd.f32 %v5250, %v5324
        %v5328 = vsel %vm1972, %v5327, 0.0
        %v5329 = vrot.slane %v5328, 4
        %v5330 = vadd.f32 %v5328, %v5329
        %v5331 = vrot.slane %v5330, 2
        %v5332 = vadd.f32 %v5330, %v5331
        %v5333 = vrot.slane %v5332, 1
        %v5334 = vadd.f32 %v5332, %v5333
        %v5336 = vsel %vm1972, %v5334, 0
        %5338 = vmatprep.subr.mxu0 0.0
        %5339 = vmatpush1.msra.mxu0 %v4660
        %5340 = vmatprep.subr.mxu0 0.0
        %5341 = vmatpush1.msra.mxu0 %v4661
        %5342 = vmatprep.subr.mxu0 0.0
        %5343 = vmatpush1.msra.mxu0 %v4662
        %5344 = vmatprep.subr.mxu0 0.0
        %5345 = vmatpush1.msra.mxu0 %v4663
        %5346 = vmatprep.subr.mxu0 0.0
        %5347 = vmatpush1.msra.mxu0 %v4664
        %5348 = vmatprep.subr.mxu0 0.0
        %5349 = vmatpush1.msra.mxu0 %v4665
        %5350 = vmatprep.subr.mxu0 0.0
        %5351 = vmatpush1.msra.mxu0 %v4666
        %5352 = vmatprep.subr.mxu0 0.0
        %5353 = vmatpush1.msra.mxu0 %v4667
        %5354 = vmatprep.subr.mxu0 0.0
        %5355 = vmatpush1.msra.mxu0 0.0
        %5356 = vmatprep.subr.mxu0 0.0
        %5357 = vmatpush1.msra.mxu0 0.0
        %5358 = vmatprep.subr.mxu0 0.0
        %5359 = vmatpush1.msra.mxu0 0.0
        %5360 = vmatprep.subr.mxu0 0.0
        %5361 = vmatpush1.msra.mxu0 0.0
        %5362 = vmatprep.subr.mxu0 0.0
        %5363 = vmatpush1.msra.mxu0 0.0
        %5364 = vmatprep.subr.mxu0 0.0
        %5365 = vmatpush1.msra.mxu0 0.0
        %5366 = vmatprep.subr.mxu0 0.0
        %5367 = vmatpush1.msra.mxu0 0.0
        %5368 = vmatprep.subr.mxu0 0.0
        %5369 = vmatpush1.msra.mxu0 0.0
        %5370 = vmatprep.subr.mxu0 0.0
        %5371 = vmatpush1.msra.mxu0 0.0
        %5372 = vmatprep.subr.mxu0 0.0
        %5373 = vmatpush1.msra.mxu0 0.0
        %5374 = vmatprep.subr.mxu0 0.0
        %5375 = vmatpush1.msra.mxu0 0.0
        %5376 = vmatprep.subr.mxu0 0.0
        %5377 = vmatpush1.msra.mxu0 0.0
        %5378 = vmatprep.subr.mxu0 0.0
        %5379 = vmatpush1.msra.mxu0 0.0
        %5380 = vmatprep.subr.mxu0 0.0
        %5381 = vmatpush1.msra.mxu0 0.0
        %5382 = vmatprep.subr.mxu0 0.0
        %5383 = vmatpush1.msra.mxu0 0.0
        %5384 = vmatprep.subr.mxu0 0.0
        %5385 = vmatpush1.msra.mxu0 0.0
        %5386 = vmatprep.subr.mxu0 0.0
        %5387 = vmatpush1.msra.mxu0 0.0
        %5388 = vmatprep.subr.mxu0 0.0
        %5389 = vmatpush1.msra.mxu0 0.0
        %5390 = vmatprep.subr.mxu0 0.0
        %5391 = vmatpush1.msra.mxu0 0.0
        %5392 = vmatprep.subr.mxu0 0.0
        %5393 = vmatpush1.msra.mxu0 0.0
        %5394 = vmatprep.subr.mxu0 0.0
        %5395 = vmatpush1.msra.mxu0 0.0
        %5396 = vmatprep.subr.mxu0 0.0
        %5397 = vmatpush1.msra.mxu0 0.0
        %5398 = vmatprep.subr.mxu0 0.0
        %5399 = vmatpush1.msra.mxu0 0.0
        %5400 = vmatprep.subr.mxu0 0.0
        %5401 = vmatpush1.msra.mxu0 0.0
        %5402 = vmatprep.mubr.f32.mxu0 0.0
        %5403 = vmatmul.mubr.f32.gmra.mrb[0].mxu0 %v5336
        %v5404 = vpop.f32.mrb[0].mxu0
        %v5405 = vadd.f32 0.0, %v5404
        %v5406 = vpop.f32.mrb[0].mxu0
        %5407 = vdwg.mxu0
        %v5408 = vmul.f32 %v2418, %v4669
        %v5410 = vsel %vm2420, %v5405, 0
        %5412 = vmatprep.subr.mxu0 0.0
        %5413 = vmatpush1.msra.mxu0 %v4668
        %5414 = vmatprep.subr.mxu0 0.0
        %5415 = vmatpush1.msra.mxu0 0.0
        %5416 = vmatprep.subr.mxu0 0.0
        %5417 = vmatpush1.msra.mxu0 0.0
        %5418 = vmatprep.subr.mxu0 0.0
        %5419 = vmatpush1.msra.mxu0 0.0
        %5420 = vmatprep.subr.mxu0 0.0
        %5421 = vmatpush1.msra.mxu0 0.0
        %5422 = vmatprep.subr.mxu0 0.0
        %5423 = vmatpush1.msra.mxu0 0.0
        %5424 = vmatprep.subr.mxu0 0.0
        %5425 = vmatpush1.msra.mxu0 0.0
        %5426 = vmatprep.subr.mxu0 0.0
        %5427 = vmatpush1.msra.mxu0 0.0
        %5428 = vmatprep.subr.mxu0 0.0
        %5429 = vmatpush1.msra.mxu0 0.0
        %5430 = vmatprep.subr.mxu0 0.0
        %5431 = vmatpush1.msra.mxu0 0.0
        %5432 = vmatprep.subr.mxu0 0.0
        %5433 = vmatpush1.msra.mxu0 0.0
        %5434 = vmatprep.subr.mxu0 0.0
        %5435 = vmatpush1.msra.mxu0 0.0
        %5436 = vmatprep.subr.mxu0 0.0
        %5437 = vmatpush1.msra.mxu0 0.0
        %5438 = vmatprep.subr.mxu0 0.0
        %5439 = vmatpush1.msra.mxu0 0.0
        %5440 = vmatprep.subr.mxu0 0.0
        %5441 = vmatpush1.msra.mxu0 0.0
        %5442 = vmatprep.subr.mxu0 0.0
        %5443 = vmatpush1.msra.mxu0 0.0
        %5444 = vmatprep.subr.mxu0 0.0
        %5445 = vmatpush1.msra.mxu0 0.0
        %5446 = vmatprep.subr.mxu0 0.0
        %5447 = vmatpush1.msra.mxu0 0.0
        %5448 = vmatprep.subr.mxu0 0.0
        %5449 = vmatpush1.msra.mxu0 0.0
        %5450 = vmatprep.subr.mxu0 0.0
        %5451 = vmatpush1.msra.mxu0 0.0
        %5452 = vmatprep.subr.mxu0 0.0
        %5453 = vmatpush1.msra.mxu0 0.0
        %5454 = vmatprep.subr.mxu0 0.0
        %5455 = vmatpush1.msra.mxu0 0.0
        %5456 = vmatprep.subr.mxu0 0.0
        %5457 = vmatpush1.msra.mxu0 0.0
        %5458 = vmatprep.subr.mxu0 0.0
        %5459 = vmatpush1.msra.mxu0 0.0
        %5460 = vmatprep.subr.mxu0 0.0
        %5461 = vmatpush1.msra.mxu0 0.0
        %5462 = vmatprep.subr.mxu0 0.0
        %5463 = vmatpush1.msra.mxu0 0.0
        %5464 = vmatprep.subr.mxu0 0.0
        %5465 = vmatpush1.msra.mxu0 0.0
        %5466 = vmatprep.subr.mxu0 0.0
        %5467 = vmatpush1.msra.mxu0 0.0
        %5468 = vmatprep.subr.mxu0 0.0
        %5469 = vmatpush1.msra.mxu0 0.0
        %5470 = vmatprep.subr.mxu0 0.0
        %5471 = vmatpush1.msra.mxu0 0.0
        %5472 = vmatprep.subr.mxu0 0.0
        %5473 = vmatpush1.msra.mxu0 0.0
        %5474 = vmatprep.subr.mxu0 0.0
        %5475 = vmatpush1.msra.mxu0 0.0
        %5476 = vmatprep.mubr.f32.mxu0 0.0
        %5477 = vmatmul.mubr.f32.gmra.mrb[0].mxu0 %v5410
        %v5478 = vpop.f32.mrb[0].mxu0
        %v5479 = vadd.f32 %v5408, %v5478
        %v5480 = vpop.f32.mrb[0].mxu0
        %5481 = vdwg.mxu0
        %v5482 = vadd.f32 %v5479, %v4670
        %vm5483 = vcmp.gt.f32.partialorder %v5482, 0.0
        %v5484 = vmul.f32 %v5482, 0.01
        %v5485 = vsel %vm5483, %v5482, %v5484
        %v5487 = vsel %vm2420, %v5485, 0
        %5489 = vmatprep.subr.mxu0 0.0
        %5490 = vmatpush1.msra.mxu0 %v4671
        %5491 = vmatprep.subr.mxu0 0.0
        %5492 = vmatpush1.msra.mxu0 0.0
        %5493 = vmatprep.subr.mxu0 0.0
        %5494 = vmatpush1.msra.mxu0 0.0
        %5495 = vmatprep.subr.mxu0 0.0
        %5496 = vmatpush1.msra.mxu0 0.0
        %5497 = vmatprep.subr.mxu0 0.0
        %5498 = vmatpush1.msra.mxu0 0.0
        %5499 = vmatprep.subr.mxu0 0.0
        %5500 = vmatpush1.msra.mxu0 0.0
        %5501 = vmatprep.subr.mxu0 0.0
        %5502 = vmatpush1.msra.mxu0 0.0
        %5503 = vmatprep.subr.mxu0 0.0
        %5504 = vmatpush1.msra.mxu0 0.0
        %5505 = vmatprep.subr.mxu0 0.0
        %5506 = vmatpush1.msra.mxu0 0.0
        %5507 = vmatprep.subr.mxu0 0.0
        %5508 = vmatpush1.msra.mxu0 0.0
        %5509 = vmatprep.subr.mxu0 0.0
        %5510 = vmatpush1.msra.mxu0 0.0
        %5511 = vmatprep.subr.mxu0 0.0
        %5512 = vmatpush1.msra.mxu0 0.0
        %5513 = vmatprep.subr.mxu0 0.0
        %5514 = vmatpush1.msra.mxu0 0.0
        %5515 = vmatprep.subr.mxu0 0.0
        %5516 = vmatpush1.msra.mxu0 0.0
        %5517 = vmatprep.subr.mxu0 0.0
        %5518 = vmatpush1.msra.mxu0 0.0
        %5519 = vmatprep.subr.mxu0 0.0
        %5520 = vmatpush1.msra.mxu0 0.0
        %5521 = vmatprep.subr.mxu0 0.0
        %5522 = vmatpush1.msra.mxu0 0.0
        %5523 = vmatprep.subr.mxu0 0.0
        %5524 = vmatpush1.msra.mxu0 0.0
        %5525 = vmatprep.subr.mxu0 0.0
        %5526 = vmatpush1.msra.mxu0 0.0
        %5527 = vmatprep.subr.mxu0 0.0
        %5528 = vmatpush1.msra.mxu0 0.0
        %5529 = vmatprep.subr.mxu0 0.0
        %5530 = vmatpush1.msra.mxu0 0.0
        %5531 = vmatprep.subr.mxu0 0.0
        %5532 = vmatpush1.msra.mxu0 0.0
        %5533 = vmatprep.subr.mxu0 0.0
        %5534 = vmatpush1.msra.mxu0 0.0
        %5535 = vmatprep.subr.mxu0 0.0
        %5536 = vmatpush1.msra.mxu0 0.0
        %5537 = vmatprep.subr.mxu0 0.0
        %5538 = vmatpush1.msra.mxu0 0.0
        %5539 = vmatprep.subr.mxu0 0.0
        %5540 = vmatpush1.msra.mxu0 0.0
        %5541 = vmatprep.subr.mxu0 0.0
        %5542 = vmatpush1.msra.mxu0 0.0
        %5543 = vmatprep.subr.mxu0 0.0
        %5544 = vmatpush1.msra.mxu0 0.0
        %5545 = vmatprep.subr.mxu0 0.0
        %5546 = vmatpush1.msra.mxu0 0.0
        %5547 = vmatprep.subr.mxu0 0.0
        %5548 = vmatpush1.msra.mxu0 0.0
        %5549 = vmatprep.subr.mxu0 0.0
        %5550 = vmatpush1.msra.mxu0 0.0
        %5551 = vmatprep.subr.mxu0 0.0
        %5552 = vmatpush1.msra.mxu0 0.0
        %5553 = vmatprep.mubr.f32.mxu0 0.0
        %5554 = vmatmul.mubr.f32.gmra.mrb[0].mxu0 %v5487
        %v5555 = vpop.f32.mrb[0].mxu0
        %v5556 = vadd.f32 %v4672, %v5555
        %v5557 = vpop.f32.mrb[0].mxu0
        %5558 = vdwg.mxu0
        %v5559 = vxor.u32 %v5556, 2147483648
        %v5560 = vmul.f32 %v5559, 1.442695
        %v5561 = vpow.pop %v5560
        %v5562 = vadd.f32 %v5561, 1.0
        %v5563 = vrcp.pop %v5562
        %v5564 = vmul.f32 1.0, %v5563
        %v5566 = vsel %vm2420, %v5564, 0
        %5568 = vmatprep.subr.mxu0 0.0
        %5569 = vmatpush1.msra.mxu0 %v4673
        %5570 = vmatprep.subr.mxu0 0.0
        %5571 = vmatpush1.msra.mxu0 0.0
        %5572 = vmatprep.subr.mxu0 0.0
        %5573 = vmatpush1.msra.mxu0 0.0
        %5574 = vmatprep.subr.mxu0 0.0
        %5575 = vmatpush1.msra.mxu0 0.0
        %5576 = vmatprep.subr.mxu0 0.0
        %5577 = vmatpush1.msra.mxu0 0.0
        %5578 = vmatprep.subr.mxu0 0.0
        %5579 = vmatpush1.msra.mxu0 0.0
        %5580 = vmatprep.subr.mxu0 0.0
        %5581 = vmatpush1.msra.mxu0 0.0
        %5582 = vmatprep.subr.mxu0 0.0
        %5583 = vmatpush1.msra.mxu0 0.0
        %5584 = vmatprep.subr.mxu0 0.0
        %5585 = vmatpush1.msra.mxu0 0.0
        %5586 = vmatprep.subr.mxu0 0.0
        %5587 = vmatpush1.msra.mxu0 0.0
        %5588 = vmatprep.subr.mxu0 0.0
        %5589 = vmatpush1.msra.mxu0 0.0
        %5590 = vmatprep.subr.mxu0 0.0
        %5591 = vmatpush1.msra.mxu0 0.0
        %5592 = vmatprep.subr.mxu0 0.0
        %5593 = vmatpush1.msra.mxu0 0.0
        %5594 = vmatprep.subr.mxu0 0.0
        %5595 = vmatpush1.msra.mxu0 0.0
        %5596 = vmatprep.subr.mxu0 0.0
        %5597 = vmatpush1.msra.mxu0 0.0
        %5598 = vmatprep.subr.mxu0 0.0
        %5599 = vmatpush1.msra.mxu0 0.0
        %5600 = vmatprep.subr.mxu0 0.0
        %5601 = vmatpush1.msra.mxu0 0.0
        %5602 = vmatprep.subr.mxu0 0.0
        %5603 = vmatpush1.msra.mxu0 0.0
        %5604 = vmatprep.subr.mxu0 0.0
        %5605 = vmatpush1.msra.mxu0 0.0
        %5606 = vmatprep.subr.mxu0 0.0
        %5607 = vmatpush1.msra.mxu0 0.0
        %5608 = vmatprep.subr.mxu0 0.0
        %5609 = vmatpush1.msra.mxu0 0.0
        %5610 = vmatprep.subr.mxu0 0.0
        %5611 = vmatpush1.msra.mxu0 0.0
        %5612 = vmatprep.subr.mxu0 0.0
        %5613 = vmatpush1.msra.mxu0 0.0
        %5614 = vmatprep.subr.mxu0 0.0
        %5615 = vmatpush1.msra.mxu0 0.0
        %5616 = vmatprep.subr.mxu0 0.0
        %5617 = vmatpush1.msra.mxu0 0.0
        %5618 = vmatprep.subr.mxu0 0.0
        %5619 = vmatpush1.msra.mxu0 0.0
        %5620 = vmatprep.subr.mxu0 0.0
        %5621 = vmatpush1.msra.mxu0 0.0
        %5622 = vmatprep.subr.mxu0 0.0
        %5623 = vmatpush1.msra.mxu0 0.0
        %5624 = vmatprep.subr.mxu0 0.0
        %5625 = vmatpush1.msra.mxu0 0.0
        %5626 = vmatprep.subr.mxu0 0.0
        %5627 = vmatpush1.msra.mxu0 0.0
        %5628 = vmatprep.subr.mxu0 0.0
        %5629 = vmatpush1.msra.mxu0 0.0
        %5630 = vmatprep.subr.mxu0 0.0
        %5631 = vmatpush1.msra.mxu0 0.0
        %5632 = vmatprep.mubr.f32.mxu0 0.0
        %5633 = vmatmul.mubr.f32.gmra.mrb[0].mxu0 %v5566
        %v5634 = vpop.f32.mrb[0].mxu0
        %v5635 = vadd.f32 0.0, %v5634
        %v5636 = vpop.f32.mrb[0].mxu0
        %5637 = vdwg.mxu0
        %v5638 = vlaneseq
        %v5639 = vshrl.u32 %v5638, 7
        %v5640 = vsub.s32 0, %v5639
        %v5641 = vrot.slane %v5635, %v5640
        %v5642 = vmul.f32 %v5327, %v5641
        %5643 = vst.msk [vmem:[%s1831] sm:$0xff] %vm1972, %v5642
        %p5644 = scmp.lt.s32.totalorder %s122, 1
        %s5645 = scalar_select %p5644, %s122, 1
        %s5646 = smul.addr %s5645, 8
        %s5647 = scalar_lea.vmem %s93, %s5646
        // Predicated region
        $region341: #{fwd.1} parent=203 // pred_check
          %p5648 = pneg %p1111
        $region342: #{fwd.1} parent=203 // pred_check_branch
          %5650 = sbr.rel (%p5648) target = $region344
        $region343: #{fwd.1} parent=203 // pred_region
          _
        $region344: #{fwd.1} parent=203 // pred_fallthru
          _
      $region204: #{fwd.1} parent=5 // pred_fallthru
        _
      %p5651 = scmp.le.s32.totalorder 2, %s117
      // Predicated region
      $region345: #{fwd.1} parent=5 // pred_check
        %p5652 = pneg %p5651
      $region346: #{fwd.1} parent=5 // pred_check_branch
        %5654 = sbr.rel (%p5652) target = $region348
      $region347: #{fwd.1} parent=5 // pred_region
        %s5655 = ssub.s32 %s117, 2
        // Predicated region
        $region349: #{fwd.1} parent=347 // pred_check
          %p5656 = pneg %p1117
        $region350: #{fwd.1} parent=347 // pred_check_branch
          %5658 = sbr.rel (%p5656) target = $region352
        $region351: #{fwd.1} parent=347 // pred_region
          %p5659 = scmp.lt.s32.totalorder %s123, 1
          %s5660 = scalar_select %p5659, %s123, 1
          %s5661 = smul.addr %s5660, 8
          %s5662 = scalar_lea.vmem %s93, %s5661
        $region352: #{fwd.1} parent=347 // pred_fallthru
          _
      $region348: #{fwd.1} parent=5 // pred_fallthru
        _
    $region6: #{fwd.1} parent=1 // loop_footer
      %s121 = sadd.s32 1, %s117
    $region7: #{fwd.1} parent=1 // loop_footer_branch
      %116 = sbr.rel target = $region3
    $region8: #{fwd.1} parent=1 // loop_exit
      _
    %5663 = vsyncpa [#allocation3], 1
    %s5664 = scalar_lea.sflag [#allocation3], 1
    %5665 = vsyncpa %s5664, 1
    %5666 = vsyncpa [#allocation7], 1
    %5667 = vsyncpa [#allocation10], 1
    %5668 = vsyncpa [#allocation13], 1
    %5669 = vsyncpa [#allocation16], 1
    %5670 = vsyncpa [#allocation19], 1
    %5671 = vsyncpa [#allocation22], 1
    %5672 = vsyncpa [#allocation25], 1
    %5673 = vsyncpa [#allocation28], 1
    %5674 = vsyncpa [#allocation31], 1
    %5675 = vsyncpa [#allocation34], 1
    %5676 = vsyncpa [#allocation37], 1
    %5677 = vsyncpa [#allocation40], 1
    %5678 = vsyncpa [#allocation43], 1
    %5679 = vsyncpa [#allocation46], 1
    %5680 = vsyncpa [#allocation49], 1
    %5681 = vsyncpa [#allocation52], 1
    %5682 = vsyncpa [#allocation4], 1
    %s5683 = scalar_lea.sflag [#allocation4], 1
    %5684 = vsyncpa %s5683, 1

</llo_original>
